<compile_context>
chip_gen: v5e
topology: v5e:2x2
jax: 0.10.0
libtpu: 0.0.40
codegen_flags: <defaults>
</compile_context>

<pallas_src>
import functools
import math

import numpy as np
import jax
import jax.numpy as jnp
from jax import lax
from jax.experimental import pallas as pl
from jax.experimental.pallas import tpu as pltpu

# ----------------------------------------------------------------------------
# Model hyper-parameters (scaled down from the original dim_mlp=1024 network).
# ----------------------------------------------------------------------------
CIN = 3                       # input channels
DIM = 32                      # stand-in for dim_mlp = 1024
NUM_CLASSES = 2
MULTI = 3
SIZE_IMG = 2                  # samples per SSL group
BATCH = MULTI * SIZE_IMG      # 6
IN_SIDE = 8
S_IN = IN_SIDE ** 3           # 512 voxels
S4_SIDE = 4
S4 = S4_SIDE ** 3             # 64 voxels (Fl spatial)
S2_SIDE = 2
S2 = S2_SIDE ** 3             # 8 voxels (Fc / Fuhc_prime spatial)
FL_C = 8                      # stand-in for features_t1 channels
C2 = 2 * DIM                  # Fc channels (2*dim_mlp in the original)
ARC_M = 0.5
ARC_S = 64.0
PAD_ROWS = 8                  # sublane-pad the batch dim
PAD_COLS = 128                # lane width of the head outputs

# ---- packed parameter slab row offsets (all multiples of 8) ----------------
# column-512 slab
S512_WFLK = 0                         # (192, 512)  wfl  kron I_64
S512_WFCK = 192                       # (24, 512)   wfc  kron I_8
S512_G64 = 216                        # (512, 512)  BN group mean (8ch x 64vox)
S512_G8 = 728                         # (512, 512)  BN group mean (64ch x 8vox)
S512_ROWS = 1240
# column-256 slab
S256_WE2X = 0                         # (24, 256)   we2x kron I_8
S256_WE2F = 24                        # (64, 256)   we2f kron I_8
S256_WCONV = 88                       # (512, 256)  folded 3x3x3 conv
S256_WFA = 600                        # (256, 256)  wfuse_a kron I_8
S256_WFB = 856                        # (256, 256)  wfuse_b kron I_8
S256_G8 = 1112                        # (256, 256)  BN group mean (32ch x 8vox)
S256_ROWS = 1368
# column-128 slab
S128_AVG = 0                          # (256, 128)  spatial-avg (1/8 folded)
S128_WM = 256                         # (128, 128)  3 margin heads, row-padded
S128_WCLS = 384                       # (256, 128)  3 linear heads (+avg folded)
S128_BCLS = 640                       # (8, 128)    linear-head bias, row-tiled
S128_ROWS = 648
# pooling slab (64 cols)
POOL2_P3 = 0                          # (192, 24)   4^3 -> 2^3 on CIN channels
POOL2_P8 = 192                        # (512, 64)   4^3 -> 2^3 on FL_C channels
POOL2_ROWS = 704
# lane-tiled BN affine vectors (one 16x512 slab, one row per vector)
(VEC_GFL, VEC_BFL, VEC_GFC, VEC_BFC, VEC_GE2, VEC_BE2,
 VEC_GCONV, VEC_BCONV, VEC_GFU, VEC_BFU) = range(10)
VEC_ROWS = 16

_VMEM = pl.BlockSpec(memory_space=pltpu.MemorySpace.VMEM)


# ----------------------------------------------------------------------------
# Precomputed linear operators
# ----------------------------------------------------------------------------
def _pool_matrix(src_side, dst_side):
    """(dst^3, src^3) block-mean operator; voxel index = (z*side + y)*side + x."""
    r = src_side // dst_side
    m = np.zeros((dst_side ** 3, src_side ** 3), np.float32)
    w = 1.0 / r ** 3
    for zd in range(dst_side):
        for yd in range(dst_side):
            for xd in range(dst_side):
                u = (zd * dst_side + yd) * dst_side + xd
                for dz in range(r):
                    for dy in range(r):
                        for dx in range(r):
                            s = ((zd * r + dz) * src_side + (yd * r + dy)) \
                                * src_side + (xd * r + dx)
                            m[u, s] = w
    return m


def _conv_eff_bm(w27):
    """Fold a 3x3x3 (pad=1) conv on the 2x2x2 grid into (S2*C2, S2*DIM).

    Row index = c_in*8 + v_in, column index = c_out*8 + v_out (channel-major
    voxel-minor, matching the batch-major lane layout of the activations).
    """
    side = S2_SIDE
    eff = np.zeros((S2 * C2, S2 * DIM), np.float32)
    for uz in range(side):
        for uy in range(side):
            for ux in range(side):
                u = (uz * side + uy) * side + ux
                for vz in range(side):
                    for vy in range(side):
                        for vx in range(side):
                            v = (vz * side + vy) * side + vx
                            t = ((vz - uz + 1) * 3 + (vy - uy + 1)) * 3 \
                                + (vx - ux + 1)
                            eff[v::S2, u::S2] = w27[t]
    return eff


# ----------------------------------------------------------------------------
# The single fused Pallas kernel
# ----------------------------------------------------------------------------
def _cmtlnet_kernel(x_ref, aux_ref, p4k_ref, pool2_ref, s512_ref, s256_ref,
                    s128_ref, vec_ref, margin_ref, cls_ref,
                    *, s, cos_m, sin_m, th, mm):
    f32 = jnp.float32

    def dot(a, b):
        return jnp.dot(a, b, preferred_element_type=f32)

    rowmask = lax.broadcasted_iota(jnp.int32, (PAD_ROWS, 1), 0) < BATCH
    inv_b = 1.0 / BATCH
    vecs = vec_ref[...]                                        # (16, 512)

    def bn_relu(z, g_row, b_row, gmat):
        # Train-mode BN; per-channel stats via a group-mean matmul (channels
        # are tiled along lanes; 1/n_vox is folded into gmat, 1/batch here).
        # TODO(synk): single-pass E[x^2]-E[x]^2 in f32; at dim_mlp=1024 scale
        # prefer the two-pass (x - mean) form.
        cs1 = jnp.sum(z, axis=0, keepdims=True) * inv_b
        cs2 = jnp.sum(z * z, axis=0, keepdims=True) * inv_b
        m1 = dot(cs1, gmat)
        var = jnp.maximum(dot(cs2, gmat) - m1 * m1, 0.0)
        y = (z - m1) * lax.rsqrt(var + 1e-5) * g_row + b_row
        # Re-zero the padded batch rows so downstream statistics stay exact.
        return jnp.where(rowmask, jnp.maximum(y, 0.0), 0.0)

    # --- pooling: all batches & channels in one matmul each -----------------
    x = x_ref[...]                                             # (8, 1536)
    x4 = dot(x, p4k_ref[...])                                  # (8, 192)
    x2 = dot(x4, pool2_ref[POOL2_P3:POOL2_P8, 0:CIN * S2])     # (8, 24)

    # --- CFE stand-ins: Fl (4^3, FL_C ch) and Fc (2^3, 2*DIM ch) ------------
    fl = bn_relu(dot(x4, s512_ref[S512_WFLK:S512_WFCK, :]),
                 vecs[VEC_GFL:VEC_GFL + 1, :], vecs[VEC_BFL:VEC_BFL + 1, :],
                 s512_ref[S512_G64:S512_G8, :])                # (8, 512)
    fl2 = dot(fl, pool2_ref[POOL2_P8:POOL2_ROWS, :])           # (8, 64)
    fc = bn_relu(dot(x2, s512_ref[S512_WFCK:S512_G64, :]),
                 vecs[VEC_GFC:VEC_GFC + 1, :], vecs[VEC_BFC:VEC_BFC + 1, :],
                 s512_ref[S512_G8:S512_ROWS, :])               # (8, 512)

    # --- UFE_E2 stand-in (concat folded into split weights) + cond. bias ----
    g256 = s256_ref[S256_G8:S256_ROWS, :]
    e2 = dot(x2, s256_ref[S256_WE2X:S256_WE2F, :]) \
        + dot(fl2, s256_ref[S256_WE2F:S256_WCONV, :])
    fuhc = bn_relu(e2, vecs[VEC_GE2:VEC_GE2 + 1, 0:256],
                   vecs[VEC_BE2:VEC_BE2 + 1, 0:256], g256)     # (8, 256)
    fuhc = fuhc + aux_ref[:, PAD_COLS:PAD_COLS + DIM * S2]     # precomputed bias

    # --- UFE MarginLoss heads: 3 ArcFace heads in one lane-dense matmul -----
    favg = dot(fuhc, s128_ref[S128_AVG:S128_WM, :])            # (8, 128) spatial avg
    xn = favg * lax.rsqrt(jnp.sum(favg * favg, axis=-1, keepdims=True) + 1e-12)
    wm = s128_ref[S128_WM:S128_WCLS, :]                        # (128, 128) row-padded
    wn = wm * lax.rsqrt(jnp.sum(wm * wm, axis=0, keepdims=True) + 1e-12)
    cos = jnp.clip(dot(xn, wn), -1.0, 1.0)
    sin = jnp.sqrt(jnp.maximum(1.0 - cos * cos, 0.0))
    phi = jnp.where(cos > th, cos * cos_m - sin * sin_m, cos - mm)
    tmask = aux_ref[:, 0:PAD_COLS]
    margin_ref[...] = jnp.where(tmask > 0.5, phi, cos) * s     # full (8,128) store

    # --- UCFC block_fc: folded 3x3x3 conv as ONE (8,512)x(512,256) matmul ---
    conv = bn_relu(dot(fc, s256_ref[S256_WCONV:S256_WFA, :]),
                   vecs[VEC_GCONV:VEC_GCONV + 1, 0:256],
                   vecs[VEC_BCONV:VEC_BCONV + 1, 0:256], g256)  # (8, 256)

    # --- UCFC fusion stand-in + 3 linear heads (avg folded into the weight) -
    fused = bn_relu(dot(fuhc, s256_ref[S256_WFA:S256_WFB, :])
                    + dot(conv, s256_ref[S256_WFB:S256_G8, :]),
                    vecs[VEC_GFU:VEC_GFU + 1, 0:256],
                    vecs[VEC_BFU:VEC_BFU + 1, 0:256], g256)     # (8, 256)
    cls_ref[...] = dot(fused, s128_ref[S128_WCLS:S128_BCLS, :]) \
        + s128_ref[S128_BCLS:S128_ROWS, :]                      # full (8,128) store


# ----------------------------------------------------------------------------
# Parameter / operator initialization (deterministic, synthetic)
# ----------------------------------------------------------------------------
def init_params(key):
    ks = jax.random.split(key, 20)
    nrm = lambda k, shape: np.asarray(0.1 * jax.random.normal(k, shape), np.float32)
    eye = lambda n: np.eye(n, dtype=np.float32)

    # TODO(synk): backbone.maskdense121 / CFE_refine / UFE_E2 / UCFCFusion are
    # not defined in the source; pooled 1x1-conv stand-ins of matching ranks.
    wfl = nrm(ks[0], (CIN, FL_C))
    wfc = nrm(ks[1], (CIN, C2))
    we2x = nrm(ks[2], (CIN, DIM))
    we2f = nrm(ks[3], (FL_C, DIM))
    cond_emb = nrm(ks[4], (MULTI, DIM))
    wm = np.concatenate([nrm(ks[5 + i], (DIM, NUM_CLASSES)) for i in range(MULTI)], axis=1)
    w27 = nrm(ks[8], (27, C2, DIM))          # 3x3x3 conv taps for block_fc
    wfa = nrm(ks[9], (DIM, DIM))
    wfb = nrm(ks[10], (DIM, DIM))
    wcls = np.concatenate([nrm(ks[11 + i], (DIM, NUM_CLASSES)) for i in range(MULTI)], axis=1)
    bcls = np.concatenate([nrm(ks[14 + i], (1, NUM_CLASSES)) for i in range(MULTI)], axis=1)

    # Pooling operators (right-multiplication, channel-major voxel-minor lanes).
    p4 = _pool_matrix(IN_SIDE, S4_SIDE)                 # (64, 512)
    p42 = _pool_matrix(S4_SIDE, S2_SIDE)                # (8, 64)
    p4k = np.kron(eye(CIN), p4.T)                       # (1536, 192)

    pool2 = np.zeros((POOL2_ROWS, S4), np.float32)
    pool2[POOL2_P3:POOL2_P3 + CIN * S4, 0:CIN * S2] = np.kron(eye(CIN), p42.T)
    pool2[POOL2_P8:POOL2_P8 + FL_C * S4, 0:FL_C * S2] = np.kron(eye(FL_C), p42.T)

    # BN group-mean matrices (1/n_vox folded in).
    g512_64 = np.kron(eye(FL_C), np.full((S4, S4), 1.0 / S4, np.float32))
    g512_8 = np.kron(eye(C2), np.full((S2, S2), 1.0 / S2, np.float32))
    g256_8 = np.kron(eye(DIM), np.full((S2, S2), 1.0 / S2, np.float32))

    s512 = np.zeros((S512_ROWS, 512), np.float32)
    s512[S512_WFLK:S512_WFLK + CIN * S4] = np.kron(wfl, eye(S4))
    s512[S512_WFCK:S512_WFCK + CIN * S2] = np.kron(wfc, eye(S2))
    s512[S512_G64:S512_G64 + FL_C * S4] = g512_64
    s512[S512_G8:S512_G8 + C2 * S2] = g512_8

    s256 = np.zeros((S256_ROWS, 256), np.float32)
    s256[S256_WE2X:S256_WE2X + CIN * S2] = np.kron(we2x, eye(S2))
    s256[S256_WE2F:S256_WE2F + FL_C * S2] = np.kron(we2f, eye(S2))
    s256[S256_WCONV:S256_WCONV + C2 * S2] = _conv_eff_bm(w27)
    s256[S256_WFA:S256_WFA + DIM * S2] = np.kron(wfa, eye(S2))
    s256[S256_WFB:S256_WFB + DIM * S2] = np.kron(wfb, eye(S2))
    s256[S256_G8:S256_G8 + DIM * S2] = g256_8

    ncols = MULTI * NUM_CLASSES
    s128 = np.zeros((S128_ROWS, PAD_COLS), np.float32)
    s128[S128_AVG:S128_AVG + DIM * S2, 0:DIM] = \
        np.kron(eye(DIM), np.full((S2, 1), 1.0 / S2, np.float32))
    s128[S128_WM:S128_WM + DIM, 0:ncols] = wm
    s128[S128_WCLS:S128_WCLS + DIM * S2, 0:ncols] = \
        np.kron(wcls, np.full((S2, 1), 1.0 / S2, np.float32))     # avg folded in
    s128[S128_BCLS:S128_BCLS + PAD_ROWS, 0:ncols] = np.tile(bcls, (PAD_ROWS, 1))

    # Lane-tiled BN affine params (gamma=1, beta=0 synthetic init).
    vecs = np.zeros((VEC_ROWS, 512), np.float32)
    vecs[VEC_GFL, :FL_C * S4] = np.repeat(np.ones(FL_C, np.float32), S4)
    vecs[VEC_GFC, :C2 * S2] = np.repeat(np.ones(C2, np.float32), S2)
    vecs[VEC_GE2, :DIM * S2] = np.repeat(np.ones(DIM, np.float32), S2)
    vecs[VEC_GCONV, :DIM * S2] = np.repeat(np.ones(DIM, np.float32), S2)
    vecs[VEC_GFU, :DIM * S2] = np.repeat(np.ones(DIM, np.float32), S2)
    # beta rows stay zero.

    return {
        "p4k": jnp.asarray(p4k),
        "pool2": jnp.asarray(pool2),
        "s512": jnp.asarray(s512),
        "s256": jnp.asarray(s256),
        "s128": jnp.asarray(s128),
        "vecs": jnp.asarray(vecs),
        "cond_emb": jnp.asarray(cond_emb),
    }


# ----------------------------------------------------------------------------
# CMTLNet forward: one fused pallas_call
# ----------------------------------------------------------------------------
@jax.jit
def cmtlnet_forward(p, x_ncdhw, label_list, condition):
    # Layout prep only (everything heavy runs inside the single pallas_call).
    x_bm = x_ncdhw.reshape(BATCH, CIN * S_IN).astype(jnp.float32)   # (6, 1536)
    x_bm = jnp.pad(x_bm, ((0, PAD_ROWS - BATCH), (0, 0)))           # (8, 1536)

    # Margin-head target mask (one-hot column per (sample, head, label)).
    labels_all = jnp.concatenate(label_list, axis=0).astype(jnp.int32)
    head = jnp.arange(BATCH, dtype=jnp.int32) // SIZE_IMG
    tmask = jax.nn.one_hot(head * NUM_CLASSES + labels_all, PAD_COLS,
                           dtype=jnp.float32)
    tmask = jnp.pad(tmask, ((0, PAD_ROWS - BATCH), (0, 0)))         # (8, 128)

    # Condition bias precomputed on the XLA side (tiny), lane-tiled per voxel.
    cond_oh = jax.nn.one_hot(condition, MULTI, dtype=jnp.float32)   # (6, 3)
    cond_bias = jnp.repeat(cond_oh @ p["cond_emb"], S2, axis=1)     # (6, 256)
    cond_bias = jnp.pad(cond_bias, ((0, PAD_ROWS - BATCH), (0, 0))) # (8, 256)

    aux = jnp.concatenate([tmask, cond_bias], axis=1)               # (8, 384)

    kern = functools.partial(
        _cmtlnet_kernel,
        s=ARC_S, cos_m=math.cos(ARC_M), sin_m=math.sin(ARC_M),
        th=math.cos(math.pi - ARC_M), mm=math.sin(math.pi - ARC_M) * ARC_M)

    out_shapes = (jax.ShapeDtypeStruct((PAD_ROWS, PAD_COLS), jnp.float32),
                  jax.ShapeDtypeStruct((PAD_ROWS, PAD_COLS), jnp.float32))

    # TODO(synk): at the real dim_mlp=1024 config add a grid with a "parallel"
    # axis (v7x 2 TensorCores), K-tile the folded-conv matmul with an f32 VMEM
    # accumulator, use bf16 weights, and set vmem_limit_bytes explicitly.
    margin_out, cls_out = pl.pallas_call(
        kern,
        out_shape=out_shapes,
        in_specs=[_VMEM] * 8,
        out_specs=(_VMEM, _VMEM),
    )(x_bm, aux, p["p4k"], p["pool2"], p["s512"], p["s256"], p["s128"],
      p["vecs"])

    ufe_logits, ucfc_logits = [], []
    for m in range(MULTI):
        rs = slice(m * SIZE_IMG, (m + 1) * SIZE_IMG)
        cs = slice(m * NUM_CLASSES, (m + 1) * NUM_CLASSES)
        ufe_logits.append(margin_out[rs, cs])
        ucfc_logits.append(cls_out[rs, cs])
    return ufe_logits, list(label_list), ucfc_logits, list(label_list)


# ----------------------------------------------------------------------------
# Main
# ----------------------------------------------------------------------------
if __name__ == "__main__":
    key = jax.random.PRNGKey(0)
    k_x, k_p, k_l0, k_l1, k_l2 = jax.random.split(key, 5)

    params = init_params(k_p)

    x = jax.random.normal(
        k_x, (BATCH, CIN, IN_SIDE, IN_SIDE, IN_SIDE), dtype=jnp.float32)
    label_list = [
        jax.random.randint(k_l0, (SIZE_IMG,), 0, NUM_CLASSES, dtype=jnp.int32),
        jax.random.randint(k_l1, (SIZE_IMG,), 0, NUM_CLASSES, dtype=jnp.int32),
        jax.random.randint(k_l2, (SIZE_IMG,), 0, NUM_CLASSES, dtype=jnp.int32),
    ]
    condition = jnp.repeat(jnp.arange(MULTI, dtype=jnp.int32), SIZE_IMG)  # (6,)

    outs = cmtlnet_forward(params, x, label_list, condition)
    jax.block_until_ready(jax.tree_util.tree_leaves(outs))

    ufe_logits, ufe_labels, ucfc_logits, ucfc_labels = outs
    assert len(ufe_logits) == MULTI and ufe_logits[0].shape == (SIZE_IMG, NUM_CLASSES)
    assert len(ucfc_logits) == MULTI and ucfc_logits[0].shape == (SIZE_IMG, NUM_CLASSES)
    assert all(bool(jnp.all(jnp.isfinite(l))) for l in ufe_logits + ucfc_logits)
    print("KERNEL_OK")
</pallas_src>

<mosaic_0001>
module attributes {stable_mosaic.version = 11 : i64} {
  func.func @_cmtlnet_kernel(%arg0: memref<8x1536xf32, #tpu.memory_space<vmem>>, %arg1: memref<8x384xf32, #tpu.memory_space<vmem>>, %arg2: memref<1536x192xf32, #tpu.memory_space<vmem>>, %arg3: memref<704x64xf32, #tpu.memory_space<vmem>>, %arg4: memref<1240x512xf32, #tpu.memory_space<vmem>>, %arg5: memref<1368x256xf32, #tpu.memory_space<vmem>>, %arg6: memref<648x128xf32, #tpu.memory_space<vmem>>, %arg7: memref<16x512xf32, #tpu.memory_space<vmem>>, %arg8: memref<8x128xf32, #tpu.memory_space<vmem>>, %arg9: memref<8x128xf32, #tpu.memory_space<vmem>>) attributes {dimension_semantics = [], scalar_prefetch = 0 : i64, scratch_operands = 0 : i64, tpu.core_type = #tpu.core_type<tc>} {
    %0 = tpu.iota {dimensions = array<i32: 0>} : vector<8x1xi32>
    %c6_i32 = arith.constant 6 : i32
    %1 = vector.broadcast %c6_i32 : i32 to vector<8x1xi32>
    %2 = arith.cmpi slt, %0, %1 : vector<8x1xi32>
    %c0 = arith.constant 0 : index
    %c0_0 = arith.constant 0 : index
    %3 = vector.load %arg7[%c0, %c0_0] : memref<16x512xf32, #tpu.memory_space<vmem>>, vector<16x512xf32>
    %c0_1 = arith.constant 0 : index
    %c0_2 = arith.constant 0 : index
    %4 = vector.load %arg0[%c0_1, %c0_2] : memref<8x1536xf32, #tpu.memory_space<vmem>>, vector<8x1536xf32>
    %c0_3 = arith.constant 0 : index
    %c0_4 = arith.constant 0 : index
    %5 = vector.load %arg2[%c0_3, %c0_4] : memref<1536x192xf32, #tpu.memory_space<vmem>>, vector<1536x192xf32>
    %cst = arith.constant dense<0.000000e+00> : vector<8x192xf32>
    %6 = tpu.matmul %4, %5, %cst {dimension_numbers = #tpu.dot_dimension_numbers<[1], [0], [0], [1], [0, 0, 1, 1], [], []>} : vector<8x1536xf32>, vector<1536x192xf32>, vector<8x192xf32> -> vector<8x192xf32>
    %c0_5 = arith.constant 0 : index
    %c0_6 = arith.constant 0 : index
    %7 = vector.load %arg3[%c0_5, %c0_6] : memref<704x64xf32, #tpu.memory_space<vmem>>, vector<192x24xf32>
    %cst_7 = arith.constant dense<0.000000e+00> : vector<8x24xf32>
    %8 = tpu.matmul %6, %7, %cst_7 {dimension_numbers = #tpu.dot_dimension_numbers<[1], [0], [0], [1], [0, 0, 1, 1], [], []>} : vector<8x192xf32>, vector<192x24xf32>, vector<8x24xf32> -> vector<8x24xf32>
    %c0_8 = arith.constant 0 : index
    %c0_9 = arith.constant 0 : index
    %9 = vector.load %arg4[%c0_8, %c0_9] : memref<1240x512xf32, #tpu.memory_space<vmem>>, vector<192x512xf32>
    %cst_10 = arith.constant dense<0.000000e+00> : vector<8x512xf32>
    %10 = tpu.matmul %6, %9, %cst_10 {dimension_numbers = #tpu.dot_dimension_numbers<[1], [0], [0], [1], [0, 0, 1, 1], [], []>} : vector<8x192xf32>, vector<192x512xf32>, vector<8x512xf32> -> vector<8x512xf32>
    %11 = vector.extract_strided_slice %3 {offsets = [0, 0], sizes = [1, 512], strides = [1, 1]} : vector<16x512xf32> to vector<1x512xf32>
    %12 = vector.extract_strided_slice %3 {offsets = [1, 0], sizes = [1, 512], strides = [1, 1]} : vector<16x512xf32> to vector<1x512xf32>
    %c216 = arith.constant 216 : index
    %c0_11 = arith.constant 0 : index
    %13 = vector.load %arg4[%c216, %c0_11] : memref<1240x512xf32, #tpu.memory_space<vmem>>, vector<512x512xf32>
    %cst_12 = arith.constant dense<0.000000e+00> : vector<512xf32>
    %14 = vector.multi_reduction <add>, %10, %cst_12 [0] : vector<8x512xf32> to vector<512xf32>
    %15 = vector.shape_cast %14 : vector<512xf32> to vector<1x512xf32>
    %cst_13 = arith.constant 0.166666672 : f32
    %16 = vector.broadcast %cst_13 : f32 to vector<1x512xf32>
    %17 = arith.mulf %15, %16 : vector<1x512xf32>
    %18 = arith.mulf %10, %10 : vector<8x512xf32>
    %cst_14 = arith.constant dense<0.000000e+00> : vector<512xf32>
    %19 = vector.multi_reduction <add>, %18, %cst_14 [0] : vector<8x512xf32> to vector<512xf32>
    %20 = vector.shape_cast %19 : vector<512xf32> to vector<1x512xf32>
    %cst_15 = arith.constant 0.166666672 : f32
    %21 = vector.broadcast %cst_15 : f32 to vector<1x512xf32>
    %22 = arith.mulf %20, %21 : vector<1x512xf32>
    %cst_16 = arith.constant dense<0.000000e+00> : vector<1x512xf32>
    %23 = tpu.matmul %17, %13, %cst_16 {dimension_numbers = #tpu.dot_dimension_numbers<[1], [0], [0], [1], [0, 0, 1, 1], [], []>} : vector<1x512xf32>, vector<512x512xf32>, vector<1x512xf32> -> vector<1x512xf32>
    %cst_17 = arith.constant dense<0.000000e+00> : vector<1x512xf32>
    %24 = tpu.matmul %22, %13, %cst_17 {dimension_numbers = #tpu.dot_dimension_numbers<[1], [0], [0], [1], [0, 0, 1, 1], [], []>} : vector<1x512xf32>, vector<512x512xf32>, vector<1x512xf32> -> vector<1x512xf32>
    %25 = arith.mulf %23, %23 : vector<1x512xf32>
    %26 = arith.subf %24, %25 : vector<1x512xf32>
    %cst_18 = arith.constant 0.000000e+00 : f32
    %27 = vector.broadcast %cst_18 : f32 to vector<1x512xf32>
    %28 = arith.maximumf %26, %27 : vector<1x512xf32>
    %29 = vector.broadcast %23 : vector<1x512xf32> to vector<8x512xf32>
    %30 = arith.subf %10, %29 : vector<8x512xf32>
    %cst_19 = arith.constant 9.99999974E-6 : f32
    %31 = vector.broadcast %cst_19 : f32 to vector<1x512xf32>
    %32 = arith.addf %28, %31 : vector<1x512xf32>
    %33 = math.rsqrt %32 : vector<1x512xf32>
    %34 = vector.broadcast %33 : vector<1x512xf32> to vector<8x512xf32>
    %35 = arith.mulf %30, %34 : vector<8x512xf32>
    %36 = vector.broadcast %11 : vector<1x512xf32> to vector<8x512xf32>
    %37 = arith.mulf %35, %36 : vector<8x512xf32>
    %38 = vector.broadcast %12 : vector<1x512xf32> to vector<8x512xf32>
    %39 = arith.addf %37, %38 : vector<8x512xf32>
    %cst_20 = arith.constant 0.000000e+00 : f32
    %40 = vector.broadcast %cst_20 : f32 to vector<8x512xf32>
    %41 = arith.maximumf %39, %40 : vector<8x512xf32>
    %cst_21 = arith.constant 0.000000e+00 : f32
    %42 = vector.shape_cast %2 : vector<8x1xi1> to vector<8x1xi1>
    %43 = vector.broadcast %42 : vector<8x1xi1> to vector<8x512xi1>
    %44 = vector.broadcast %cst_21 : f32 to vector<8x512xf32>
    %45 = arith.select %43, %41, %44 : vector<8x512xi1>, vector<8x512xf32>
    %c192 = arith.constant 192 : index
    %c0_22 = arith.constant 0 : index
    %46 = vector.load %arg3[%c192, %c0_22] : memref<704x64xf32, #tpu.memory_space<vmem>>, vector<512x64xf32>
    %cst_23 = arith.constant dense<0.000000e+00> : vector<8x64xf32>
    %47 = tpu.matmul %45, %46, %cst_23 {dimension_numbers = #tpu.dot_dimension_numbers<[1], [0], [0], [1], [0, 0, 1, 1], [], []>} : vector<8x512xf32>, vector<512x64xf32>, vector<8x64xf32> -> vector<8x64xf32>
    %c192_24 = arith.constant 192 : index
    %c0_25 = arith.constant 0 : index
    %48 = vector.load %arg4[%c192_24, %c0_25] : memref<1240x512xf32, #tpu.memory_space<vmem>>, vector<24x512xf32>
    %cst_26 = arith.constant dense<0.000000e+00> : vector<8x512xf32>
    %49 = tpu.matmul %8, %48, %cst_26 {dimension_numbers = #tpu.dot_dimension_numbers<[1], [0], [0], [1], [0, 0, 1, 1], [], []>} : vector<8x24xf32>, vector<24x512xf32>, vector<8x512xf32> -> vector<8x512xf32>
    %50 = vector.extract_strided_slice %3 {offsets = [2, 0], sizes = [1, 512], strides = [1, 1]} : vector<16x512xf32> to vector<1x512xf32>
    %51 = vector.extract_strided_slice %3 {offsets = [3, 0], sizes = [1, 512], strides = [1, 1]} : vector<16x512xf32> to vector<1x512xf32>
    %c728 = arith.constant 728 : index
    %c0_27 = arith.constant 0 : index
    %52 = vector.load %arg4[%c728, %c0_27] : memref<1240x512xf32, #tpu.memory_space<vmem>>, vector<512x512xf32>
    %cst_28 = arith.constant dense<0.000000e+00> : vector<512xf32>
    %53 = vector.multi_reduction <add>, %49, %cst_28 [0] : vector<8x512xf32> to vector<512xf32>
    %54 = vector.shape_cast %53 : vector<512xf32> to vector<1x512xf32>
    %cst_29 = arith.constant 0.166666672 : f32
    %55 = vector.broadcast %cst_29 : f32 to vector<1x512xf32>
    %56 = arith.mulf %54, %55 : vector<1x512xf32>
    %57 = arith.mulf %49, %49 : vector<8x512xf32>
    %cst_30 = arith.constant dense<0.000000e+00> : vector<512xf32>
    %58 = vector.multi_reduction <add>, %57, %cst_30 [0] : vector<8x512xf32> to vector<512xf32>
    %59 = vector.shape_cast %58 : vector<512xf32> to vector<1x512xf32>
    %cst_31 = arith.constant 0.166666672 : f32
    %60 = vector.broadcast %cst_31 : f32 to vector<1x512xf32>
    %61 = arith.mulf %59, %60 : vector<1x512xf32>
    %cst_32 = arith.constant dense<0.000000e+00> : vector<1x512xf32>
    %62 = tpu.matmul %56, %52, %cst_32 {dimension_numbers = #tpu.dot_dimension_numbers<[1], [0], [0], [1], [0, 0, 1, 1], [], []>} : vector<1x512xf32>, vector<512x512xf32>, vector<1x512xf32> -> vector<1x512xf32>
    %cst_33 = arith.constant dense<0.000000e+00> : vector<1x512xf32>
    %63 = tpu.matmul %61, %52, %cst_33 {dimension_numbers = #tpu.dot_dimension_numbers<[1], [0], [0], [1], [0, 0, 1, 1], [], []>} : vector<1x512xf32>, vector<512x512xf32>, vector<1x512xf32> -> vector<1x512xf32>
    %64 = arith.mulf %62, %62 : vector<1x512xf32>
    %65 = arith.subf %63, %64 : vector<1x512xf32>
    %cst_34 = arith.constant 0.000000e+00 : f32
    %66 = vector.broadcast %cst_34 : f32 to vector<1x512xf32>
    %67 = arith.maximumf %65, %66 : vector<1x512xf32>
    %68 = vector.broadcast %62 : vector<1x512xf32> to vector<8x512xf32>
    %69 = arith.subf %49, %68 : vector<8x512xf32>
    %cst_35 = arith.constant 9.99999974E-6 : f32
    %70 = vector.broadcast %cst_35 : f32 to vector<1x512xf32>
    %71 = arith.addf %67, %70 : vector<1x512xf32>
    %72 = math.rsqrt %71 : vector<1x512xf32>
    %73 = vector.broadcast %72 : vector<1x512xf32> to vector<8x512xf32>
    %74 = arith.mulf %69, %73 : vector<8x512xf32>
    %75 = vector.broadcast %50 : vector<1x512xf32> to vector<8x512xf32>
    %76 = arith.mulf %74, %75 : vector<8x512xf32>
    %77 = vector.broadcast %51 : vector<1x512xf32> to vector<8x512xf32>
    %78 = arith.addf %76, %77 : vector<8x512xf32>
    %cst_36 = arith.constant 0.000000e+00 : f32
    %79 = vector.broadcast %cst_36 : f32 to vector<8x512xf32>
    %80 = arith.maximumf %78, %79 : vector<8x512xf32>
    %cst_37 = arith.constant 0.000000e+00 : f32
    %81 = vector.shape_cast %2 : vector<8x1xi1> to vector<8x1xi1>
    %82 = vector.broadcast %81 : vector<8x1xi1> to vector<8x512xi1>
    %83 = vector.broadcast %cst_37 : f32 to vector<8x512xf32>
    %84 = arith.select %82, %80, %83 : vector<8x512xi1>, vector<8x512xf32>
    %c1112 = arith.constant 1112 : index
    %c0_38 = arith.constant 0 : index
    %85 = vector.load %arg5[%c1112, %c0_38] : memref<1368x256xf32, #tpu.memory_space<vmem>>, vector<256x256xf32>
    %c0_39 = arith.constant 0 : index
    %c0_40 = arith.constant 0 : index
    %86 = vector.load %arg5[%c0_39, %c0_40] : memref<1368x256xf32, #tpu.memory_space<vmem>>, vector<24x256xf32>
    %cst_41 = arith.constant dense<0.000000e+00> : vector<8x256xf32>
    %87 = tpu.matmul %8, %86, %cst_41 {dimension_numbers = #tpu.dot_dimension_numbers<[1], [0], [0], [1], [0, 0, 1, 1], [], []>} : vector<8x24xf32>, vector<24x256xf32>, vector<8x256xf32> -> vector<8x256xf32>
    %c24 = arith.constant 24 : index
    %c0_42 = arith.constant 0 : index
    %88 = vector.load %arg5[%c24, %c0_42] : memref<1368x256xf32, #tpu.memory_space<vmem>>, vector<64x256xf32>
    %cst_43 = arith.constant dense<0.000000e+00> : vector<8x256xf32>
    %89 = tpu.matmul %47, %88, %cst_43 {dimension_numbers = #tpu.dot_dimension_numbers<[1], [0], [0], [1], [0, 0, 1, 1], [], []>} : vector<8x64xf32>, vector<64x256xf32>, vector<8x256xf32> -> vector<8x256xf32>
    %90 = arith.addf %87, %89 : vector<8x256xf32>
    %91 = vector.extract_strided_slice %3 {offsets = [4, 0], sizes = [1, 256], strides = [1, 1]} : vector<16x512xf32> to vector<1x256xf32>
    %92 = vector.extract_strided_slice %3 {offsets = [5, 0], sizes = [1, 256], strides = [1, 1]} : vector<16x512xf32> to vector<1x256xf32>
    %cst_44 = arith.constant dense<0.000000e+00> : vector<256xf32>
    %93 = vector.multi_reduction <add>, %90, %cst_44 [0] : vector<8x256xf32> to vector<256xf32>
    %94 = vector.shape_cast %93 : vector<256xf32> to vector<1x256xf32>
    %cst_45 = arith.constant 0.166666672 : f32
    %95 = vector.broadcast %cst_45 : f32 to vector<1x256xf32>
    %96 = arith.mulf %94, %95 : vector<1x256xf32>
    %97 = arith.mulf %90, %90 : vector<8x256xf32>
    %cst_46 = arith.constant dense<0.000000e+00> : vector<256xf32>
    %98 = vector.multi_reduction <add>, %97, %cst_46 [0] : vector<8x256xf32> to vector<256xf32>
    %99 = vector.shape_cast %98 : vector<256xf32> to vector<1x256xf32>
    %cst_47 = arith.constant 0.166666672 : f32
    %100 = vector.broadcast %cst_47 : f32 to vector<1x256xf32>
    %101 = arith.mulf %99, %100 : vector<1x256xf32>
    %cst_48 = arith.constant dense<0.000000e+00> : vector<1x256xf32>
    %102 = tpu.matmul %96, %85, %cst_48 {dimension_numbers = #tpu.dot_dimension_numbers<[1], [0], [0], [1], [0, 0, 1, 1], [], []>} : vector<1x256xf32>, vector<256x256xf32>, vector<1x256xf32> -> vector<1x256xf32>
    %cst_49 = arith.constant dense<0.000000e+00> : vector<1x256xf32>
    %103 = tpu.matmul %101, %85, %cst_49 {dimension_numbers = #tpu.dot_dimension_numbers<[1], [0], [0], [1], [0, 0, 1, 1], [], []>} : vector<1x256xf32>, vector<256x256xf32>, vector<1x256xf32> -> vector<1x256xf32>
    %104 = arith.mulf %102, %102 : vector<1x256xf32>
    %105 = arith.subf %103, %104 : vector<1x256xf32>
    %cst_50 = arith.constant 0.000000e+00 : f32
    %106 = vector.broadcast %cst_50 : f32 to vector<1x256xf32>
    %107 = arith.maximumf %105, %106 : vector<1x256xf32>
    %108 = vector.broadcast %102 : vector<1x256xf32> to vector<8x256xf32>
    %109 = arith.subf %90, %108 : vector<8x256xf32>
    %cst_51 = arith.constant 9.99999974E-6 : f32
    %110 = vector.broadcast %cst_51 : f32 to vector<1x256xf32>
    %111 = arith.addf %107, %110 : vector<1x256xf32>
    %112 = math.rsqrt %111 : vector<1x256xf32>
    %113 = vector.broadcast %112 : vector<1x256xf32> to vector<8x256xf32>
    %114 = arith.mulf %109, %113 : vector<8x256xf32>
    %115 = vector.broadcast %91 : vector<1x256xf32> to vector<8x256xf32>
    %116 = arith.mulf %114, %115 : vector<8x256xf32>
    %117 = vector.broadcast %92 : vector<1x256xf32> to vector<8x256xf32>
    %118 = arith.addf %116, %117 : vector<8x256xf32>
    %cst_52 = arith.constant 0.000000e+00 : f32
    %119 = vector.broadcast %cst_52 : f32 to vector<8x256xf32>
    %120 = arith.maximumf %118, %119 : vector<8x256xf32>
    %cst_53 = arith.constant 0.000000e+00 : f32
    %121 = vector.shape_cast %2 : vector<8x1xi1> to vector<8x1xi1>
    %122 = vector.broadcast %121 : vector<8x1xi1> to vector<8x256xi1>
    %123 = vector.broadcast %cst_53 : f32 to vector<8x256xf32>
    %124 = arith.select %122, %120, %123 : vector<8x256xi1>, vector<8x256xf32>
    %c0_54 = arith.constant 0 : index
    %c128 = arith.constant 128 : index
    %125 = vector.load %arg1[%c0_54, %c128] : memref<8x384xf32, #tpu.memory_space<vmem>>, vector<8x256xf32>
    %126 = arith.addf %124, %125 : vector<8x256xf32>
    %c0_55 = arith.constant 0 : index
    %c0_56 = arith.constant 0 : index
    %127 = vector.load %arg6[%c0_55, %c0_56] : memref<648x128xf32, #tpu.memory_space<vmem>>, vector<256x128xf32>
    %cst_57 = arith.constant dense<0.000000e+00> : vector<8x128xf32>
    %128 = tpu.matmul %126, %127, %cst_57 {dimension_numbers = #tpu.dot_dimension_numbers<[1], [0], [0], [1], [0, 0, 1, 1], [], []>} : vector<8x256xf32>, vector<256x128xf32>, vector<8x128xf32> -> vector<8x128xf32>
    %129 = arith.mulf %128, %128 : vector<8x128xf32>
    %cst_58 = arith.constant dense<0.000000e+00> : vector<8xf32>
    %130 = vector.multi_reduction <add>, %129, %cst_58 [1] : vector<8x128xf32> to vector<8xf32>
    %131 = vector.shape_cast %130 : vector<8xf32> to vector<8x1xf32>
    %cst_59 = arith.constant 9.99999996E-13 : f32
    %132 = vector.broadcast %cst_59 : f32 to vector<8x1xf32>
    %133 = arith.addf %131, %132 : vector<8x1xf32>
    %134 = math.rsqrt %133 : vector<8x1xf32>
    %135 = vector.broadcast %134 : vector<8x1xf32> to vector<8x128xf32>
    %136 = arith.mulf %128, %135 : vector<8x128xf32>
    %c256 = arith.constant 256 : index
    %c0_60 = arith.constant 0 : index
    %137 = vector.load %arg6[%c256, %c0_60] : memref<648x128xf32, #tpu.memory_space<vmem>>, vector<128x128xf32>
    %138 = arith.mulf %137, %137 : vector<128x128xf32>
    %cst_61 = arith.constant dense<0.000000e+00> : vector<128xf32>
    %139 = vector.multi_reduction <add>, %138, %cst_61 [0] : vector<128x128xf32> to vector<128xf32>
    %140 = vector.shape_cast %139 : vector<128xf32> to vector<1x128xf32>
    %cst_62 = arith.constant 9.99999996E-13 : f32
    %141 = vector.broadcast %cst_62 : f32 to vector<1x128xf32>
    %142 = arith.addf %140, %141 : vector<1x128xf32>
    %143 = math.rsqrt %142 : vector<1x128xf32>
    %144 = vector.broadcast %143 : vector<1x128xf32> to vector<128x128xf32>
    %145 = arith.mulf %137, %144 : vector<128x128xf32>
    %cst_63 = arith.constant dense<0.000000e+00> : vector<8x128xf32>
    %146 = tpu.matmul %136, %145, %cst_63 {dimension_numbers = #tpu.dot_dimension_numbers<[1], [0], [0], [1], [0, 0, 1, 1], [], []>} : vector<8x128xf32>, vector<128x128xf32>, vector<8x128xf32> -> vector<8x128xf32>
    %cst_64 = arith.constant -1.000000e+00 : f32
    %cst_65 = arith.constant 1.000000e+00 : f32
    %147 = vector.broadcast %cst_64 : f32 to vector<8x128xf32>
    %148 = arith.maximumf %147, %146 : vector<8x128xf32>
    %149 = vector.broadcast %cst_65 : f32 to vector<8x128xf32>
    %150 = arith.minimumf %149, %148 : vector<8x128xf32>
    %151 = arith.mulf %150, %150 : vector<8x128xf32>
    %cst_66 = arith.constant 1.000000e+00 : f32
    %152 = vector.broadcast %cst_66 : f32 to vector<8x128xf32>
    %153 = arith.subf %152, %151 : vector<8x128xf32>
    %cst_67 = arith.constant 0.000000e+00 : f32
    %154 = vector.broadcast %cst_67 : f32 to vector<8x128xf32>
    %155 = arith.maximumf %153, %154 : vector<8x128xf32>
    %156 = math.sqrt %155 : vector<8x128xf32>
    %cst_68 = arith.constant -0.87758255 : f32
    %157 = vector.broadcast %cst_68 : f32 to vector<8x128xf32>
    %158 = arith.cmpf ogt, %150, %157 : vector<8x128xf32>
    %cst_69 = arith.constant 0.87758255 : f32
    %159 = vector.broadcast %cst_69 : f32 to vector<8x128xf32>
    %160 = arith.mulf %150, %159 : vector<8x128xf32>
    %cst_70 = arith.constant 0.47942555 : f32
    %161 = vector.broadcast %cst_70 : f32 to vector<8x128xf32>
    %162 = arith.mulf %156, %161 : vector<8x128xf32>
    %163 = arith.subf %160, %162 : vector<8x128xf32>
    %cst_71 = arith.constant 0.239712775 : f32
    %164 = vector.broadcast %cst_71 : f32 to vector<8x128xf32>
    %165 = arith.subf %150, %164 : vector<8x128xf32>
    %166 = arith.select %158, %163, %165 : vector<8x128xi1>, vector<8x128xf32>
    %c0_72 = arith.constant 0 : index
    %c0_73 = arith.constant 0 : index
    %167 = vector.load %arg1[%c0_72, %c0_73] : memref<8x384xf32, #tpu.memory_space<vmem>>, vector<8x128xf32>
    %cst_74 = arith.constant 5.000000e-01 : f32
    %168 = vector.broadcast %cst_74 : f32 to vector<8x128xf32>
    %169 = arith.cmpf ogt, %167, %168 : vector<8x128xf32>
    %170 = arith.select %169, %166, %150 : vector<8x128xi1>, vector<8x128xf32>
    %cst_75 = arith.constant 6.400000e+01 : f32
    %171 = vector.broadcast %cst_75 : f32 to vector<8x128xf32>
    %172 = arith.mulf %170, %171 : vector<8x128xf32>
    %c0_76 = arith.constant 0 : index
    %c0_77 = arith.constant 0 : index
    %173 = vector.load %arg8[%c0_76, %c0_77] : memref<8x128xf32, #tpu.memory_space<vmem>>, vector<8x128xf32>
    tpu.vector_store %arg8[%c0_76, %c0_77], %172 {strides = array<i32>} : memref<8x128xf32, #tpu.memory_space<vmem>>, vector<8x128xf32>,
    %c88 = arith.constant 88 : index
    %c0_78 = arith.constant 0 : index
    %174 = vector.load %arg5[%c88, %c0_78] : memref<1368x256xf32, #tpu.memory_space<vmem>>, vector<512x256xf32>
    %cst_79 = arith.constant dense<0.000000e+00> : vector<8x256xf32>
    %175 = tpu.matmul %84, %174, %cst_79 {dimension_numbers = #tpu.dot_dimension_numbers<[1], [0], [0], [1], [0, 0, 1, 1], [], []>} : vector<8x512xf32>, vector<512x256xf32>, vector<8x256xf32> -> vector<8x256xf32>
    %176 = vector.extract_strided_slice %3 {offsets = [6, 0], sizes = [1, 256], strides = [1, 1]} : vector<16x512xf32> to vector<1x256xf32>
    %177 = vector.extract_strided_slice %3 {offsets = [7, 0], sizes = [1, 256], strides = [1, 1]} : vector<16x512xf32> to vector<1x256xf32>
    %cst_80 = arith.constant dense<0.000000e+00> : vector<256xf32>
    %178 = vector.multi_reduction <add>, %175, %cst_80 [0] : vector<8x256xf32> to vector<256xf32>
    %179 = vector.shape_cast %178 : vector<256xf32> to vector<1x256xf32>
    %cst_81 = arith.constant 0.166666672 : f32
    %180 = vector.broadcast %cst_81 : f32 to vector<1x256xf32>
    %181 = arith.mulf %179, %180 : vector<1x256xf32>
    %182 = arith.mulf %175, %175 : vector<8x256xf32>
    %cst_82 = arith.constant dense<0.000000e+00> : vector<256xf32>
    %183 = vector.multi_reduction <add>, %182, %cst_82 [0] : vector<8x256xf32> to vector<256xf32>
    %184 = vector.shape_cast %183 : vector<256xf32> to vector<1x256xf32>
    %cst_83 = arith.constant 0.166666672 : f32
    %185 = vector.broadcast %cst_83 : f32 to vector<1x256xf32>
    %186 = arith.mulf %184, %185 : vector<1x256xf32>
    %cst_84 = arith.constant dense<0.000000e+00> : vector<1x256xf32>
    %187 = tpu.matmul %181, %85, %cst_84 {dimension_numbers = #tpu.dot_dimension_numbers<[1], [0], [0], [1], [0, 0, 1, 1], [], []>} : vector<1x256xf32>, vector<256x256xf32>, vector<1x256xf32> -> vector<1x256xf32>
    %cst_85 = arith.constant dense<0.000000e+00> : vector<1x256xf32>
    %188 = tpu.matmul %186, %85, %cst_85 {dimension_numbers = #tpu.dot_dimension_numbers<[1], [0], [0], [1], [0, 0, 1, 1], [], []>} : vector<1x256xf32>, vector<256x256xf32>, vector<1x256xf32> -> vector<1x256xf32>
    %189 = arith.mulf %187, %187 : vector<1x256xf32>
    %190 = arith.subf %188, %189 : vector<1x256xf32>
    %cst_86 = arith.constant 0.000000e+00 : f32
    %191 = vector.broadcast %cst_86 : f32 to vector<1x256xf32>
    %192 = arith.maximumf %190, %191 : vector<1x256xf32>
    %193 = vector.broadcast %187 : vector<1x256xf32> to vector<8x256xf32>
    %194 = arith.subf %175, %193 : vector<8x256xf32>
    %cst_87 = arith.constant 9.99999974E-6 : f32
    %195 = vector.broadcast %cst_87 : f32 to vector<1x256xf32>
    %196 = arith.addf %192, %195 : vector<1x256xf32>
    %197 = math.rsqrt %196 : vector<1x256xf32>
    %198 = vector.broadcast %197 : vector<1x256xf32> to vector<8x256xf32>
    %199 = arith.mulf %194, %198 : vector<8x256xf32>
    %200 = vector.broadcast %176 : vector<1x256xf32> to vector<8x256xf32>
    %201 = arith.mulf %199, %200 : vector<8x256xf32>
    %202 = vector.broadcast %177 : vector<1x256xf32> to vector<8x256xf32>
    %203 = arith.addf %201, %202 : vector<8x256xf32>
    %cst_88 = arith.constant 0.000000e+00 : f32
    %204 = vector.broadcast %cst_88 : f32 to vector<8x256xf32>
    %205 = arith.maximumf %203, %204 : vector<8x256xf32>
    %cst_89 = arith.constant 0.000000e+00 : f32
    %206 = vector.shape_cast %2 : vector<8x1xi1> to vector<8x1xi1>
    %207 = vector.broadcast %206 : vector<8x1xi1> to vector<8x256xi1>
    %208 = vector.broadcast %cst_89 : f32 to vector<8x256xf32>
    %209 = arith.select %207, %205, %208 : vector<8x256xi1>, vector<8x256xf32>
    %c600 = arith.constant 600 : index
    %c0_90 = arith.constant 0 : index
    %210 = vector.load %arg5[%c600, %c0_90] : memref<1368x256xf32, #tpu.memory_space<vmem>>, vector<256x256xf32>
    %cst_91 = arith.constant dense<0.000000e+00> : vector<8x256xf32>
    %211 = tpu.matmul %126, %210, %cst_91 {dimension_numbers = #tpu.dot_dimension_numbers<[1], [0], [0], [1], [0, 0, 1, 1], [], []>} : vector<8x256xf32>, vector<256x256xf32>, vector<8x256xf32> -> vector<8x256xf32>
    %c856 = arith.constant 856 : index
    %c0_92 = arith.constant 0 : index
    %212 = vector.load %arg5[%c856, %c0_92] : memref<1368x256xf32, #tpu.memory_space<vmem>>, vector<256x256xf32>
    %cst_93 = arith.constant dense<0.000000e+00> : vector<8x256xf32>
    %213 = tpu.matmul %209, %212, %cst_93 {dimension_numbers = #tpu.dot_dimension_numbers<[1], [0], [0], [1], [0, 0, 1, 1], [], []>} : vector<8x256xf32>, vector<256x256xf32>, vector<8x256xf32> -> vector<8x256xf32>
    %214 = arith.addf %211, %213 : vector<8x256xf32>
    %215 = vector.extract_strided_slice %3 {offsets = [8, 0], sizes = [1, 256], strides = [1, 1]} : vector<16x512xf32> to vector<1x256xf32>
    %216 = vector.extract_strided_slice %3 {offsets = [9, 0], sizes = [1, 256], strides = [1, 1]} : vector<16x512xf32> to vector<1x256xf32>
    %cst_94 = arith.constant dense<0.000000e+00> : vector<256xf32>
    %217 = vector.multi_reduction <add>, %214, %cst_94 [0] : vector<8x256xf32> to vector<256xf32>
    %218 = vector.shape_cast %217 : vector<256xf32> to vector<1x256xf32>
    %cst_95 = arith.constant 0.166666672 : f32
    %219 = vector.broadcast %cst_95 : f32 to vector<1x256xf32>
    %220 = arith.mulf %218, %219 : vector<1x256xf32>
    %221 = arith.mulf %214, %214 : vector<8x256xf32>
    %cst_96 = arith.constant dense<0.000000e+00> : vector<256xf32>
    %222 = vector.multi_reduction <add>, %221, %cst_96 [0] : vector<8x256xf32> to vector<256xf32>
    %223 = vector.shape_cast %222 : vector<256xf32> to vector<1x256xf32>
    %cst_97 = arith.constant 0.166666672 : f32
    %224 = vector.broadcast %cst_97 : f32 to vector<1x256xf32>
    %225 = arith.mulf %223, %224 : vector<1x256xf32>
    %cst_98 = arith.constant dense<0.000000e+00> : vector<1x256xf32>
    %226 = tpu.matmul %220, %85, %cst_98 {dimension_numbers = #tpu.dot_dimension_numbers<[1], [0], [0], [1], [0, 0, 1, 1], [], []>} : vector<1x256xf32>, vector<256x256xf32>, vector<1x256xf32> -> vector<1x256xf32>
    %cst_99 = arith.constant dense<0.000000e+00> : vector<1x256xf32>
    %227 = tpu.matmul %225, %85, %cst_99 {dimension_numbers = #tpu.dot_dimension_numbers<[1], [0], [0], [1], [0, 0, 1, 1], [], []>} : vector<1x256xf32>, vector<256x256xf32>, vector<1x256xf32> -> vector<1x256xf32>
    %228 = arith.mulf %226, %226 : vector<1x256xf32>
    %229 = arith.subf %227, %228 : vector<1x256xf32>
    %cst_100 = arith.constant 0.000000e+00 : f32
    %230 = vector.broadcast %cst_100 : f32 to vector<1x256xf32>
    %231 = arith.maximumf %229, %230 : vector<1x256xf32>
    %232 = vector.broadcast %226 : vector<1x256xf32> to vector<8x256xf32>
    %233 = arith.subf %214, %232 : vector<8x256xf32>
    %cst_101 = arith.constant 9.99999974E-6 : f32
    %234 = vector.broadcast %cst_101 : f32 to vector<1x256xf32>
    %235 = arith.addf %231, %234 : vector<1x256xf32>
    %236 = math.rsqrt %235 : vector<1x256xf32>
    %237 = vector.broadcast %236 : vector<1x256xf32> to vector<8x256xf32>
    %238 = arith.mulf %233, %237 : vector<8x256xf32>
    %239 = vector.broadcast %215 : vector<1x256xf32> to vector<8x256xf32>
    %240 = arith.mulf %238, %239 : vector<8x256xf32>
    %241 = vector.broadcast %216 : vector<1x256xf32> to vector<8x256xf32>
    %242 = arith.addf %240, %241 : vector<8x256xf32>
    %cst_102 = arith.constant 0.000000e+00 : f32
    %243 = vector.broadcast %cst_102 : f32 to vector<8x256xf32>
    %244 = arith.maximumf %242, %243 : vector<8x256xf32>
    %cst_103 = arith.constant 0.000000e+00 : f32
    %245 = vector.shape_cast %2 : vector<8x1xi1> to vector<8x1xi1>
    %246 = vector.broadcast %245 : vector<8x1xi1> to vector<8x256xi1>
    %247 = vector.broadcast %cst_103 : f32 to vector<8x256xf32>
    %248 = arith.select %246, %244, %247 : vector<8x256xi1>, vector<8x256xf32>
    %c384 = arith.constant 384 : index
    %c0_104 = arith.constant 0 : index
    %249 = vector.load %arg6[%c384, %c0_104] : memref<648x128xf32, #tpu.memory_space<vmem>>, vector<256x128xf32>
    %cst_105 = arith.constant dense<0.000000e+00> : vector<8x128xf32>
    %250 = tpu.matmul %248, %249, %cst_105 {dimension_numbers = #tpu.dot_dimension_numbers<[1], [0], [0], [1], [0, 0, 1, 1], [], []>} : vector<8x256xf32>, vector<256x128xf32>, vector<8x128xf32> -> vector<8x128xf32>
    %c640 = arith.constant 640 : index
    %c0_106 = arith.constant 0 : index
    %251 = vector.load %arg6[%c640, %c0_106] : memref<648x128xf32, #tpu.memory_space<vmem>>, vector<8x128xf32>
    %252 = arith.addf %250, %251 : vector<8x128xf32>
    %c0_107 = arith.constant 0 : index
    %c0_108 = arith.constant 0 : index
    %253 = vector.load %arg9[%c0_107, %c0_108] : memref<8x128xf32, #tpu.memory_space<vmem>>, vector<8x128xf32>
    tpu.vector_store %arg9[%c0_107, %c0_108], %252 {strides = array<i32>} : memref<8x128xf32, #tpu.memory_space<vmem>>, vector<8x128xf32>,
    return
  }
}

</mosaic_0001>

<llo_original>
// kernel: cmtlnet_forward.1
$region0: #{cmtlnet_forward.1}
  #allocation0 [shape = 'u32[]', space=smem, size = 0x4, offset = 0x4, fixed_abs, tag = 'smem constant byte address 0x4 - core index']
  #allocation1 [shape = 'u32[72,128]{1,0:T(1,128)}', space=vmem, size = 0x9000, scoped, tag = 'internal scratch']
  %s0 = inlined_call_operand.vmem [shape: f32[8,1536], index: 0, kind: input, shape index: {}]
  %s1 = inlined_call_operand.vmem [shape: f32[8,384], index: 1, kind: input, shape index: {}]
  %s2 = inlined_call_operand.vmem [shape: f32[1536,192], index: 2, kind: input, shape index: {}]
  %s3 = inlined_call_operand.vmem [shape: f32[704,64], index: 3, kind: input, shape index: {}]
  %s4 = inlined_call_operand.vmem [shape: f32[1240,512], index: 4, kind: input, shape index: {}]
  %s5 = inlined_call_operand.vmem [shape: f32[1368,256], index: 5, kind: input, shape index: {}]
  %s6 = inlined_call_operand.hbm [shape: f32[648,128], index: 6, kind: input, shape index: {}]
  %s7 = inlined_call_operand.vmem [shape: f32[16,512], index: 7, kind: input, shape index: {}]
  %s8 = inlined_call_operand.vmem [shape: f32[8,128], index: 8, kind: output, shape index: {0}]
  %s9 = inlined_call_operand.vmem [shape: f32[8,128], index: 9, kind: output, shape index: {1}]
  %10 = xla_tuple %s8, %s9
  %s11 = sld [smem:[#allocation0]]
  $region54: #{cmtlnet_forward.1} parent=0
    _
  %s13 = ssub.s32 1, %s11
  %s14 = scalar_select 0, %s13, %s11
  $region1: #{cmtlnet_forward.1} parent=0
    #allocation2 [shape = 'u8[331776]{0}', space=vmem, size = 0x51000, scoped, tag = 'input window, operand 6, single buffered']
    #allocation3 [shape = 's32[1]{0}', space=sflag, size = 0x4, scoped, tag = 'scoped memory for cmtlnet_forward.1']
    %15 = vsyncpa [#allocation3], 0
    // Predicated region
    $region2: #{cmtlnet_forward.1} parent=1 // pred_check
      _
    $region3: #{cmtlnet_forward.1} parent=1 // pred_check_branch
      %17 = sbr.rel (0) target = $region5
    $region4: #{cmtlnet_forward.1} parent=1 // pred_region
      _
    $region5: #{cmtlnet_forward.1} parent=1 // pred_fallthru
      _
    // Predicated region
    $region6: #{cmtlnet_forward.1} parent=1 // pred_check
      _
    $region7: #{cmtlnet_forward.1} parent=1 // pred_check_branch
      %19 = sbr.rel (0) target = $region9
    $region8: #{cmtlnet_forward.1} parent=1 // pred_region
      _
    $region9: #{cmtlnet_forward.1} parent=1 // pred_fallthru
      _
    // Predicated region
    $region10: #{cmtlnet_forward.1} parent=1 // pred_check
      _
    $region11: #{cmtlnet_forward.1} parent=1 // pred_check_branch
      %21 = sbr.rel (0) target = $region13
    $region12: #{cmtlnet_forward.1} parent=1 // pred_region
      _
    $region13: #{cmtlnet_forward.1} parent=1 // pred_fallthru
      _
    // Predicated region
    $region14: #{cmtlnet_forward.1} parent=1 // pred_check
      _
    $region15: #{cmtlnet_forward.1} parent=1 // pred_check_branch
      %23 = sbr.rel (0) target = $region17
    $region16: #{cmtlnet_forward.1} parent=1 // pred_region
      _
    $region17: #{cmtlnet_forward.1} parent=1 // pred_fallthru
      _
    // Predicated region
    $region18: #{cmtlnet_forward.1} parent=1 // pred_check
      _
    $region19: #{cmtlnet_forward.1} parent=1 // pred_check_branch
      %25 = sbr.rel (0) target = $region21
    $region20: #{cmtlnet_forward.1} parent=1 // pred_region
      _
    $region21: #{cmtlnet_forward.1} parent=1 // pred_fallthru
      _
    // Predicated region
    $region22: #{cmtlnet_forward.1} parent=1 // pred_check
      _
    $region23: #{cmtlnet_forward.1} parent=1 // pred_check_branch
      %27 = sbr.rel (0) target = $region25
    $region24: #{cmtlnet_forward.1} parent=1 // pred_region
      _
    $region25: #{cmtlnet_forward.1} parent=1 // pred_fallthru
      _
    // Predicated region
    $region26: #{cmtlnet_forward.1} parent=1 // pred_check
      _
    $region27: #{cmtlnet_forward.1} parent=1 // pred_check_branch
      %29 = sbr.rel (0) target = $region29
    $region28: #{cmtlnet_forward.1} parent=1 // pred_region
      %31 = vsyncadd [#allocation3], 0
      %s32 = sshll.u32 %s6, 4
      %s33 = int_to_ptr.hbm [resolvable:$true] %s32
      %s34 = sshll.u32 [#allocation2], 4
      %s35 = int_to_ptr.vmem [resolvable:$true] %s34
      %40 = dma.hbm_to_vmem [thread:$0]  %s33, 10368, %s35, [#allocation3], 128, 128, 8
    $region29: #{cmtlnet_forward.1} parent=1 // pred_fallthru
      _
    // Predicated region
    $region30: #{cmtlnet_forward.1} parent=1 // pred_check
      _
    $region31: #{cmtlnet_forward.1} parent=1 // pred_check_branch
      %42 = sbr.rel (0) target = $region33
    $region32: #{cmtlnet_forward.1} parent=1 // pred_region
      _
    $region33: #{cmtlnet_forward.1} parent=1 // pred_fallthru
      _
    // Predicated region
    $region34: #{cmtlnet_forward.1} parent=1 // pred_check
      _
    $region35: #{cmtlnet_forward.1} parent=1 // pred_check_branch
      %44 = sbr.rel (0) target = $region37
    $region36: #{cmtlnet_forward.1} parent=1 // pred_region
      %46 = dma.done [#allocation3], 10368
    $region37: #{cmtlnet_forward.1} parent=1 // pred_fallthru
      _
    %v47 = vlaneseq
    %v48 = vshrl.u32 %v47, 7
    %vm49 = vcmp.lt.s32.totalorder %v48, 6
    %v50 = vld [vmem:[%s7] sm:$0xff]
    %v51 = vld [vmem:[%s7 + $0x8] sm:$0xff]
    %v52 = vld [vmem:[%s7 + $0x10] sm:$0xff]
    %v53 = vld [vmem:[%s7 + $0x18] sm:$0xff]
    %v54 = vld [vmem:[%s7 + $0x20] sm:$0xff]
    %v55 = vld [vmem:[%s7 + $0x28] sm:$0xff]
    %v56 = vld [vmem:[%s0] sm:$0xff]
    %v57 = vld [vmem:[%s0 + $0x8] sm:$0xff]
    %v58 = vld [vmem:[%s0 + $0x10] sm:$0xff]
    %v59 = vld [vmem:[%s0 + $0x18] sm:$0xff]
    %v60 = vld [vmem:[%s0 + $0x20] sm:$0xff]
    %v61 = vld [vmem:[%s0 + $0x28] sm:$0xff]
    %v62 = vld [vmem:[%s0 + $0x30] sm:$0xff]
    %v63 = vld [vmem:[%s0 + $0x38] sm:$0xff]
    %v64 = vld [vmem:[%s0 + $0x40] sm:$0xff]
    %v65 = vld [vmem:[%s0 + $0x48] sm:$0xff]
    %v66 = vld [vmem:[%s0 + $0x50] sm:$0xff]
    %v67 = vld [vmem:[%s0 + $0x58] sm:$0xff]
    %v68 = vld [vmem:[%s2] sm:$0xff]
    %v69 = vld [vmem:[%s2 + $0x8] sm:$0xff]
    %v70 = vld [vmem:[%s2 + $0x10] sm:$0xff]
    %v71 = vld [vmem:[%s2 + $0x18] sm:$0xff]
    %v72 = vld [vmem:[%s2 + $0x20] sm:$0xff]
    %v73 = vld [vmem:[%s2 + $0x28] sm:$0xff]
    %v74 = vld [vmem:[%s2 + $0x30] sm:$0xff]
    %v75 = vld [vmem:[%s2 + $0x38] sm:$0xff]
    %v76 = vld [vmem:[%s2 + $0x40] sm:$0xff]
    %v77 = vld [vmem:[%s2 + $0x48] sm:$0xff]
    %v78 = vld [vmem:[%s2 + $0x50] sm:$0xff]
    %v79 = vld [vmem:[%s2 + $0x58] sm:$0xff]
    %v80 = vld [vmem:[%s2 + $0x60] sm:$0xff]
    %v81 = vld [vmem:[%s2 + $0x68] sm:$0xff]
    %v82 = vld [vmem:[%s2 + $0x70] sm:$0xff]
    %v83 = vld [vmem:[%s2 + $0x78] sm:$0xff]
    %v84 = vld [vmem:[%s2 + $0x80] sm:$0xff]
    %v85 = vld [vmem:[%s2 + $0x88] sm:$0xff]
    %v86 = vld [vmem:[%s2 + $0x90] sm:$0xff]
    %v87 = vld [vmem:[%s2 + $0x98] sm:$0xff]
    %v88 = vld [vmem:[%s2 + $0xa0] sm:$0xff]
    %v89 = vld [vmem:[%s2 + $0xa8] sm:$0xff]
    %v90 = vld [vmem:[%s2 + $0xb0] sm:$0xff]
    %v91 = vld [vmem:[%s2 + $0xb8] sm:$0xff]
    %v92 = vld [vmem:[%s2 + $0xc0] sm:$0xff]
    %v93 = vld [vmem:[%s2 + $0xc8] sm:$0xff]
    %v94 = vld [vmem:[%s2 + $0xd0] sm:$0xff]
    %v95 = vld [vmem:[%s2 + $0xd8] sm:$0xff]
    %v96 = vld [vmem:[%s2 + $0xe0] sm:$0xff]
    %v97 = vld [vmem:[%s2 + $0xe8] sm:$0xff]
    %v98 = vld [vmem:[%s2 + $0xf0] sm:$0xff]
    %v99 = vld [vmem:[%s2 + $0xf8] sm:$0xff]
    %v100 = vld [vmem:[%s2 + $0x100] sm:$0xff]
    %v101 = vld [vmem:[%s2 + $0x108] sm:$0xff]
    %v102 = vld [vmem:[%s2 + $0x110] sm:$0xff]
    %v103 = vld [vmem:[%s2 + $0x118] sm:$0xff]
    %v104 = vld [vmem:[%s2 + $0x120] sm:$0xff]
    %v105 = vld [vmem:[%s2 + $0x128] sm:$0xff]
    %v106 = vld [vmem:[%s2 + $0x130] sm:$0xff]
    %v107 = vld [vmem:[%s2 + $0x138] sm:$0xff]
    %v108 = vld [vmem:[%s2 + $0x140] sm:$0xff]
    %v109 = vld [vmem:[%s2 + $0x148] sm:$0xff]
    %v110 = vld [vmem:[%s2 + $0x150] sm:$0xff]
    %v111 = vld [vmem:[%s2 + $0x158] sm:$0xff]
    %v112 = vld [vmem:[%s2 + $0x160] sm:$0xff]
    %v113 = vld [vmem:[%s2 + $0x168] sm:$0xff]
    %v114 = vld [vmem:[%s2 + $0x170] sm:$0xff]
    %v115 = vld [vmem:[%s2 + $0x178] sm:$0xff]
    %v116 = vld [vmem:[%s2 + $0x180] sm:$0xff]
    %v117 = vld [vmem:[%s2 + $0x188] sm:$0xff]
    %v118 = vld [vmem:[%s2 + $0x190] sm:$0xff]
    %v119 = vld [vmem:[%s2 + $0x198] sm:$0xff]
    %v120 = vld [vmem:[%s2 + $0x1a0] sm:$0xff]
    %v121 = vld [vmem:[%s2 + $0x1a8] sm:$0xff]
    %v122 = vld [vmem:[%s2 + $0x1b0] sm:$0xff]
    %v123 = vld [vmem:[%s2 + $0x1b8] sm:$0xff]
    %v124 = vld [vmem:[%s2 + $0x1c0] sm:$0xff]
    %v125 = vld [vmem:[%s2 + $0x1c8] sm:$0xff]
    %v126 = vld [vmem:[%s2 + $0x1d0] sm:$0xff]
    %v127 = vld [vmem:[%s2 + $0x1d8] sm:$0xff]
    %v128 = vld [vmem:[%s2 + $0x1e0] sm:$0xff]
    %v129 = vld [vmem:[%s2 + $0x1e8] sm:$0xff]
    %v130 = vld [vmem:[%s2 + $0x1f0] sm:$0xff]
    %v131 = vld [vmem:[%s2 + $0x1f8] sm:$0xff]
    %v132 = vld [vmem:[%s2 + $0x200] sm:$0xff]
    %v133 = vld [vmem:[%s2 + $0x208] sm:$0xff]
    %v134 = vld [vmem:[%s2 + $0x210] sm:$0xff]
    %v135 = vld [vmem:[%s2 + $0x218] sm:$0xff]
    %v136 = vld [vmem:[%s2 + $0x220] sm:$0xff]
    %v137 = vld [vmem:[%s2 + $0x228] sm:$0xff]
    %v138 = vld [vmem:[%s2 + $0x230] sm:$0xff]
    %v139 = vld [vmem:[%s2 + $0x238] sm:$0xff]
    %v140 = vld [vmem:[%s2 + $0x240] sm:$0xff]
    %v141 = vld [vmem:[%s2 + $0x248] sm:$0xff]
    %v142 = vld [vmem:[%s2 + $0x250] sm:$0xff]
    %v143 = vld [vmem:[%s2 + $0x258] sm:$0xff]
    %v144 = vld [vmem:[%s2 + $0x260] sm:$0xff]
    %v145 = vld [vmem:[%s2 + $0x268] sm:$0xff]
    %v146 = vld [vmem:[%s2 + $0x270] sm:$0xff]
    %v147 = vld [vmem:[%s2 + $0x278] sm:$0xff]
    %v148 = vld [vmem:[%s2 + $0x280] sm:$0xff]
    %v149 = vld [vmem:[%s2 + $0x288] sm:$0xff]
    %v150 = vld [vmem:[%s2 + $0x290] sm:$0xff]
    %v151 = vld [vmem:[%s2 + $0x298] sm:$0xff]
    %v152 = vld [vmem:[%s2 + $0x2a0] sm:$0xff]
    %v153 = vld [vmem:[%s2 + $0x2a8] sm:$0xff]
    %v154 = vld [vmem:[%s2 + $0x2b0] sm:$0xff]
    %v155 = vld [vmem:[%s2 + $0x2b8] sm:$0xff]
    %v156 = vld [vmem:[%s2 + $0x2c0] sm:$0xff]
    %v157 = vld [vmem:[%s2 + $0x2c8] sm:$0xff]
    %v158 = vld [vmem:[%s2 + $0x2d0] sm:$0xff]
    %v159 = vld [vmem:[%s2 + $0x2d8] sm:$0xff]
    %v160 = vld [vmem:[%s2 + $0x2e0] sm:$0xff]
    %v161 = vld [vmem:[%s2 + $0x2e8] sm:$0xff]
    %v162 = vld [vmem:[%s2 + $0x2f0] sm:$0xff]
    %v163 = vld [vmem:[%s2 + $0x2f8] sm:$0xff]
    %v164 = vld [vmem:[%s2 + $0x300] sm:$0xff]
    %v165 = vld [vmem:[%s2 + $0x308] sm:$0xff]
    %v166 = vld [vmem:[%s2 + $0x310] sm:$0xff]
    %v167 = vld [vmem:[%s2 + $0x318] sm:$0xff]
    %v168 = vld [vmem:[%s2 + $0x320] sm:$0xff]
    %v169 = vld [vmem:[%s2 + $0x328] sm:$0xff]
    %v170 = vld [vmem:[%s2 + $0x330] sm:$0xff]
    %v171 = vld [vmem:[%s2 + $0x338] sm:$0xff]
    %v172 = vld [vmem:[%s2 + $0x340] sm:$0xff]
    %v173 = vld [vmem:[%s2 + $0x348] sm:$0xff]
    %v174 = vld [vmem:[%s2 + $0x350] sm:$0xff]
    %v175 = vld [vmem:[%s2 + $0x358] sm:$0xff]
    %v176 = vld [vmem:[%s2 + $0x360] sm:$0xff]
    %v177 = vld [vmem:[%s2 + $0x368] sm:$0xff]
    %v178 = vld [vmem:[%s2 + $0x370] sm:$0xff]
    %v179 = vld [vmem:[%s2 + $0x378] sm:$0xff]
    %v180 = vld [vmem:[%s2 + $0x380] sm:$0xff]
    %v181 = vld [vmem:[%s2 + $0x388] sm:$0xff]
    %v182 = vld [vmem:[%s2 + $0x390] sm:$0xff]
    %v183 = vld [vmem:[%s2 + $0x398] sm:$0xff]
    %v184 = vld [vmem:[%s2 + $0x3a0] sm:$0xff]
    %v185 = vld [vmem:[%s2 + $0x3a8] sm:$0xff]
    %v186 = vld [vmem:[%s2 + $0x3b0] sm:$0xff]
    %v187 = vld [vmem:[%s2 + $0x3b8] sm:$0xff]
    %v188 = vld [vmem:[%s2 + $0x3c0] sm:$0xff]
    %v189 = vld [vmem:[%s2 + $0x3c8] sm:$0xff]
    %v190 = vld [vmem:[%s2 + $0x3d0] sm:$0xff]
    %v191 = vld [vmem:[%s2 + $0x3d8] sm:$0xff]
    %v192 = vld [vmem:[%s2 + $0x3e0] sm:$0xff]
    %v193 = vld [vmem:[%s2 + $0x3e8] sm:$0xff]
    %v194 = vld [vmem:[%s2 + $0x3f0] sm:$0xff]
    %v195 = vld [vmem:[%s2 + $0x3f8] sm:$0xff]
    %v196 = vld [vmem:[%s2 + $0x400] sm:$0xff]
    %v197 = vld [vmem:[%s2 + $0x408] sm:$0xff]
    %v198 = vld [vmem:[%s2 + $0x410] sm:$0xff]
    %v199 = vld [vmem:[%s2 + $0x418] sm:$0xff]
    %v200 = vld [vmem:[%s2 + $0x420] sm:$0xff]
    %v201 = vld [vmem:[%s2 + $0x428] sm:$0xff]
    %v202 = vld [vmem:[%s2 + $0x430] sm:$0xff]
    %v203 = vld [vmem:[%s2 + $0x438] sm:$0xff]
    %v204 = vld [vmem:[%s2 + $0x440] sm:$0xff]
    %v205 = vld [vmem:[%s2 + $0x448] sm:$0xff]
    %v206 = vld [vmem:[%s2 + $0x450] sm:$0xff]
    %v207 = vld [vmem:[%s2 + $0x458] sm:$0xff]
    %v208 = vld [vmem:[%s2 + $0x460] sm:$0xff]
    %v209 = vld [vmem:[%s2 + $0x468] sm:$0xff]
    %v210 = vld [vmem:[%s2 + $0x470] sm:$0xff]
    %v211 = vld [vmem:[%s2 + $0x478] sm:$0xff]
    %v212 = vld [vmem:[%s2 + $0x480] sm:$0xff]
    %v213 = vld [vmem:[%s2 + $0x488] sm:$0xff]
    %v214 = vld [vmem:[%s2 + $0x490] sm:$0xff]
    %v215 = vld [vmem:[%s2 + $0x498] sm:$0xff]
    %v216 = vld [vmem:[%s2 + $0x4a0] sm:$0xff]
    %v217 = vld [vmem:[%s2 + $0x4a8] sm:$0xff]
    %v218 = vld [vmem:[%s2 + $0x4b0] sm:$0xff]
    %v219 = vld [vmem:[%s2 + $0x4b8] sm:$0xff]
    %v220 = vld [vmem:[%s2 + $0x4c0] sm:$0xff]
    %v221 = vld [vmem:[%s2 + $0x4c8] sm:$0xff]
    %v222 = vld [vmem:[%s2 + $0x4d0] sm:$0xff]
    %v223 = vld [vmem:[%s2 + $0x4d8] sm:$0xff]
    %v224 = vld [vmem:[%s2 + $0x4e0] sm:$0xff]
    %v225 = vld [vmem:[%s2 + $0x4e8] sm:$0xff]
    %v226 = vld [vmem:[%s2 + $0x4f0] sm:$0xff]
    %v227 = vld [vmem:[%s2 + $0x4f8] sm:$0xff]
    %v228 = vld [vmem:[%s2 + $0x500] sm:$0xff]
    %v229 = vld [vmem:[%s2 + $0x508] sm:$0xff]
    %v230 = vld [vmem:[%s2 + $0x510] sm:$0xff]
    %v231 = vld [vmem:[%s2 + $0x518] sm:$0xff]
    %v232 = vld [vmem:[%s2 + $0x520] sm:$0xff]
    %v233 = vld [vmem:[%s2 + $0x528] sm:$0xff]
    %v234 = vld [vmem:[%s2 + $0x530] sm:$0xff]
    %v235 = vld [vmem:[%s2 + $0x538] sm:$0xff]
    %v236 = vld [vmem:[%s2 + $0x540] sm:$0xff]
    %v237 = vld [vmem:[%s2 + $0x548] sm:$0xff]
    %v238 = vld [vmem:[%s2 + $0x550] sm:$0xff]
    %v239 = vld [vmem:[%s2 + $0x558] sm:$0xff]
    %v240 = vld [vmem:[%s2 + $0x560] sm:$0xff]
    %v241 = vld [vmem:[%s2 + $0x568] sm:$0xff]
    %v242 = vld [vmem:[%s2 + $0x570] sm:$0xff]
    %v243 = vld [vmem:[%s2 + $0x578] sm:$0xff]
    %v244 = vld [vmem:[%s2 + $0x580] sm:$0xff]
    %v245 = vld [vmem:[%s2 + $0x588] sm:$0xff]
    %v246 = vld [vmem:[%s2 + $0x590] sm:$0xff]
    %v247 = vld [vmem:[%s2 + $0x598] sm:$0xff]
    %v248 = vld [vmem:[%s2 + $0x5a0] sm:$0xff]
    %v249 = vld [vmem:[%s2 + $0x5a8] sm:$0xff]
    %v250 = vld [vmem:[%s2 + $0x5b0] sm:$0xff]
    %v251 = vld [vmem:[%s2 + $0x5b8] sm:$0xff]
    %v252 = vld [vmem:[%s2 + $0x5c0] sm:$0xff]
    %v253 = vld [vmem:[%s2 + $0x5c8] sm:$0xff]
    %v254 = vld [vmem:[%s2 + $0x5d0] sm:$0xff]
    %v255 = vld [vmem:[%s2 + $0x5d8] sm:$0xff]
    %v256 = vld [vmem:[%s2 + $0x5e0] sm:$0xff]
    %v257 = vld [vmem:[%s2 + $0x5e8] sm:$0xff]
    %v258 = vld [vmem:[%s2 + $0x5f0] sm:$0xff]
    %v259 = vld [vmem:[%s2 + $0x5f8] sm:$0xff]
    %v260 = vld [vmem:[%s2 + $0x600] sm:$0xff]
    %v261 = vld [vmem:[%s2 + $0x608] sm:$0xff]
    %v262 = vld [vmem:[%s2 + $0x610] sm:$0xff]
    %v263 = vld [vmem:[%s2 + $0x618] sm:$0xff]
    %v264 = vld [vmem:[%s2 + $0x620] sm:$0xff]
    %v265 = vld [vmem:[%s2 + $0x628] sm:$0xff]
    %v266 = vld [vmem:[%s2 + $0x630] sm:$0xff]
    %v267 = vld [vmem:[%s2 + $0x638] sm:$0xff]
    %v268 = vld [vmem:[%s2 + $0x640] sm:$0xff]
    %v269 = vld [vmem:[%s2 + $0x648] sm:$0xff]
    %v270 = vld [vmem:[%s2 + $0x650] sm:$0xff]
    %v271 = vld [vmem:[%s2 + $0x658] sm:$0xff]
    %v272 = vld [vmem:[%s2 + $0x660] sm:$0xff]
    %v273 = vld [vmem:[%s2 + $0x668] sm:$0xff]
    %v274 = vld [vmem:[%s2 + $0x670] sm:$0xff]
    %v275 = vld [vmem:[%s2 + $0x678] sm:$0xff]
    %v276 = vld [vmem:[%s2 + $0x680] sm:$0xff]
    %v277 = vld [vmem:[%s2 + $0x688] sm:$0xff]
    %v278 = vld [vmem:[%s2 + $0x690] sm:$0xff]
    %v279 = vld [vmem:[%s2 + $0x698] sm:$0xff]
    %v280 = vld [vmem:[%s2 + $0x6a0] sm:$0xff]
    %v281 = vld [vmem:[%s2 + $0x6a8] sm:$0xff]
    %v282 = vld [vmem:[%s2 + $0x6b0] sm:$0xff]
    %v283 = vld [vmem:[%s2 + $0x6b8] sm:$0xff]
    %v284 = vld [vmem:[%s2 + $0x6c0] sm:$0xff]
    %v285 = vld [vmem:[%s2 + $0x6c8] sm:$0xff]
    %v286 = vld [vmem:[%s2 + $0x6d0] sm:$0xff]
    %v287 = vld [vmem:[%s2 + $0x6d8] sm:$0xff]
    %v288 = vld [vmem:[%s2 + $0x6e0] sm:$0xff]
    %v289 = vld [vmem:[%s2 + $0x6e8] sm:$0xff]
    %v290 = vld [vmem:[%s2 + $0x6f0] sm:$0xff]
    %v291 = vld [vmem:[%s2 + $0x6f8] sm:$0xff]
    %v292 = vld [vmem:[%s2 + $0x700] sm:$0xff]
    %v293 = vld [vmem:[%s2 + $0x708] sm:$0xff]
    %v294 = vld [vmem:[%s2 + $0x710] sm:$0xff]
    %v295 = vld [vmem:[%s2 + $0x718] sm:$0xff]
    %v296 = vld [vmem:[%s2 + $0x720] sm:$0xff]
    %v297 = vld [vmem:[%s2 + $0x728] sm:$0xff]
    %v298 = vld [vmem:[%s2 + $0x730] sm:$0xff]
    %v299 = vld [vmem:[%s2 + $0x738] sm:$0xff]
    %v300 = vld [vmem:[%s2 + $0x740] sm:$0xff]
    %v301 = vld [vmem:[%s2 + $0x748] sm:$0xff]
    %v302 = vld [vmem:[%s2 + $0x750] sm:$0xff]
    %v303 = vld [vmem:[%s2 + $0x758] sm:$0xff]
    %v304 = vld [vmem:[%s2 + $0x760] sm:$0xff]
    %v305 = vld [vmem:[%s2 + $0x768] sm:$0xff]
    %v306 = vld [vmem:[%s2 + $0x770] sm:$0xff]
    %v307 = vld [vmem:[%s2 + $0x778] sm:$0xff]
    %v308 = vld [vmem:[%s2 + $0x780] sm:$0xff]
    %v309 = vld [vmem:[%s2 + $0x788] sm:$0xff]
    %v310 = vld [vmem:[%s2 + $0x790] sm:$0xff]
    %v311 = vld [vmem:[%s2 + $0x798] sm:$0xff]
    %v312 = vld [vmem:[%s2 + $0x7a0] sm:$0xff]
    %v313 = vld [vmem:[%s2 + $0x7a8] sm:$0xff]
    %v314 = vld [vmem:[%s2 + $0x7b0] sm:$0xff]
    %v315 = vld [vmem:[%s2 + $0x7b8] sm:$0xff]
    %v316 = vld [vmem:[%s2 + $0x7c0] sm:$0xff]
    %v317 = vld [vmem:[%s2 + $0x7c8] sm:$0xff]
    %v318 = vld [vmem:[%s2 + $0x7d0] sm:$0xff]
    %v319 = vld [vmem:[%s2 + $0x7d8] sm:$0xff]
    %v320 = vld [vmem:[%s2 + $0x7e0] sm:$0xff]
    %v321 = vld [vmem:[%s2 + $0x7e8] sm:$0xff]
    %v322 = vld [vmem:[%s2 + $0x7f0] sm:$0xff]
    %v323 = vld [vmem:[%s2 + $0x7f8] sm:$0xff]
    %v324 = vld [vmem:[%s2 + $0x800] sm:$0xff]
    %v325 = vld [vmem:[%s2 + $0x808] sm:$0xff]
    %v326 = vld [vmem:[%s2 + $0x810] sm:$0xff]
    %v327 = vld [vmem:[%s2 + $0x818] sm:$0xff]
    %v328 = vld [vmem:[%s2 + $0x820] sm:$0xff]
    %v329 = vld [vmem:[%s2 + $0x828] sm:$0xff]
    %v330 = vld [vmem:[%s2 + $0x830] sm:$0xff]
    %v331 = vld [vmem:[%s2 + $0x838] sm:$0xff]
    %v332 = vld [vmem:[%s2 + $0x840] sm:$0xff]
    %v333 = vld [vmem:[%s2 + $0x848] sm:$0xff]
    %v334 = vld [vmem:[%s2 + $0x850] sm:$0xff]
    %v335 = vld [vmem:[%s2 + $0x858] sm:$0xff]
    %v336 = vld [vmem:[%s2 + $0x860] sm:$0xff]
    %v337 = vld [vmem:[%s2 + $0x868] sm:$0xff]
    %v338 = vld [vmem:[%s2 + $0x870] sm:$0xff]
    %v339 = vld [vmem:[%s2 + $0x878] sm:$0xff]
    %v340 = vld [vmem:[%s2 + $0x880] sm:$0xff]
    %v341 = vld [vmem:[%s2 + $0x888] sm:$0xff]
    %v342 = vld [vmem:[%s2 + $0x890] sm:$0xff]
    %v343 = vld [vmem:[%s2 + $0x898] sm:$0xff]
    %v344 = vld [vmem:[%s2 + $0x8a0] sm:$0xff]
    %v345 = vld [vmem:[%s2 + $0x8a8] sm:$0xff]
    %v346 = vld [vmem:[%s2 + $0x8b0] sm:$0xff]
    %v347 = vld [vmem:[%s2 + $0x8b8] sm:$0xff]
    %v348 = vld [vmem:[%s2 + $0x8c0] sm:$0xff]
    %v349 = vld [vmem:[%s2 + $0x8c8] sm:$0xff]
    %v350 = vld [vmem:[%s2 + $0x8d0] sm:$0xff]
    %v351 = vld [vmem:[%s2 + $0x8d8] sm:$0xff]
    %v352 = vld [vmem:[%s2 + $0x8e0] sm:$0xff]
    %v353 = vld [vmem:[%s2 + $0x8e8] sm:$0xff]
    %v354 = vld [vmem:[%s2 + $0x8f0] sm:$0xff]
    %v355 = vld [vmem:[%s2 + $0x8f8] sm:$0xff]
    %v356 = vld [vmem:[%s2 + $0x900] sm:$0xff]
    %v357 = vld [vmem:[%s2 + $0x908] sm:$0xff]
    %v358 = vld [vmem:[%s2 + $0x910] sm:$0xff]
    %v359 = vld [vmem:[%s2 + $0x918] sm:$0xff]
    %v360 = vld [vmem:[%s2 + $0x920] sm:$0xff]
    %v361 = vld [vmem:[%s2 + $0x928] sm:$0xff]
    %v362 = vld [vmem:[%s2 + $0x930] sm:$0xff]
    %v363 = vld [vmem:[%s2 + $0x938] sm:$0xff]
    %v364 = vld [vmem:[%s2 + $0x940] sm:$0xff]
    %v365 = vld [vmem:[%s2 + $0x948] sm:$0xff]
    %v366 = vld [vmem:[%s2 + $0x950] sm:$0xff]
    %v367 = vld [vmem:[%s2 + $0x958] sm:$0xff]
    %v368 = vld [vmem:[%s2 + $0x960] sm:$0xff]
    %v369 = vld [vmem:[%s2 + $0x968] sm:$0xff]
    %v370 = vld [vmem:[%s2 + $0x970] sm:$0xff]
    %v371 = vld [vmem:[%s2 + $0x978] sm:$0xff]
    %v372 = vld [vmem:[%s2 + $0x980] sm:$0xff]
    %v373 = vld [vmem:[%s2 + $0x988] sm:$0xff]
    %v374 = vld [vmem:[%s2 + $0x990] sm:$0xff]
    %v375 = vld [vmem:[%s2 + $0x998] sm:$0xff]
    %v376 = vld [vmem:[%s2 + $0x9a0] sm:$0xff]
    %v377 = vld [vmem:[%s2 + $0x9a8] sm:$0xff]
    %v378 = vld [vmem:[%s2 + $0x9b0] sm:$0xff]
    %v379 = vld [vmem:[%s2 + $0x9b8] sm:$0xff]
    %v380 = vld [vmem:[%s2 + $0x9c0] sm:$0xff]
    %v381 = vld [vmem:[%s2 + $0x9c8] sm:$0xff]
    %v382 = vld [vmem:[%s2 + $0x9d0] sm:$0xff]
    %v383 = vld [vmem:[%s2 + $0x9d8] sm:$0xff]
    %v384 = vld [vmem:[%s2 + $0x9e0] sm:$0xff]
    %v385 = vld [vmem:[%s2 + $0x9e8] sm:$0xff]
    %v386 = vld [vmem:[%s2 + $0x9f0] sm:$0xff]
    %v387 = vld [vmem:[%s2 + $0x9f8] sm:$0xff]
    %v388 = vld [vmem:[%s2 + $0xa00] sm:$0xff]
    %v389 = vld [vmem:[%s2 + $0xa08] sm:$0xff]
    %v390 = vld [vmem:[%s2 + $0xa10] sm:$0xff]
    %v391 = vld [vmem:[%s2 + $0xa18] sm:$0xff]
    %v392 = vld [vmem:[%s2 + $0xa20] sm:$0xff]
    %v393 = vld [vmem:[%s2 + $0xa28] sm:$0xff]
    %v394 = vld [vmem:[%s2 + $0xa30] sm:$0xff]
    %v395 = vld [vmem:[%s2 + $0xa38] sm:$0xff]
    %v396 = vld [vmem:[%s2 + $0xa40] sm:$0xff]
    %v397 = vld [vmem:[%s2 + $0xa48] sm:$0xff]
    %v398 = vld [vmem:[%s2 + $0xa50] sm:$0xff]
    %v399 = vld [vmem:[%s2 + $0xa58] sm:$0xff]
    %v400 = vld [vmem:[%s2 + $0xa60] sm:$0xff]
    %v401 = vld [vmem:[%s2 + $0xa68] sm:$0xff]
    %v402 = vld [vmem:[%s2 + $0xa70] sm:$0xff]
    %v403 = vld [vmem:[%s2 + $0xa78] sm:$0xff]
    %v404 = vld [vmem:[%s2 + $0xa80] sm:$0xff]
    %v405 = vld [vmem:[%s2 + $0xa88] sm:$0xff]
    %v406 = vld [vmem:[%s2 + $0xa90] sm:$0xff]
    %v407 = vld [vmem:[%s2 + $0xa98] sm:$0xff]
    %v408 = vld [vmem:[%s2 + $0xaa0] sm:$0xff]
    %v409 = vld [vmem:[%s2 + $0xaa8] sm:$0xff]
    %v410 = vld [vmem:[%s2 + $0xab0] sm:$0xff]
    %v411 = vld [vmem:[%s2 + $0xab8] sm:$0xff]
    %v412 = vld [vmem:[%s2 + $0xac0] sm:$0xff]
    %v413 = vld [vmem:[%s2 + $0xac8] sm:$0xff]
    %v414 = vld [vmem:[%s2 + $0xad0] sm:$0xff]
    %v415 = vld [vmem:[%s2 + $0xad8] sm:$0xff]
    %v416 = vld [vmem:[%s2 + $0xae0] sm:$0xff]
    %v417 = vld [vmem:[%s2 + $0xae8] sm:$0xff]
    %v418 = vld [vmem:[%s2 + $0xaf0] sm:$0xff]
    %v419 = vld [vmem:[%s2 + $0xaf8] sm:$0xff]
    %v420 = vld [vmem:[%s2 + $0xb00] sm:$0xff]
    %v421 = vld [vmem:[%s2 + $0xb08] sm:$0xff]
    %v422 = vld [vmem:[%s2 + $0xb10] sm:$0xff]
    %v423 = vld [vmem:[%s2 + $0xb18] sm:$0xff]
    %v424 = vld [vmem:[%s2 + $0xb20] sm:$0xff]
    %v425 = vld [vmem:[%s2 + $0xb28] sm:$0xff]
    %v426 = vld [vmem:[%s2 + $0xb30] sm:$0xff]
    %v427 = vld [vmem:[%s2 + $0xb38] sm:$0xff]
    %v428 = vld [vmem:[%s2 + $0xb40] sm:$0xff]
    %v429 = vld [vmem:[%s2 + $0xb48] sm:$0xff]
    %v430 = vld [vmem:[%s2 + $0xb50] sm:$0xff]
    %v431 = vld [vmem:[%s2 + $0xb58] sm:$0xff]
    %v432 = vld [vmem:[%s2 + $0xb60] sm:$0xff]
    %v433 = vld [vmem:[%s2 + $0xb68] sm:$0xff]
    %v434 = vld [vmem:[%s2 + $0xb70] sm:$0xff]
    %v435 = vld [vmem:[%s2 + $0xb78] sm:$0xff]
    %v436 = vld [vmem:[%s2 + $0xb80] sm:$0xff]
    %v437 = vld [vmem:[%s2 + $0xb88] sm:$0xff]
    %v438 = vld [vmem:[%s2 + $0xb90] sm:$0xff]
    %v439 = vld [vmem:[%s2 + $0xb98] sm:$0xff]
    %v440 = vld [vmem:[%s2 + $0xba0] sm:$0xff]
    %v441 = vld [vmem:[%s2 + $0xba8] sm:$0xff]
    %v442 = vld [vmem:[%s2 + $0xbb0] sm:$0xff]
    %v443 = vld [vmem:[%s2 + $0xbb8] sm:$0xff]
    %v444 = vld [vmem:[%s2 + $0xbc0] sm:$0xff]
    %v445 = vld [vmem:[%s2 + $0xbc8] sm:$0xff]
    %v446 = vld [vmem:[%s2 + $0xbd0] sm:$0xff]
    %v447 = vld [vmem:[%s2 + $0xbd8] sm:$0xff]
    %v448 = vld [vmem:[%s2 + $0xbe0] sm:$0xff]
    %v449 = vld [vmem:[%s2 + $0xbe8] sm:$0xff]
    %v450 = vld [vmem:[%s2 + $0xbf0] sm:$0xff]
    %v451 = vld [vmem:[%s2 + $0xbf8] sm:$0xff]
    %452 = vmatpush.msra.mxu0 %v98
    %453 = vmatpush.msra.mxu0 %v96
    %454 = vmatpush.msra.mxu0 %v94
    %455 = vmatpush.msra.mxu0 %v92
    %456 = vmatpush.msra.mxu0 %v90
    %457 = vmatpush.msra.mxu0 %v88
    %458 = vmatpush.msra.mxu0 %v86
    %459 = vmatpush.msra.mxu0 %v84
    %460 = vmatpush.msra.mxu0 %v82
    %461 = vmatpush.msra.mxu0 %v80
    %462 = vmatpush.msra.mxu0 %v78
    %463 = vmatpush.msra.mxu0 %v76
    %464 = vmatpush.msra.mxu0 %v74
    %465 = vmatpush.msra.mxu0 %v72
    %466 = vmatpush.msra.mxu0 %v70
    %467 = vmatpush.msra.mxu0 %v68
    %468 = vmatmul.f32.gmra.mxu0 %v56
    %v469 = vpop.f32.mrf.mxu0
    %v470 = vadd.f32 0.0, %v469
    %471 = vdwg.mxu0
    %472 = vmatpush.msra.mxu0 %v130
    %473 = vmatpush.msra.mxu0 %v128
    %474 = vmatpush.msra.mxu0 %v126
    %475 = vmatpush.msra.mxu0 %v124
    %476 = vmatpush.msra.mxu0 %v122
    %477 = vmatpush.msra.mxu0 %v120
    %478 = vmatpush.msra.mxu0 %v118
    %479 = vmatpush.msra.mxu0 %v116
    %480 = vmatpush.msra.mxu0 %v114
    %481 = vmatpush.msra.mxu0 %v112
    %482 = vmatpush.msra.mxu0 %v110
    %483 = vmatpush.msra.mxu0 %v108
    %484 = vmatpush.msra.mxu0 %v106
    %485 = vmatpush.msra.mxu0 %v104
    %486 = vmatpush.msra.mxu0 %v102
    %487 = vmatpush.msra.mxu0 %v100
    %488 = vmatmul.f32.gmra.mxu0 %v57
    %v489 = vpop.f32.mrf.mxu0
    %v490 = vadd.f32 %v470, %v489
    %491 = vdwg.mxu0
    %492 = vmatpush.msra.mxu0 %v162
    %493 = vmatpush.msra.mxu0 %v160
    %494 = vmatpush.msra.mxu0 %v158
    %495 = vmatpush.msra.mxu0 %v156
    %496 = vmatpush.msra.mxu0 %v154
    %497 = vmatpush.msra.mxu0 %v152
    %498 = vmatpush.msra.mxu0 %v150
    %499 = vmatpush.msra.mxu0 %v148
    %500 = vmatpush.msra.mxu0 %v146
    %501 = vmatpush.msra.mxu0 %v144
    %502 = vmatpush.msra.mxu0 %v142
    %503 = vmatpush.msra.mxu0 %v140
    %504 = vmatpush.msra.mxu0 %v138
    %505 = vmatpush.msra.mxu0 %v136
    %506 = vmatpush.msra.mxu0 %v134
    %507 = vmatpush.msra.mxu0 %v132
    %508 = vmatmul.f32.gmra.mxu0 %v58
    %v509 = vpop.f32.mrf.mxu0
    %v510 = vadd.f32 %v490, %v509
    %511 = vdwg.mxu0
    %512 = vmatpush.msra.mxu0 %v194
    %513 = vmatpush.msra.mxu0 %v192
    %514 = vmatpush.msra.mxu0 %v190
    %515 = vmatpush.msra.mxu0 %v188
    %516 = vmatpush.msra.mxu0 %v186
    %517 = vmatpush.msra.mxu0 %v184
    %518 = vmatpush.msra.mxu0 %v182
    %519 = vmatpush.msra.mxu0 %v180
    %520 = vmatpush.msra.mxu0 %v178
    %521 = vmatpush.msra.mxu0 %v176
    %522 = vmatpush.msra.mxu0 %v174
    %523 = vmatpush.msra.mxu0 %v172
    %524 = vmatpush.msra.mxu0 %v170
    %525 = vmatpush.msra.mxu0 %v168
    %526 = vmatpush.msra.mxu0 %v166
    %527 = vmatpush.msra.mxu0 %v164
    %528 = vmatmul.f32.gmra.mxu0 %v59
    %v529 = vpop.f32.mrf.mxu0
    %v530 = vadd.f32 %v510, %v529
    %531 = vdwg.mxu0
    %532 = vmatpush.msra.mxu0 %v226
    %533 = vmatpush.msra.mxu0 %v224
    %534 = vmatpush.msra.mxu0 %v222
    %535 = vmatpush.msra.mxu0 %v220
    %536 = vmatpush.msra.mxu0 %v218
    %537 = vmatpush.msra.mxu0 %v216
    %538 = vmatpush.msra.mxu0 %v214
    %539 = vmatpush.msra.mxu0 %v212
    %540 = vmatpush.msra.mxu0 %v210
    %541 = vmatpush.msra.mxu0 %v208
    %542 = vmatpush.msra.mxu0 %v206
    %543 = vmatpush.msra.mxu0 %v204
    %544 = vmatpush.msra.mxu0 %v202
    %545 = vmatpush.msra.mxu0 %v200
    %546 = vmatpush.msra.mxu0 %v198
    %547 = vmatpush.msra.mxu0 %v196
    %548 = vmatmul.f32.gmra.mxu0 %v60
    %v549 = vpop.f32.mrf.mxu0
    %v550 = vadd.f32 %v530, %v549
    %551 = vdwg.mxu0
    %552 = vmatpush.msra.mxu0 %v258
    %553 = vmatpush.msra.mxu0 %v256
    %554 = vmatpush.msra.mxu0 %v254
    %555 = vmatpush.msra.mxu0 %v252
    %556 = vmatpush.msra.mxu0 %v250
    %557 = vmatpush.msra.mxu0 %v248
    %558 = vmatpush.msra.mxu0 %v246
    %559 = vmatpush.msra.mxu0 %v244
    %560 = vmatpush.msra.mxu0 %v242
    %561 = vmatpush.msra.mxu0 %v240
    %562 = vmatpush.msra.mxu0 %v238
    %563 = vmatpush.msra.mxu0 %v236
    %564 = vmatpush.msra.mxu0 %v234
    %565 = vmatpush.msra.mxu0 %v232
    %566 = vmatpush.msra.mxu0 %v230
    %567 = vmatpush.msra.mxu0 %v228
    %568 = vmatmul.f32.gmra.mxu0 %v61
    %v569 = vpop.f32.mrf.mxu0
    %v570 = vadd.f32 %v550, %v569
    %571 = vdwg.mxu0
    %572 = vmatpush.msra.mxu0 %v290
    %573 = vmatpush.msra.mxu0 %v288
    %574 = vmatpush.msra.mxu0 %v286
    %575 = vmatpush.msra.mxu0 %v284
    %576 = vmatpush.msra.mxu0 %v282
    %577 = vmatpush.msra.mxu0 %v280
    %578 = vmatpush.msra.mxu0 %v278
    %579 = vmatpush.msra.mxu0 %v276
    %580 = vmatpush.msra.mxu0 %v274
    %581 = vmatpush.msra.mxu0 %v272
    %582 = vmatpush.msra.mxu0 %v270
    %583 = vmatpush.msra.mxu0 %v268
    %584 = vmatpush.msra.mxu0 %v266
    %585 = vmatpush.msra.mxu0 %v264
    %586 = vmatpush.msra.mxu0 %v262
    %587 = vmatpush.msra.mxu0 %v260
    %588 = vmatmul.f32.gmra.mxu0 %v62
    %v589 = vpop.f32.mrf.mxu0
    %v590 = vadd.f32 %v570, %v589
    %591 = vdwg.mxu0
    %592 = vmatpush.msra.mxu0 %v322
    %593 = vmatpush.msra.mxu0 %v320
    %594 = vmatpush.msra.mxu0 %v318
    %595 = vmatpush.msra.mxu0 %v316
    %596 = vmatpush.msra.mxu0 %v314
    %597 = vmatpush.msra.mxu0 %v312
    %598 = vmatpush.msra.mxu0 %v310
    %599 = vmatpush.msra.mxu0 %v308
    %600 = vmatpush.msra.mxu0 %v306
    %601 = vmatpush.msra.mxu0 %v304
    %602 = vmatpush.msra.mxu0 %v302
    %603 = vmatpush.msra.mxu0 %v300
    %604 = vmatpush.msra.mxu0 %v298
    %605 = vmatpush.msra.mxu0 %v296
    %606 = vmatpush.msra.mxu0 %v294
    %607 = vmatpush.msra.mxu0 %v292
    %608 = vmatmul.f32.gmra.mxu0 %v63
    %v609 = vpop.f32.mrf.mxu0
    %v610 = vadd.f32 %v590, %v609
    %611 = vdwg.mxu0
    %612 = vmatpush.msra.mxu0 %v354
    %613 = vmatpush.msra.mxu0 %v352
    %614 = vmatpush.msra.mxu0 %v350
    %615 = vmatpush.msra.mxu0 %v348
    %616 = vmatpush.msra.mxu0 %v346
    %617 = vmatpush.msra.mxu0 %v344
    %618 = vmatpush.msra.mxu0 %v342
    %619 = vmatpush.msra.mxu0 %v340
    %620 = vmatpush.msra.mxu0 %v338
    %621 = vmatpush.msra.mxu0 %v336
    %622 = vmatpush.msra.mxu0 %v334
    %623 = vmatpush.msra.mxu0 %v332
    %624 = vmatpush.msra.mxu0 %v330
    %625 = vmatpush.msra.mxu0 %v328
    %626 = vmatpush.msra.mxu0 %v326
    %627 = vmatpush.msra.mxu0 %v324
    %628 = vmatmul.f32.gmra.mxu0 %v64
    %v629 = vpop.f32.mrf.mxu0
    %v630 = vadd.f32 %v610, %v629
    %631 = vdwg.mxu0
    %632 = vmatpush.msra.mxu0 %v386
    %633 = vmatpush.msra.mxu0 %v384
    %634 = vmatpush.msra.mxu0 %v382
    %635 = vmatpush.msra.mxu0 %v380
    %636 = vmatpush.msra.mxu0 %v378
    %637 = vmatpush.msra.mxu0 %v376
    %638 = vmatpush.msra.mxu0 %v374
    %639 = vmatpush.msra.mxu0 %v372
    %640 = vmatpush.msra.mxu0 %v370
    %641 = vmatpush.msra.mxu0 %v368
    %642 = vmatpush.msra.mxu0 %v366
    %643 = vmatpush.msra.mxu0 %v364
    %644 = vmatpush.msra.mxu0 %v362
    %645 = vmatpush.msra.mxu0 %v360
    %646 = vmatpush.msra.mxu0 %v358
    %647 = vmatpush.msra.mxu0 %v356
    %648 = vmatmul.f32.gmra.mxu0 %v65
    %v649 = vpop.f32.mrf.mxu0
    %v650 = vadd.f32 %v630, %v649
    %651 = vdwg.mxu0
    %652 = vmatpush.msra.mxu0 %v418
    %653 = vmatpush.msra.mxu0 %v416
    %654 = vmatpush.msra.mxu0 %v414
    %655 = vmatpush.msra.mxu0 %v412
    %656 = vmatpush.msra.mxu0 %v410
    %657 = vmatpush.msra.mxu0 %v408
    %658 = vmatpush.msra.mxu0 %v406
    %659 = vmatpush.msra.mxu0 %v404
    %660 = vmatpush.msra.mxu0 %v402
    %661 = vmatpush.msra.mxu0 %v400
    %662 = vmatpush.msra.mxu0 %v398
    %663 = vmatpush.msra.mxu0 %v396
    %664 = vmatpush.msra.mxu0 %v394
    %665 = vmatpush.msra.mxu0 %v392
    %666 = vmatpush.msra.mxu0 %v390
    %667 = vmatpush.msra.mxu0 %v388
    %668 = vmatmul.f32.gmra.mxu0 %v66
    %v669 = vpop.f32.mrf.mxu0
    %v670 = vadd.f32 %v650, %v669
    %671 = vdwg.mxu0
    %672 = vmatpush.msra.mxu0 %v450
    %673 = vmatpush.msra.mxu0 %v448
    %674 = vmatpush.msra.mxu0 %v446
    %675 = vmatpush.msra.mxu0 %v444
    %676 = vmatpush.msra.mxu0 %v442
    %677 = vmatpush.msra.mxu0 %v440
    %678 = vmatpush.msra.mxu0 %v438
    %679 = vmatpush.msra.mxu0 %v436
    %680 = vmatpush.msra.mxu0 %v434
    %681 = vmatpush.msra.mxu0 %v432
    %682 = vmatpush.msra.mxu0 %v430
    %683 = vmatpush.msra.mxu0 %v428
    %684 = vmatpush.msra.mxu0 %v426
    %685 = vmatpush.msra.mxu0 %v424
    %686 = vmatpush.msra.mxu0 %v422
    %687 = vmatpush.msra.mxu0 %v420
    %688 = vmatmul.f32.gmra.mxu0 %v67
    %v689 = vpop.f32.mrf.mxu0
    %v690 = vadd.f32 %v670, %v689
    %691 = vdwg.mxu0
    %692 = vmatpush.msra.mxu0 %v99
    %693 = vmatpush.msra.mxu0 %v97
    %694 = vmatpush.msra.mxu0 %v95
    %695 = vmatpush.msra.mxu0 %v93
    %696 = vmatpush.msra.mxu0 %v91
    %697 = vmatpush.msra.mxu0 %v89
    %698 = vmatpush.msra.mxu0 %v87
    %699 = vmatpush.msra.mxu0 %v85
    %700 = vmatpush.msra.mxu0 %v83
    %701 = vmatpush.msra.mxu0 %v81
    %702 = vmatpush.msra.mxu0 %v79
    %703 = vmatpush.msra.mxu0 %v77
    %704 = vmatpush.msra.mxu0 %v75
    %705 = vmatpush.msra.mxu0 %v73
    %706 = vmatpush.msra.mxu0 %v71
    %707 = vmatpush.msra.mxu0 %v69
    %708 = vmatmul.f32.gmra.mxu0 %v56
    %v709 = vpop.f32.mrf.mxu0
    %v710 = vadd.f32 0.0, %v709
    %711 = vdwg.mxu0
    %712 = vmatpush.msra.mxu0 %v131
    %713 = vmatpush.msra.mxu0 %v129
    %714 = vmatpush.msra.mxu0 %v127
    %715 = vmatpush.msra.mxu0 %v125
    %716 = vmatpush.msra.mxu0 %v123
    %717 = vmatpush.msra.mxu0 %v121
    %718 = vmatpush.msra.mxu0 %v119
    %719 = vmatpush.msra.mxu0 %v117
    %720 = vmatpush.msra.mxu0 %v115
    %721 = vmatpush.msra.mxu0 %v113
    %722 = vmatpush.msra.mxu0 %v111
    %723 = vmatpush.msra.mxu0 %v109
    %724 = vmatpush.msra.mxu0 %v107
    %725 = vmatpush.msra.mxu0 %v105
    %726 = vmatpush.msra.mxu0 %v103
    %727 = vmatpush.msra.mxu0 %v101
    %728 = vmatmul.f32.gmra.mxu0 %v57
    %v729 = vpop.f32.mrf.mxu0
    %v730 = vadd.f32 %v710, %v729
    %731 = vdwg.mxu0
    %732 = vmatpush.msra.mxu0 %v163
    %733 = vmatpush.msra.mxu0 %v161
    %734 = vmatpush.msra.mxu0 %v159
    %735 = vmatpush.msra.mxu0 %v157
    %736 = vmatpush.msra.mxu0 %v155
    %737 = vmatpush.msra.mxu0 %v153
    %738 = vmatpush.msra.mxu0 %v151
    %739 = vmatpush.msra.mxu0 %v149
    %740 = vmatpush.msra.mxu0 %v147
    %741 = vmatpush.msra.mxu0 %v145
    %742 = vmatpush.msra.mxu0 %v143
    %743 = vmatpush.msra.mxu0 %v141
    %744 = vmatpush.msra.mxu0 %v139
    %745 = vmatpush.msra.mxu0 %v137
    %746 = vmatpush.msra.mxu0 %v135
    %747 = vmatpush.msra.mxu0 %v133
    %748 = vmatmul.f32.gmra.mxu0 %v58
    %v749 = vpop.f32.mrf.mxu0
    %v750 = vadd.f32 %v730, %v749
    %751 = vdwg.mxu0
    %752 = vmatpush.msra.mxu0 %v195
    %753 = vmatpush.msra.mxu0 %v193
    %754 = vmatpush.msra.mxu0 %v191
    %755 = vmatpush.msra.mxu0 %v189
    %756 = vmatpush.msra.mxu0 %v187
    %757 = vmatpush.msra.mxu0 %v185
    %758 = vmatpush.msra.mxu0 %v183
    %759 = vmatpush.msra.mxu0 %v181
    %760 = vmatpush.msra.mxu0 %v179
    %761 = vmatpush.msra.mxu0 %v177
    %762 = vmatpush.msra.mxu0 %v175
    %763 = vmatpush.msra.mxu0 %v173
    %764 = vmatpush.msra.mxu0 %v171
    %765 = vmatpush.msra.mxu0 %v169
    %766 = vmatpush.msra.mxu0 %v167
    %767 = vmatpush.msra.mxu0 %v165
    %768 = vmatmul.f32.gmra.mxu0 %v59
    %v769 = vpop.f32.mrf.mxu0
    %v770 = vadd.f32 %v750, %v769
    %771 = vdwg.mxu0
    %772 = vmatpush.msra.mxu0 %v227
    %773 = vmatpush.msra.mxu0 %v225
    %774 = vmatpush.msra.mxu0 %v223
    %775 = vmatpush.msra.mxu0 %v221
    %776 = vmatpush.msra.mxu0 %v219
    %777 = vmatpush.msra.mxu0 %v217
    %778 = vmatpush.msra.mxu0 %v215
    %779 = vmatpush.msra.mxu0 %v213
    %780 = vmatpush.msra.mxu0 %v211
    %781 = vmatpush.msra.mxu0 %v209
    %782 = vmatpush.msra.mxu0 %v207
    %783 = vmatpush.msra.mxu0 %v205
    %784 = vmatpush.msra.mxu0 %v203
    %785 = vmatpush.msra.mxu0 %v201
    %786 = vmatpush.msra.mxu0 %v199
    %787 = vmatpush.msra.mxu0 %v197
    %788 = vmatmul.f32.gmra.mxu0 %v60
    %v789 = vpop.f32.mrf.mxu0
    %v790 = vadd.f32 %v770, %v789
    %791 = vdwg.mxu0
    %792 = vmatpush.msra.mxu0 %v259
    %793 = vmatpush.msra.mxu0 %v257
    %794 = vmatpush.msra.mxu0 %v255
    %795 = vmatpush.msra.mxu0 %v253
    %796 = vmatpush.msra.mxu0 %v251
    %797 = vmatpush.msra.mxu0 %v249
    %798 = vmatpush.msra.mxu0 %v247
    %799 = vmatpush.msra.mxu0 %v245
    %800 = vmatpush.msra.mxu0 %v243
    %801 = vmatpush.msra.mxu0 %v241
    %802 = vmatpush.msra.mxu0 %v239
    %803 = vmatpush.msra.mxu0 %v237
    %804 = vmatpush.msra.mxu0 %v235
    %805 = vmatpush.msra.mxu0 %v233
    %806 = vmatpush.msra.mxu0 %v231
    %807 = vmatpush.msra.mxu0 %v229
    %808 = vmatmul.f32.gmra.mxu0 %v61
    %v809 = vpop.f32.mrf.mxu0
    %v810 = vadd.f32 %v790, %v809
    %811 = vdwg.mxu0
    %812 = vmatpush.msra.mxu0 %v291
    %813 = vmatpush.msra.mxu0 %v289
    %814 = vmatpush.msra.mxu0 %v287
    %815 = vmatpush.msra.mxu0 %v285
    %816 = vmatpush.msra.mxu0 %v283
    %817 = vmatpush.msra.mxu0 %v281
    %818 = vmatpush.msra.mxu0 %v279
    %819 = vmatpush.msra.mxu0 %v277
    %820 = vmatpush.msra.mxu0 %v275
    %821 = vmatpush.msra.mxu0 %v273
    %822 = vmatpush.msra.mxu0 %v271
    %823 = vmatpush.msra.mxu0 %v269
    %824 = vmatpush.msra.mxu0 %v267
    %825 = vmatpush.msra.mxu0 %v265
    %826 = vmatpush.msra.mxu0 %v263
    %827 = vmatpush.msra.mxu0 %v261
    %828 = vmatmul.f32.gmra.mxu0 %v62
    %v829 = vpop.f32.mrf.mxu0
    %v830 = vadd.f32 %v810, %v829
    %831 = vdwg.mxu0
    %832 = vmatpush.msra.mxu0 %v323
    %833 = vmatpush.msra.mxu0 %v321
    %834 = vmatpush.msra.mxu0 %v319
    %835 = vmatpush.msra.mxu0 %v317
    %836 = vmatpush.msra.mxu0 %v315
    %837 = vmatpush.msra.mxu0 %v313
    %838 = vmatpush.msra.mxu0 %v311
    %839 = vmatpush.msra.mxu0 %v309
    %840 = vmatpush.msra.mxu0 %v307
    %841 = vmatpush.msra.mxu0 %v305
    %842 = vmatpush.msra.mxu0 %v303
    %843 = vmatpush.msra.mxu0 %v301
    %844 = vmatpush.msra.mxu0 %v299
    %845 = vmatpush.msra.mxu0 %v297
    %846 = vmatpush.msra.mxu0 %v295
    %847 = vmatpush.msra.mxu0 %v293
    %848 = vmatmul.f32.gmra.mxu0 %v63
    %v849 = vpop.f32.mrf.mxu0
    %v850 = vadd.f32 %v830, %v849
    %851 = vdwg.mxu0
    %852 = vmatpush.msra.mxu0 %v355
    %853 = vmatpush.msra.mxu0 %v353
    %854 = vmatpush.msra.mxu0 %v351
    %855 = vmatpush.msra.mxu0 %v349
    %856 = vmatpush.msra.mxu0 %v347
    %857 = vmatpush.msra.mxu0 %v345
    %858 = vmatpush.msra.mxu0 %v343
    %859 = vmatpush.msra.mxu0 %v341
    %860 = vmatpush.msra.mxu0 %v339
    %861 = vmatpush.msra.mxu0 %v337
    %862 = vmatpush.msra.mxu0 %v335
    %863 = vmatpush.msra.mxu0 %v333
    %864 = vmatpush.msra.mxu0 %v331
    %865 = vmatpush.msra.mxu0 %v329
    %866 = vmatpush.msra.mxu0 %v327
    %867 = vmatpush.msra.mxu0 %v325
    %868 = vmatmul.f32.gmra.mxu0 %v64
    %v869 = vpop.f32.mrf.mxu0
    %v870 = vadd.f32 %v850, %v869
    %871 = vdwg.mxu0
    %872 = vmatpush.msra.mxu0 %v387
    %873 = vmatpush.msra.mxu0 %v385
    %874 = vmatpush.msra.mxu0 %v383
    %875 = vmatpush.msra.mxu0 %v381
    %876 = vmatpush.msra.mxu0 %v379
    %877 = vmatpush.msra.mxu0 %v377
    %878 = vmatpush.msra.mxu0 %v375
    %879 = vmatpush.msra.mxu0 %v373
    %880 = vmatpush.msra.mxu0 %v371
    %881 = vmatpush.msra.mxu0 %v369
    %882 = vmatpush.msra.mxu0 %v367
    %883 = vmatpush.msra.mxu0 %v365
    %884 = vmatpush.msra.mxu0 %v363
    %885 = vmatpush.msra.mxu0 %v361
    %886 = vmatpush.msra.mxu0 %v359
    %887 = vmatpush.msra.mxu0 %v357
    %888 = vmatmul.f32.gmra.mxu0 %v65
    %v889 = vpop.f32.mrf.mxu0
    %v890 = vadd.f32 %v870, %v889
    %891 = vdwg.mxu0
    %892 = vmatpush.msra.mxu0 %v419
    %893 = vmatpush.msra.mxu0 %v417
    %894 = vmatpush.msra.mxu0 %v415
    %895 = vmatpush.msra.mxu0 %v413
    %896 = vmatpush.msra.mxu0 %v411
    %897 = vmatpush.msra.mxu0 %v409
    %898 = vmatpush.msra.mxu0 %v407
    %899 = vmatpush.msra.mxu0 %v405
    %900 = vmatpush.msra.mxu0 %v403
    %901 = vmatpush.msra.mxu0 %v401
    %902 = vmatpush.msra.mxu0 %v399
    %903 = vmatpush.msra.mxu0 %v397
    %904 = vmatpush.msra.mxu0 %v395
    %905 = vmatpush.msra.mxu0 %v393
    %906 = vmatpush.msra.mxu0 %v391
    %907 = vmatpush.msra.mxu0 %v389
    %908 = vmatmul.f32.gmra.mxu0 %v66
    %v909 = vpop.f32.mrf.mxu0
    %v910 = vadd.f32 %v890, %v909
    %911 = vdwg.mxu0
    %912 = vmatpush.msra.mxu0 %v451
    %913 = vmatpush.msra.mxu0 %v449
    %914 = vmatpush.msra.mxu0 %v447
    %915 = vmatpush.msra.mxu0 %v445
    %916 = vmatpush.msra.mxu0 %v443
    %917 = vmatpush.msra.mxu0 %v441
    %918 = vmatpush.msra.mxu0 %v439
    %919 = vmatpush.msra.mxu0 %v437
    %920 = vmatpush.msra.mxu0 %v435
    %921 = vmatpush.msra.mxu0 %v433
    %922 = vmatpush.msra.mxu0 %v431
    %923 = vmatpush.msra.mxu0 %v429
    %924 = vmatpush.msra.mxu0 %v427
    %925 = vmatpush.msra.mxu0 %v425
    %926 = vmatpush.msra.mxu0 %v423
    %927 = vmatpush.msra.mxu0 %v421
    %928 = vmatmul.f32.gmra.mxu0 %v67
    %v929 = vpop.f32.mrf.mxu0
    %v930 = vadd.f32 %v910, %v929
    %931 = vdwg.mxu0
    %v932 = vld [vmem:[%s3] sm:$0xff]
    %v933 = vld [vmem:[%s3 + $0x8] sm:$0xff]
    %v934 = vld [vmem:[%s3 + $0x10] sm:$0xff]
    %v935 = vld [vmem:[%s3 + $0x18] sm:$0xff]
    %v936 = vld [vmem:[%s3 + $0x20] sm:$0xff]
    %v937 = vld [vmem:[%s3 + $0x28] sm:$0xff]
    %v938 = vld [vmem:[%s3 + $0x30] sm:$0xff]
    %v939 = vld [vmem:[%s3 + $0x38] sm:$0xff]
    %v940 = vld [vmem:[%s3 + $0x40] sm:$0xff]
    %v941 = vld [vmem:[%s3 + $0x48] sm:$0xff]
    %v942 = vld [vmem:[%s3 + $0x50] sm:$0xff]
    %v943 = vld [vmem:[%s3 + $0x58] sm:$0xff]
    %v944 = vld [vmem:[%s3 + $0x60] sm:$0xff]
    %v945 = vld [vmem:[%s3 + $0x68] sm:$0xff]
    %v946 = vld [vmem:[%s3 + $0x70] sm:$0xff]
    %v947 = vld [vmem:[%s3 + $0x78] sm:$0xff]
    %v948 = vld [vmem:[%s3 + $0x80] sm:$0xff]
    %v949 = vld [vmem:[%s3 + $0x88] sm:$0xff]
    %v950 = vld [vmem:[%s3 + $0x90] sm:$0xff]
    %v951 = vld [vmem:[%s3 + $0x98] sm:$0xff]
    %v952 = vld [vmem:[%s3 + $0xa0] sm:$0xff]
    %v953 = vld [vmem:[%s3 + $0xa8] sm:$0xff]
    %v954 = vld [vmem:[%s3 + $0xb0] sm:$0xff]
    %v955 = vld [vmem:[%s3 + $0xb8] sm:$0xff]
    %vm956 = vcmask 523264
    %v958 = vsel %vm956, %v930, 0
    %960 = vmatpush.msra.mxu0 %v947
    %961 = vmatpush.msra.mxu0 %v946
    %962 = vmatpush.msra.mxu0 %v945
    %963 = vmatpush.msra.mxu0 %v944
    %964 = vmatpush.msra.mxu0 %v943
    %965 = vmatpush.msra.mxu0 %v942
    %966 = vmatpush.msra.mxu0 %v941
    %967 = vmatpush.msra.mxu0 %v940
    %968 = vmatpush.msra.mxu0 %v939
    %969 = vmatpush.msra.mxu0 %v938
    %970 = vmatpush.msra.mxu0 %v937
    %971 = vmatpush.msra.mxu0 %v936
    %972 = vmatpush.msra.mxu0 %v935
    %973 = vmatpush.msra.mxu0 %v934
    %974 = vmatpush.msra.mxu0 %v933
    %975 = vmatpush.msra.mxu0 %v932
    %976 = vmatmul.f32.gmra.mxu0 %v690
    %v977 = vpop.f32.mrf.mxu0
    %v978 = vadd.f32 0.0, %v977
    %979 = vdwg.mxu0
    %980 = vmatpush.msra.mxu0 0.0
    %981 = vmatpush.msra.mxu0 0.0
    %982 = vmatpush.msra.mxu0 0.0
    %983 = vmatpush.msra.mxu0 0.0
    %984 = vmatpush.msra.mxu0 0.0
    %985 = vmatpush.msra.mxu0 0.0
    %986 = vmatpush.msra.mxu0 0.0
    %987 = vmatpush.msra.mxu0 0.0
    %988 = vmatpush.msra.mxu0 %v955
    %989 = vmatpush.msra.mxu0 %v954
    %990 = vmatpush.msra.mxu0 %v953
    %991 = vmatpush.msra.mxu0 %v952
    %992 = vmatpush.msra.mxu0 %v951
    %993 = vmatpush.msra.mxu0 %v950
    %994 = vmatpush.msra.mxu0 %v949
    %995 = vmatpush.msra.mxu0 %v948
    %996 = vmatmul.f32.gmra.mxu0 %v958
    %v997 = vpop.f32.mrf.mxu0
    %v998 = vadd.f32 %v978, %v997
    %999 = vdwg.mxu0
    %v1000 = vld [vmem:[%s4] sm:$0xff]
    %v1001 = vld [vmem:[%s4 + $0x8] sm:$0xff]
    %v1002 = vld [vmem:[%s4 + $0x10] sm:$0xff]
    %v1003 = vld [vmem:[%s4 + $0x18] sm:$0xff]
    %v1004 = vld [vmem:[%s4 + $0x20] sm:$0xff]
    %v1005 = vld [vmem:[%s4 + $0x28] sm:$0xff]
    %v1006 = vld [vmem:[%s4 + $0x30] sm:$0xff]
    %v1007 = vld [vmem:[%s4 + $0x38] sm:$0xff]
    %v1008 = vld [vmem:[%s4 + $0x40] sm:$0xff]
    %v1009 = vld [vmem:[%s4 + $0x48] sm:$0xff]
    %v1010 = vld [vmem:[%s4 + $0x50] sm:$0xff]
    %v1011 = vld [vmem:[%s4 + $0x58] sm:$0xff]
    %v1012 = vld [vmem:[%s4 + $0x60] sm:$0xff]
    %v1013 = vld [vmem:[%s4 + $0x68] sm:$0xff]
    %v1014 = vld [vmem:[%s4 + $0x70] sm:$0xff]
    %v1015 = vld [vmem:[%s4 + $0x78] sm:$0xff]
    %v1016 = vld [vmem:[%s4 + $0x80] sm:$0xff]
    %v1017 = vld [vmem:[%s4 + $0x88] sm:$0xff]
    %v1018 = vld [vmem:[%s4 + $0x90] sm:$0xff]
    %v1019 = vld [vmem:[%s4 + $0x98] sm:$0xff]
    %v1020 = vld [vmem:[%s4 + $0xa0] sm:$0xff]
    %v1021 = vld [vmem:[%s4 + $0xa8] sm:$0xff]
    %v1022 = vld [vmem:[%s4 + $0xb0] sm:$0xff]
    %v1023 = vld [vmem:[%s4 + $0xb8] sm:$0xff]
    %v1024 = vld [vmem:[%s4 + $0xc0] sm:$0xff]
    %v1025 = vld [vmem:[%s4 + $0xc8] sm:$0xff]
    %v1026 = vld [vmem:[%s4 + $0xd0] sm:$0xff]
    %v1027 = vld [vmem:[%s4 + $0xd8] sm:$0xff]
    %v1028 = vld [vmem:[%s4 + $0xe0] sm:$0xff]
    %v1029 = vld [vmem:[%s4 + $0xe8] sm:$0xff]
    %v1030 = vld [vmem:[%s4 + $0xf0] sm:$0xff]
    %v1031 = vld [vmem:[%s4 + $0xf8] sm:$0xff]
    %v1032 = vld [vmem:[%s4 + $0x100] sm:$0xff]
    %v1033 = vld [vmem:[%s4 + $0x108] sm:$0xff]
    %v1034 = vld [vmem:[%s4 + $0x110] sm:$0xff]
    %v1035 = vld [vmem:[%s4 + $0x118] sm:$0xff]
    %v1036 = vld [vmem:[%s4 + $0x120] sm:$0xff]
    %v1037 = vld [vmem:[%s4 + $0x128] sm:$0xff]
    %v1038 = vld [vmem:[%s4 + $0x130] sm:$0xff]
    %v1039 = vld [vmem:[%s4 + $0x138] sm:$0xff]
    %v1040 = vld [vmem:[%s4 + $0x140] sm:$0xff]
    %v1041 = vld [vmem:[%s4 + $0x148] sm:$0xff]
    %v1042 = vld [vmem:[%s4 + $0x150] sm:$0xff]
    %v1043 = vld [vmem:[%s4 + $0x158] sm:$0xff]
    %v1044 = vld [vmem:[%s4 + $0x160] sm:$0xff]
    %v1045 = vld [vmem:[%s4 + $0x168] sm:$0xff]
    %v1046 = vld [vmem:[%s4 + $0x170] sm:$0xff]
    %v1047 = vld [vmem:[%s4 + $0x178] sm:$0xff]
    %v1048 = vld [vmem:[%s4 + $0x180] sm:$0xff]
    %v1049 = vld [vmem:[%s4 + $0x188] sm:$0xff]
    %v1050 = vld [vmem:[%s4 + $0x190] sm:$0xff]
    %v1051 = vld [vmem:[%s4 + $0x198] sm:$0xff]
    %v1052 = vld [vmem:[%s4 + $0x1a0] sm:$0xff]
    %v1053 = vld [vmem:[%s4 + $0x1a8] sm:$0xff]
    %v1054 = vld [vmem:[%s4 + $0x1b0] sm:$0xff]
    %v1055 = vld [vmem:[%s4 + $0x1b8] sm:$0xff]
    %v1056 = vld [vmem:[%s4 + $0x1c0] sm:$0xff]
    %v1057 = vld [vmem:[%s4 + $0x1c8] sm:$0xff]
    %v1058 = vld [vmem:[%s4 + $0x1d0] sm:$0xff]
    %v1059 = vld [vmem:[%s4 + $0x1d8] sm:$0xff]
    %v1060 = vld [vmem:[%s4 + $0x1e0] sm:$0xff]
    %v1061 = vld [vmem:[%s4 + $0x1e8] sm:$0xff]
    %v1062 = vld [vmem:[%s4 + $0x1f0] sm:$0xff]
    %v1063 = vld [vmem:[%s4 + $0x1f8] sm:$0xff]
    %v1064 = vld [vmem:[%s4 + $0x200] sm:$0xff]
    %v1065 = vld [vmem:[%s4 + $0x208] sm:$0xff]
    %v1066 = vld [vmem:[%s4 + $0x210] sm:$0xff]
    %v1067 = vld [vmem:[%s4 + $0x218] sm:$0xff]
    %v1068 = vld [vmem:[%s4 + $0x220] sm:$0xff]
    %v1069 = vld [vmem:[%s4 + $0x228] sm:$0xff]
    %v1070 = vld [vmem:[%s4 + $0x230] sm:$0xff]
    %v1071 = vld [vmem:[%s4 + $0x238] sm:$0xff]
    %v1072 = vld [vmem:[%s4 + $0x240] sm:$0xff]
    %v1073 = vld [vmem:[%s4 + $0x248] sm:$0xff]
    %v1074 = vld [vmem:[%s4 + $0x250] sm:$0xff]
    %v1075 = vld [vmem:[%s4 + $0x258] sm:$0xff]
    %v1076 = vld [vmem:[%s4 + $0x260] sm:$0xff]
    %v1077 = vld [vmem:[%s4 + $0x268] sm:$0xff]
    %v1078 = vld [vmem:[%s4 + $0x270] sm:$0xff]
    %v1079 = vld [vmem:[%s4 + $0x278] sm:$0xff]
    %v1080 = vld [vmem:[%s4 + $0x280] sm:$0xff]
    %v1081 = vld [vmem:[%s4 + $0x288] sm:$0xff]
    %v1082 = vld [vmem:[%s4 + $0x290] sm:$0xff]
    %v1083 = vld [vmem:[%s4 + $0x298] sm:$0xff]
    %v1084 = vld [vmem:[%s4 + $0x2a0] sm:$0xff]
    %v1085 = vld [vmem:[%s4 + $0x2a8] sm:$0xff]
    %v1086 = vld [vmem:[%s4 + $0x2b0] sm:$0xff]
    %v1087 = vld [vmem:[%s4 + $0x2b8] sm:$0xff]
    %v1088 = vld [vmem:[%s4 + $0x2c0] sm:$0xff]
    %v1089 = vld [vmem:[%s4 + $0x2c8] sm:$0xff]
    %v1090 = vld [vmem:[%s4 + $0x2d0] sm:$0xff]
    %v1091 = vld [vmem:[%s4 + $0x2d8] sm:$0xff]
    %v1092 = vld [vmem:[%s4 + $0x2e0] sm:$0xff]
    %v1093 = vld [vmem:[%s4 + $0x2e8] sm:$0xff]
    %v1094 = vld [vmem:[%s4 + $0x2f0] sm:$0xff]
    %v1095 = vld [vmem:[%s4 + $0x2f8] sm:$0xff]
    %1096 = vmatpush.msra.mxu0 %v1060
    %1097 = vmatpush.msra.mxu0 %v1056
    %1098 = vmatpush.msra.mxu0 %v1052
    %1099 = vmatpush.msra.mxu0 %v1048
    %1100 = vmatpush.msra.mxu0 %v1044
    %1101 = vmatpush.msra.mxu0 %v1040
    %1102 = vmatpush.msra.mxu0 %v1036
    %1103 = vmatpush.msra.mxu0 %v1032
    %1104 = vmatpush.msra.mxu0 %v1028
    %1105 = vmatpush.msra.mxu0 %v1024
    %1106 = vmatpush.msra.mxu0 %v1020
    %1107 = vmatpush.msra.mxu0 %v1016
    %1108 = vmatpush.msra.mxu0 %v1012
    %1109 = vmatpush.msra.mxu0 %v1008
    %1110 = vmatpush.msra.mxu0 %v1004
    %1111 = vmatpush.msra.mxu0 %v1000
    %1112 = vmatmul.f32.gmra.mxu0 %v690
    %v1113 = vpop.f32.mrf.mxu0
    %v1114 = vadd.f32 0.0, %v1113
    %1115 = vdwg.mxu0
    %1116 = vmatpush.msra.mxu0 0.0
    %1117 = vmatpush.msra.mxu0 0.0
    %1118 = vmatpush.msra.mxu0 0.0
    %1119 = vmatpush.msra.mxu0 0.0
    %1120 = vmatpush.msra.mxu0 0.0
    %1121 = vmatpush.msra.mxu0 0.0
    %1122 = vmatpush.msra.mxu0 0.0
    %1123 = vmatpush.msra.mxu0 0.0
    %1124 = vmatpush.msra.mxu0 %v1092
    %1125 = vmatpush.msra.mxu0 %v1088
    %1126 = vmatpush.msra.mxu0 %v1084
    %1127 = vmatpush.msra.mxu0 %v1080
    %1128 = vmatpush.msra.mxu0 %v1076
    %1129 = vmatpush.msra.mxu0 %v1072
    %1130 = vmatpush.msra.mxu0 %v1068
    %1131 = vmatpush.msra.mxu0 %v1064
    %1132 = vmatmul.f32.gmra.mxu0 %v958
    %v1133 = vpop.f32.mrf.mxu0
    %v1134 = vadd.f32 %v1114, %v1133
    %1135 = vdwg.mxu0
    %1136 = vmatpush.msra.mxu0 %v1061
    %1137 = vmatpush.msra.mxu0 %v1057
    %1138 = vmatpush.msra.mxu0 %v1053
    %1139 = vmatpush.msra.mxu0 %v1049
    %1140 = vmatpush.msra.mxu0 %v1045
    %1141 = vmatpush.msra.mxu0 %v1041
    %1142 = vmatpush.msra.mxu0 %v1037
    %1143 = vmatpush.msra.mxu0 %v1033
    %1144 = vmatpush.msra.mxu0 %v1029
    %1145 = vmatpush.msra.mxu0 %v1025
    %1146 = vmatpush.msra.mxu0 %v1021
    %1147 = vmatpush.msra.mxu0 %v1017
    %1148 = vmatpush.msra.mxu0 %v1013
    %1149 = vmatpush.msra.mxu0 %v1009
    %1150 = vmatpush.msra.mxu0 %v1005
    %1151 = vmatpush.msra.mxu0 %v1001
    %1152 = vmatmul.f32.gmra.mxu0 %v690
    %v1153 = vpop.f32.mrf.mxu0
    %v1154 = vadd.f32 0.0, %v1153
    %1155 = vdwg.mxu0
    %1156 = vmatpush.msra.mxu0 0.0
    %1157 = vmatpush.msra.mxu0 0.0
    %1158 = vmatpush.msra.mxu0 0.0
    %1159 = vmatpush.msra.mxu0 0.0
    %1160 = vmatpush.msra.mxu0 0.0
    %1161 = vmatpush.msra.mxu0 0.0
    %1162 = vmatpush.msra.mxu0 0.0
    %1163 = vmatpush.msra.mxu0 0.0
    %1164 = vmatpush.msra.mxu0 %v1093
    %1165 = vmatpush.msra.mxu0 %v1089
    %1166 = vmatpush.msra.mxu0 %v1085
    %1167 = vmatpush.msra.mxu0 %v1081
    %1168 = vmatpush.msra.mxu0 %v1077
    %1169 = vmatpush.msra.mxu0 %v1073
    %1170 = vmatpush.msra.mxu0 %v1069
    %1171 = vmatpush.msra.mxu0 %v1065
    %1172 = vmatmul.f32.gmra.mxu0 %v958
    %v1173 = vpop.f32.mrf.mxu0
    %v1174 = vadd.f32 %v1154, %v1173
    %1175 = vdwg.mxu0
    %1176 = vmatpush.msra.mxu0 %v1062
    %1177 = vmatpush.msra.mxu0 %v1058
    %1178 = vmatpush.msra.mxu0 %v1054
    %1179 = vmatpush.msra.mxu0 %v1050
    %1180 = vmatpush.msra.mxu0 %v1046
    %1181 = vmatpush.msra.mxu0 %v1042
    %1182 = vmatpush.msra.mxu0 %v1038
    %1183 = vmatpush.msra.mxu0 %v1034
    %1184 = vmatpush.msra.mxu0 %v1030
    %1185 = vmatpush.msra.mxu0 %v1026
    %1186 = vmatpush.msra.mxu0 %v1022
    %1187 = vmatpush.msra.mxu0 %v1018
    %1188 = vmatpush.msra.mxu0 %v1014
    %1189 = vmatpush.msra.mxu0 %v1010
    %1190 = vmatpush.msra.mxu0 %v1006
    %1191 = vmatpush.msra.mxu0 %v1002
    %1192 = vmatmul.f32.gmra.mxu0 %v690
    %v1193 = vpop.f32.mrf.mxu0
    %v1194 = vadd.f32 0.0, %v1193
    %1195 = vdwg.mxu0
    %1196 = vmatpush.msra.mxu0 0.0
    %1197 = vmatpush.msra.mxu0 0.0
    %1198 = vmatpush.msra.mxu0 0.0
    %1199 = vmatpush.msra.mxu0 0.0
    %1200 = vmatpush.msra.mxu0 0.0
    %1201 = vmatpush.msra.mxu0 0.0
    %1202 = vmatpush.msra.mxu0 0.0
    %1203 = vmatpush.msra.mxu0 0.0
    %1204 = vmatpush.msra.mxu0 %v1094
    %1205 = vmatpush.msra.mxu0 %v1090
    %1206 = vmatpush.msra.mxu0 %v1086
    %1207 = vmatpush.msra.mxu0 %v1082
    %1208 = vmatpush.msra.mxu0 %v1078
    %1209 = vmatpush.msra.mxu0 %v1074
    %1210 = vmatpush.msra.mxu0 %v1070
    %1211 = vmatpush.msra.mxu0 %v1066
    %1212 = vmatmul.f32.gmra.mxu0 %v958
    %v1213 = vpop.f32.mrf.mxu0
    %v1214 = vadd.f32 %v1194, %v1213
    %1215 = vdwg.mxu0
    %1216 = vmatpush.msra.mxu0 %v1063
    %1217 = vmatpush.msra.mxu0 %v1059
    %1218 = vmatpush.msra.mxu0 %v1055
    %1219 = vmatpush.msra.mxu0 %v1051
    %1220 = vmatpush.msra.mxu0 %v1047
    %1221 = vmatpush.msra.mxu0 %v1043
    %1222 = vmatpush.msra.mxu0 %v1039
    %1223 = vmatpush.msra.mxu0 %v1035
    %1224 = vmatpush.msra.mxu0 %v1031
    %1225 = vmatpush.msra.mxu0 %v1027
    %1226 = vmatpush.msra.mxu0 %v1023
    %1227 = vmatpush.msra.mxu0 %v1019
    %1228 = vmatpush.msra.mxu0 %v1015
    %1229 = vmatpush.msra.mxu0 %v1011
    %1230 = vmatpush.msra.mxu0 %v1007
    %1231 = vmatpush.msra.mxu0 %v1003
    %1232 = vmatmul.f32.gmra.mxu0 %v690
    %v1233 = vpop.f32.mrf.mxu0
    %v1234 = vadd.f32 0.0, %v1233
    %1235 = vdwg.mxu0
    %1236 = vmatpush.msra.mxu0 0.0
    %1237 = vmatpush.msra.mxu0 0.0
    %1238 = vmatpush.msra.mxu0 0.0
    %1239 = vmatpush.msra.mxu0 0.0
    %1240 = vmatpush.msra.mxu0 0.0
    %1241 = vmatpush.msra.mxu0 0.0
    %1242 = vmatpush.msra.mxu0 0.0
    %1243 = vmatpush.msra.mxu0 0.0
    %1244 = vmatpush.msra.mxu0 %v1095
    %1245 = vmatpush.msra.mxu0 %v1091
    %1246 = vmatpush.msra.mxu0 %v1087
    %1247 = vmatpush.msra.mxu0 %v1083
    %1248 = vmatpush.msra.mxu0 %v1079
    %1249 = vmatpush.msra.mxu0 %v1075
    %1250 = vmatpush.msra.mxu0 %v1071
    %1251 = vmatpush.msra.mxu0 %v1067
    %1252 = vmatmul.f32.gmra.mxu0 %v958
    %v1253 = vpop.f32.mrf.mxu0
    %v1254 = vadd.f32 %v1234, %v1253
    %1255 = vdwg.mxu0
    %v1256 = vld [vmem:[%s4 + $0x360] sm:$0xff]
    %v1257 = vld [vmem:[%s4 + $0x368] sm:$0xff]
    %v1258 = vld [vmem:[%s4 + $0x370] sm:$0xff]
    %v1259 = vld [vmem:[%s4 + $0x378] sm:$0xff]
    %v1260 = vld [vmem:[%s4 + $0x380] sm:$0xff]
    %v1261 = vld [vmem:[%s4 + $0x388] sm:$0xff]
    %v1262 = vld [vmem:[%s4 + $0x390] sm:$0xff]
    %v1263 = vld [vmem:[%s4 + $0x398] sm:$0xff]
    %v1264 = vld [vmem:[%s4 + $0x3a0] sm:$0xff]
    %v1265 = vld [vmem:[%s4 + $0x3a8] sm:$0xff]
    %v1266 = vld [vmem:[%s4 + $0x3b0] sm:$0xff]
    %v1267 = vld [vmem:[%s4 + $0x3b8] sm:$0xff]
    %v1268 = vld [vmem:[%s4 + $0x3c0] sm:$0xff]
    %v1269 = vld [vmem:[%s4 + $0x3c8] sm:$0xff]
    %v1270 = vld [vmem:[%s4 + $0x3d0] sm:$0xff]
    %v1271 = vld [vmem:[%s4 + $0x3d8] sm:$0xff]
    %v1272 = vld [vmem:[%s4 + $0x3e0] sm:$0xff]
    %v1273 = vld [vmem:[%s4 + $0x3e8] sm:$0xff]
    %v1274 = vld [vmem:[%s4 + $0x3f0] sm:$0xff]
    %v1275 = vld [vmem:[%s4 + $0x3f8] sm:$0xff]
    %v1276 = vld [vmem:[%s4 + $0x400] sm:$0xff]
    %v1277 = vld [vmem:[%s4 + $0x408] sm:$0xff]
    %v1278 = vld [vmem:[%s4 + $0x410] sm:$0xff]
    %v1279 = vld [vmem:[%s4 + $0x418] sm:$0xff]
    %v1280 = vld [vmem:[%s4 + $0x420] sm:$0xff]
    %v1281 = vld [vmem:[%s4 + $0x428] sm:$0xff]
    %v1282 = vld [vmem:[%s4 + $0x430] sm:$0xff]
    %v1283 = vld [vmem:[%s4 + $0x438] sm:$0xff]
    %v1284 = vld [vmem:[%s4 + $0x440] sm:$0xff]
    %v1285 = vld [vmem:[%s4 + $0x448] sm:$0xff]
    %v1286 = vld [vmem:[%s4 + $0x450] sm:$0xff]
    %v1287 = vld [vmem:[%s4 + $0x458] sm:$0xff]
    %v1288 = vld [vmem:[%s4 + $0x460] sm:$0xff]
    %v1289 = vld [vmem:[%s4 + $0x468] sm:$0xff]
    %v1290 = vld [vmem:[%s4 + $0x470] sm:$0xff]
    %v1291 = vld [vmem:[%s4 + $0x478] sm:$0xff]
    %v1292 = vld [vmem:[%s4 + $0x480] sm:$0xff]
    %v1293 = vld [vmem:[%s4 + $0x488] sm:$0xff]
    %v1294 = vld [vmem:[%s4 + $0x490] sm:$0xff]
    %v1295 = vld [vmem:[%s4 + $0x498] sm:$0xff]
    %v1296 = vld [vmem:[%s4 + $0x4a0] sm:$0xff]
    %v1297 = vld [vmem:[%s4 + $0x4a8] sm:$0xff]
    %v1298 = vld [vmem:[%s4 + $0x4b0] sm:$0xff]
    %v1299 = vld [vmem:[%s4 + $0x4b8] sm:$0xff]
    %v1300 = vld [vmem:[%s4 + $0x4c0] sm:$0xff]
    %v1301 = vld [vmem:[%s4 + $0x4c8] sm:$0xff]
    %v1302 = vld [vmem:[%s4 + $0x4d0] sm:$0xff]
    %v1303 = vld [vmem:[%s4 + $0x4d8] sm:$0xff]
    %v1304 = vld [vmem:[%s4 + $0x4e0] sm:$0xff]
    %v1305 = vld [vmem:[%s4 + $0x4e8] sm:$0xff]
    %v1306 = vld [vmem:[%s4 + $0x4f0] sm:$0xff]
    %v1307 = vld [vmem:[%s4 + $0x4f8] sm:$0xff]
    %v1308 = vld [vmem:[%s4 + $0x500] sm:$0xff]
    %v1309 = vld [vmem:[%s4 + $0x508] sm:$0xff]
    %v1310 = vld [vmem:[%s4 + $0x510] sm:$0xff]
    %v1311 = vld [vmem:[%s4 + $0x518] sm:$0xff]
    %v1312 = vld [vmem:[%s4 + $0x520] sm:$0xff]
    %v1313 = vld [vmem:[%s4 + $0x528] sm:$0xff]
    %v1314 = vld [vmem:[%s4 + $0x530] sm:$0xff]
    %v1315 = vld [vmem:[%s4 + $0x538] sm:$0xff]
    %v1316 = vld [vmem:[%s4 + $0x540] sm:$0xff]
    %v1317 = vld [vmem:[%s4 + $0x548] sm:$0xff]
    %v1318 = vld [vmem:[%s4 + $0x550] sm:$0xff]
    %v1319 = vld [vmem:[%s4 + $0x558] sm:$0xff]
    %v1320 = vld [vmem:[%s4 + $0x560] sm:$0xff]
    %v1321 = vld [vmem:[%s4 + $0x568] sm:$0xff]
    %v1322 = vld [vmem:[%s4 + $0x570] sm:$0xff]
    %v1323 = vld [vmem:[%s4 + $0x578] sm:$0xff]
    %v1324 = vld [vmem:[%s4 + $0x580] sm:$0xff]
    %v1325 = vld [vmem:[%s4 + $0x588] sm:$0xff]
    %v1326 = vld [vmem:[%s4 + $0x590] sm:$0xff]
    %v1327 = vld [vmem:[%s4 + $0x598] sm:$0xff]
    %v1328 = vld [vmem:[%s4 + $0x5a0] sm:$0xff]
    %v1329 = vld [vmem:[%s4 + $0x5a8] sm:$0xff]
    %v1330 = vld [vmem:[%s4 + $0x5b0] sm:$0xff]
    %v1331 = vld [vmem:[%s4 + $0x5b8] sm:$0xff]
    %v1332 = vld [vmem:[%s4 + $0x5c0] sm:$0xff]
    %v1333 = vld [vmem:[%s4 + $0x5c8] sm:$0xff]
    %v1334 = vld [vmem:[%s4 + $0x5d0] sm:$0xff]
    %v1335 = vld [vmem:[%s4 + $0x5d8] sm:$0xff]
    %v1336 = vld [vmem:[%s4 + $0x5e0] sm:$0xff]
    %v1337 = vld [vmem:[%s4 + $0x5e8] sm:$0xff]
    %v1338 = vld [vmem:[%s4 + $0x5f0] sm:$0xff]
    %v1339 = vld [vmem:[%s4 + $0x5f8] sm:$0xff]
    %v1340 = vld [vmem:[%s4 + $0x600] sm:$0xff]
    %v1341 = vld [vmem:[%s4 + $0x608] sm:$0xff]
    %v1342 = vld [vmem:[%s4 + $0x610] sm:$0xff]
    %v1343 = vld [vmem:[%s4 + $0x618] sm:$0xff]
    %v1344 = vld [vmem:[%s4 + $0x620] sm:$0xff]
    %v1345 = vld [vmem:[%s4 + $0x628] sm:$0xff]
    %v1346 = vld [vmem:[%s4 + $0x630] sm:$0xff]
    %v1347 = vld [vmem:[%s4 + $0x638] sm:$0xff]
    %v1348 = vld [vmem:[%s4 + $0x640] sm:$0xff]
    %v1349 = vld [vmem:[%s4 + $0x648] sm:$0xff]
    %v1350 = vld [vmem:[%s4 + $0x650] sm:$0xff]
    %v1351 = vld [vmem:[%s4 + $0x658] sm:$0xff]
    %v1352 = vld [vmem:[%s4 + $0x660] sm:$0xff]
    %v1353 = vld [vmem:[%s4 + $0x668] sm:$0xff]
    %v1354 = vld [vmem:[%s4 + $0x670] sm:$0xff]
    %v1355 = vld [vmem:[%s4 + $0x678] sm:$0xff]
    %v1356 = vld [vmem:[%s4 + $0x680] sm:$0xff]
    %v1357 = vld [vmem:[%s4 + $0x688] sm:$0xff]
    %v1358 = vld [vmem:[%s4 + $0x690] sm:$0xff]
    %v1359 = vld [vmem:[%s4 + $0x698] sm:$0xff]
    %v1360 = vld [vmem:[%s4 + $0x6a0] sm:$0xff]
    %v1361 = vld [vmem:[%s4 + $0x6a8] sm:$0xff]
    %v1362 = vld [vmem:[%s4 + $0x6b0] sm:$0xff]
    %v1363 = vld [vmem:[%s4 + $0x6b8] sm:$0xff]
    %v1364 = vld [vmem:[%s4 + $0x6c0] sm:$0xff]
    %v1365 = vld [vmem:[%s4 + $0x6c8] sm:$0xff]
    %v1366 = vld [vmem:[%s4 + $0x6d0] sm:$0xff]
    %v1367 = vld [vmem:[%s4 + $0x6d8] sm:$0xff]
    %v1368 = vld [vmem:[%s4 + $0x6e0] sm:$0xff]
    %v1369 = vld [vmem:[%s4 + $0x6e8] sm:$0xff]
    %v1370 = vld [vmem:[%s4 + $0x6f0] sm:$0xff]
    %v1371 = vld [vmem:[%s4 + $0x6f8] sm:$0xff]
    %v1372 = vld [vmem:[%s4 + $0x700] sm:$0xff]
    %v1373 = vld [vmem:[%s4 + $0x708] sm:$0xff]
    %v1374 = vld [vmem:[%s4 + $0x710] sm:$0xff]
    %v1375 = vld [vmem:[%s4 + $0x718] sm:$0xff]
    %v1376 = vld [vmem:[%s4 + $0x720] sm:$0xff]
    %v1377 = vld [vmem:[%s4 + $0x728] sm:$0xff]
    %v1378 = vld [vmem:[%s4 + $0x730] sm:$0xff]
    %v1379 = vld [vmem:[%s4 + $0x738] sm:$0xff]
    %v1380 = vld [vmem:[%s4 + $0x740] sm:$0xff]
    %v1381 = vld [vmem:[%s4 + $0x748] sm:$0xff]
    %v1382 = vld [vmem:[%s4 + $0x750] sm:$0xff]
    %v1383 = vld [vmem:[%s4 + $0x758] sm:$0xff]
    %v1384 = vld [vmem:[%s4 + $0x760] sm:$0xff]
    %v1385 = vld [vmem:[%s4 + $0x768] sm:$0xff]
    %v1386 = vld [vmem:[%s4 + $0x770] sm:$0xff]
    %v1387 = vld [vmem:[%s4 + $0x778] sm:$0xff]
    %v1388 = vld [vmem:[%s4 + $0x780] sm:$0xff]
    %v1389 = vld [vmem:[%s4 + $0x788] sm:$0xff]
    %v1390 = vld [vmem:[%s4 + $0x790] sm:$0xff]
    %v1391 = vld [vmem:[%s4 + $0x798] sm:$0xff]
    %v1392 = vld [vmem:[%s4 + $0x7a0] sm:$0xff]
    %v1393 = vld [vmem:[%s4 + $0x7a8] sm:$0xff]
    %v1394 = vld [vmem:[%s4 + $0x7b0] sm:$0xff]
    %v1395 = vld [vmem:[%s4 + $0x7b8] sm:$0xff]
    %v1396 = vld [vmem:[%s4 + $0x7c0] sm:$0xff]
    %v1397 = vld [vmem:[%s4 + $0x7c8] sm:$0xff]
    %v1398 = vld [vmem:[%s4 + $0x7d0] sm:$0xff]
    %v1399 = vld [vmem:[%s4 + $0x7d8] sm:$0xff]
    %v1400 = vld [vmem:[%s4 + $0x7e0] sm:$0xff]
    %v1401 = vld [vmem:[%s4 + $0x7e8] sm:$0xff]
    %v1402 = vld [vmem:[%s4 + $0x7f0] sm:$0xff]
    %v1403 = vld [vmem:[%s4 + $0x7f8] sm:$0xff]
    %v1404 = vld [vmem:[%s4 + $0x800] sm:$0xff]
    %v1405 = vld [vmem:[%s4 + $0x808] sm:$0xff]
    %v1406 = vld [vmem:[%s4 + $0x810] sm:$0xff]
    %v1407 = vld [vmem:[%s4 + $0x818] sm:$0xff]
    %v1408 = vld [vmem:[%s4 + $0x820] sm:$0xff]
    %v1409 = vld [vmem:[%s4 + $0x828] sm:$0xff]
    %v1410 = vld [vmem:[%s4 + $0x830] sm:$0xff]
    %v1411 = vld [vmem:[%s4 + $0x838] sm:$0xff]
    %v1412 = vld [vmem:[%s4 + $0x840] sm:$0xff]
    %v1413 = vld [vmem:[%s4 + $0x848] sm:$0xff]
    %v1414 = vld [vmem:[%s4 + $0x850] sm:$0xff]
    %v1415 = vld [vmem:[%s4 + $0x858] sm:$0xff]
    %v1416 = vld [vmem:[%s4 + $0x860] sm:$0xff]
    %v1417 = vld [vmem:[%s4 + $0x868] sm:$0xff]
    %v1418 = vld [vmem:[%s4 + $0x870] sm:$0xff]
    %v1419 = vld [vmem:[%s4 + $0x878] sm:$0xff]
    %v1420 = vld [vmem:[%s4 + $0x880] sm:$0xff]
    %v1421 = vld [vmem:[%s4 + $0x888] sm:$0xff]
    %v1422 = vld [vmem:[%s4 + $0x890] sm:$0xff]
    %v1423 = vld [vmem:[%s4 + $0x898] sm:$0xff]
    %v1424 = vld [vmem:[%s4 + $0x8a0] sm:$0xff]
    %v1425 = vld [vmem:[%s4 + $0x8a8] sm:$0xff]
    %v1426 = vld [vmem:[%s4 + $0x8b0] sm:$0xff]
    %v1427 = vld [vmem:[%s4 + $0x8b8] sm:$0xff]
    %v1428 = vld [vmem:[%s4 + $0x8c0] sm:$0xff]
    %v1429 = vld [vmem:[%s4 + $0x8c8] sm:$0xff]
    %v1430 = vld [vmem:[%s4 + $0x8d0] sm:$0xff]
    %v1431 = vld [vmem:[%s4 + $0x8d8] sm:$0xff]
    %v1432 = vld [vmem:[%s4 + $0x8e0] sm:$0xff]
    %v1433 = vld [vmem:[%s4 + $0x8e8] sm:$0xff]
    %v1434 = vld [vmem:[%s4 + $0x8f0] sm:$0xff]
    %v1435 = vld [vmem:[%s4 + $0x8f8] sm:$0xff]
    %v1436 = vld [vmem:[%s4 + $0x900] sm:$0xff]
    %v1437 = vld [vmem:[%s4 + $0x908] sm:$0xff]
    %v1438 = vld [vmem:[%s4 + $0x910] sm:$0xff]
    %v1439 = vld [vmem:[%s4 + $0x918] sm:$0xff]
    %v1440 = vld [vmem:[%s4 + $0x920] sm:$0xff]
    %v1441 = vld [vmem:[%s4 + $0x928] sm:$0xff]
    %v1442 = vld [vmem:[%s4 + $0x930] sm:$0xff]
    %v1443 = vld [vmem:[%s4 + $0x938] sm:$0xff]
    %v1444 = vld [vmem:[%s4 + $0x940] sm:$0xff]
    %v1445 = vld [vmem:[%s4 + $0x948] sm:$0xff]
    %v1446 = vld [vmem:[%s4 + $0x950] sm:$0xff]
    %v1447 = vld [vmem:[%s4 + $0x958] sm:$0xff]
    %v1448 = vld [vmem:[%s4 + $0x960] sm:$0xff]
    %v1449 = vld [vmem:[%s4 + $0x968] sm:$0xff]
    %v1450 = vld [vmem:[%s4 + $0x970] sm:$0xff]
    %v1451 = vld [vmem:[%s4 + $0x978] sm:$0xff]
    %v1452 = vld [vmem:[%s4 + $0x980] sm:$0xff]
    %v1453 = vld [vmem:[%s4 + $0x988] sm:$0xff]
    %v1454 = vld [vmem:[%s4 + $0x990] sm:$0xff]
    %v1455 = vld [vmem:[%s4 + $0x998] sm:$0xff]
    %v1456 = vld [vmem:[%s4 + $0x9a0] sm:$0xff]
    %v1457 = vld [vmem:[%s4 + $0x9a8] sm:$0xff]
    %v1458 = vld [vmem:[%s4 + $0x9b0] sm:$0xff]
    %v1459 = vld [vmem:[%s4 + $0x9b8] sm:$0xff]
    %v1460 = vld [vmem:[%s4 + $0x9c0] sm:$0xff]
    %v1461 = vld [vmem:[%s4 + $0x9c8] sm:$0xff]
    %v1462 = vld [vmem:[%s4 + $0x9d0] sm:$0xff]
    %v1463 = vld [vmem:[%s4 + $0x9d8] sm:$0xff]
    %v1464 = vld [vmem:[%s4 + $0x9e0] sm:$0xff]
    %v1465 = vld [vmem:[%s4 + $0x9e8] sm:$0xff]
    %v1466 = vld [vmem:[%s4 + $0x9f0] sm:$0xff]
    %v1467 = vld [vmem:[%s4 + $0x9f8] sm:$0xff]
    %v1468 = vld [vmem:[%s4 + $0xa00] sm:$0xff]
    %v1469 = vld [vmem:[%s4 + $0xa08] sm:$0xff]
    %v1470 = vld [vmem:[%s4 + $0xa10] sm:$0xff]
    %v1471 = vld [vmem:[%s4 + $0xa18] sm:$0xff]
    %v1472 = vld [vmem:[%s4 + $0xa20] sm:$0xff]
    %v1473 = vld [vmem:[%s4 + $0xa28] sm:$0xff]
    %v1474 = vld [vmem:[%s4 + $0xa30] sm:$0xff]
    %v1475 = vld [vmem:[%s4 + $0xa38] sm:$0xff]
    %v1476 = vld [vmem:[%s4 + $0xa40] sm:$0xff]
    %v1477 = vld [vmem:[%s4 + $0xa48] sm:$0xff]
    %v1478 = vld [vmem:[%s4 + $0xa50] sm:$0xff]
    %v1479 = vld [vmem:[%s4 + $0xa58] sm:$0xff]
    %v1480 = vld [vmem:[%s4 + $0xa60] sm:$0xff]
    %v1481 = vld [vmem:[%s4 + $0xa68] sm:$0xff]
    %v1482 = vld [vmem:[%s4 + $0xa70] sm:$0xff]
    %v1483 = vld [vmem:[%s4 + $0xa78] sm:$0xff]
    %v1484 = vld [vmem:[%s4 + $0xa80] sm:$0xff]
    %v1485 = vld [vmem:[%s4 + $0xa88] sm:$0xff]
    %v1486 = vld [vmem:[%s4 + $0xa90] sm:$0xff]
    %v1487 = vld [vmem:[%s4 + $0xa98] sm:$0xff]
    %v1488 = vld [vmem:[%s4 + $0xaa0] sm:$0xff]
    %v1489 = vld [vmem:[%s4 + $0xaa8] sm:$0xff]
    %v1490 = vld [vmem:[%s4 + $0xab0] sm:$0xff]
    %v1491 = vld [vmem:[%s4 + $0xab8] sm:$0xff]
    %v1492 = vld [vmem:[%s4 + $0xac0] sm:$0xff]
    %v1493 = vld [vmem:[%s4 + $0xac8] sm:$0xff]
    %v1494 = vld [vmem:[%s4 + $0xad0] sm:$0xff]
    %v1495 = vld [vmem:[%s4 + $0xad8] sm:$0xff]
    %v1496 = vld [vmem:[%s4 + $0xae0] sm:$0xff]
    %v1497 = vld [vmem:[%s4 + $0xae8] sm:$0xff]
    %v1498 = vld [vmem:[%s4 + $0xaf0] sm:$0xff]
    %v1499 = vld [vmem:[%s4 + $0xaf8] sm:$0xff]
    %v1500 = vld [vmem:[%s4 + $0xb00] sm:$0xff]
    %v1501 = vld [vmem:[%s4 + $0xb08] sm:$0xff]
    %v1502 = vld [vmem:[%s4 + $0xb10] sm:$0xff]
    %v1503 = vld [vmem:[%s4 + $0xb18] sm:$0xff]
    %v1504 = vld [vmem:[%s4 + $0xb20] sm:$0xff]
    %v1505 = vld [vmem:[%s4 + $0xb28] sm:$0xff]
    %v1506 = vld [vmem:[%s4 + $0xb30] sm:$0xff]
    %v1507 = vld [vmem:[%s4 + $0xb38] sm:$0xff]
    %v1508 = vld [vmem:[%s4 + $0xb40] sm:$0xff]
    %v1509 = vld [vmem:[%s4 + $0xb48] sm:$0xff]
    %v1510 = vld [vmem:[%s4 + $0xb50] sm:$0xff]
    %v1511 = vld [vmem:[%s4 + $0xb58] sm:$0xff]
    %v1512 = vrot.slane %v1134, 4
    %v1513 = vadd.f32 %v1134, %v1512
    %v1514 = vrot.slane %v1513, 2
    %v1515 = vadd.f32 %v1513, %v1514
    %v1516 = vrot.slane %v1515, 1
    %v1517 = vadd.f32 %v1515, %v1516
    %v1518 = vrot.slane %v1174, 4
    %v1519 = vadd.f32 %v1174, %v1518
    %v1520 = vrot.slane %v1519, 2
    %v1521 = vadd.f32 %v1519, %v1520
    %v1522 = vrot.slane %v1521, 1
    %v1523 = vadd.f32 %v1521, %v1522
    %v1524 = vrot.slane %v1214, 4
    %v1525 = vadd.f32 %v1214, %v1524
    %v1526 = vrot.slane %v1525, 2
    %v1527 = vadd.f32 %v1525, %v1526
    %v1528 = vrot.slane %v1527, 1
    %v1529 = vadd.f32 %v1527, %v1528
    %v1530 = vrot.slane %v1254, 4
    %v1531 = vadd.f32 %v1254, %v1530
    %v1532 = vrot.slane %v1531, 2
    %v1533 = vadd.f32 %v1531, %v1532
    %v1534 = vrot.slane %v1533, 1
    %v1535 = vadd.f32 %v1533, %v1534
    %v1536 = vmul.f32 %v1517, 0.16666667
    %v1537 = vmul.f32 %v1523, 0.16666667
    %v1538 = vmul.f32 %v1529, 0.16666667
    %v1539 = vmul.f32 %v1535, 0.16666667
    %v1540 = vmul.f32 %v1134, %v1134
    %v1541 = vmul.f32 %v1174, %v1174
    %v1542 = vmul.f32 %v1214, %v1214
    %v1543 = vmul.f32 %v1254, %v1254
    %v1544 = vrot.slane %v1540, 4
    %v1545 = vadd.f32 %v1540, %v1544
    %v1546 = vrot.slane %v1545, 2
    %v1547 = vadd.f32 %v1545, %v1546
    %v1548 = vrot.slane %v1547, 1
    %v1549 = vadd.f32 %v1547, %v1548
    %v1550 = vrot.slane %v1541, 4
    %v1551 = vadd.f32 %v1541, %v1550
    %v1552 = vrot.slane %v1551, 2
    %v1553 = vadd.f32 %v1551, %v1552
    %v1554 = vrot.slane %v1553, 1
    %v1555 = vadd.f32 %v1553, %v1554
    %v1556 = vrot.slane %v1542, 4
    %v1557 = vadd.f32 %v1542, %v1556
    %v1558 = vrot.slane %v1557, 2
    %v1559 = vadd.f32 %v1557, %v1558
    %v1560 = vrot.slane %v1559, 1
    %v1561 = vadd.f32 %v1559, %v1560
    %v1562 = vrot.slane %v1543, 4
    %v1563 = vadd.f32 %v1543, %v1562
    %v1564 = vrot.slane %v1563, 2
    %v1565 = vadd.f32 %v1563, %v1564
    %v1566 = vrot.slane %v1565, 1
    %v1567 = vadd.f32 %v1565, %v1566
    %v1568 = vmul.f32 %v1549, 0.16666667
    %v1569 = vmul.f32 %v1555, 0.16666667
    %v1570 = vmul.f32 %v1561, 0.16666667
    %v1571 = vmul.f32 %v1567, 0.16666667
    %1572 = vmatpush.msra.mxu0 %v1316
    %1573 = vmatpush.msra.mxu0 %v1312
    %1574 = vmatpush.msra.mxu0 %v1308
    %1575 = vmatpush.msra.mxu0 %v1304
    %1576 = vmatpush.msra.mxu0 %v1300
    %1577 = vmatpush.msra.mxu0 %v1296
    %1578 = vmatpush.msra.mxu0 %v1292
    %1579 = vmatpush.msra.mxu0 %v1288
    %1580 = vmatpush.msra.mxu0 %v1284
    %1581 = vmatpush.msra.mxu0 %v1280
    %1582 = vmatpush.msra.mxu0 %v1276
    %1583 = vmatpush.msra.mxu0 %v1272
    %1584 = vmatpush.msra.mxu0 %v1268
    %1585 = vmatpush.msra.mxu0 %v1264
    %1586 = vmatpush.msra.mxu0 %v1260
    %1587 = vmatpush.msra.mxu0 %v1256
    %1588 = vmatmul.f32.gmra.mxu0 %v1536
    %v1589 = vpop.f32.mrf.mxu0
    %v1590 = vadd.f32 0.0, %v1589
    %1591 = vdwg.mxu0
    %1592 = vmatpush.msra.mxu0 %v1380
    %1593 = vmatpush.msra.mxu0 %v1376
    %1594 = vmatpush.msra.mxu0 %v1372
    %1595 = vmatpush.msra.mxu0 %v1368
    %1596 = vmatpush.msra.mxu0 %v1364
    %1597 = vmatpush.msra.mxu0 %v1360
    %1598 = vmatpush.msra.mxu0 %v1356
    %1599 = vmatpush.msra.mxu0 %v1352
    %1600 = vmatpush.msra.mxu0 %v1348
    %1601 = vmatpush.msra.mxu0 %v1344
    %1602 = vmatpush.msra.mxu0 %v1340
    %1603 = vmatpush.msra.mxu0 %v1336
    %1604 = vmatpush.msra.mxu0 %v1332
    %1605 = vmatpush.msra.mxu0 %v1328
    %1606 = vmatpush.msra.mxu0 %v1324
    %1607 = vmatpush.msra.mxu0 %v1320
    %1608 = vmatmul.f32.gmra.mxu0 %v1537
    %v1609 = vpop.f32.mrf.mxu0
    %v1610 = vadd.f32 %v1590, %v1609
    %1611 = vdwg.mxu0
    %1612 = vmatpush.msra.mxu0 %v1444
    %1613 = vmatpush.msra.mxu0 %v1440
    %1614 = vmatpush.msra.mxu0 %v1436
    %1615 = vmatpush.msra.mxu0 %v1432
    %1616 = vmatpush.msra.mxu0 %v1428
    %1617 = vmatpush.msra.mxu0 %v1424
    %1618 = vmatpush.msra.mxu0 %v1420
    %1619 = vmatpush.msra.mxu0 %v1416
    %1620 = vmatpush.msra.mxu0 %v1412
    %1621 = vmatpush.msra.mxu0 %v1408
    %1622 = vmatpush.msra.mxu0 %v1404
    %1623 = vmatpush.msra.mxu0 %v1400
    %1624 = vmatpush.msra.mxu0 %v1396
    %1625 = vmatpush.msra.mxu0 %v1392
    %1626 = vmatpush.msra.mxu0 %v1388
    %1627 = vmatpush.msra.mxu0 %v1384
    %1628 = vmatmul.f32.gmra.mxu0 %v1538
    %v1629 = vpop.f32.mrf.mxu0
    %v1630 = vadd.f32 %v1610, %v1629
    %1631 = vdwg.mxu0
    %1632 = vmatpush.msra.mxu0 %v1508
    %1633 = vmatpush.msra.mxu0 %v1504
    %1634 = vmatpush.msra.mxu0 %v1500
    %1635 = vmatpush.msra.mxu0 %v1496
    %1636 = vmatpush.msra.mxu0 %v1492
    %1637 = vmatpush.msra.mxu0 %v1488
    %1638 = vmatpush.msra.mxu0 %v1484
    %1639 = vmatpush.msra.mxu0 %v1480
    %1640 = vmatpush.msra.mxu0 %v1476
    %1641 = vmatpush.msra.mxu0 %v1472
    %1642 = vmatpush.msra.mxu0 %v1468
    %1643 = vmatpush.msra.mxu0 %v1464
    %1644 = vmatpush.msra.mxu0 %v1460
    %1645 = vmatpush.msra.mxu0 %v1456
    %1646 = vmatpush.msra.mxu0 %v1452
    %1647 = vmatpush.msra.mxu0 %v1448
    %1648 = vmatmul.f32.gmra.mxu0 %v1539
    %v1649 = vpop.f32.mrf.mxu0
    %v1650 = vadd.f32 %v1630, %v1649
    %1651 = vdwg.mxu0
    %1652 = vmatpush.msra.mxu0 %v1317
    %1653 = vmatpush.msra.mxu0 %v1313
    %1654 = vmatpush.msra.mxu0 %v1309
    %1655 = vmatpush.msra.mxu0 %v1305
    %1656 = vmatpush.msra.mxu0 %v1301
    %1657 = vmatpush.msra.mxu0 %v1297
    %1658 = vmatpush.msra.mxu0 %v1293
    %1659 = vmatpush.msra.mxu0 %v1289
    %1660 = vmatpush.msra.mxu0 %v1285
    %1661 = vmatpush.msra.mxu0 %v1281
    %1662 = vmatpush.msra.mxu0 %v1277
    %1663 = vmatpush.msra.mxu0 %v1273
    %1664 = vmatpush.msra.mxu0 %v1269
    %1665 = vmatpush.msra.mxu0 %v1265
    %1666 = vmatpush.msra.mxu0 %v1261
    %1667 = vmatpush.msra.mxu0 %v1257
    %1668 = vmatmul.f32.gmra.mxu0 %v1536
    %v1669 = vpop.f32.mrf.mxu0
    %v1670 = vadd.f32 0.0, %v1669
    %1671 = vdwg.mxu0
    %1672 = vmatpush.msra.mxu0 %v1381
    %1673 = vmatpush.msra.mxu0 %v1377
    %1674 = vmatpush.msra.mxu0 %v1373
    %1675 = vmatpush.msra.mxu0 %v1369
    %1676 = vmatpush.msra.mxu0 %v1365
    %1677 = vmatpush.msra.mxu0 %v1361
    %1678 = vmatpush.msra.mxu0 %v1357
    %1679 = vmatpush.msra.mxu0 %v1353
    %1680 = vmatpush.msra.mxu0 %v1349
    %1681 = vmatpush.msra.mxu0 %v1345
    %1682 = vmatpush.msra.mxu0 %v1341
    %1683 = vmatpush.msra.mxu0 %v1337
    %1684 = vmatpush.msra.mxu0 %v1333
    %1685 = vmatpush.msra.mxu0 %v1329
    %1686 = vmatpush.msra.mxu0 %v1325
    %1687 = vmatpush.msra.mxu0 %v1321
    %1688 = vmatmul.f32.gmra.mxu0 %v1537
    %v1689 = vpop.f32.mrf.mxu0
    %v1690 = vadd.f32 %v1670, %v1689
    %1691 = vdwg.mxu0
    %1692 = vmatpush.msra.mxu0 %v1445
    %1693 = vmatpush.msra.mxu0 %v1441
    %1694 = vmatpush.msra.mxu0 %v1437
    %1695 = vmatpush.msra.mxu0 %v1433
    %1696 = vmatpush.msra.mxu0 %v1429
    %1697 = vmatpush.msra.mxu0 %v1425
    %1698 = vmatpush.msra.mxu0 %v1421
    %1699 = vmatpush.msra.mxu0 %v1417
    %1700 = vmatpush.msra.mxu0 %v1413
    %1701 = vmatpush.msra.mxu0 %v1409
    %1702 = vmatpush.msra.mxu0 %v1405
    %1703 = vmatpush.msra.mxu0 %v1401
    %1704 = vmatpush.msra.mxu0 %v1397
    %1705 = vmatpush.msra.mxu0 %v1393
    %1706 = vmatpush.msra.mxu0 %v1389
    %1707 = vmatpush.msra.mxu0 %v1385
    %1708 = vmatmul.f32.gmra.mxu0 %v1538
    %v1709 = vpop.f32.mrf.mxu0
    %v1710 = vadd.f32 %v1690, %v1709
    %1711 = vdwg.mxu0
    %1712 = vmatpush.msra.mxu0 %v1509
    %1713 = vmatpush.msra.mxu0 %v1505
    %1714 = vmatpush.msra.mxu0 %v1501
    %1715 = vmatpush.msra.mxu0 %v1497
    %1716 = vmatpush.msra.mxu0 %v1493
    %1717 = vmatpush.msra.mxu0 %v1489
    %1718 = vmatpush.msra.mxu0 %v1485
    %1719 = vmatpush.msra.mxu0 %v1481
    %1720 = vmatpush.msra.mxu0 %v1477
    %1721 = vmatpush.msra.mxu0 %v1473
    %1722 = vmatpush.msra.mxu0 %v1469
    %1723 = vmatpush.msra.mxu0 %v1465
    %1724 = vmatpush.msra.mxu0 %v1461
    %1725 = vmatpush.msra.mxu0 %v1457
    %1726 = vmatpush.msra.mxu0 %v1453
    %1727 = vmatpush.msra.mxu0 %v1449
    %1728 = vmatmul.f32.gmra.mxu0 %v1539
    %v1729 = vpop.f32.mrf.mxu0
    %v1730 = vadd.f32 %v1710, %v1729
    %1731 = vdwg.mxu0
    %1732 = vmatpush.msra.mxu0 %v1318
    %1733 = vmatpush.msra.mxu0 %v1314
    %1734 = vmatpush.msra.mxu0 %v1310
    %1735 = vmatpush.msra.mxu0 %v1306
    %1736 = vmatpush.msra.mxu0 %v1302
    %1737 = vmatpush.msra.mxu0 %v1298
    %1738 = vmatpush.msra.mxu0 %v1294
    %1739 = vmatpush.msra.mxu0 %v1290
    %1740 = vmatpush.msra.mxu0 %v1286
    %1741 = vmatpush.msra.mxu0 %v1282
    %1742 = vmatpush.msra.mxu0 %v1278
    %1743 = vmatpush.msra.mxu0 %v1274
    %1744 = vmatpush.msra.mxu0 %v1270
    %1745 = vmatpush.msra.mxu0 %v1266
    %1746 = vmatpush.msra.mxu0 %v1262
    %1747 = vmatpush.msra.mxu0 %v1258
    %1748 = vmatmul.f32.gmra.mxu0 %v1536
    %v1749 = vpop.f32.mrf.mxu0
    %v1750 = vadd.f32 0.0, %v1749
    %1751 = vdwg.mxu0
    %1752 = vmatpush.msra.mxu0 %v1382
    %1753 = vmatpush.msra.mxu0 %v1378
    %1754 = vmatpush.msra.mxu0 %v1374
    %1755 = vmatpush.msra.mxu0 %v1370
    %1756 = vmatpush.msra.mxu0 %v1366
    %1757 = vmatpush.msra.mxu0 %v1362
    %1758 = vmatpush.msra.mxu0 %v1358
    %1759 = vmatpush.msra.mxu0 %v1354
    %1760 = vmatpush.msra.mxu0 %v1350
    %1761 = vmatpush.msra.mxu0 %v1346
    %1762 = vmatpush.msra.mxu0 %v1342
    %1763 = vmatpush.msra.mxu0 %v1338
    %1764 = vmatpush.msra.mxu0 %v1334
    %1765 = vmatpush.msra.mxu0 %v1330
    %1766 = vmatpush.msra.mxu0 %v1326
    %1767 = vmatpush.msra.mxu0 %v1322
    %1768 = vmatmul.f32.gmra.mxu0 %v1537
    %v1769 = vpop.f32.mrf.mxu0
    %v1770 = vadd.f32 %v1750, %v1769
    %1771 = vdwg.mxu0
    %1772 = vmatpush.msra.mxu0 %v1446
    %1773 = vmatpush.msra.mxu0 %v1442
    %1774 = vmatpush.msra.mxu0 %v1438
    %1775 = vmatpush.msra.mxu0 %v1434
    %1776 = vmatpush.msra.mxu0 %v1430
    %1777 = vmatpush.msra.mxu0 %v1426
    %1778 = vmatpush.msra.mxu0 %v1422
    %1779 = vmatpush.msra.mxu0 %v1418
    %1780 = vmatpush.msra.mxu0 %v1414
    %1781 = vmatpush.msra.mxu0 %v1410
    %1782 = vmatpush.msra.mxu0 %v1406
    %1783 = vmatpush.msra.mxu0 %v1402
    %1784 = vmatpush.msra.mxu0 %v1398
    %1785 = vmatpush.msra.mxu0 %v1394
    %1786 = vmatpush.msra.mxu0 %v1390
    %1787 = vmatpush.msra.mxu0 %v1386
    %1788 = vmatmul.f32.gmra.mxu0 %v1538
    %v1789 = vpop.f32.mrf.mxu0
    %v1790 = vadd.f32 %v1770, %v1789
    %1791 = vdwg.mxu0
    %1792 = vmatpush.msra.mxu0 %v1510
    %1793 = vmatpush.msra.mxu0 %v1506
    %1794 = vmatpush.msra.mxu0 %v1502
    %1795 = vmatpush.msra.mxu0 %v1498
    %1796 = vmatpush.msra.mxu0 %v1494
    %1797 = vmatpush.msra.mxu0 %v1490
    %1798 = vmatpush.msra.mxu0 %v1486
    %1799 = vmatpush.msra.mxu0 %v1482
    %1800 = vmatpush.msra.mxu0 %v1478
    %1801 = vmatpush.msra.mxu0 %v1474
    %1802 = vmatpush.msra.mxu0 %v1470
    %1803 = vmatpush.msra.mxu0 %v1466
    %1804 = vmatpush.msra.mxu0 %v1462
    %1805 = vmatpush.msra.mxu0 %v1458
    %1806 = vmatpush.msra.mxu0 %v1454
    %1807 = vmatpush.msra.mxu0 %v1450
    %1808 = vmatmul.f32.gmra.mxu0 %v1539
    %v1809 = vpop.f32.mrf.mxu0
    %v1810 = vadd.f32 %v1790, %v1809
    %1811 = vdwg.mxu0
    %1812 = vmatpush.msra.mxu0 %v1319
    %1813 = vmatpush.msra.mxu0 %v1315
    %1814 = vmatpush.msra.mxu0 %v1311
    %1815 = vmatpush.msra.mxu0 %v1307
    %1816 = vmatpush.msra.mxu0 %v1303
    %1817 = vmatpush.msra.mxu0 %v1299
    %1818 = vmatpush.msra.mxu0 %v1295
    %1819 = vmatpush.msra.mxu0 %v1291
    %1820 = vmatpush.msra.mxu0 %v1287
    %1821 = vmatpush.msra.mxu0 %v1283
    %1822 = vmatpush.msra.mxu0 %v1279
    %1823 = vmatpush.msra.mxu0 %v1275
    %1824 = vmatpush.msra.mxu0 %v1271
    %1825 = vmatpush.msra.mxu0 %v1267
    %1826 = vmatpush.msra.mxu0 %v1263
    %1827 = vmatpush.msra.mxu0 %v1259
    %1828 = vmatmul.f32.gmra.mxu0 %v1536
    %v1829 = vpop.f32.mrf.mxu0
    %v1830 = vadd.f32 0.0, %v1829
    %1831 = vdwg.mxu0
    %1832 = vmatpush.msra.mxu0 %v1383
    %1833 = vmatpush.msra.mxu0 %v1379
    %1834 = vmatpush.msra.mxu0 %v1375
    %1835 = vmatpush.msra.mxu0 %v1371
    %1836 = vmatpush.msra.mxu0 %v1367
    %1837 = vmatpush.msra.mxu0 %v1363
    %1838 = vmatpush.msra.mxu0 %v1359
    %1839 = vmatpush.msra.mxu0 %v1355
    %1840 = vmatpush.msra.mxu0 %v1351
    %1841 = vmatpush.msra.mxu0 %v1347
    %1842 = vmatpush.msra.mxu0 %v1343
    %1843 = vmatpush.msra.mxu0 %v1339
    %1844 = vmatpush.msra.mxu0 %v1335
    %1845 = vmatpush.msra.mxu0 %v1331
    %1846 = vmatpush.msra.mxu0 %v1327
    %1847 = vmatpush.msra.mxu0 %v1323
    %1848 = vmatmul.f32.gmra.mxu0 %v1537
    %v1849 = vpop.f32.mrf.mxu0
    %v1850 = vadd.f32 %v1830, %v1849
    %1851 = vdwg.mxu0
    %1852 = vmatpush.msra.mxu0 %v1447
    %1853 = vmatpush.msra.mxu0 %v1443
    %1854 = vmatpush.msra.mxu0 %v1439
    %1855 = vmatpush.msra.mxu0 %v1435
    %1856 = vmatpush.msra.mxu0 %v1431
    %1857 = vmatpush.msra.mxu0 %v1427
    %1858 = vmatpush.msra.mxu0 %v1423
    %1859 = vmatpush.msra.mxu0 %v1419
    %1860 = vmatpush.msra.mxu0 %v1415
    %1861 = vmatpush.msra.mxu0 %v1411
    %1862 = vmatpush.msra.mxu0 %v1407
    %1863 = vmatpush.msra.mxu0 %v1403
    %1864 = vmatpush.msra.mxu0 %v1399
    %1865 = vmatpush.msra.mxu0 %v1395
    %1866 = vmatpush.msra.mxu0 %v1391
    %1867 = vmatpush.msra.mxu0 %v1387
    %1868 = vmatmul.f32.gmra.mxu0 %v1538
    %v1869 = vpop.f32.mrf.mxu0
    %v1870 = vadd.f32 %v1850, %v1869
    %1871 = vdwg.mxu0
    %1872 = vmatpush.msra.mxu0 %v1511
    %1873 = vmatpush.msra.mxu0 %v1507
    %1874 = vmatpush.msra.mxu0 %v1503
    %1875 = vmatpush.msra.mxu0 %v1499
    %1876 = vmatpush.msra.mxu0 %v1495
    %1877 = vmatpush.msra.mxu0 %v1491
    %1878 = vmatpush.msra.mxu0 %v1487
    %1879 = vmatpush.msra.mxu0 %v1483
    %1880 = vmatpush.msra.mxu0 %v1479
    %1881 = vmatpush.msra.mxu0 %v1475
    %1882 = vmatpush.msra.mxu0 %v1471
    %1883 = vmatpush.msra.mxu0 %v1467
    %1884 = vmatpush.msra.mxu0 %v1463
    %1885 = vmatpush.msra.mxu0 %v1459
    %1886 = vmatpush.msra.mxu0 %v1455
    %1887 = vmatpush.msra.mxu0 %v1451
    %1888 = vmatmul.f32.gmra.mxu0 %v1539
    %v1889 = vpop.f32.mrf.mxu0
    %v1890 = vadd.f32 %v1870, %v1889
    %1891 = vdwg.mxu0
    %1892 = vmatpush.msra.mxu0 %v1316
    %1893 = vmatpush.msra.mxu0 %v1312
    %1894 = vmatpush.msra.mxu0 %v1308
    %1895 = vmatpush.msra.mxu0 %v1304
    %1896 = vmatpush.msra.mxu0 %v1300
    %1897 = vmatpush.msra.mxu0 %v1296
    %1898 = vmatpush.msra.mxu0 %v1292
    %1899 = vmatpush.msra.mxu0 %v1288
    %1900 = vmatpush.msra.mxu0 %v1284
    %1901 = vmatpush.msra.mxu0 %v1280
    %1902 = vmatpush.msra.mxu0 %v1276
    %1903 = vmatpush.msra.mxu0 %v1272
    %1904 = vmatpush.msra.mxu0 %v1268
    %1905 = vmatpush.msra.mxu0 %v1264
    %1906 = vmatpush.msra.mxu0 %v1260
    %1907 = vmatpush.msra.mxu0 %v1256
    %1908 = vmatmul.f32.gmra.mxu0 %v1568
    %v1909 = vpop.f32.mrf.mxu0
    %v1910 = vadd.f32 0.0, %v1909
    %1911 = vdwg.mxu0
    %1912 = vmatpush.msra.mxu0 %v1380
    %1913 = vmatpush.msra.mxu0 %v1376
    %1914 = vmatpush.msra.mxu0 %v1372
    %1915 = vmatpush.msra.mxu0 %v1368
    %1916 = vmatpush.msra.mxu0 %v1364
    %1917 = vmatpush.msra.mxu0 %v1360
    %1918 = vmatpush.msra.mxu0 %v1356
    %1919 = vmatpush.msra.mxu0 %v1352
    %1920 = vmatpush.msra.mxu0 %v1348
    %1921 = vmatpush.msra.mxu0 %v1344
    %1922 = vmatpush.msra.mxu0 %v1340
    %1923 = vmatpush.msra.mxu0 %v1336
    %1924 = vmatpush.msra.mxu0 %v1332
    %1925 = vmatpush.msra.mxu0 %v1328
    %1926 = vmatpush.msra.mxu0 %v1324
    %1927 = vmatpush.msra.mxu0 %v1320
    %1928 = vmatmul.f32.gmra.mxu0 %v1569
    %v1929 = vpop.f32.mrf.mxu0
    %v1930 = vadd.f32 %v1910, %v1929
    %1931 = vdwg.mxu0
    %1932 = vmatpush.msra.mxu0 %v1444
    %1933 = vmatpush.msra.mxu0 %v1440
    %1934 = vmatpush.msra.mxu0 %v1436
    %1935 = vmatpush.msra.mxu0 %v1432
    %1936 = vmatpush.msra.mxu0 %v1428
    %1937 = vmatpush.msra.mxu0 %v1424
    %1938 = vmatpush.msra.mxu0 %v1420
    %1939 = vmatpush.msra.mxu0 %v1416
    %1940 = vmatpush.msra.mxu0 %v1412
    %1941 = vmatpush.msra.mxu0 %v1408
    %1942 = vmatpush.msra.mxu0 %v1404
    %1943 = vmatpush.msra.mxu0 %v1400
    %1944 = vmatpush.msra.mxu0 %v1396
    %1945 = vmatpush.msra.mxu0 %v1392
    %1946 = vmatpush.msra.mxu0 %v1388
    %1947 = vmatpush.msra.mxu0 %v1384
    %1948 = vmatmul.f32.gmra.mxu0 %v1570
    %v1949 = vpop.f32.mrf.mxu0
    %v1950 = vadd.f32 %v1930, %v1949
    %1951 = vdwg.mxu0
    %1952 = vmatpush.msra.mxu0 %v1508
    %1953 = vmatpush.msra.mxu0 %v1504
    %1954 = vmatpush.msra.mxu0 %v1500
    %1955 = vmatpush.msra.mxu0 %v1496
    %1956 = vmatpush.msra.mxu0 %v1492
    %1957 = vmatpush.msra.mxu0 %v1488
    %1958 = vmatpush.msra.mxu0 %v1484
    %1959 = vmatpush.msra.mxu0 %v1480
    %1960 = vmatpush.msra.mxu0 %v1476
    %1961 = vmatpush.msra.mxu0 %v1472
    %1962 = vmatpush.msra.mxu0 %v1468
    %1963 = vmatpush.msra.mxu0 %v1464
    %1964 = vmatpush.msra.mxu0 %v1460
    %1965 = vmatpush.msra.mxu0 %v1456
    %1966 = vmatpush.msra.mxu0 %v1452
    %1967 = vmatpush.msra.mxu0 %v1448
    %1968 = vmatmul.f32.gmra.mxu0 %v1571
    %v1969 = vpop.f32.mrf.mxu0
    %v1970 = vadd.f32 %v1950, %v1969
    %1971 = vdwg.mxu0
    %1972 = vmatpush.msra.mxu0 %v1317
    %1973 = vmatpush.msra.mxu0 %v1313
    %1974 = vmatpush.msra.mxu0 %v1309
    %1975 = vmatpush.msra.mxu0 %v1305
    %1976 = vmatpush.msra.mxu0 %v1301
    %1977 = vmatpush.msra.mxu0 %v1297
    %1978 = vmatpush.msra.mxu0 %v1293
    %1979 = vmatpush.msra.mxu0 %v1289
    %1980 = vmatpush.msra.mxu0 %v1285
    %1981 = vmatpush.msra.mxu0 %v1281
    %1982 = vmatpush.msra.mxu0 %v1277
    %1983 = vmatpush.msra.mxu0 %v1273
    %1984 = vmatpush.msra.mxu0 %v1269
    %1985 = vmatpush.msra.mxu0 %v1265
    %1986 = vmatpush.msra.mxu0 %v1261
    %1987 = vmatpush.msra.mxu0 %v1257
    %1988 = vmatmul.f32.gmra.mxu0 %v1568
    %v1989 = vpop.f32.mrf.mxu0
    %v1990 = vadd.f32 0.0, %v1989
    %1991 = vdwg.mxu0
    %1992 = vmatpush.msra.mxu0 %v1381
    %1993 = vmatpush.msra.mxu0 %v1377
    %1994 = vmatpush.msra.mxu0 %v1373
    %1995 = vmatpush.msra.mxu0 %v1369
    %1996 = vmatpush.msra.mxu0 %v1365
    %1997 = vmatpush.msra.mxu0 %v1361
    %1998 = vmatpush.msra.mxu0 %v1357
    %1999 = vmatpush.msra.mxu0 %v1353
    %2000 = vmatpush.msra.mxu0 %v1349
    %2001 = vmatpush.msra.mxu0 %v1345
    %2002 = vmatpush.msra.mxu0 %v1341
    %2003 = vmatpush.msra.mxu0 %v1337
    %2004 = vmatpush.msra.mxu0 %v1333
    %2005 = vmatpush.msra.mxu0 %v1329
    %2006 = vmatpush.msra.mxu0 %v1325
    %2007 = vmatpush.msra.mxu0 %v1321
    %2008 = vmatmul.f32.gmra.mxu0 %v1569
    %v2009 = vpop.f32.mrf.mxu0
    %v2010 = vadd.f32 %v1990, %v2009
    %2011 = vdwg.mxu0
    %2012 = vmatpush.msra.mxu0 %v1445
    %2013 = vmatpush.msra.mxu0 %v1441
    %2014 = vmatpush.msra.mxu0 %v1437
    %2015 = vmatpush.msra.mxu0 %v1433
    %2016 = vmatpush.msra.mxu0 %v1429
    %2017 = vmatpush.msra.mxu0 %v1425
    %2018 = vmatpush.msra.mxu0 %v1421
    %2019 = vmatpush.msra.mxu0 %v1417
    %2020 = vmatpush.msra.mxu0 %v1413
    %2021 = vmatpush.msra.mxu0 %v1409
    %2022 = vmatpush.msra.mxu0 %v1405
    %2023 = vmatpush.msra.mxu0 %v1401
    %2024 = vmatpush.msra.mxu0 %v1397
    %2025 = vmatpush.msra.mxu0 %v1393
    %2026 = vmatpush.msra.mxu0 %v1389
    %2027 = vmatpush.msra.mxu0 %v1385
    %2028 = vmatmul.f32.gmra.mxu0 %v1570
    %v2029 = vpop.f32.mrf.mxu0
    %v2030 = vadd.f32 %v2010, %v2029
    %2031 = vdwg.mxu0
    %2032 = vmatpush.msra.mxu0 %v1509
    %2033 = vmatpush.msra.mxu0 %v1505
    %2034 = vmatpush.msra.mxu0 %v1501
    %2035 = vmatpush.msra.mxu0 %v1497
    %2036 = vmatpush.msra.mxu0 %v1493
    %2037 = vmatpush.msra.mxu0 %v1489
    %2038 = vmatpush.msra.mxu0 %v1485
    %2039 = vmatpush.msra.mxu0 %v1481
    %2040 = vmatpush.msra.mxu0 %v1477
    %2041 = vmatpush.msra.mxu0 %v1473
    %2042 = vmatpush.msra.mxu0 %v1469
    %2043 = vmatpush.msra.mxu0 %v1465
    %2044 = vmatpush.msra.mxu0 %v1461
    %2045 = vmatpush.msra.mxu0 %v1457
    %2046 = vmatpush.msra.mxu0 %v1453
    %2047 = vmatpush.msra.mxu0 %v1449
    %2048 = vmatmul.f32.gmra.mxu0 %v1571
    %v2049 = vpop.f32.mrf.mxu0
    %v2050 = vadd.f32 %v2030, %v2049
    %2051 = vdwg.mxu0
    %2052 = vmatpush.msra.mxu0 %v1318
    %2053 = vmatpush.msra.mxu0 %v1314
    %2054 = vmatpush.msra.mxu0 %v1310
    %2055 = vmatpush.msra.mxu0 %v1306
    %2056 = vmatpush.msra.mxu0 %v1302
    %2057 = vmatpush.msra.mxu0 %v1298
    %2058 = vmatpush.msra.mxu0 %v1294
    %2059 = vmatpush.msra.mxu0 %v1290
    %2060 = vmatpush.msra.mxu0 %v1286
    %2061 = vmatpush.msra.mxu0 %v1282
    %2062 = vmatpush.msra.mxu0 %v1278
    %2063 = vmatpush.msra.mxu0 %v1274
    %2064 = vmatpush.msra.mxu0 %v1270
    %2065 = vmatpush.msra.mxu0 %v1266
    %2066 = vmatpush.msra.mxu0 %v1262
    %2067 = vmatpush.msra.mxu0 %v1258
    %2068 = vmatmul.f32.gmra.mxu0 %v1568
    %v2069 = vpop.f32.mrf.mxu0
    %v2070 = vadd.f32 0.0, %v2069
    %2071 = vdwg.mxu0
    %2072 = vmatpush.msra.mxu0 %v1382
    %2073 = vmatpush.msra.mxu0 %v1378
    %2074 = vmatpush.msra.mxu0 %v1374
    %2075 = vmatpush.msra.mxu0 %v1370
    %2076 = vmatpush.msra.mxu0 %v1366
    %2077 = vmatpush.msra.mxu0 %v1362
    %2078 = vmatpush.msra.mxu0 %v1358
    %2079 = vmatpush.msra.mxu0 %v1354
    %2080 = vmatpush.msra.mxu0 %v1350
    %2081 = vmatpush.msra.mxu0 %v1346
    %2082 = vmatpush.msra.mxu0 %v1342
    %2083 = vmatpush.msra.mxu0 %v1338
    %2084 = vmatpush.msra.mxu0 %v1334
    %2085 = vmatpush.msra.mxu0 %v1330
    %2086 = vmatpush.msra.mxu0 %v1326
    %2087 = vmatpush.msra.mxu0 %v1322
    %2088 = vmatmul.f32.gmra.mxu0 %v1569
    %v2089 = vpop.f32.mrf.mxu0
    %v2090 = vadd.f32 %v2070, %v2089
    %2091 = vdwg.mxu0
    %2092 = vmatpush.msra.mxu0 %v1446
    %2093 = vmatpush.msra.mxu0 %v1442
    %2094 = vmatpush.msra.mxu0 %v1438
    %2095 = vmatpush.msra.mxu0 %v1434
    %2096 = vmatpush.msra.mxu0 %v1430
    %2097 = vmatpush.msra.mxu0 %v1426
    %2098 = vmatpush.msra.mxu0 %v1422
    %2099 = vmatpush.msra.mxu0 %v1418
    %2100 = vmatpush.msra.mxu0 %v1414
    %2101 = vmatpush.msra.mxu0 %v1410
    %2102 = vmatpush.msra.mxu0 %v1406
    %2103 = vmatpush.msra.mxu0 %v1402
    %2104 = vmatpush.msra.mxu0 %v1398
    %2105 = vmatpush.msra.mxu0 %v1394
    %2106 = vmatpush.msra.mxu0 %v1390
    %2107 = vmatpush.msra.mxu0 %v1386
    %2108 = vmatmul.f32.gmra.mxu0 %v1570
    %v2109 = vpop.f32.mrf.mxu0
    %v2110 = vadd.f32 %v2090, %v2109
    %2111 = vdwg.mxu0
    %2112 = vmatpush.msra.mxu0 %v1510
    %2113 = vmatpush.msra.mxu0 %v1506
    %2114 = vmatpush.msra.mxu0 %v1502
    %2115 = vmatpush.msra.mxu0 %v1498
    %2116 = vmatpush.msra.mxu0 %v1494
    %2117 = vmatpush.msra.mxu0 %v1490
    %2118 = vmatpush.msra.mxu0 %v1486
    %2119 = vmatpush.msra.mxu0 %v1482
    %2120 = vmatpush.msra.mxu0 %v1478
    %2121 = vmatpush.msra.mxu0 %v1474
    %2122 = vmatpush.msra.mxu0 %v1470
    %2123 = vmatpush.msra.mxu0 %v1466
    %2124 = vmatpush.msra.mxu0 %v1462
    %2125 = vmatpush.msra.mxu0 %v1458
    %2126 = vmatpush.msra.mxu0 %v1454
    %2127 = vmatpush.msra.mxu0 %v1450
    %2128 = vmatmul.f32.gmra.mxu0 %v1571
    %v2129 = vpop.f32.mrf.mxu0
    %v2130 = vadd.f32 %v2110, %v2129
    %2131 = vdwg.mxu0
    %2132 = vmatpush.msra.mxu0 %v1319
    %2133 = vmatpush.msra.mxu0 %v1315
    %2134 = vmatpush.msra.mxu0 %v1311
    %2135 = vmatpush.msra.mxu0 %v1307
    %2136 = vmatpush.msra.mxu0 %v1303
    %2137 = vmatpush.msra.mxu0 %v1299
    %2138 = vmatpush.msra.mxu0 %v1295
    %2139 = vmatpush.msra.mxu0 %v1291
    %2140 = vmatpush.msra.mxu0 %v1287
    %2141 = vmatpush.msra.mxu0 %v1283
    %2142 = vmatpush.msra.mxu0 %v1279
    %2143 = vmatpush.msra.mxu0 %v1275
    %2144 = vmatpush.msra.mxu0 %v1271
    %2145 = vmatpush.msra.mxu0 %v1267
    %2146 = vmatpush.msra.mxu0 %v1263
    %2147 = vmatpush.msra.mxu0 %v1259
    %2148 = vmatmul.f32.gmra.mxu0 %v1568
    %v2149 = vpop.f32.mrf.mxu0
    %v2150 = vadd.f32 0.0, %v2149
    %2151 = vdwg.mxu0
    %2152 = vmatpush.msra.mxu0 %v1383
    %2153 = vmatpush.msra.mxu0 %v1379
    %2154 = vmatpush.msra.mxu0 %v1375
    %2155 = vmatpush.msra.mxu0 %v1371
    %2156 = vmatpush.msra.mxu0 %v1367
    %2157 = vmatpush.msra.mxu0 %v1363
    %2158 = vmatpush.msra.mxu0 %v1359
    %2159 = vmatpush.msra.mxu0 %v1355
    %2160 = vmatpush.msra.mxu0 %v1351
    %2161 = vmatpush.msra.mxu0 %v1347
    %2162 = vmatpush.msra.mxu0 %v1343
    %2163 = vmatpush.msra.mxu0 %v1339
    %2164 = vmatpush.msra.mxu0 %v1335
    %2165 = vmatpush.msra.mxu0 %v1331
    %2166 = vmatpush.msra.mxu0 %v1327
    %2167 = vmatpush.msra.mxu0 %v1323
    %2168 = vmatmul.f32.gmra.mxu0 %v1569
    %v2169 = vpop.f32.mrf.mxu0
    %v2170 = vadd.f32 %v2150, %v2169
    %2171 = vdwg.mxu0
    %2172 = vmatpush.msra.mxu0 %v1447
    %2173 = vmatpush.msra.mxu0 %v1443
    %2174 = vmatpush.msra.mxu0 %v1439
    %2175 = vmatpush.msra.mxu0 %v1435
    %2176 = vmatpush.msra.mxu0 %v1431
    %2177 = vmatpush.msra.mxu0 %v1427
    %2178 = vmatpush.msra.mxu0 %v1423
    %2179 = vmatpush.msra.mxu0 %v1419
    %2180 = vmatpush.msra.mxu0 %v1415
    %2181 = vmatpush.msra.mxu0 %v1411
    %2182 = vmatpush.msra.mxu0 %v1407
    %2183 = vmatpush.msra.mxu0 %v1403
    %2184 = vmatpush.msra.mxu0 %v1399
    %2185 = vmatpush.msra.mxu0 %v1395
    %2186 = vmatpush.msra.mxu0 %v1391
    %2187 = vmatpush.msra.mxu0 %v1387
    %2188 = vmatmul.f32.gmra.mxu0 %v1570
    %v2189 = vpop.f32.mrf.mxu0
    %v2190 = vadd.f32 %v2170, %v2189
    %2191 = vdwg.mxu0
    %2192 = vmatpush.msra.mxu0 %v1511
    %2193 = vmatpush.msra.mxu0 %v1507
    %2194 = vmatpush.msra.mxu0 %v1503
    %2195 = vmatpush.msra.mxu0 %v1499
    %2196 = vmatpush.msra.mxu0 %v1495
    %2197 = vmatpush.msra.mxu0 %v1491
    %2198 = vmatpush.msra.mxu0 %v1487
    %2199 = vmatpush.msra.mxu0 %v1483
    %2200 = vmatpush.msra.mxu0 %v1479
    %2201 = vmatpush.msra.mxu0 %v1475
    %2202 = vmatpush.msra.mxu0 %v1471
    %2203 = vmatpush.msra.mxu0 %v1467
    %2204 = vmatpush.msra.mxu0 %v1463
    %2205 = vmatpush.msra.mxu0 %v1459
    %2206 = vmatpush.msra.mxu0 %v1455
    %2207 = vmatpush.msra.mxu0 %v1451
    %2208 = vmatmul.f32.gmra.mxu0 %v1571
    %v2209 = vpop.f32.mrf.mxu0
    %v2210 = vadd.f32 %v2190, %v2209
    %2211 = vdwg.mxu0
    %v2212 = vmul.f32 %v1650, %v1650
    %v2213 = vmul.f32 %v1730, %v1730
    %v2214 = vmul.f32 %v1810, %v1810
    %v2215 = vmul.f32 %v1890, %v1890
    %v2216 = vsub.f32 %v1970, %v2212
    %v2217 = vsub.f32 %v2050, %v2213
    %v2218 = vsub.f32 %v2130, %v2214
    %v2219 = vsub.f32 %v2210, %v2215
    %v2220 = vmax.f32 %v2216, 0.0
    %v2221 = vmax.f32 %v2217, 0.0
    %v2222 = vmax.f32 %v2218, 0.0
    %v2223 = vmax.f32 %v2219, 0.0
    %v2224 = vperm.slane %v1650, 0
    %v2225 = vperm.slane %v1730, 0
    %v2226 = vperm.slane %v1810, 0
    %v2227 = vperm.slane %v1890, 0
    %v2228 = vsub.f32 %v1134, %v2224
    %v2229 = vsub.f32 %v1174, %v2225
    %v2230 = vsub.f32 %v1214, %v2226
    %v2231 = vsub.f32 %v1254, %v2227
    %v2232 = vadd.f32 %v2220, 1e-05
    %v2233 = vadd.f32 %v2221, 1e-05
    %v2234 = vadd.f32 %v2222, 1e-05
    %v2235 = vadd.f32 %v2223, 1e-05
    %v2236 = vrsqrt.pop %v2232
    %v2237 = vmul.f32 %v2236, %v2232
    %v2238 = vmul.f32 %v2237, %v2236
    %v2239 = vmul.f32 0.5, %v2238
    %v2240 = vsub.f32 1.5, %v2239
    %v2241 = vmul.f32 %v2236, %v2240
    %vm2242 = vweird.f32 %v2232
    %vm2243 = vweird.f32 %v2236
    %vm2244 = vmor %vm2242, %vm2243
    %v2245 = vsel %vm2244, %v2236, %v2241
    %v2246 = vrsqrt.pop %v2233
    %v2247 = vmul.f32 %v2246, %v2233
    %v2248 = vmul.f32 %v2247, %v2246
    %v2249 = vmul.f32 0.5, %v2248
    %v2250 = vsub.f32 1.5, %v2249
    %v2251 = vmul.f32 %v2246, %v2250
    %vm2252 = vweird.f32 %v2233
    %vm2253 = vweird.f32 %v2246
    %vm2254 = vmor %vm2252, %vm2253
    %v2255 = vsel %vm2254, %v2246, %v2251
    %v2256 = vrsqrt.pop %v2234
    %v2257 = vmul.f32 %v2256, %v2234
    %v2258 = vmul.f32 %v2257, %v2256
    %v2259 = vmul.f32 0.5, %v2258
    %v2260 = vsub.f32 1.5, %v2259
    %v2261 = vmul.f32 %v2256, %v2260
    %vm2262 = vweird.f32 %v2234
    %vm2263 = vweird.f32 %v2256
    %vm2264 = vmor %vm2262, %vm2263
    %v2265 = vsel %vm2264, %v2256, %v2261
    %v2266 = vrsqrt.pop %v2235
    %v2267 = vmul.f32 %v2266, %v2235
    %v2268 = vmul.f32 %v2267, %v2266
    %v2269 = vmul.f32 0.5, %v2268
    %v2270 = vsub.f32 1.5, %v2269
    %v2271 = vmul.f32 %v2266, %v2270
    %vm2272 = vweird.f32 %v2235
    %vm2273 = vweird.f32 %v2266
    %vm2274 = vmor %vm2272, %vm2273
    %v2275 = vsel %vm2274, %v2266, %v2271
    %v2276 = vperm.slane %v2245, 0
    %v2277 = vperm.slane %v2255, 0
    %v2278 = vperm.slane %v2265, 0
    %v2279 = vperm.slane %v2275, 0
    %v2280 = vmul.f32 %v2228, %v2276
    %v2281 = vmul.f32 %v2229, %v2277
    %v2282 = vmul.f32 %v2230, %v2278
    %v2283 = vmul.f32 %v2231, %v2279
    %v2284 = vperm.slane %v50, 0
    %v2285 = vperm.slane %v51, 0
    %v2286 = vperm.slane %v52, 0
    %v2287 = vperm.slane %v53, 0
    %v2288 = vmul.f32 %v2280, %v2284
    %v2289 = vmul.f32 %v2281, %v2285
    %v2290 = vmul.f32 %v2282, %v2286
    %v2291 = vmul.f32 %v2283, %v2287
    %v2292 = vperm.slane %v50, 1
    %v2293 = vperm.slane %v51, 1
    %v2294 = vperm.slane %v52, 1
    %v2295 = vperm.slane %v53, 1
    %v2296 = vadd.f32 %v2288, %v2292
    %v2297 = vadd.f32 %v2289, %v2293
    %v2298 = vadd.f32 %v2290, %v2294
    %v2299 = vadd.f32 %v2291, %v2295
    %v2300 = vmax.f32 %v2296, 0.0
    %v2301 = vmax.f32 %v2297, 0.0
    %v2302 = vmax.f32 %v2298, 0.0
    %v2303 = vmax.f32 %v2299, 0.0
    %v2304 = vsel %vm49, 1, 0
    %vm2305 = vcmp.eq.s32.totalorder %v2304, 1
    %v2306 = vsel %vm2305, %v2300, 0.0
    %v2307 = vsel %vm2305, %v2301, 0.0
    %v2308 = vsel %vm2305, %v2302, 0.0
    %v2309 = vsel %vm2305, %v2303, 0.0
    %v2310 = vld [vmem:[%s3 + $0xc0] sm:$0xff]
    %v2311 = vld [vmem:[%s3 + $0xc8] sm:$0xff]
    %v2312 = vld [vmem:[%s3 + $0xd0] sm:$0xff]
    %v2313 = vld [vmem:[%s3 + $0xd8] sm:$0xff]
    %v2314 = vld [vmem:[%s3 + $0xe0] sm:$0xff]
    %v2315 = vld [vmem:[%s3 + $0xe8] sm:$0xff]
    %v2316 = vld [vmem:[%s3 + $0xf0] sm:$0xff]
    %v2317 = vld [vmem:[%s3 + $0xf8] sm:$0xff]
    %v2318 = vld [vmem:[%s3 + $0x100] sm:$0xff]
    %v2319 = vld [vmem:[%s3 + $0x108] sm:$0xff]
    %v2320 = vld [vmem:[%s3 + $0x110] sm:$0xff]
    %v2321 = vld [vmem:[%s3 + $0x118] sm:$0xff]
    %v2322 = vld [vmem:[%s3 + $0x120] sm:$0xff]
    %v2323 = vld [vmem:[%s3 + $0x128] sm:$0xff]
    %v2324 = vld [vmem:[%s3 + $0x130] sm:$0xff]
    %v2325 = vld [vmem:[%s3 + $0x138] sm:$0xff]
    %v2326 = vld [vmem:[%s3 + $0x140] sm:$0xff]
    %v2327 = vld [vmem:[%s3 + $0x148] sm:$0xff]
    %v2328 = vld [vmem:[%s3 + $0x150] sm:$0xff]
    %v2329 = vld [vmem:[%s3 + $0x158] sm:$0xff]
    %v2330 = vld [vmem:[%s3 + $0x160] sm:$0xff]
    %v2331 = vld [vmem:[%s3 + $0x168] sm:$0xff]
    %v2332 = vld [vmem:[%s3 + $0x170] sm:$0xff]
    %v2333 = vld [vmem:[%s3 + $0x178] sm:$0xff]
    %v2334 = vld [vmem:[%s3 + $0x180] sm:$0xff]
    %v2335 = vld [vmem:[%s3 + $0x188] sm:$0xff]
    %v2336 = vld [vmem:[%s3 + $0x190] sm:$0xff]
    %v2337 = vld [vmem:[%s3 + $0x198] sm:$0xff]
    %v2338 = vld [vmem:[%s3 + $0x1a0] sm:$0xff]
    %v2339 = vld [vmem:[%s3 + $0x1a8] sm:$0xff]
    %v2340 = vld [vmem:[%s3 + $0x1b0] sm:$0xff]
    %v2341 = vld [vmem:[%s3 + $0x1b8] sm:$0xff]
    %v2342 = vld [vmem:[%s3 + $0x1c0] sm:$0xff]
    %v2343 = vld [vmem:[%s3 + $0x1c8] sm:$0xff]
    %v2344 = vld [vmem:[%s3 + $0x1d0] sm:$0xff]
    %v2345 = vld [vmem:[%s3 + $0x1d8] sm:$0xff]
    %v2346 = vld [vmem:[%s3 + $0x1e0] sm:$0xff]
    %v2347 = vld [vmem:[%s3 + $0x1e8] sm:$0xff]
    %v2348 = vld [vmem:[%s3 + $0x1f0] sm:$0xff]
    %v2349 = vld [vmem:[%s3 + $0x1f8] sm:$0xff]
    %v2350 = vld [vmem:[%s3 + $0x200] sm:$0xff]
    %v2351 = vld [vmem:[%s3 + $0x208] sm:$0xff]
    %v2352 = vld [vmem:[%s3 + $0x210] sm:$0xff]
    %v2353 = vld [vmem:[%s3 + $0x218] sm:$0xff]
    %v2354 = vld [vmem:[%s3 + $0x220] sm:$0xff]
    %v2355 = vld [vmem:[%s3 + $0x228] sm:$0xff]
    %v2356 = vld [vmem:[%s3 + $0x230] sm:$0xff]
    %v2357 = vld [vmem:[%s3 + $0x238] sm:$0xff]
    %v2358 = vld [vmem:[%s3 + $0x240] sm:$0xff]
    %v2359 = vld [vmem:[%s3 + $0x248] sm:$0xff]
    %v2360 = vld [vmem:[%s3 + $0x250] sm:$0xff]
    %v2361 = vld [vmem:[%s3 + $0x258] sm:$0xff]
    %v2362 = vld [vmem:[%s3 + $0x260] sm:$0xff]
    %v2363 = vld [vmem:[%s3 + $0x268] sm:$0xff]
    %v2364 = vld [vmem:[%s3 + $0x270] sm:$0xff]
    %v2365 = vld [vmem:[%s3 + $0x278] sm:$0xff]
    %v2366 = vld [vmem:[%s3 + $0x280] sm:$0xff]
    %v2367 = vld [vmem:[%s3 + $0x288] sm:$0xff]
    %v2368 = vld [vmem:[%s3 + $0x290] sm:$0xff]
    %v2369 = vld [vmem:[%s3 + $0x298] sm:$0xff]
    %v2370 = vld [vmem:[%s3 + $0x2a0] sm:$0xff]
    %v2371 = vld [vmem:[%s3 + $0x2a8] sm:$0xff]
    %v2372 = vld [vmem:[%s3 + $0x2b0] sm:$0xff]
    %v2373 = vld [vmem:[%s3 + $0x2b8] sm:$0xff]
    %2374 = vmatpush.msra.mxu0 %v2325
    %2375 = vmatpush.msra.mxu0 %v2324
    %2376 = vmatpush.msra.mxu0 %v2323
    %2377 = vmatpush.msra.mxu0 %v2322
    %2378 = vmatpush.msra.mxu0 %v2321
    %2379 = vmatpush.msra.mxu0 %v2320
    %2380 = vmatpush.msra.mxu0 %v2319
    %2381 = vmatpush.msra.mxu0 %v2318
    %2382 = vmatpush.msra.mxu0 %v2317
    %2383 = vmatpush.msra.mxu0 %v2316
    %2384 = vmatpush.msra.mxu0 %v2315
    %2385 = vmatpush.msra.mxu0 %v2314
    %2386 = vmatpush.msra.mxu0 %v2313
    %2387 = vmatpush.msra.mxu0 %v2312
    %2388 = vmatpush.msra.mxu0 %v2311
    %2389 = vmatpush.msra.mxu0 %v2310
    %2390 = vmatmul.f32.gmra.mxu0 %v2306
    %v2391 = vpop.f32.mrf.mxu0
    %v2392 = vadd.f32 0.0, %v2391
    %2393 = vdwg.mxu0
    %2394 = vmatpush.msra.mxu0 %v2341
    %2395 = vmatpush.msra.mxu0 %v2340
    %2396 = vmatpush.msra.mxu0 %v2339
    %2397 = vmatpush.msra.mxu0 %v2338
    %2398 = vmatpush.msra.mxu0 %v2337
    %2399 = vmatpush.msra.mxu0 %v2336
    %2400 = vmatpush.msra.mxu0 %v2335
    %2401 = vmatpush.msra.mxu0 %v2334
    %2402 = vmatpush.msra.mxu0 %v2333
    %2403 = vmatpush.msra.mxu0 %v2332
    %2404 = vmatpush.msra.mxu0 %v2331
    %2405 = vmatpush.msra.mxu0 %v2330
    %2406 = vmatpush.msra.mxu0 %v2329
    %2407 = vmatpush.msra.mxu0 %v2328
    %2408 = vmatpush.msra.mxu0 %v2327
    %2409 = vmatpush.msra.mxu0 %v2326
    %2410 = vmatmul.f32.gmra.mxu0 %v2307
    %v2411 = vpop.f32.mrf.mxu0
    %v2412 = vadd.f32 %v2392, %v2411
    %2413 = vdwg.mxu0
    %2414 = vmatpush.msra.mxu0 %v2357
    %2415 = vmatpush.msra.mxu0 %v2356
    %2416 = vmatpush.msra.mxu0 %v2355
    %2417 = vmatpush.msra.mxu0 %v2354
    %2418 = vmatpush.msra.mxu0 %v2353
    %2419 = vmatpush.msra.mxu0 %v2352
    %2420 = vmatpush.msra.mxu0 %v2351
    %2421 = vmatpush.msra.mxu0 %v2350
    %2422 = vmatpush.msra.mxu0 %v2349
    %2423 = vmatpush.msra.mxu0 %v2348
    %2424 = vmatpush.msra.mxu0 %v2347
    %2425 = vmatpush.msra.mxu0 %v2346
    %2426 = vmatpush.msra.mxu0 %v2345
    %2427 = vmatpush.msra.mxu0 %v2344
    %2428 = vmatpush.msra.mxu0 %v2343
    %2429 = vmatpush.msra.mxu0 %v2342
    %2430 = vmatmul.f32.gmra.mxu0 %v2308
    %v2431 = vpop.f32.mrf.mxu0
    %v2432 = vadd.f32 %v2412, %v2431
    %2433 = vdwg.mxu0
    %2434 = vmatpush.msra.mxu0 %v2373
    %2435 = vmatpush.msra.mxu0 %v2372
    %2436 = vmatpush.msra.mxu0 %v2371
    %2437 = vmatpush.msra.mxu0 %v2370
    %2438 = vmatpush.msra.mxu0 %v2369
    %2439 = vmatpush.msra.mxu0 %v2368
    %2440 = vmatpush.msra.mxu0 %v2367
    %2441 = vmatpush.msra.mxu0 %v2366
    %2442 = vmatpush.msra.mxu0 %v2365
    %2443 = vmatpush.msra.mxu0 %v2364
    %2444 = vmatpush.msra.mxu0 %v2363
    %2445 = vmatpush.msra.mxu0 %v2362
    %2446 = vmatpush.msra.mxu0 %v2361
    %2447 = vmatpush.msra.mxu0 %v2360
    %2448 = vmatpush.msra.mxu0 %v2359
    %2449 = vmatpush.msra.mxu0 %v2358
    %2450 = vmatmul.f32.gmra.mxu0 %v2309
    %v2451 = vpop.f32.mrf.mxu0
    %v2452 = vadd.f32 %v2432, %v2451
    %2453 = vdwg.mxu0
    %v2454 = vld [vmem:[%s4 + $0x300] sm:$0xff]
    %v2455 = vld [vmem:[%s4 + $0x308] sm:$0xff]
    %v2456 = vld [vmem:[%s4 + $0x310] sm:$0xff]
    %v2457 = vld [vmem:[%s4 + $0x318] sm:$0xff]
    %v2458 = vld [vmem:[%s4 + $0x320] sm:$0xff]
    %v2459 = vld [vmem:[%s4 + $0x328] sm:$0xff]
    %v2460 = vld [vmem:[%s4 + $0x330] sm:$0xff]
    %v2461 = vld [vmem:[%s4 + $0x338] sm:$0xff]
    %v2462 = vld [vmem:[%s4 + $0x340] sm:$0xff]
    %v2463 = vld [vmem:[%s4 + $0x348] sm:$0xff]
    %v2464 = vld [vmem:[%s4 + $0x350] sm:$0xff]
    %v2465 = vld [vmem:[%s4 + $0x358] sm:$0xff]
    %vm2466 = vcmask 195584
    %v2468 = vsel %vm2466, %v998, 0
    %2470 = vmatpush.msra.mxu0 0.0
    %2471 = vmatpush.msra.mxu0 0.0
    %2472 = vmatpush.msra.mxu0 0.0
    %2473 = vmatpush.msra.mxu0 0.0
    %2474 = vmatpush.msra.mxu0 0.0
    %2475 = vmatpush.msra.mxu0 0.0
    %2476 = vmatpush.msra.mxu0 0.0
    %2477 = vmatpush.msra.mxu0 0.0
    %2478 = vmatpush.msra.mxu0 0.0
    %2479 = vmatpush.msra.mxu0 0.0
    %2480 = vmatpush.msra.mxu0 0.0
    %2481 = vmatpush.msra.mxu0 0.0
    %2482 = vmatpush.msra.mxu0 0.0
    %2483 = vmatpush.msra.mxu0 %v2462
    %2484 = vmatpush.msra.mxu0 %v2458
    %2485 = vmatpush.msra.mxu0 %v2454
    %2486 = vmatmul.f32.gmra.mxu0 %v2468
    %v2487 = vpop.f32.mrf.mxu0
    %v2488 = vadd.f32 0.0, %v2487
    %2489 = vdwg.mxu0
    %2490 = vmatpush.msra.mxu0 0.0
    %2491 = vmatpush.msra.mxu0 0.0
    %2492 = vmatpush.msra.mxu0 0.0
    %2493 = vmatpush.msra.mxu0 0.0
    %2494 = vmatpush.msra.mxu0 0.0
    %2495 = vmatpush.msra.mxu0 0.0
    %2496 = vmatpush.msra.mxu0 0.0
    %2497 = vmatpush.msra.mxu0 0.0
    %2498 = vmatpush.msra.mxu0 0.0
    %2499 = vmatpush.msra.mxu0 0.0
    %2500 = vmatpush.msra.mxu0 0.0
    %2501 = vmatpush.msra.mxu0 0.0
    %2502 = vmatpush.msra.mxu0 0.0
    %2503 = vmatpush.msra.mxu0 %v2463
    %2504 = vmatpush.msra.mxu0 %v2459
    %2505 = vmatpush.msra.mxu0 %v2455
    %2506 = vmatmul.f32.gmra.mxu0 %v2468
    %v2507 = vpop.f32.mrf.mxu0
    %v2508 = vadd.f32 0.0, %v2507
    %2509 = vdwg.mxu0
    %2510 = vmatpush.msra.mxu0 0.0
    %2511 = vmatpush.msra.mxu0 0.0
    %2512 = vmatpush.msra.mxu0 0.0
    %2513 = vmatpush.msra.mxu0 0.0
    %2514 = vmatpush.msra.mxu0 0.0
    %2515 = vmatpush.msra.mxu0 0.0
    %2516 = vmatpush.msra.mxu0 0.0
    %2517 = vmatpush.msra.mxu0 0.0
    %2518 = vmatpush.msra.mxu0 0.0
    %2519 = vmatpush.msra.mxu0 0.0
    %2520 = vmatpush.msra.mxu0 0.0
    %2521 = vmatpush.msra.mxu0 0.0
    %2522 = vmatpush.msra.mxu0 0.0
    %2523 = vmatpush.msra.mxu0 %v2464
    %2524 = vmatpush.msra.mxu0 %v2460
    %2525 = vmatpush.msra.mxu0 %v2456
    %2526 = vmatmul.f32.gmra.mxu0 %v2468
    %v2527 = vpop.f32.mrf.mxu0
    %v2528 = vadd.f32 0.0, %v2527
    %2529 = vdwg.mxu0
    %2530 = vmatpush.msra.mxu0 0.0
    %2531 = vmatpush.msra.mxu0 0.0
    %2532 = vmatpush.msra.mxu0 0.0
    %2533 = vmatpush.msra.mxu0 0.0
    %2534 = vmatpush.msra.mxu0 0.0
    %2535 = vmatpush.msra.mxu0 0.0
    %2536 = vmatpush.msra.mxu0 0.0
    %2537 = vmatpush.msra.mxu0 0.0
    %2538 = vmatpush.msra.mxu0 0.0
    %2539 = vmatpush.msra.mxu0 0.0
    %2540 = vmatpush.msra.mxu0 0.0
    %2541 = vmatpush.msra.mxu0 0.0
    %2542 = vmatpush.msra.mxu0 0.0
    %2543 = vmatpush.msra.mxu0 %v2465
    %2544 = vmatpush.msra.mxu0 %v2461
    %2545 = vmatpush.msra.mxu0 %v2457
    %2546 = vmatmul.f32.gmra.mxu0 %v2468
    %v2547 = vpop.f32.mrf.mxu0
    %v2548 = vadd.f32 0.0, %v2547
    %2549 = vdwg.mxu0
    %v2550 = vld [vmem:[%s4 + $0xb60] sm:$0xff]
    %v2551 = vld [vmem:[%s4 + $0xb68] sm:$0xff]
    %v2552 = vld [vmem:[%s4 + $0xb70] sm:$0xff]
    %v2553 = vld [vmem:[%s4 + $0xb78] sm:$0xff]
    %v2554 = vld [vmem:[%s4 + $0xb80] sm:$0xff]
    %v2555 = vld [vmem:[%s4 + $0xb88] sm:$0xff]
    %v2556 = vld [vmem:[%s4 + $0xb90] sm:$0xff]
    %v2557 = vld [vmem:[%s4 + $0xb98] sm:$0xff]
    %v2558 = vld [vmem:[%s4 + $0xba0] sm:$0xff]
    %v2559 = vld [vmem:[%s4 + $0xba8] sm:$0xff]
    %v2560 = vld [vmem:[%s4 + $0xbb0] sm:$0xff]
    %v2561 = vld [vmem:[%s4 + $0xbb8] sm:$0xff]
    %v2562 = vld [vmem:[%s4 + $0xbc0] sm:$0xff]
    %v2563 = vld [vmem:[%s4 + $0xbc8] sm:$0xff]
    %v2564 = vld [vmem:[%s4 + $0xbd0] sm:$0xff]
    %v2565 = vld [vmem:[%s4 + $0xbd8] sm:$0xff]
    %v2566 = vld [vmem:[%s4 + $0xbe0] sm:$0xff]
    %v2567 = vld [vmem:[%s4 + $0xbe8] sm:$0xff]
    %v2568 = vld [vmem:[%s4 + $0xbf0] sm:$0xff]
    %v2569 = vld [vmem:[%s4 + $0xbf8] sm:$0xff]
    %v2570 = vld [vmem:[%s4 + $0xc00] sm:$0xff]
    %v2571 = vld [vmem:[%s4 + $0xc08] sm:$0xff]
    %v2572 = vld [vmem:[%s4 + $0xc10] sm:$0xff]
    %v2573 = vld [vmem:[%s4 + $0xc18] sm:$0xff]
    %v2574 = vld [vmem:[%s4 + $0xc20] sm:$0xff]
    %v2575 = vld [vmem:[%s4 + $0xc28] sm:$0xff]
    %v2576 = vld [vmem:[%s4 + $0xc30] sm:$0xff]
    %v2577 = vld [vmem:[%s4 + $0xc38] sm:$0xff]
    %v2578 = vld [vmem:[%s4 + $0xc40] sm:$0xff]
    %v2579 = vld [vmem:[%s4 + $0xc48] sm:$0xff]
    %v2580 = vld [vmem:[%s4 + $0xc50] sm:$0xff]
    %v2581 = vld [vmem:[%s4 + $0xc58] sm:$0xff]
    %v2582 = vld [vmem:[%s4 + $0xc60] sm:$0xff]
    %v2583 = vld [vmem:[%s4 + $0xc68] sm:$0xff]
    %v2584 = vld [vmem:[%s4 + $0xc70] sm:$0xff]
    %v2585 = vld [vmem:[%s4 + $0xc78] sm:$0xff]
    %v2586 = vld [vmem:[%s4 + $0xc80] sm:$0xff]
    %v2587 = vld [vmem:[%s4 + $0xc88] sm:$0xff]
    %v2588 = vld [vmem:[%s4 + $0xc90] sm:$0xff]
    %v2589 = vld [vmem:[%s4 + $0xc98] sm:$0xff]
    %v2590 = vld [vmem:[%s4 + $0xca0] sm:$0xff]
    %v2591 = vld [vmem:[%s4 + $0xca8] sm:$0xff]
    %v2592 = vld [vmem:[%s4 + $0xcb0] sm:$0xff]
    %v2593 = vld [vmem:[%s4 + $0xcb8] sm:$0xff]
    %v2594 = vld [vmem:[%s4 + $0xcc0] sm:$0xff]
    %v2595 = vld [vmem:[%s4 + $0xcc8] sm:$0xff]
    %v2596 = vld [vmem:[%s4 + $0xcd0] sm:$0xff]
    %v2597 = vld [vmem:[%s4 + $0xcd8] sm:$0xff]
    %v2598 = vld [vmem:[%s4 + $0xce0] sm:$0xff]
    %v2599 = vld [vmem:[%s4 + $0xce8] sm:$0xff]
    %v2600 = vld [vmem:[%s4 + $0xcf0] sm:$0xff]
    %v2601 = vld [vmem:[%s4 + $0xcf8] sm:$0xff]
    %v2602 = vld [vmem:[%s4 + $0xd00] sm:$0xff]
    %v2603 = vld [vmem:[%s4 + $0xd08] sm:$0xff]
    %v2604 = vld [vmem:[%s4 + $0xd10] sm:$0xff]
    %v2605 = vld [vmem:[%s4 + $0xd18] sm:$0xff]
    %v2606 = vld [vmem:[%s4 + $0xd20] sm:$0xff]
    %v2607 = vld [vmem:[%s4 + $0xd28] sm:$0xff]
    %v2608 = vld [vmem:[%s4 + $0xd30] sm:$0xff]
    %v2609 = vld [vmem:[%s4 + $0xd38] sm:$0xff]
    %v2610 = vld [vmem:[%s4 + $0xd40] sm:$0xff]
    %v2611 = vld [vmem:[%s4 + $0xd48] sm:$0xff]
    %v2612 = vld [vmem:[%s4 + $0xd50] sm:$0xff]
    %v2613 = vld [vmem:[%s4 + $0xd58] sm:$0xff]
    %v2614 = vld [vmem:[%s4 + $0xd60] sm:$0xff]
    %v2615 = vld [vmem:[%s4 + $0xd68] sm:$0xff]
    %v2616 = vld [vmem:[%s4 + $0xd70] sm:$0xff]
    %v2617 = vld [vmem:[%s4 + $0xd78] sm:$0xff]
    %v2618 = vld [vmem:[%s4 + $0xd80] sm:$0xff]
    %v2619 = vld [vmem:[%s4 + $0xd88] sm:$0xff]
    %v2620 = vld [vmem:[%s4 + $0xd90] sm:$0xff]
    %v2621 = vld [vmem:[%s4 + $0xd98] sm:$0xff]
    %v2622 = vld [vmem:[%s4 + $0xda0] sm:$0xff]
    %v2623 = vld [vmem:[%s4 + $0xda8] sm:$0xff]
    %v2624 = vld [vmem:[%s4 + $0xdb0] sm:$0xff]
    %v2625 = vld [vmem:[%s4 + $0xdb8] sm:$0xff]
    %v2626 = vld [vmem:[%s4 + $0xdc0] sm:$0xff]
    %v2627 = vld [vmem:[%s4 + $0xdc8] sm:$0xff]
    %v2628 = vld [vmem:[%s4 + $0xdd0] sm:$0xff]
    %v2629 = vld [vmem:[%s4 + $0xdd8] sm:$0xff]
    %v2630 = vld [vmem:[%s4 + $0xde0] sm:$0xff]
    %v2631 = vld [vmem:[%s4 + $0xde8] sm:$0xff]
    %v2632 = vld [vmem:[%s4 + $0xdf0] sm:$0xff]
    %v2633 = vld [vmem:[%s4 + $0xdf8] sm:$0xff]
    %v2634 = vld [vmem:[%s4 + $0xe00] sm:$0xff]
    %v2635 = vld [vmem:[%s4 + $0xe08] sm:$0xff]
    %v2636 = vld [vmem:[%s4 + $0xe10] sm:$0xff]
    %v2637 = vld [vmem:[%s4 + $0xe18] sm:$0xff]
    %v2638 = vld [vmem:[%s4 + $0xe20] sm:$0xff]
    %v2639 = vld [vmem:[%s4 + $0xe28] sm:$0xff]
    %v2640 = vld [vmem:[%s4 + $0xe30] sm:$0xff]
    %v2641 = vld [vmem:[%s4 + $0xe38] sm:$0xff]
    %v2642 = vld [vmem:[%s4 + $0xe40] sm:$0xff]
    %v2643 = vld [vmem:[%s4 + $0xe48] sm:$0xff]
    %v2644 = vld [vmem:[%s4 + $0xe50] sm:$0xff]
    %v2645 = vld [vmem:[%s4 + $0xe58] sm:$0xff]
    %v2646 = vld [vmem:[%s4 + $0xe60] sm:$0xff]
    %v2647 = vld [vmem:[%s4 + $0xe68] sm:$0xff]
    %v2648 = vld [vmem:[%s4 + $0xe70] sm:$0xff]
    %v2649 = vld [vmem:[%s4 + $0xe78] sm:$0xff]
    %v2650 = vld [vmem:[%s4 + $0xe80] sm:$0xff]
    %v2651 = vld [vmem:[%s4 + $0xe88] sm:$0xff]
    %v2652 = vld [vmem:[%s4 + $0xe90] sm:$0xff]
    %v2653 = vld [vmem:[%s4 + $0xe98] sm:$0xff]
    %v2654 = vld [vmem:[%s4 + $0xea0] sm:$0xff]
    %v2655 = vld [vmem:[%s4 + $0xea8] sm:$0xff]
    %v2656 = vld [vmem:[%s4 + $0xeb0] sm:$0xff]
    %v2657 = vld [vmem:[%s4 + $0xeb8] sm:$0xff]
    %v2658 = vld [vmem:[%s4 + $0xec0] sm:$0xff]
    %v2659 = vld [vmem:[%s4 + $0xec8] sm:$0xff]
    %v2660 = vld [vmem:[%s4 + $0xed0] sm:$0xff]
    %v2661 = vld [vmem:[%s4 + $0xed8] sm:$0xff]
    %v2662 = vld [vmem:[%s4 + $0xee0] sm:$0xff]
    %v2663 = vld [vmem:[%s4 + $0xee8] sm:$0xff]
    %v2664 = vld [vmem:[%s4 + $0xef0] sm:$0xff]
    %v2665 = vld [vmem:[%s4 + $0xef8] sm:$0xff]
    %v2666 = vld [vmem:[%s4 + $0xf00] sm:$0xff]
    %v2667 = vld [vmem:[%s4 + $0xf08] sm:$0xff]
    %v2668 = vld [vmem:[%s4 + $0xf10] sm:$0xff]
    %v2669 = vld [vmem:[%s4 + $0xf18] sm:$0xff]
    %v2670 = vld [vmem:[%s4 + $0xf20] sm:$0xff]
    %v2671 = vld [vmem:[%s4 + $0xf28] sm:$0xff]
    %v2672 = vld [vmem:[%s4 + $0xf30] sm:$0xff]
    %v2673 = vld [vmem:[%s4 + $0xf38] sm:$0xff]
    %v2674 = vld [vmem:[%s4 + $0xf40] sm:$0xff]
    %v2675 = vld [vmem:[%s4 + $0xf48] sm:$0xff]
    %v2676 = vld [vmem:[%s4 + $0xf50] sm:$0xff]
    %v2677 = vld [vmem:[%s4 + $0xf58] sm:$0xff]
    %v2678 = vld [vmem:[%s4 + $0xf60] sm:$0xff]
    %v2679 = vld [vmem:[%s4 + $0xf68] sm:$0xff]
    %v2680 = vld [vmem:[%s4 + $0xf70] sm:$0xff]
    %v2681 = vld [vmem:[%s4 + $0xf78] sm:$0xff]
    %v2682 = vld [vmem:[%s4 + $0xf80] sm:$0xff]
    %v2683 = vld [vmem:[%s4 + $0xf88] sm:$0xff]
    %v2684 = vld [vmem:[%s4 + $0xf90] sm:$0xff]
    %v2685 = vld [vmem:[%s4 + $0xf98] sm:$0xff]
    %v2686 = vld [vmem:[%s4 + $0xfa0] sm:$0xff]
    %v2687 = vld [vmem:[%s4 + $0xfa8] sm:$0xff]
    %v2688 = vld [vmem:[%s4 + $0xfb0] sm:$0xff]
    %v2689 = vld [vmem:[%s4 + $0xfb8] sm:$0xff]
    %v2690 = vld [vmem:[%s4 + $0xfc0] sm:$0xff]
    %v2691 = vld [vmem:[%s4 + $0xfc8] sm:$0xff]
    %v2692 = vld [vmem:[%s4 + $0xfd0] sm:$0xff]
    %v2693 = vld [vmem:[%s4 + $0xfd8] sm:$0xff]
    %v2694 = vld [vmem:[%s4 + $0xfe0] sm:$0xff]
    %v2695 = vld [vmem:[%s4 + $0xfe8] sm:$0xff]
    %v2696 = vld [vmem:[%s4 + $0xff0] sm:$0xff]
    %v2697 = vld [vmem:[%s4 + $0xff8] sm:$0xff]
    %v2698 = vld [vmem:[%s4 + $0x1000] sm:$0xff]
    %v2699 = vld [vmem:[%s4 + $0x1008] sm:$0xff]
    %v2700 = vld [vmem:[%s4 + $0x1010] sm:$0xff]
    %v2701 = vld [vmem:[%s4 + $0x1018] sm:$0xff]
    %v2702 = vld [vmem:[%s4 + $0x1020] sm:$0xff]
    %v2703 = vld [vmem:[%s4 + $0x1028] sm:$0xff]
    %v2704 = vld [vmem:[%s4 + $0x1030] sm:$0xff]
    %v2705 = vld [vmem:[%s4 + $0x1038] sm:$0xff]
    %v2706 = vld [vmem:[%s4 + $0x1040] sm:$0xff]
    %v2707 = vld [vmem:[%s4 + $0x1048] sm:$0xff]
    %v2708 = vld [vmem:[%s4 + $0x1050] sm:$0xff]
    %v2709 = vld [vmem:[%s4 + $0x1058] sm:$0xff]
    %v2710 = vld [vmem:[%s4 + $0x1060] sm:$0xff]
    %v2711 = vld [vmem:[%s4 + $0x1068] sm:$0xff]
    %v2712 = vld [vmem:[%s4 + $0x1070] sm:$0xff]
    %v2713 = vld [vmem:[%s4 + $0x1078] sm:$0xff]
    %v2714 = vld [vmem:[%s4 + $0x1080] sm:$0xff]
    %v2715 = vld [vmem:[%s4 + $0x1088] sm:$0xff]
    %v2716 = vld [vmem:[%s4 + $0x1090] sm:$0xff]
    %v2717 = vld [vmem:[%s4 + $0x1098] sm:$0xff]
    %v2718 = vld [vmem:[%s4 + $0x10a0] sm:$0xff]
    %v2719 = vld [vmem:[%s4 + $0x10a8] sm:$0xff]
    %v2720 = vld [vmem:[%s4 + $0x10b0] sm:$0xff]
    %v2721 = vld [vmem:[%s4 + $0x10b8] sm:$0xff]
    %v2722 = vld [vmem:[%s4 + $0x10c0] sm:$0xff]
    %v2723 = vld [vmem:[%s4 + $0x10c8] sm:$0xff]
    %v2724 = vld [vmem:[%s4 + $0x10d0] sm:$0xff]
    %v2725 = vld [vmem:[%s4 + $0x10d8] sm:$0xff]
    %v2726 = vld [vmem:[%s4 + $0x10e0] sm:$0xff]
    %v2727 = vld [vmem:[%s4 + $0x10e8] sm:$0xff]
    %v2728 = vld [vmem:[%s4 + $0x10f0] sm:$0xff]
    %v2729 = vld [vmem:[%s4 + $0x10f8] sm:$0xff]
    %v2730 = vld [vmem:[%s4 + $0x1100] sm:$0xff]
    %v2731 = vld [vmem:[%s4 + $0x1108] sm:$0xff]
    %v2732 = vld [vmem:[%s4 + $0x1110] sm:$0xff]
    %v2733 = vld [vmem:[%s4 + $0x1118] sm:$0xff]
    %v2734 = vld [vmem:[%s4 + $0x1120] sm:$0xff]
    %v2735 = vld [vmem:[%s4 + $0x1128] sm:$0xff]
    %v2736 = vld [vmem:[%s4 + $0x1130] sm:$0xff]
    %v2737 = vld [vmem:[%s4 + $0x1138] sm:$0xff]
    %v2738 = vld [vmem:[%s4 + $0x1140] sm:$0xff]
    %v2739 = vld [vmem:[%s4 + $0x1148] sm:$0xff]
    %v2740 = vld [vmem:[%s4 + $0x1150] sm:$0xff]
    %v2741 = vld [vmem:[%s4 + $0x1158] sm:$0xff]
    %v2742 = vld [vmem:[%s4 + $0x1160] sm:$0xff]
    %v2743 = vld [vmem:[%s4 + $0x1168] sm:$0xff]
    %v2744 = vld [vmem:[%s4 + $0x1170] sm:$0xff]
    %v2745 = vld [vmem:[%s4 + $0x1178] sm:$0xff]
    %v2746 = vld [vmem:[%s4 + $0x1180] sm:$0xff]
    %v2747 = vld [vmem:[%s4 + $0x1188] sm:$0xff]
    %v2748 = vld [vmem:[%s4 + $0x1190] sm:$0xff]
    %v2749 = vld [vmem:[%s4 + $0x1198] sm:$0xff]
    %v2750 = vld [vmem:[%s4 + $0x11a0] sm:$0xff]
    %v2751 = vld [vmem:[%s4 + $0x11a8] sm:$0xff]
    %v2752 = vld [vmem:[%s4 + $0x11b0] sm:$0xff]
    %v2753 = vld [vmem:[%s4 + $0x11b8] sm:$0xff]
    %v2754 = vld [vmem:[%s4 + $0x11c0] sm:$0xff]
    %v2755 = vld [vmem:[%s4 + $0x11c8] sm:$0xff]
    %v2756 = vld [vmem:[%s4 + $0x11d0] sm:$0xff]
    %v2757 = vld [vmem:[%s4 + $0x11d8] sm:$0xff]
    %v2758 = vld [vmem:[%s4 + $0x11e0] sm:$0xff]
    %v2759 = vld [vmem:[%s4 + $0x11e8] sm:$0xff]
    %v2760 = vld [vmem:[%s4 + $0x11f0] sm:$0xff]
    %v2761 = vld [vmem:[%s4 + $0x11f8] sm:$0xff]
    %v2762 = vld [vmem:[%s4 + $0x1200] sm:$0xff]
    %v2763 = vld [vmem:[%s4 + $0x1208] sm:$0xff]
    %v2764 = vld [vmem:[%s4 + $0x1210] sm:$0xff]
    %v2765 = vld [vmem:[%s4 + $0x1218] sm:$0xff]
    %v2766 = vld [vmem:[%s4 + $0x1220] sm:$0xff]
    %v2767 = vld [vmem:[%s4 + $0x1228] sm:$0xff]
    %v2768 = vld [vmem:[%s4 + $0x1230] sm:$0xff]
    %v2769 = vld [vmem:[%s4 + $0x1238] sm:$0xff]
    %v2770 = vld [vmem:[%s4 + $0x1240] sm:$0xff]
    %v2771 = vld [vmem:[%s4 + $0x1248] sm:$0xff]
    %v2772 = vld [vmem:[%s4 + $0x1250] sm:$0xff]
    %v2773 = vld [vmem:[%s4 + $0x1258] sm:$0xff]
    %v2774 = vld [vmem:[%s4 + $0x1260] sm:$0xff]
    %v2775 = vld [vmem:[%s4 + $0x1268] sm:$0xff]
    %v2776 = vld [vmem:[%s4 + $0x1270] sm:$0xff]
    %v2777 = vld [vmem:[%s4 + $0x1278] sm:$0xff]
    %v2778 = vld [vmem:[%s4 + $0x1280] sm:$0xff]
    %v2779 = vld [vmem:[%s4 + $0x1288] sm:$0xff]
    %v2780 = vld [vmem:[%s4 + $0x1290] sm:$0xff]
    %v2781 = vld [vmem:[%s4 + $0x1298] sm:$0xff]
    %v2782 = vld [vmem:[%s4 + $0x12a0] sm:$0xff]
    %v2783 = vld [vmem:[%s4 + $0x12a8] sm:$0xff]
    %v2784 = vld [vmem:[%s4 + $0x12b0] sm:$0xff]
    %v2785 = vld [vmem:[%s4 + $0x12b8] sm:$0xff]
    %v2786 = vld [vmem:[%s4 + $0x12c0] sm:$0xff]
    %v2787 = vld [vmem:[%s4 + $0x12c8] sm:$0xff]
    %v2788 = vld [vmem:[%s4 + $0x12d0] sm:$0xff]
    %v2789 = vld [vmem:[%s4 + $0x12d8] sm:$0xff]
    %v2790 = vld [vmem:[%s4 + $0x12e0] sm:$0xff]
    %v2791 = vld [vmem:[%s4 + $0x12e8] sm:$0xff]
    %v2792 = vld [vmem:[%s4 + $0x12f0] sm:$0xff]
    %v2793 = vld [vmem:[%s4 + $0x12f8] sm:$0xff]
    %v2794 = vld [vmem:[%s4 + $0x1300] sm:$0xff]
    %v2795 = vld [vmem:[%s4 + $0x1308] sm:$0xff]
    %v2796 = vld [vmem:[%s4 + $0x1310] sm:$0xff]
    %v2797 = vld [vmem:[%s4 + $0x1318] sm:$0xff]
    %v2798 = vld [vmem:[%s4 + $0x1320] sm:$0xff]
    %v2799 = vld [vmem:[%s4 + $0x1328] sm:$0xff]
    %v2800 = vld [vmem:[%s4 + $0x1330] sm:$0xff]
    %v2801 = vld [vmem:[%s4 + $0x1338] sm:$0xff]
    %v2802 = vld [vmem:[%s4 + $0x1340] sm:$0xff]
    %v2803 = vld [vmem:[%s4 + $0x1348] sm:$0xff]
    %v2804 = vld [vmem:[%s4 + $0x1350] sm:$0xff]
    %v2805 = vld [vmem:[%s4 + $0x1358] sm:$0xff]
    %v2806 = vrot.slane %v2488, 4
    %v2807 = vadd.f32 %v2488, %v2806
    %v2808 = vrot.slane %v2807, 2
    %v2809 = vadd.f32 %v2807, %v2808
    %v2810 = vrot.slane %v2809, 1
    %v2811 = vadd.f32 %v2809, %v2810
    %v2812 = vrot.slane %v2508, 4
    %v2813 = vadd.f32 %v2508, %v2812
    %v2814 = vrot.slane %v2813, 2
    %v2815 = vadd.f32 %v2813, %v2814
    %v2816 = vrot.slane %v2815, 1
    %v2817 = vadd.f32 %v2815, %v2816
    %v2818 = vrot.slane %v2528, 4
    %v2819 = vadd.f32 %v2528, %v2818
    %v2820 = vrot.slane %v2819, 2
    %v2821 = vadd.f32 %v2819, %v2820
    %v2822 = vrot.slane %v2821, 1
    %v2823 = vadd.f32 %v2821, %v2822
    %v2824 = vrot.slane %v2548, 4
    %v2825 = vadd.f32 %v2548, %v2824
    %v2826 = vrot.slane %v2825, 2
    %v2827 = vadd.f32 %v2825, %v2826
    %v2828 = vrot.slane %v2827, 1
    %v2829 = vadd.f32 %v2827, %v2828
    %v2830 = vmul.f32 %v2811, 0.16666667
    %v2831 = vmul.f32 %v2817, 0.16666667
    %v2832 = vmul.f32 %v2823, 0.16666667
    %v2833 = vmul.f32 %v2829, 0.16666667
    %v2834 = vmul.f32 %v2488, %v2488
    %v2835 = vmul.f32 %v2508, %v2508
    %v2836 = vmul.f32 %v2528, %v2528
    %v2837 = vmul.f32 %v2548, %v2548
    %v2838 = vrot.slane %v2834, 4
    %v2839 = vadd.f32 %v2834, %v2838
    %v2840 = vrot.slane %v2839, 2
    %v2841 = vadd.f32 %v2839, %v2840
    %v2842 = vrot.slane %v2841, 1
    %v2843 = vadd.f32 %v2841, %v2842
    %v2844 = vrot.slane %v2835, 4
    %v2845 = vadd.f32 %v2835, %v2844
    %v2846 = vrot.slane %v2845, 2
    %v2847 = vadd.f32 %v2845, %v2846
    %v2848 = vrot.slane %v2847, 1
    %v2849 = vadd.f32 %v2847, %v2848
    %v2850 = vrot.slane %v2836, 4
    %v2851 = vadd.f32 %v2836, %v2850
    %v2852 = vrot.slane %v2851, 2
    %v2853 = vadd.f32 %v2851, %v2852
    %v2854 = vrot.slane %v2853, 1
    %v2855 = vadd.f32 %v2853, %v2854
    %v2856 = vrot.slane %v2837, 4
    %v2857 = vadd.f32 %v2837, %v2856
    %v2858 = vrot.slane %v2857, 2
    %v2859 = vadd.f32 %v2857, %v2858
    %v2860 = vrot.slane %v2859, 1
    %v2861 = vadd.f32 %v2859, %v2860
    %v2862 = vmul.f32 %v2843, 0.16666667
    %v2863 = vmul.f32 %v2849, 0.16666667
    %v2864 = vmul.f32 %v2855, 0.16666667
    %v2865 = vmul.f32 %v2861, 0.16666667
    %2866 = vmatpush.msra.mxu0 %v2610
    %2867 = vmatpush.msra.mxu0 %v2606
    %2868 = vmatpush.msra.mxu0 %v2602
    %2869 = vmatpush.msra.mxu0 %v2598
    %2870 = vmatpush.msra.mxu0 %v2594
    %2871 = vmatpush.msra.mxu0 %v2590
    %2872 = vmatpush.msra.mxu0 %v2586
    %2873 = vmatpush.msra.mxu0 %v2582
    %2874 = vmatpush.msra.mxu0 %v2578
    %2875 = vmatpush.msra.mxu0 %v2574
    %2876 = vmatpush.msra.mxu0 %v2570
    %2877 = vmatpush.msra.mxu0 %v2566
    %2878 = vmatpush.msra.mxu0 %v2562
    %2879 = vmatpush.msra.mxu0 %v2558
    %2880 = vmatpush.msra.mxu0 %v2554
    %2881 = vmatpush.msra.mxu0 %v2550
    %2882 = vmatmul.f32.gmra.mxu0 %v2830
    %v2883 = vpop.f32.mrf.mxu0
    %v2884 = vadd.f32 0.0, %v2883
    %2885 = vdwg.mxu0
    %2886 = vmatpush.msra.mxu0 %v2674
    %2887 = vmatpush.msra.mxu0 %v2670
    %2888 = vmatpush.msra.mxu0 %v2666
    %2889 = vmatpush.msra.mxu0 %v2662
    %2890 = vmatpush.msra.mxu0 %v2658
    %2891 = vmatpush.msra.mxu0 %v2654
    %2892 = vmatpush.msra.mxu0 %v2650
    %2893 = vmatpush.msra.mxu0 %v2646
    %2894 = vmatpush.msra.mxu0 %v2642
    %2895 = vmatpush.msra.mxu0 %v2638
    %2896 = vmatpush.msra.mxu0 %v2634
    %2897 = vmatpush.msra.mxu0 %v2630
    %2898 = vmatpush.msra.mxu0 %v2626
    %2899 = vmatpush.msra.mxu0 %v2622
    %2900 = vmatpush.msra.mxu0 %v2618
    %2901 = vmatpush.msra.mxu0 %v2614
    %2902 = vmatmul.f32.gmra.mxu0 %v2831
    %v2903 = vpop.f32.mrf.mxu0
    %v2904 = vadd.f32 %v2884, %v2903
    %2905 = vdwg.mxu0
    %2906 = vmatpush.msra.mxu0 %v2738
    %2907 = vmatpush.msra.mxu0 %v2734
    %2908 = vmatpush.msra.mxu0 %v2730
    %2909 = vmatpush.msra.mxu0 %v2726
    %2910 = vmatpush.msra.mxu0 %v2722
    %2911 = vmatpush.msra.mxu0 %v2718
    %2912 = vmatpush.msra.mxu0 %v2714
    %2913 = vmatpush.msra.mxu0 %v2710
    %2914 = vmatpush.msra.mxu0 %v2706
    %2915 = vmatpush.msra.mxu0 %v2702
    %2916 = vmatpush.msra.mxu0 %v2698
    %2917 = vmatpush.msra.mxu0 %v2694
    %2918 = vmatpush.msra.mxu0 %v2690
    %2919 = vmatpush.msra.mxu0 %v2686
    %2920 = vmatpush.msra.mxu0 %v2682
    %2921 = vmatpush.msra.mxu0 %v2678
    %2922 = vmatmul.f32.gmra.mxu0 %v2832
    %v2923 = vpop.f32.mrf.mxu0
    %v2924 = vadd.f32 %v2904, %v2923
    %2925 = vdwg.mxu0
    %2926 = vmatpush.msra.mxu0 %v2802
    %2927 = vmatpush.msra.mxu0 %v2798
    %2928 = vmatpush.msra.mxu0 %v2794
    %2929 = vmatpush.msra.mxu0 %v2790
    %2930 = vmatpush.msra.mxu0 %v2786
    %2931 = vmatpush.msra.mxu0 %v2782
    %2932 = vmatpush.msra.mxu0 %v2778
    %2933 = vmatpush.msra.mxu0 %v2774
    %2934 = vmatpush.msra.mxu0 %v2770
    %2935 = vmatpush.msra.mxu0 %v2766
    %2936 = vmatpush.msra.mxu0 %v2762
    %2937 = vmatpush.msra.mxu0 %v2758
    %2938 = vmatpush.msra.mxu0 %v2754
    %2939 = vmatpush.msra.mxu0 %v2750
    %2940 = vmatpush.msra.mxu0 %v2746
    %2941 = vmatpush.msra.mxu0 %v2742
    %2942 = vmatmul.f32.gmra.mxu0 %v2833
    %v2943 = vpop.f32.mrf.mxu0
    %v2944 = vadd.f32 %v2924, %v2943
    %2945 = vdwg.mxu0
    %2946 = vmatpush.msra.mxu0 %v2611
    %2947 = vmatpush.msra.mxu0 %v2607
    %2948 = vmatpush.msra.mxu0 %v2603
    %2949 = vmatpush.msra.mxu0 %v2599
    %2950 = vmatpush.msra.mxu0 %v2595
    %2951 = vmatpush.msra.mxu0 %v2591
    %2952 = vmatpush.msra.mxu0 %v2587
    %2953 = vmatpush.msra.mxu0 %v2583
    %2954 = vmatpush.msra.mxu0 %v2579
    %2955 = vmatpush.msra.mxu0 %v2575
    %2956 = vmatpush.msra.mxu0 %v2571
    %2957 = vmatpush.msra.mxu0 %v2567
    %2958 = vmatpush.msra.mxu0 %v2563
    %2959 = vmatpush.msra.mxu0 %v2559
    %2960 = vmatpush.msra.mxu0 %v2555
    %2961 = vmatpush.msra.mxu0 %v2551
    %2962 = vmatmul.f32.gmra.mxu0 %v2830
    %v2963 = vpop.f32.mrf.mxu0
    %v2964 = vadd.f32 0.0, %v2963
    %2965 = vdwg.mxu0
    %2966 = vmatpush.msra.mxu0 %v2675
    %2967 = vmatpush.msra.mxu0 %v2671
    %2968 = vmatpush.msra.mxu0 %v2667
    %2969 = vmatpush.msra.mxu0 %v2663
    %2970 = vmatpush.msra.mxu0 %v2659
    %2971 = vmatpush.msra.mxu0 %v2655
    %2972 = vmatpush.msra.mxu0 %v2651
    %2973 = vmatpush.msra.mxu0 %v2647
    %2974 = vmatpush.msra.mxu0 %v2643
    %2975 = vmatpush.msra.mxu0 %v2639
    %2976 = vmatpush.msra.mxu0 %v2635
    %2977 = vmatpush.msra.mxu0 %v2631
    %2978 = vmatpush.msra.mxu0 %v2627
    %2979 = vmatpush.msra.mxu0 %v2623
    %2980 = vmatpush.msra.mxu0 %v2619
    %2981 = vmatpush.msra.mxu0 %v2615
    %2982 = vmatmul.f32.gmra.mxu0 %v2831
    %v2983 = vpop.f32.mrf.mxu0
    %v2984 = vadd.f32 %v2964, %v2983
    %2985 = vdwg.mxu0
    %2986 = vmatpush.msra.mxu0 %v2739
    %2987 = vmatpush.msra.mxu0 %v2735
    %2988 = vmatpush.msra.mxu0 %v2731
    %2989 = vmatpush.msra.mxu0 %v2727
    %2990 = vmatpush.msra.mxu0 %v2723
    %2991 = vmatpush.msra.mxu0 %v2719
    %2992 = vmatpush.msra.mxu0 %v2715
    %2993 = vmatpush.msra.mxu0 %v2711
    %2994 = vmatpush.msra.mxu0 %v2707
    %2995 = vmatpush.msra.mxu0 %v2703
    %2996 = vmatpush.msra.mxu0 %v2699
    %2997 = vmatpush.msra.mxu0 %v2695
    %2998 = vmatpush.msra.mxu0 %v2691
    %2999 = vmatpush.msra.mxu0 %v2687
    %3000 = vmatpush.msra.mxu0 %v2683
    %3001 = vmatpush.msra.mxu0 %v2679
    %3002 = vmatmul.f32.gmra.mxu0 %v2832
    %v3003 = vpop.f32.mrf.mxu0
    %v3004 = vadd.f32 %v2984, %v3003
    %3005 = vdwg.mxu0
    %3006 = vmatpush.msra.mxu0 %v2803
    %3007 = vmatpush.msra.mxu0 %v2799
    %3008 = vmatpush.msra.mxu0 %v2795
    %3009 = vmatpush.msra.mxu0 %v2791
    %3010 = vmatpush.msra.mxu0 %v2787
    %3011 = vmatpush.msra.mxu0 %v2783
    %3012 = vmatpush.msra.mxu0 %v2779
    %3013 = vmatpush.msra.mxu0 %v2775
    %3014 = vmatpush.msra.mxu0 %v2771
    %3015 = vmatpush.msra.mxu0 %v2767
    %3016 = vmatpush.msra.mxu0 %v2763
    %3017 = vmatpush.msra.mxu0 %v2759
    %3018 = vmatpush.msra.mxu0 %v2755
    %3019 = vmatpush.msra.mxu0 %v2751
    %3020 = vmatpush.msra.mxu0 %v2747
    %3021 = vmatpush.msra.mxu0 %v2743
    %3022 = vmatmul.f32.gmra.mxu0 %v2833
    %v3023 = vpop.f32.mrf.mxu0
    %v3024 = vadd.f32 %v3004, %v3023
    %3025 = vdwg.mxu0
    %3026 = vmatpush.msra.mxu0 %v2612
    %3027 = vmatpush.msra.mxu0 %v2608
    %3028 = vmatpush.msra.mxu0 %v2604
    %3029 = vmatpush.msra.mxu0 %v2600
    %3030 = vmatpush.msra.mxu0 %v2596
    %3031 = vmatpush.msra.mxu0 %v2592
    %3032 = vmatpush.msra.mxu0 %v2588
    %3033 = vmatpush.msra.mxu0 %v2584
    %3034 = vmatpush.msra.mxu0 %v2580
    %3035 = vmatpush.msra.mxu0 %v2576
    %3036 = vmatpush.msra.mxu0 %v2572
    %3037 = vmatpush.msra.mxu0 %v2568
    %3038 = vmatpush.msra.mxu0 %v2564
    %3039 = vmatpush.msra.mxu0 %v2560
    %3040 = vmatpush.msra.mxu0 %v2556
    %3041 = vmatpush.msra.mxu0 %v2552
    %3042 = vmatmul.f32.gmra.mxu0 %v2830
    %v3043 = vpop.f32.mrf.mxu0
    %v3044 = vadd.f32 0.0, %v3043
    %3045 = vdwg.mxu0
    %3046 = vmatpush.msra.mxu0 %v2676
    %3047 = vmatpush.msra.mxu0 %v2672
    %3048 = vmatpush.msra.mxu0 %v2668
    %3049 = vmatpush.msra.mxu0 %v2664
    %3050 = vmatpush.msra.mxu0 %v2660
    %3051 = vmatpush.msra.mxu0 %v2656
    %3052 = vmatpush.msra.mxu0 %v2652
    %3053 = vmatpush.msra.mxu0 %v2648
    %3054 = vmatpush.msra.mxu0 %v2644
    %3055 = vmatpush.msra.mxu0 %v2640
    %3056 = vmatpush.msra.mxu0 %v2636
    %3057 = vmatpush.msra.mxu0 %v2632
    %3058 = vmatpush.msra.mxu0 %v2628
    %3059 = vmatpush.msra.mxu0 %v2624
    %3060 = vmatpush.msra.mxu0 %v2620
    %3061 = vmatpush.msra.mxu0 %v2616
    %3062 = vmatmul.f32.gmra.mxu0 %v2831
    %v3063 = vpop.f32.mrf.mxu0
    %v3064 = vadd.f32 %v3044, %v3063
    %3065 = vdwg.mxu0
    %3066 = vmatpush.msra.mxu0 %v2740
    %3067 = vmatpush.msra.mxu0 %v2736
    %3068 = vmatpush.msra.mxu0 %v2732
    %3069 = vmatpush.msra.mxu0 %v2728
    %3070 = vmatpush.msra.mxu0 %v2724
    %3071 = vmatpush.msra.mxu0 %v2720
    %3072 = vmatpush.msra.mxu0 %v2716
    %3073 = vmatpush.msra.mxu0 %v2712
    %3074 = vmatpush.msra.mxu0 %v2708
    %3075 = vmatpush.msra.mxu0 %v2704
    %3076 = vmatpush.msra.mxu0 %v2700
    %3077 = vmatpush.msra.mxu0 %v2696
    %3078 = vmatpush.msra.mxu0 %v2692
    %3079 = vmatpush.msra.mxu0 %v2688
    %3080 = vmatpush.msra.mxu0 %v2684
    %3081 = vmatpush.msra.mxu0 %v2680
    %3082 = vmatmul.f32.gmra.mxu0 %v2832
    %v3083 = vpop.f32.mrf.mxu0
    %v3084 = vadd.f32 %v3064, %v3083
    %3085 = vdwg.mxu0
    %3086 = vmatpush.msra.mxu0 %v2804
    %3087 = vmatpush.msra.mxu0 %v2800
    %3088 = vmatpush.msra.mxu0 %v2796
    %3089 = vmatpush.msra.mxu0 %v2792
    %3090 = vmatpush.msra.mxu0 %v2788
    %3091 = vmatpush.msra.mxu0 %v2784
    %3092 = vmatpush.msra.mxu0 %v2780
    %3093 = vmatpush.msra.mxu0 %v2776
    %3094 = vmatpush.msra.mxu0 %v2772
    %3095 = vmatpush.msra.mxu0 %v2768
    %3096 = vmatpush.msra.mxu0 %v2764
    %3097 = vmatpush.msra.mxu0 %v2760
    %3098 = vmatpush.msra.mxu0 %v2756
    %3099 = vmatpush.msra.mxu0 %v2752
    %3100 = vmatpush.msra.mxu0 %v2748
    %3101 = vmatpush.msra.mxu0 %v2744
    %3102 = vmatmul.f32.gmra.mxu0 %v2833
    %v3103 = vpop.f32.mrf.mxu0
    %v3104 = vadd.f32 %v3084, %v3103
    %3105 = vdwg.mxu0
    %3106 = vmatpush.msra.mxu0 %v2613
    %3107 = vmatpush.msra.mxu0 %v2609
    %3108 = vmatpush.msra.mxu0 %v2605
    %3109 = vmatpush.msra.mxu0 %v2601
    %3110 = vmatpush.msra.mxu0 %v2597
    %3111 = vmatpush.msra.mxu0 %v2593
    %3112 = vmatpush.msra.mxu0 %v2589
    %3113 = vmatpush.msra.mxu0 %v2585
    %3114 = vmatpush.msra.mxu0 %v2581
    %3115 = vmatpush.msra.mxu0 %v2577
    %3116 = vmatpush.msra.mxu0 %v2573
    %3117 = vmatpush.msra.mxu0 %v2569
    %3118 = vmatpush.msra.mxu0 %v2565
    %3119 = vmatpush.msra.mxu0 %v2561
    %3120 = vmatpush.msra.mxu0 %v2557
    %3121 = vmatpush.msra.mxu0 %v2553
    %3122 = vmatmul.f32.gmra.mxu0 %v2830
    %v3123 = vpop.f32.mrf.mxu0
    %v3124 = vadd.f32 0.0, %v3123
    %3125 = vdwg.mxu0
    %3126 = vmatpush.msra.mxu0 %v2677
    %3127 = vmatpush.msra.mxu0 %v2673
    %3128 = vmatpush.msra.mxu0 %v2669
    %3129 = vmatpush.msra.mxu0 %v2665
    %3130 = vmatpush.msra.mxu0 %v2661
    %3131 = vmatpush.msra.mxu0 %v2657
    %3132 = vmatpush.msra.mxu0 %v2653
    %3133 = vmatpush.msra.mxu0 %v2649
    %3134 = vmatpush.msra.mxu0 %v2645
    %3135 = vmatpush.msra.mxu0 %v2641
    %3136 = vmatpush.msra.mxu0 %v2637
    %3137 = vmatpush.msra.mxu0 %v2633
    %3138 = vmatpush.msra.mxu0 %v2629
    %3139 = vmatpush.msra.mxu0 %v2625
    %3140 = vmatpush.msra.mxu0 %v2621
    %3141 = vmatpush.msra.mxu0 %v2617
    %3142 = vmatmul.f32.gmra.mxu0 %v2831
    %v3143 = vpop.f32.mrf.mxu0
    %v3144 = vadd.f32 %v3124, %v3143
    %3145 = vdwg.mxu0
    %3146 = vmatpush.msra.mxu0 %v2741
    %3147 = vmatpush.msra.mxu0 %v2737
    %3148 = vmatpush.msra.mxu0 %v2733
    %3149 = vmatpush.msra.mxu0 %v2729
    %3150 = vmatpush.msra.mxu0 %v2725
    %3151 = vmatpush.msra.mxu0 %v2721
    %3152 = vmatpush.msra.mxu0 %v2717
    %3153 = vmatpush.msra.mxu0 %v2713
    %3154 = vmatpush.msra.mxu0 %v2709
    %3155 = vmatpush.msra.mxu0 %v2705
    %3156 = vmatpush.msra.mxu0 %v2701
    %3157 = vmatpush.msra.mxu0 %v2697
    %3158 = vmatpush.msra.mxu0 %v2693
    %3159 = vmatpush.msra.mxu0 %v2689
    %3160 = vmatpush.msra.mxu0 %v2685
    %3161 = vmatpush.msra.mxu0 %v2681
    %3162 = vmatmul.f32.gmra.mxu0 %v2832
    %v3163 = vpop.f32.mrf.mxu0
    %v3164 = vadd.f32 %v3144, %v3163
    %3165 = vdwg.mxu0
    %3166 = vmatpush.msra.mxu0 %v2805
    %3167 = vmatpush.msra.mxu0 %v2801
    %3168 = vmatpush.msra.mxu0 %v2797
    %3169 = vmatpush.msra.mxu0 %v2793
    %3170 = vmatpush.msra.mxu0 %v2789
    %3171 = vmatpush.msra.mxu0 %v2785
    %3172 = vmatpush.msra.mxu0 %v2781
    %3173 = vmatpush.msra.mxu0 %v2777
    %3174 = vmatpush.msra.mxu0 %v2773
    %3175 = vmatpush.msra.mxu0 %v2769
    %3176 = vmatpush.msra.mxu0 %v2765
    %3177 = vmatpush.msra.mxu0 %v2761
    %3178 = vmatpush.msra.mxu0 %v2757
    %3179 = vmatpush.msra.mxu0 %v2753
    %3180 = vmatpush.msra.mxu0 %v2749
    %3181 = vmatpush.msra.mxu0 %v2745
    %3182 = vmatmul.f32.gmra.mxu0 %v2833
    %v3183 = vpop.f32.mrf.mxu0
    %v3184 = vadd.f32 %v3164, %v3183
    %3185 = vdwg.mxu0
    %3186 = vmatpush.msra.mxu0 %v2610
    %3187 = vmatpush.msra.mxu0 %v2606
    %3188 = vmatpush.msra.mxu0 %v2602
    %3189 = vmatpush.msra.mxu0 %v2598
    %3190 = vmatpush.msra.mxu0 %v2594
    %3191 = vmatpush.msra.mxu0 %v2590
    %3192 = vmatpush.msra.mxu0 %v2586
    %3193 = vmatpush.msra.mxu0 %v2582
    %3194 = vmatpush.msra.mxu0 %v2578
    %3195 = vmatpush.msra.mxu0 %v2574
    %3196 = vmatpush.msra.mxu0 %v2570
    %3197 = vmatpush.msra.mxu0 %v2566
    %3198 = vmatpush.msra.mxu0 %v2562
    %3199 = vmatpush.msra.mxu0 %v2558
    %3200 = vmatpush.msra.mxu0 %v2554
    %3201 = vmatpush.msra.mxu0 %v2550
    %3202 = vmatmul.f32.gmra.mxu0 %v2862
    %v3203 = vpop.f32.mrf.mxu0
    %v3204 = vadd.f32 0.0, %v3203
    %3205 = vdwg.mxu0
    %3206 = vmatpush.msra.mxu0 %v2674
    %3207 = vmatpush.msra.mxu0 %v2670
    %3208 = vmatpush.msra.mxu0 %v2666
    %3209 = vmatpush.msra.mxu0 %v2662
    %3210 = vmatpush.msra.mxu0 %v2658
    %3211 = vmatpush.msra.mxu0 %v2654
    %3212 = vmatpush.msra.mxu0 %v2650
    %3213 = vmatpush.msra.mxu0 %v2646
    %3214 = vmatpush.msra.mxu0 %v2642
    %3215 = vmatpush.msra.mxu0 %v2638
    %3216 = vmatpush.msra.mxu0 %v2634
    %3217 = vmatpush.msra.mxu0 %v2630
    %3218 = vmatpush.msra.mxu0 %v2626
    %3219 = vmatpush.msra.mxu0 %v2622
    %3220 = vmatpush.msra.mxu0 %v2618
    %3221 = vmatpush.msra.mxu0 %v2614
    %3222 = vmatmul.f32.gmra.mxu0 %v2863
    %v3223 = vpop.f32.mrf.mxu0
    %v3224 = vadd.f32 %v3204, %v3223
    %3225 = vdwg.mxu0
    %3226 = vmatpush.msra.mxu0 %v2738
    %3227 = vmatpush.msra.mxu0 %v2734
    %3228 = vmatpush.msra.mxu0 %v2730
    %3229 = vmatpush.msra.mxu0 %v2726
    %3230 = vmatpush.msra.mxu0 %v2722
    %3231 = vmatpush.msra.mxu0 %v2718
    %3232 = vmatpush.msra.mxu0 %v2714
    %3233 = vmatpush.msra.mxu0 %v2710
    %3234 = vmatpush.msra.mxu0 %v2706
    %3235 = vmatpush.msra.mxu0 %v2702
    %3236 = vmatpush.msra.mxu0 %v2698
    %3237 = vmatpush.msra.mxu0 %v2694
    %3238 = vmatpush.msra.mxu0 %v2690
    %3239 = vmatpush.msra.mxu0 %v2686
    %3240 = vmatpush.msra.mxu0 %v2682
    %3241 = vmatpush.msra.mxu0 %v2678
    %3242 = vmatmul.f32.gmra.mxu0 %v2864
    %v3243 = vpop.f32.mrf.mxu0
    %v3244 = vadd.f32 %v3224, %v3243
    %3245 = vdwg.mxu0
    %3246 = vmatpush.msra.mxu0 %v2802
    %3247 = vmatpush.msra.mxu0 %v2798
    %3248 = vmatpush.msra.mxu0 %v2794
    %3249 = vmatpush.msra.mxu0 %v2790
    %3250 = vmatpush.msra.mxu0 %v2786
    %3251 = vmatpush.msra.mxu0 %v2782
    %3252 = vmatpush.msra.mxu0 %v2778
    %3253 = vmatpush.msra.mxu0 %v2774
    %3254 = vmatpush.msra.mxu0 %v2770
    %3255 = vmatpush.msra.mxu0 %v2766
    %3256 = vmatpush.msra.mxu0 %v2762
    %3257 = vmatpush.msra.mxu0 %v2758
    %3258 = vmatpush.msra.mxu0 %v2754
    %3259 = vmatpush.msra.mxu0 %v2750
    %3260 = vmatpush.msra.mxu0 %v2746
    %3261 = vmatpush.msra.mxu0 %v2742
    %3262 = vmatmul.f32.gmra.mxu0 %v2865
    %v3263 = vpop.f32.mrf.mxu0
    %v3264 = vadd.f32 %v3244, %v3263
    %3265 = vdwg.mxu0
    %3266 = vmatpush.msra.mxu0 %v2611
    %3267 = vmatpush.msra.mxu0 %v2607
    %3268 = vmatpush.msra.mxu0 %v2603
    %3269 = vmatpush.msra.mxu0 %v2599
    %3270 = vmatpush.msra.mxu0 %v2595
    %3271 = vmatpush.msra.mxu0 %v2591
    %3272 = vmatpush.msra.mxu0 %v2587
    %3273 = vmatpush.msra.mxu0 %v2583
    %3274 = vmatpush.msra.mxu0 %v2579
    %3275 = vmatpush.msra.mxu0 %v2575
    %3276 = vmatpush.msra.mxu0 %v2571
    %3277 = vmatpush.msra.mxu0 %v2567
    %3278 = vmatpush.msra.mxu0 %v2563
    %3279 = vmatpush.msra.mxu0 %v2559
    %3280 = vmatpush.msra.mxu0 %v2555
    %3281 = vmatpush.msra.mxu0 %v2551
    %3282 = vmatmul.f32.gmra.mxu0 %v2862
    %v3283 = vpop.f32.mrf.mxu0
    %v3284 = vadd.f32 0.0, %v3283
    %3285 = vdwg.mxu0
    %3286 = vmatpush.msra.mxu0 %v2675
    %3287 = vmatpush.msra.mxu0 %v2671
    %3288 = vmatpush.msra.mxu0 %v2667
    %3289 = vmatpush.msra.mxu0 %v2663
    %3290 = vmatpush.msra.mxu0 %v2659
    %3291 = vmatpush.msra.mxu0 %v2655
    %3292 = vmatpush.msra.mxu0 %v2651
    %3293 = vmatpush.msra.mxu0 %v2647
    %3294 = vmatpush.msra.mxu0 %v2643
    %3295 = vmatpush.msra.mxu0 %v2639
    %3296 = vmatpush.msra.mxu0 %v2635
    %3297 = vmatpush.msra.mxu0 %v2631
    %3298 = vmatpush.msra.mxu0 %v2627
    %3299 = vmatpush.msra.mxu0 %v2623
    %3300 = vmatpush.msra.mxu0 %v2619
    %3301 = vmatpush.msra.mxu0 %v2615
    %3302 = vmatmul.f32.gmra.mxu0 %v2863
    %v3303 = vpop.f32.mrf.mxu0
    %v3304 = vadd.f32 %v3284, %v3303
    %3305 = vdwg.mxu0
    %3306 = vmatpush.msra.mxu0 %v2739
    %3307 = vmatpush.msra.mxu0 %v2735
    %3308 = vmatpush.msra.mxu0 %v2731
    %3309 = vmatpush.msra.mxu0 %v2727
    %3310 = vmatpush.msra.mxu0 %v2723
    %3311 = vmatpush.msra.mxu0 %v2719
    %3312 = vmatpush.msra.mxu0 %v2715
    %3313 = vmatpush.msra.mxu0 %v2711
    %3314 = vmatpush.msra.mxu0 %v2707
    %3315 = vmatpush.msra.mxu0 %v2703
    %3316 = vmatpush.msra.mxu0 %v2699
    %3317 = vmatpush.msra.mxu0 %v2695
    %3318 = vmatpush.msra.mxu0 %v2691
    %3319 = vmatpush.msra.mxu0 %v2687
    %3320 = vmatpush.msra.mxu0 %v2683
    %3321 = vmatpush.msra.mxu0 %v2679
    %3322 = vmatmul.f32.gmra.mxu0 %v2864
    %v3323 = vpop.f32.mrf.mxu0
    %v3324 = vadd.f32 %v3304, %v3323
    %3325 = vdwg.mxu0
    %3326 = vmatpush.msra.mxu0 %v2803
    %3327 = vmatpush.msra.mxu0 %v2799
    %3328 = vmatpush.msra.mxu0 %v2795
    %3329 = vmatpush.msra.mxu0 %v2791
    %3330 = vmatpush.msra.mxu0 %v2787
    %3331 = vmatpush.msra.mxu0 %v2783
    %3332 = vmatpush.msra.mxu0 %v2779
    %3333 = vmatpush.msra.mxu0 %v2775
    %3334 = vmatpush.msra.mxu0 %v2771
    %3335 = vmatpush.msra.mxu0 %v2767
    %3336 = vmatpush.msra.mxu0 %v2763
    %3337 = vmatpush.msra.mxu0 %v2759
    %3338 = vmatpush.msra.mxu0 %v2755
    %3339 = vmatpush.msra.mxu0 %v2751
    %3340 = vmatpush.msra.mxu0 %v2747
    %3341 = vmatpush.msra.mxu0 %v2743
    %3342 = vmatmul.f32.gmra.mxu0 %v2865
    %v3343 = vpop.f32.mrf.mxu0
    %v3344 = vadd.f32 %v3324, %v3343
    %3345 = vdwg.mxu0
    %3346 = vmatpush.msra.mxu0 %v2612
    %3347 = vmatpush.msra.mxu0 %v2608
    %3348 = vmatpush.msra.mxu0 %v2604
    %3349 = vmatpush.msra.mxu0 %v2600
    %3350 = vmatpush.msra.mxu0 %v2596
    %3351 = vmatpush.msra.mxu0 %v2592
    %3352 = vmatpush.msra.mxu0 %v2588
    %3353 = vmatpush.msra.mxu0 %v2584
    %3354 = vmatpush.msra.mxu0 %v2580
    %3355 = vmatpush.msra.mxu0 %v2576
    %3356 = vmatpush.msra.mxu0 %v2572
    %3357 = vmatpush.msra.mxu0 %v2568
    %3358 = vmatpush.msra.mxu0 %v2564
    %3359 = vmatpush.msra.mxu0 %v2560
    %3360 = vmatpush.msra.mxu0 %v2556
    %3361 = vmatpush.msra.mxu0 %v2552
    %3362 = vmatmul.f32.gmra.mxu0 %v2862
    %v3363 = vpop.f32.mrf.mxu0
    %v3364 = vadd.f32 0.0, %v3363
    %3365 = vdwg.mxu0
    %3366 = vmatpush.msra.mxu0 %v2676
    %3367 = vmatpush.msra.mxu0 %v2672
    %3368 = vmatpush.msra.mxu0 %v2668
    %3369 = vmatpush.msra.mxu0 %v2664
    %3370 = vmatpush.msra.mxu0 %v2660
    %3371 = vmatpush.msra.mxu0 %v2656
    %3372 = vmatpush.msra.mxu0 %v2652
    %3373 = vmatpush.msra.mxu0 %v2648
    %3374 = vmatpush.msra.mxu0 %v2644
    %3375 = vmatpush.msra.mxu0 %v2640
    %3376 = vmatpush.msra.mxu0 %v2636
    %3377 = vmatpush.msra.mxu0 %v2632
    %3378 = vmatpush.msra.mxu0 %v2628
    %3379 = vmatpush.msra.mxu0 %v2624
    %3380 = vmatpush.msra.mxu0 %v2620
    %3381 = vmatpush.msra.mxu0 %v2616
    %3382 = vmatmul.f32.gmra.mxu0 %v2863
    %v3383 = vpop.f32.mrf.mxu0
    %v3384 = vadd.f32 %v3364, %v3383
    %3385 = vdwg.mxu0
    %3386 = vmatpush.msra.mxu0 %v2740
    %3387 = vmatpush.msra.mxu0 %v2736
    %3388 = vmatpush.msra.mxu0 %v2732
    %3389 = vmatpush.msra.mxu0 %v2728
    %3390 = vmatpush.msra.mxu0 %v2724
    %3391 = vmatpush.msra.mxu0 %v2720
    %3392 = vmatpush.msra.mxu0 %v2716
    %3393 = vmatpush.msra.mxu0 %v2712
    %3394 = vmatpush.msra.mxu0 %v2708
    %3395 = vmatpush.msra.mxu0 %v2704
    %3396 = vmatpush.msra.mxu0 %v2700
    %3397 = vmatpush.msra.mxu0 %v2696
    %3398 = vmatpush.msra.mxu0 %v2692
    %3399 = vmatpush.msra.mxu0 %v2688
    %3400 = vmatpush.msra.mxu0 %v2684
    %3401 = vmatpush.msra.mxu0 %v2680
    %3402 = vmatmul.f32.gmra.mxu0 %v2864
    %v3403 = vpop.f32.mrf.mxu0
    %v3404 = vadd.f32 %v3384, %v3403
    %3405 = vdwg.mxu0
    %3406 = vmatpush.msra.mxu0 %v2804
    %3407 = vmatpush.msra.mxu0 %v2800
    %3408 = vmatpush.msra.mxu0 %v2796
    %3409 = vmatpush.msra.mxu0 %v2792
    %3410 = vmatpush.msra.mxu0 %v2788
    %3411 = vmatpush.msra.mxu0 %v2784
    %3412 = vmatpush.msra.mxu0 %v2780
    %3413 = vmatpush.msra.mxu0 %v2776
    %3414 = vmatpush.msra.mxu0 %v2772
    %3415 = vmatpush.msra.mxu0 %v2768
    %3416 = vmatpush.msra.mxu0 %v2764
    %3417 = vmatpush.msra.mxu0 %v2760
    %3418 = vmatpush.msra.mxu0 %v2756
    %3419 = vmatpush.msra.mxu0 %v2752
    %3420 = vmatpush.msra.mxu0 %v2748
    %3421 = vmatpush.msra.mxu0 %v2744
    %3422 = vmatmul.f32.gmra.mxu0 %v2865
    %v3423 = vpop.f32.mrf.mxu0
    %v3424 = vadd.f32 %v3404, %v3423
    %3425 = vdwg.mxu0
    %3426 = vmatpush.msra.mxu0 %v2613
    %3427 = vmatpush.msra.mxu0 %v2609
    %3428 = vmatpush.msra.mxu0 %v2605
    %3429 = vmatpush.msra.mxu0 %v2601
    %3430 = vmatpush.msra.mxu0 %v2597
    %3431 = vmatpush.msra.mxu0 %v2593
    %3432 = vmatpush.msra.mxu0 %v2589
    %3433 = vmatpush.msra.mxu0 %v2585
    %3434 = vmatpush.msra.mxu0 %v2581
    %3435 = vmatpush.msra.mxu0 %v2577
    %3436 = vmatpush.msra.mxu0 %v2573
    %3437 = vmatpush.msra.mxu0 %v2569
    %3438 = vmatpush.msra.mxu0 %v2565
    %3439 = vmatpush.msra.mxu0 %v2561
    %3440 = vmatpush.msra.mxu0 %v2557
    %3441 = vmatpush.msra.mxu0 %v2553
    %3442 = vmatmul.f32.gmra.mxu0 %v2862
    %v3443 = vpop.f32.mrf.mxu0
    %v3444 = vadd.f32 0.0, %v3443
    %3445 = vdwg.mxu0
    %3446 = vmatpush.msra.mxu0 %v2677
    %3447 = vmatpush.msra.mxu0 %v2673
    %3448 = vmatpush.msra.mxu0 %v2669
    %3449 = vmatpush.msra.mxu0 %v2665
    %3450 = vmatpush.msra.mxu0 %v2661
    %3451 = vmatpush.msra.mxu0 %v2657
    %3452 = vmatpush.msra.mxu0 %v2653
    %3453 = vmatpush.msra.mxu0 %v2649
    %3454 = vmatpush.msra.mxu0 %v2645
    %3455 = vmatpush.msra.mxu0 %v2641
    %3456 = vmatpush.msra.mxu0 %v2637
    %3457 = vmatpush.msra.mxu0 %v2633
    %3458 = vmatpush.msra.mxu0 %v2629
    %3459 = vmatpush.msra.mxu0 %v2625
    %3460 = vmatpush.msra.mxu0 %v2621
    %3461 = vmatpush.msra.mxu0 %v2617
    %3462 = vmatmul.f32.gmra.mxu0 %v2863
    %v3463 = vpop.f32.mrf.mxu0
    %v3464 = vadd.f32 %v3444, %v3463
    %3465 = vdwg.mxu0
    %3466 = vmatpush.msra.mxu0 %v2741
    %3467 = vmatpush.msra.mxu0 %v2737
    %3468 = vmatpush.msra.mxu0 %v2733
    %3469 = vmatpush.msra.mxu0 %v2729
    %3470 = vmatpush.msra.mxu0 %v2725
    %3471 = vmatpush.msra.mxu0 %v2721
    %3472 = vmatpush.msra.mxu0 %v2717
    %3473 = vmatpush.msra.mxu0 %v2713
    %3474 = vmatpush.msra.mxu0 %v2709
    %3475 = vmatpush.msra.mxu0 %v2705
    %3476 = vmatpush.msra.mxu0 %v2701
    %3477 = vmatpush.msra.mxu0 %v2697
    %3478 = vmatpush.msra.mxu0 %v2693
    %3479 = vmatpush.msra.mxu0 %v2689
    %3480 = vmatpush.msra.mxu0 %v2685
    %3481 = vmatpush.msra.mxu0 %v2681
    %3482 = vmatmul.f32.gmra.mxu0 %v2864
    %v3483 = vpop.f32.mrf.mxu0
    %v3484 = vadd.f32 %v3464, %v3483
    %3485 = vdwg.mxu0
    %3486 = vmatpush.msra.mxu0 %v2805
    %3487 = vmatpush.msra.mxu0 %v2801
    %3488 = vmatpush.msra.mxu0 %v2797
    %3489 = vmatpush.msra.mxu0 %v2793
    %3490 = vmatpush.msra.mxu0 %v2789
    %3491 = vmatpush.msra.mxu0 %v2785
    %3492 = vmatpush.msra.mxu0 %v2781
    %3493 = vmatpush.msra.mxu0 %v2777
    %3494 = vmatpush.msra.mxu0 %v2773
    %3495 = vmatpush.msra.mxu0 %v2769
    %3496 = vmatpush.msra.mxu0 %v2765
    %3497 = vmatpush.msra.mxu0 %v2761
    %3498 = vmatpush.msra.mxu0 %v2757
    %3499 = vmatpush.msra.mxu0 %v2753
    %3500 = vmatpush.msra.mxu0 %v2749
    %3501 = vmatpush.msra.mxu0 %v2745
    %3502 = vmatmul.f32.gmra.mxu0 %v2865
    %v3503 = vpop.f32.mrf.mxu0
    %v3504 = vadd.f32 %v3484, %v3503
    %3505 = vdwg.mxu0
    %v3506 = vmul.f32 %v2944, %v2944
    %v3507 = vmul.f32 %v3024, %v3024
    %v3508 = vmul.f32 %v3104, %v3104
    %v3509 = vmul.f32 %v3184, %v3184
    %v3510 = vsub.f32 %v3264, %v3506
    %v3511 = vsub.f32 %v3344, %v3507
    %v3512 = vsub.f32 %v3424, %v3508
    %v3513 = vsub.f32 %v3504, %v3509
    %v3514 = vmax.f32 %v3510, 0.0
    %v3515 = vmax.f32 %v3511, 0.0
    %v3516 = vmax.f32 %v3512, 0.0
    %v3517 = vmax.f32 %v3513, 0.0
    %v3518 = vperm.slane %v2944, 0
    %v3519 = vperm.slane %v3024, 0
    %v3520 = vperm.slane %v3104, 0
    %v3521 = vperm.slane %v3184, 0
    %v3522 = vsub.f32 %v2488, %v3518
    %v3523 = vsub.f32 %v2508, %v3519
    %v3524 = vsub.f32 %v2528, %v3520
    %v3525 = vsub.f32 %v2548, %v3521
    %v3526 = vadd.f32 %v3514, 1e-05
    %v3527 = vadd.f32 %v3515, 1e-05
    %v3528 = vadd.f32 %v3516, 1e-05
    %v3529 = vadd.f32 %v3517, 1e-05
    %v3530 = vrsqrt.pop %v3526
    %v3531 = vmul.f32 %v3530, %v3526
    %v3532 = vmul.f32 %v3531, %v3530
    %v3533 = vmul.f32 0.5, %v3532
    %v3534 = vsub.f32 1.5, %v3533
    %v3535 = vmul.f32 %v3530, %v3534
    %vm3536 = vweird.f32 %v3526
    %vm3537 = vweird.f32 %v3530
    %vm3538 = vmor %vm3536, %vm3537
    %v3539 = vsel %vm3538, %v3530, %v3535
    %v3540 = vrsqrt.pop %v3527
    %v3541 = vmul.f32 %v3540, %v3527
    %v3542 = vmul.f32 %v3541, %v3540
    %v3543 = vmul.f32 0.5, %v3542
    %v3544 = vsub.f32 1.5, %v3543
    %v3545 = vmul.f32 %v3540, %v3544
    %vm3546 = vweird.f32 %v3527
    %vm3547 = vweird.f32 %v3540
    %vm3548 = vmor %vm3546, %vm3547
    %v3549 = vsel %vm3548, %v3540, %v3545
    %v3550 = vrsqrt.pop %v3528
    %v3551 = vmul.f32 %v3550, %v3528
    %v3552 = vmul.f32 %v3551, %v3550
    %v3553 = vmul.f32 0.5, %v3552
    %v3554 = vsub.f32 1.5, %v3553
    %v3555 = vmul.f32 %v3550, %v3554
    %vm3556 = vweird.f32 %v3528
    %vm3557 = vweird.f32 %v3550
    %vm3558 = vmor %vm3556, %vm3557
    %v3559 = vsel %vm3558, %v3550, %v3555
    %v3560 = vrsqrt.pop %v3529
    %v3561 = vmul.f32 %v3560, %v3529
    %v3562 = vmul.f32 %v3561, %v3560
    %v3563 = vmul.f32 0.5, %v3562
    %v3564 = vsub.f32 1.5, %v3563
    %v3565 = vmul.f32 %v3560, %v3564
    %vm3566 = vweird.f32 %v3529
    %vm3567 = vweird.f32 %v3560
    %vm3568 = vmor %vm3566, %vm3567
    %v3569 = vsel %vm3568, %v3560, %v3565
    %v3570 = vperm.slane %v3539, 0
    %v3571 = vperm.slane %v3549, 0
    %v3572 = vperm.slane %v3559, 0
    %v3573 = vperm.slane %v3569, 0
    %v3574 = vmul.f32 %v3522, %v3570
    %v3575 = vmul.f32 %v3523, %v3571
    %v3576 = vmul.f32 %v3524, %v3572
    %v3577 = vmul.f32 %v3525, %v3573
    %v3578 = vperm.slane %v50, 2
    %v3579 = vperm.slane %v51, 2
    %v3580 = vperm.slane %v52, 2
    %v3581 = vperm.slane %v53, 2
    %v3582 = vmul.f32 %v3574, %v3578
    %v3583 = vmul.f32 %v3575, %v3579
    %v3584 = vmul.f32 %v3576, %v3580
    %v3585 = vmul.f32 %v3577, %v3581
    %v3586 = vperm.slane %v50, 3
    %v3587 = vperm.slane %v51, 3
    %v3588 = vperm.slane %v52, 3
    %v3589 = vperm.slane %v53, 3
    %v3590 = vadd.f32 %v3582, %v3586
    %v3591 = vadd.f32 %v3583, %v3587
    %v3592 = vadd.f32 %v3584, %v3588
    %v3593 = vadd.f32 %v3585, %v3589
    %v3594 = vmax.f32 %v3590, 0.0
    %v3595 = vmax.f32 %v3591, 0.0
    %v3596 = vmax.f32 %v3592, 0.0
    %v3597 = vmax.f32 %v3593, 0.0
    %v3598 = vsel %vm2305, %v3594, 0.0
    %v3599 = vsel %vm2305, %v3595, 0.0
    %v3600 = vsel %vm2305, %v3596, 0.0
    %v3601 = vsel %vm2305, %v3597, 0.0
    %v3602 = vld [vmem:[%s5 + $0x8b0] sm:$0xff]
    %v3603 = vld [vmem:[%s5 + $0x8b8] sm:$0xff]
    %v3604 = vld [vmem:[%s5 + $0x8c0] sm:$0xff]
    %v3605 = vld [vmem:[%s5 + $0x8c8] sm:$0xff]
    %v3606 = vld [vmem:[%s5 + $0x8d0] sm:$0xff]
    %v3607 = vld [vmem:[%s5 + $0x8d8] sm:$0xff]
    %v3608 = vld [vmem:[%s5 + $0x8e0] sm:$0xff]
    %v3609 = vld [vmem:[%s5 + $0x8e8] sm:$0xff]
    %v3610 = vld [vmem:[%s5 + $0x8f0] sm:$0xff]
    %v3611 = vld [vmem:[%s5 + $0x8f8] sm:$0xff]
    %v3612 = vld [vmem:[%s5 + $0x900] sm:$0xff]
    %v3613 = vld [vmem:[%s5 + $0x908] sm:$0xff]
    %v3614 = vld [vmem:[%s5 + $0x910] sm:$0xff]
    %v3615 = vld [vmem:[%s5 + $0x918] sm:$0xff]
    %v3616 = vld [vmem:[%s5 + $0x920] sm:$0xff]
    %v3617 = vld [vmem:[%s5 + $0x928] sm:$0xff]
    %v3618 = vld [vmem:[%s5 + $0x930] sm:$0xff]
    %v3619 = vld [vmem:[%s5 + $0x938] sm:$0xff]
    %v3620 = vld [vmem:[%s5 + $0x940] sm:$0xff]
    %v3621 = vld [vmem:[%s5 + $0x948] sm:$0xff]
    %v3622 = vld [vmem:[%s5 + $0x950] sm:$0xff]
    %v3623 = vld [vmem:[%s5 + $0x958] sm:$0xff]
    %v3624 = vld [vmem:[%s5 + $0x960] sm:$0xff]
    %v3625 = vld [vmem:[%s5 + $0x968] sm:$0xff]
    %v3626 = vld [vmem:[%s5 + $0x970] sm:$0xff]
    %v3627 = vld [vmem:[%s5 + $0x978] sm:$0xff]
    %v3628 = vld [vmem:[%s5 + $0x980] sm:$0xff]
    %v3629 = vld [vmem:[%s5 + $0x988] sm:$0xff]
    %v3630 = vld [vmem:[%s5 + $0x990] sm:$0xff]
    %v3631 = vld [vmem:[%s5 + $0x998] sm:$0xff]
    %v3632 = vld [vmem:[%s5 + $0x9a0] sm:$0xff]
    %v3633 = vld [vmem:[%s5 + $0x9a8] sm:$0xff]
    %v3634 = vld [vmem:[%s5 + $0x9b0] sm:$0xff]
    %v3635 = vld [vmem:[%s5 + $0x9b8] sm:$0xff]
    %v3636 = vld [vmem:[%s5 + $0x9c0] sm:$0xff]
    %v3637 = vld [vmem:[%s5 + $0x9c8] sm:$0xff]
    %v3638 = vld [vmem:[%s5 + $0x9d0] sm:$0xff]
    %v3639 = vld [vmem:[%s5 + $0x9d8] sm:$0xff]
    %v3640 = vld [vmem:[%s5 + $0x9e0] sm:$0xff]
    %v3641 = vld [vmem:[%s5 + $0x9e8] sm:$0xff]
    %v3642 = vld [vmem:[%s5 + $0x9f0] sm:$0xff]
    %v3643 = vld [vmem:[%s5 + $0x9f8] sm:$0xff]
    %v3644 = vld [vmem:[%s5 + $0xa00] sm:$0xff]
    %v3645 = vld [vmem:[%s5 + $0xa08] sm:$0xff]
    %v3646 = vld [vmem:[%s5 + $0xa10] sm:$0xff]
    %v3647 = vld [vmem:[%s5 + $0xa18] sm:$0xff]
    %v3648 = vld [vmem:[%s5 + $0xa20] sm:$0xff]
    %v3649 = vld [vmem:[%s5 + $0xa28] sm:$0xff]
    %v3650 = vld [vmem:[%s5 + $0xa30] sm:$0xff]
    %v3651 = vld [vmem:[%s5 + $0xa38] sm:$0xff]
    %v3652 = vld [vmem:[%s5 + $0xa40] sm:$0xff]
    %v3653 = vld [vmem:[%s5 + $0xa48] sm:$0xff]
    %v3654 = vld [vmem:[%s5 + $0xa50] sm:$0xff]
    %v3655 = vld [vmem:[%s5 + $0xa58] sm:$0xff]
    %v3656 = vld [vmem:[%s5 + $0xa60] sm:$0xff]
    %v3657 = vld [vmem:[%s5 + $0xa68] sm:$0xff]
    %v3658 = vld [vmem:[%s5 + $0xa70] sm:$0xff]
    %v3659 = vld [vmem:[%s5 + $0xa78] sm:$0xff]
    %v3660 = vld [vmem:[%s5 + $0xa80] sm:$0xff]
    %v3661 = vld [vmem:[%s5 + $0xa88] sm:$0xff]
    %v3662 = vld [vmem:[%s5 + $0xa90] sm:$0xff]
    %v3663 = vld [vmem:[%s5 + $0xa98] sm:$0xff]
    %v3664 = vld [vmem:[%s5 + $0xaa0] sm:$0xff]
    %v3665 = vld [vmem:[%s5 + $0xaa8] sm:$0xff]
    %v3666 = vld [vmem:[%s5] sm:$0xff]
    %v3667 = vld [vmem:[%s5 + $0x8] sm:$0xff]
    %v3668 = vld [vmem:[%s5 + $0x10] sm:$0xff]
    %v3669 = vld [vmem:[%s5 + $0x18] sm:$0xff]
    %v3670 = vld [vmem:[%s5 + $0x20] sm:$0xff]
    %v3671 = vld [vmem:[%s5 + $0x28] sm:$0xff]
    %v3672 = vld [vmem:[%s5 + $0x30] sm:$0xff]
    %v3673 = vld [vmem:[%s5 + $0x38] sm:$0xff]
    %v3674 = vld [vmem:[%s5 + $0x40] sm:$0xff]
    %v3675 = vld [vmem:[%s5 + $0x48] sm:$0xff]
    %v3676 = vld [vmem:[%s5 + $0x50] sm:$0xff]
    %v3677 = vld [vmem:[%s5 + $0x58] sm:$0xff]
    %v3678 = vld [vmem:[%s5 + $0x60] sm:$0xff]
    %v3679 = vld [vmem:[%s5 + $0x68] sm:$0xff]
    %v3680 = vld [vmem:[%s5 + $0x70] sm:$0xff]
    %v3681 = vld [vmem:[%s5 + $0x78] sm:$0xff]
    %v3682 = vld [vmem:[%s5 + $0x80] sm:$0xff]
    %v3683 = vld [vmem:[%s5 + $0x88] sm:$0xff]
    %v3684 = vld [vmem:[%s5 + $0x90] sm:$0xff]
    %v3685 = vld [vmem:[%s5 + $0x98] sm:$0xff]
    %v3686 = vld [vmem:[%s5 + $0xa0] sm:$0xff]
    %v3687 = vld [vmem:[%s5 + $0xa8] sm:$0xff]
    %v3689 = vsel %vm956, %v2452, 0
    %3691 = vmatpush.msra.mxu0 0.0
    %3692 = vmatpush.msra.mxu0 0.0
    %3693 = vmatpush.msra.mxu0 0.0
    %3694 = vmatpush.msra.mxu0 0.0
    %3695 = vmatpush.msra.mxu0 0.0
    %3696 = vmatpush.msra.mxu0 0.0
    %3697 = vmatpush.msra.mxu0 0.0
    %3698 = vmatpush.msra.mxu0 0.0
    %3699 = vmatpush.msra.mxu0 %v3686
    %3700 = vmatpush.msra.mxu0 %v3684
    %3701 = vmatpush.msra.mxu0 %v3682
    %3702 = vmatpush.msra.mxu0 %v3680
    %3703 = vmatpush.msra.mxu0 %v3678
    %3704 = vmatpush.msra.mxu0 %v3676
    %3705 = vmatpush.msra.mxu0 %v3674
    %3706 = vmatpush.msra.mxu0 %v3672
    %3707 = vmatmul.f32.gmra.mxu0 %v3689
    %v3708 = vpop.f32.mrf.mxu0
    %v3709 = vadd.f32 0.0, %v3708
    %3710 = vdwg.mxu0
    %3711 = vmatpush.msra.mxu0 0.0
    %3712 = vmatpush.msra.mxu0 0.0
    %3713 = vmatpush.msra.mxu0 0.0
    %3714 = vmatpush.msra.mxu0 0.0
    %3715 = vmatpush.msra.mxu0 0.0
    %3716 = vmatpush.msra.mxu0 0.0
    %3717 = vmatpush.msra.mxu0 0.0
    %3718 = vmatpush.msra.mxu0 0.0
    %3719 = vmatpush.msra.mxu0 %v3687
    %3720 = vmatpush.msra.mxu0 %v3685
    %3721 = vmatpush.msra.mxu0 %v3683
    %3722 = vmatpush.msra.mxu0 %v3681
    %3723 = vmatpush.msra.mxu0 %v3679
    %3724 = vmatpush.msra.mxu0 %v3677
    %3725 = vmatpush.msra.mxu0 %v3675
    %3726 = vmatpush.msra.mxu0 %v3673
    %3727 = vmatmul.f32.gmra.mxu0 %v3689
    %v3728 = vpop.f32.mrf.mxu0
    %v3729 = vadd.f32 0.0, %v3728
    %3730 = vdwg.mxu0
    %3731 = vmatpush.msra.mxu0 0.0
    %3732 = vmatpush.msra.mxu0 0.0
    %3733 = vmatpush.msra.mxu0 0.0
    %3734 = vmatpush.msra.mxu0 0.0
    %3735 = vmatpush.msra.mxu0 0.0
    %3736 = vmatpush.msra.mxu0 0.0
    %3737 = vmatpush.msra.mxu0 0.0
    %3738 = vmatpush.msra.mxu0 0.0
    %3739 = vmatpush.msra.mxu0 0.0
    %3740 = vmatpush.msra.mxu0 0.0
    %3741 = vmatpush.msra.mxu0 0.0
    %3742 = vmatpush.msra.mxu0 0.0
    %3743 = vmatpush.msra.mxu0 0.0
    %3744 = vmatpush.msra.mxu0 %v3670
    %3745 = vmatpush.msra.mxu0 %v3668
    %3746 = vmatpush.msra.mxu0 %v3666
    %3747 = vmatmul.f32.gmra.mxu0 %v2468
    %v3748 = vpop.f32.mrf.mxu0
    %v3749 = vadd.f32 %v3709, %v3748
    %3750 = vdwg.mxu0
    %3751 = vmatpush.msra.mxu0 0.0
    %3752 = vmatpush.msra.mxu0 0.0
    %3753 = vmatpush.msra.mxu0 0.0
    %3754 = vmatpush.msra.mxu0 0.0
    %3755 = vmatpush.msra.mxu0 0.0
    %3756 = vmatpush.msra.mxu0 0.0
    %3757 = vmatpush.msra.mxu0 0.0
    %3758 = vmatpush.msra.mxu0 0.0
    %3759 = vmatpush.msra.mxu0 0.0
    %3760 = vmatpush.msra.mxu0 0.0
    %3761 = vmatpush.msra.mxu0 0.0
    %3762 = vmatpush.msra.mxu0 0.0
    %3763 = vmatpush.msra.mxu0 0.0
    %3764 = vmatpush.msra.mxu0 %v3671
    %3765 = vmatpush.msra.mxu0 %v3669
    %3766 = vmatpush.msra.mxu0 %v3667
    %3767 = vmatmul.f32.gmra.mxu0 %v2468
    %v3768 = vpop.f32.mrf.mxu0
    %v3769 = vadd.f32 %v3729, %v3768
    %3770 = vdwg.mxu0
    %v3771 = vrot.slane %v3749, 4
    %v3772 = vadd.f32 %v3749, %v3771
    %v3773 = vrot.slane %v3772, 2
    %v3774 = vadd.f32 %v3772, %v3773
    %v3775 = vrot.slane %v3774, 1
    %v3776 = vadd.f32 %v3774, %v3775
    %v3777 = vrot.slane %v3769, 4
    %v3778 = vadd.f32 %v3769, %v3777
    %v3779 = vrot.slane %v3778, 2
    %v3780 = vadd.f32 %v3778, %v3779
    %v3781 = vrot.slane %v3780, 1
    %v3782 = vadd.f32 %v3780, %v3781
    %v3783 = vmul.f32 %v3776, 0.16666667
    %v3784 = vmul.f32 %v3782, 0.16666667
    %v3785 = vmul.f32 %v3749, %v3749
    %v3786 = vmul.f32 %v3769, %v3769
    %v3787 = vrot.slane %v3785, 4
    %v3788 = vadd.f32 %v3785, %v3787
    %v3789 = vrot.slane %v3788, 2
    %v3790 = vadd.f32 %v3788, %v3789
    %v3791 = vrot.slane %v3790, 1
    %v3792 = vadd.f32 %v3790, %v3791
    %v3793 = vrot.slane %v3786, 4
    %v3794 = vadd.f32 %v3786, %v3793
    %v3795 = vrot.slane %v3794, 2
    %v3796 = vadd.f32 %v3794, %v3795
    %v3797 = vrot.slane %v3796, 1
    %v3798 = vadd.f32 %v3796, %v3797
    %v3799 = vmul.f32 %v3792, 0.16666667
    %v3800 = vmul.f32 %v3798, 0.16666667
    %3801 = vmatpush.msra.mxu0 %v3632
    %3802 = vmatpush.msra.mxu0 %v3630
    %3803 = vmatpush.msra.mxu0 %v3628
    %3804 = vmatpush.msra.mxu0 %v3626
    %3805 = vmatpush.msra.mxu0 %v3624
    %3806 = vmatpush.msra.mxu0 %v3622
    %3807 = vmatpush.msra.mxu0 %v3620
    %3808 = vmatpush.msra.mxu0 %v3618
    %3809 = vmatpush.msra.mxu0 %v3616
    %3810 = vmatpush.msra.mxu0 %v3614
    %3811 = vmatpush.msra.mxu0 %v3612
    %3812 = vmatpush.msra.mxu0 %v3610
    %3813 = vmatpush.msra.mxu0 %v3608
    %3814 = vmatpush.msra.mxu0 %v3606
    %3815 = vmatpush.msra.mxu0 %v3604
    %3816 = vmatpush.msra.mxu0 %v3602
    %3817 = vmatmul.f32.gmra.mxu0 %v3783
    %v3818 = vpop.f32.mrf.mxu0
    %v3819 = vadd.f32 0.0, %v3818
    %3820 = vdwg.mxu0
    %3821 = vmatpush.msra.mxu0 %v3664
    %3822 = vmatpush.msra.mxu0 %v3662
    %3823 = vmatpush.msra.mxu0 %v3660
    %3824 = vmatpush.msra.mxu0 %v3658
    %3825 = vmatpush.msra.mxu0 %v3656
    %3826 = vmatpush.msra.mxu0 %v3654
    %3827 = vmatpush.msra.mxu0 %v3652
    %3828 = vmatpush.msra.mxu0 %v3650
    %3829 = vmatpush.msra.mxu0 %v3648
    %3830 = vmatpush.msra.mxu0 %v3646
    %3831 = vmatpush.msra.mxu0 %v3644
    %3832 = vmatpush.msra.mxu0 %v3642
    %3833 = vmatpush.msra.mxu0 %v3640
    %3834 = vmatpush.msra.mxu0 %v3638
    %3835 = vmatpush.msra.mxu0 %v3636
    %3836 = vmatpush.msra.mxu0 %v3634
    %3837 = vmatmul.f32.gmra.mxu0 %v3784
    %v3838 = vpop.f32.mrf.mxu0
    %v3839 = vadd.f32 %v3819, %v3838
    %3840 = vdwg.mxu0
    %3841 = vmatpush.msra.mxu0 %v3633
    %3842 = vmatpush.msra.mxu0 %v3631
    %3843 = vmatpush.msra.mxu0 %v3629
    %3844 = vmatpush.msra.mxu0 %v3627
    %3845 = vmatpush.msra.mxu0 %v3625
    %3846 = vmatpush.msra.mxu0 %v3623
    %3847 = vmatpush.msra.mxu0 %v3621
    %3848 = vmatpush.msra.mxu0 %v3619
    %3849 = vmatpush.msra.mxu0 %v3617
    %3850 = vmatpush.msra.mxu0 %v3615
    %3851 = vmatpush.msra.mxu0 %v3613
    %3852 = vmatpush.msra.mxu0 %v3611
    %3853 = vmatpush.msra.mxu0 %v3609
    %3854 = vmatpush.msra.mxu0 %v3607
    %3855 = vmatpush.msra.mxu0 %v3605
    %3856 = vmatpush.msra.mxu0 %v3603
    %3857 = vmatmul.f32.gmra.mxu0 %v3783
    %v3858 = vpop.f32.mrf.mxu0
    %v3859 = vadd.f32 0.0, %v3858
    %3860 = vdwg.mxu0
    %3861 = vmatpush.msra.mxu0 %v3665
    %3862 = vmatpush.msra.mxu0 %v3663
    %3863 = vmatpush.msra.mxu0 %v3661
    %3864 = vmatpush.msra.mxu0 %v3659
    %3865 = vmatpush.msra.mxu0 %v3657
    %3866 = vmatpush.msra.mxu0 %v3655
    %3867 = vmatpush.msra.mxu0 %v3653
    %3868 = vmatpush.msra.mxu0 %v3651
    %3869 = vmatpush.msra.mxu0 %v3649
    %3870 = vmatpush.msra.mxu0 %v3647
    %3871 = vmatpush.msra.mxu0 %v3645
    %3872 = vmatpush.msra.mxu0 %v3643
    %3873 = vmatpush.msra.mxu0 %v3641
    %3874 = vmatpush.msra.mxu0 %v3639
    %3875 = vmatpush.msra.mxu0 %v3637
    %3876 = vmatpush.msra.mxu0 %v3635
    %3877 = vmatmul.f32.gmra.mxu0 %v3784
    %v3878 = vpop.f32.mrf.mxu0
    %v3879 = vadd.f32 %v3859, %v3878
    %3880 = vdwg.mxu0
    %3881 = vmatpush.msra.mxu0 %v3632
    %3882 = vmatpush.msra.mxu0 %v3630
    %3883 = vmatpush.msra.mxu0 %v3628
    %3884 = vmatpush.msra.mxu0 %v3626
    %3885 = vmatpush.msra.mxu0 %v3624
    %3886 = vmatpush.msra.mxu0 %v3622
    %3887 = vmatpush.msra.mxu0 %v3620
    %3888 = vmatpush.msra.mxu0 %v3618
    %3889 = vmatpush.msra.mxu0 %v3616
    %3890 = vmatpush.msra.mxu0 %v3614
    %3891 = vmatpush.msra.mxu0 %v3612
    %3892 = vmatpush.msra.mxu0 %v3610
    %3893 = vmatpush.msra.mxu0 %v3608
    %3894 = vmatpush.msra.mxu0 %v3606
    %3895 = vmatpush.msra.mxu0 %v3604
    %3896 = vmatpush.msra.mxu0 %v3602
    %3897 = vmatmul.f32.gmra.mxu0 %v3799
    %v3898 = vpop.f32.mrf.mxu0
    %v3899 = vadd.f32 0.0, %v3898
    %3900 = vdwg.mxu0
    %3901 = vmatpush.msra.mxu0 %v3664
    %3902 = vmatpush.msra.mxu0 %v3662
    %3903 = vmatpush.msra.mxu0 %v3660
    %3904 = vmatpush.msra.mxu0 %v3658
    %3905 = vmatpush.msra.mxu0 %v3656
    %3906 = vmatpush.msra.mxu0 %v3654
    %3907 = vmatpush.msra.mxu0 %v3652
    %3908 = vmatpush.msra.mxu0 %v3650
    %3909 = vmatpush.msra.mxu0 %v3648
    %3910 = vmatpush.msra.mxu0 %v3646
    %3911 = vmatpush.msra.mxu0 %v3644
    %3912 = vmatpush.msra.mxu0 %v3642
    %3913 = vmatpush.msra.mxu0 %v3640
    %3914 = vmatpush.msra.mxu0 %v3638
    %3915 = vmatpush.msra.mxu0 %v3636
    %3916 = vmatpush.msra.mxu0 %v3634
    %3917 = vmatmul.f32.gmra.mxu0 %v3800
    %v3918 = vpop.f32.mrf.mxu0
    %v3919 = vadd.f32 %v3899, %v3918
    %3920 = vdwg.mxu0
    %3921 = vmatpush.msra.mxu0 %v3633
    %3922 = vmatpush.msra.mxu0 %v3631
    %3923 = vmatpush.msra.mxu0 %v3629
    %3924 = vmatpush.msra.mxu0 %v3627
    %3925 = vmatpush.msra.mxu0 %v3625
    %3926 = vmatpush.msra.mxu0 %v3623
    %3927 = vmatpush.msra.mxu0 %v3621
    %3928 = vmatpush.msra.mxu0 %v3619
    %3929 = vmatpush.msra.mxu0 %v3617
    %3930 = vmatpush.msra.mxu0 %v3615
    %3931 = vmatpush.msra.mxu0 %v3613
    %3932 = vmatpush.msra.mxu0 %v3611
    %3933 = vmatpush.msra.mxu0 %v3609
    %3934 = vmatpush.msra.mxu0 %v3607
    %3935 = vmatpush.msra.mxu0 %v3605
    %3936 = vmatpush.msra.mxu0 %v3603
    %3937 = vmatmul.f32.gmra.mxu0 %v3799
    %v3938 = vpop.f32.mrf.mxu0
    %v3939 = vadd.f32 0.0, %v3938
    %3940 = vdwg.mxu0
    %3941 = vmatpush.msra.mxu0 %v3665
    %3942 = vmatpush.msra.mxu0 %v3663
    %3943 = vmatpush.msra.mxu0 %v3661
    %3944 = vmatpush.msra.mxu0 %v3659
    %3945 = vmatpush.msra.mxu0 %v3657
    %3946 = vmatpush.msra.mxu0 %v3655
    %3947 = vmatpush.msra.mxu0 %v3653
    %3948 = vmatpush.msra.mxu0 %v3651
    %3949 = vmatpush.msra.mxu0 %v3649
    %3950 = vmatpush.msra.mxu0 %v3647
    %3951 = vmatpush.msra.mxu0 %v3645
    %3952 = vmatpush.msra.mxu0 %v3643
    %3953 = vmatpush.msra.mxu0 %v3641
    %3954 = vmatpush.msra.mxu0 %v3639
    %3955 = vmatpush.msra.mxu0 %v3637
    %3956 = vmatpush.msra.mxu0 %v3635
    %3957 = vmatmul.f32.gmra.mxu0 %v3800
    %v3958 = vpop.f32.mrf.mxu0
    %v3959 = vadd.f32 %v3939, %v3958
    %3960 = vdwg.mxu0
    %v3961 = vmul.f32 %v3839, %v3839
    %v3962 = vmul.f32 %v3879, %v3879
    %v3963 = vsub.f32 %v3919, %v3961
    %v3964 = vsub.f32 %v3959, %v3962
    %v3965 = vmax.f32 %v3963, 0.0
    %v3966 = vmax.f32 %v3964, 0.0
    %v3967 = vperm.slane %v3839, 0
    %v3968 = vperm.slane %v3879, 0
    %v3969 = vsub.f32 %v3749, %v3967
    %v3970 = vsub.f32 %v3769, %v3968
    %v3971 = vadd.f32 %v3965, 1e-05
    %v3972 = vadd.f32 %v3966, 1e-05
    %v3973 = vrsqrt.pop %v3971
    %v3974 = vmul.f32 %v3973, %v3971
    %v3975 = vmul.f32 %v3974, %v3973
    %v3976 = vmul.f32 0.5, %v3975
    %v3977 = vsub.f32 1.5, %v3976
    %v3978 = vmul.f32 %v3973, %v3977
    %vm3979 = vweird.f32 %v3971
    %vm3980 = vweird.f32 %v3973
    %vm3981 = vmor %vm3979, %vm3980
    %v3982 = vsel %vm3981, %v3973, %v3978
    %v3983 = vrsqrt.pop %v3972
    %v3984 = vmul.f32 %v3983, %v3972
    %v3985 = vmul.f32 %v3984, %v3983
    %v3986 = vmul.f32 0.5, %v3985
    %v3987 = vsub.f32 1.5, %v3986
    %v3988 = vmul.f32 %v3983, %v3987
    %vm3989 = vweird.f32 %v3972
    %vm3990 = vweird.f32 %v3983
    %vm3991 = vmor %vm3989, %vm3990
    %v3992 = vsel %vm3991, %v3983, %v3988
    %v3993 = vperm.slane %v3982, 0
    %v3994 = vperm.slane %v3992, 0
    %v3995 = vmul.f32 %v3969, %v3993
    %v3996 = vmul.f32 %v3970, %v3994
    %v3997 = vperm.slane %v50, 4
    %v3998 = vperm.slane %v51, 4
    %v3999 = vmul.f32 %v3995, %v3997
    %v4000 = vmul.f32 %v3996, %v3998
    %v4001 = vperm.slane %v50, 5
    %v4002 = vperm.slane %v51, 5
    %v4003 = vadd.f32 %v3999, %v4001
    %v4004 = vadd.f32 %v4000, %v4002
    %v4005 = vmax.f32 %v4003, 0.0
    %v4006 = vmax.f32 %v4004, 0.0
    %v4007 = vsel %vm2305, %v4005, 0.0
    %v4008 = vsel %vm2305, %v4006, 0.0
    %v4009 = vld [vmem:[%s1 + $0x8] sm:$0xff]
    %v4010 = vld [vmem:[%s1 + $0x10] sm:$0xff]
    %v4011 = vadd.f32 %v4007, %v4009
    %v4012 = vadd.f32 %v4008, %v4010
    %v4013 = vld [vmem:[#allocation2] sm:$0xff]
    %v4014 = vld [vmem:[#allocation2 + $0x8] sm:$0xff]
    %v4015 = vld [vmem:[#allocation2 + $0x10] sm:$0xff]
    %v4016 = vld [vmem:[#allocation2 + $0x18] sm:$0xff]
    %v4017 = vld [vmem:[#allocation2 + $0x20] sm:$0xff]
    %v4018 = vld [vmem:[#allocation2 + $0x28] sm:$0xff]
    %v4019 = vld [vmem:[#allocation2 + $0x30] sm:$0xff]
    %v4020 = vld [vmem:[#allocation2 + $0x38] sm:$0xff]
    %v4021 = vld [vmem:[#allocation2 + $0x40] sm:$0xff]
    %v4022 = vld [vmem:[#allocation2 + $0x48] sm:$0xff]
    %v4023 = vld [vmem:[#allocation2 + $0x50] sm:$0xff]
    %v4024 = vld [vmem:[#allocation2 + $0x58] sm:$0xff]
    %v4025 = vld [vmem:[#allocation2 + $0x60] sm:$0xff]
    %v4026 = vld [vmem:[#allocation2 + $0x68] sm:$0xff]
    %v4027 = vld [vmem:[#allocation2 + $0x70] sm:$0xff]
    %v4028 = vld [vmem:[#allocation2 + $0x78] sm:$0xff]
    %v4029 = vld [vmem:[#allocation2 + $0x80] sm:$0xff]
    %v4030 = vld [vmem:[#allocation2 + $0x88] sm:$0xff]
    %v4031 = vld [vmem:[#allocation2 + $0x90] sm:$0xff]
    %v4032 = vld [vmem:[#allocation2 + $0x98] sm:$0xff]
    %v4033 = vld [vmem:[#allocation2 + $0xa0] sm:$0xff]
    %v4034 = vld [vmem:[#allocation2 + $0xa8] sm:$0xff]
    %v4035 = vld [vmem:[#allocation2 + $0xb0] sm:$0xff]
    %v4036 = vld [vmem:[#allocation2 + $0xb8] sm:$0xff]
    %v4037 = vld [vmem:[#allocation2 + $0xc0] sm:$0xff]
    %v4038 = vld [vmem:[#allocation2 + $0xc8] sm:$0xff]
    %v4039 = vld [vmem:[#allocation2 + $0xd0] sm:$0xff]
    %v4040 = vld [vmem:[#allocation2 + $0xd8] sm:$0xff]
    %v4041 = vld [vmem:[#allocation2 + $0xe0] sm:$0xff]
    %v4042 = vld [vmem:[#allocation2 + $0xe8] sm:$0xff]
    %v4043 = vld [vmem:[#allocation2 + $0xf0] sm:$0xff]
    %v4044 = vld [vmem:[#allocation2 + $0xf8] sm:$0xff]
    %4045 = vmatpush.msra.mxu0 %v4028
    %4046 = vmatpush.msra.mxu0 %v4027
    %4047 = vmatpush.msra.mxu0 %v4026
    %4048 = vmatpush.msra.mxu0 %v4025
    %4049 = vmatpush.msra.mxu0 %v4024
    %4050 = vmatpush.msra.mxu0 %v4023
    %4051 = vmatpush.msra.mxu0 %v4022
    %4052 = vmatpush.msra.mxu0 %v4021
    %4053 = vmatpush.msra.mxu0 %v4020
    %4054 = vmatpush.msra.mxu0 %v4019
    %4055 = vmatpush.msra.mxu0 %v4018
    %4056 = vmatpush.msra.mxu0 %v4017
    %4057 = vmatpush.msra.mxu0 %v4016
    %4058 = vmatpush.msra.mxu0 %v4015
    %4059 = vmatpush.msra.mxu0 %v4014
    %4060 = vmatpush.msra.mxu0 %v4013
    %4061 = vmatmul.f32.gmra.mxu0 %v4011
    %v4062 = vpop.f32.mrf.mxu0
    %v4063 = vadd.f32 0.0, %v4062
    %4064 = vdwg.mxu0
    %4065 = vmatpush.msra.mxu0 %v4044
    %4066 = vmatpush.msra.mxu0 %v4043
    %4067 = vmatpush.msra.mxu0 %v4042
    %4068 = vmatpush.msra.mxu0 %v4041
    %4069 = vmatpush.msra.mxu0 %v4040
    %4070 = vmatpush.msra.mxu0 %v4039
    %4071 = vmatpush.msra.mxu0 %v4038
    %4072 = vmatpush.msra.mxu0 %v4037
    %4073 = vmatpush.msra.mxu0 %v4036
    %4074 = vmatpush.msra.mxu0 %v4035
    %4075 = vmatpush.msra.mxu0 %v4034
    %4076 = vmatpush.msra.mxu0 %v4033
    %4077 = vmatpush.msra.mxu0 %v4032
    %4078 = vmatpush.msra.mxu0 %v4031
    %4079 = vmatpush.msra.mxu0 %v4030
    %4080 = vmatpush.msra.mxu0 %v4029
    %4081 = vmatmul.f32.gmra.mxu0 %v4012
    %v4082 = vpop.f32.mrf.mxu0
    %v4083 = vadd.f32 %v4063, %v4082
    %4084 = vdwg.mxu0
    %v4085 = vmul.f32 %v4083, %v4083
    %4086 = vadd.xlane.f32.xlu0 %v4085
    %v4087 = vpop.xlane.xlu0 %4086
    %v4088 = vadd.f32 %v4087, 1e-12
    %v4089 = vrsqrt.pop %v4088
    %v4090 = vmul.f32 %v4089, %v4088
    %v4091 = vmul.f32 %v4090, %v4089
    %v4092 = vmul.f32 0.5, %v4091
    %v4093 = vsub.f32 1.5, %v4092
    %v4094 = vmul.f32 %v4089, %v4093
    %vm4095 = vweird.f32 %v4088
    %vm4096 = vweird.f32 %v4089
    %vm4097 = vmor %vm4095, %vm4096
    %v4098 = vsel %vm4097, %v4089, %v4094
    %v4099 = vmul.f32 %v4083, %v4098
    %v4100 = vld [vmem:[#allocation2 + $0x100] sm:$0xff]
    %v4101 = vld [vmem:[#allocation2 + $0x108] sm:$0xff]
    %v4102 = vld [vmem:[#allocation2 + $0x110] sm:$0xff]
    %v4103 = vld [vmem:[#allocation2 + $0x118] sm:$0xff]
    %v4104 = vld [vmem:[#allocation2 + $0x120] sm:$0xff]
    %v4105 = vld [vmem:[#allocation2 + $0x128] sm:$0xff]
    %v4106 = vld [vmem:[#allocation2 + $0x130] sm:$0xff]
    %v4107 = vld [vmem:[#allocation2 + $0x138] sm:$0xff]
    %v4108 = vld [vmem:[#allocation2 + $0x140] sm:$0xff]
    %v4109 = vld [vmem:[#allocation2 + $0x148] sm:$0xff]
    %v4110 = vld [vmem:[#allocation2 + $0x150] sm:$0xff]
    %v4111 = vld [vmem:[#allocation2 + $0x158] sm:$0xff]
    %v4112 = vld [vmem:[#allocation2 + $0x160] sm:$0xff]
    %v4113 = vld [vmem:[#allocation2 + $0x168] sm:$0xff]
    %v4114 = vld [vmem:[#allocation2 + $0x170] sm:$0xff]
    %v4115 = vld [vmem:[#allocation2 + $0x178] sm:$0xff]
    %v4116 = vmul.f32 %v4100, %v4100
    %v4117 = vmul.f32 %v4101, %v4101
    %v4118 = vmul.f32 %v4102, %v4102
    %v4119 = vmul.f32 %v4103, %v4103
    %v4120 = vmul.f32 %v4104, %v4104
    %v4121 = vmul.f32 %v4105, %v4105
    %v4122 = vmul.f32 %v4106, %v4106
    %v4123 = vmul.f32 %v4107, %v4107
    %v4124 = vmul.f32 %v4108, %v4108
    %v4125 = vmul.f32 %v4109, %v4109
    %v4126 = vmul.f32 %v4110, %v4110
    %v4127 = vmul.f32 %v4111, %v4111
    %v4128 = vmul.f32 %v4112, %v4112
    %v4129 = vmul.f32 %v4113, %v4113
    %v4130 = vmul.f32 %v4114, %v4114
    %v4131 = vmul.f32 %v4115, %v4115
    %v4132 = vadd.f32 %v4116, %v4117
    %v4133 = vadd.f32 %v4132, %v4118
    %v4134 = vadd.f32 %v4133, %v4119
    %v4135 = vadd.f32 %v4134, %v4120
    %v4136 = vadd.f32 %v4135, %v4121
    %v4137 = vadd.f32 %v4136, %v4122
    %v4138 = vadd.f32 %v4137, %v4123
    %v4139 = vadd.f32 %v4138, %v4124
    %v4140 = vadd.f32 %v4139, %v4125
    %v4141 = vadd.f32 %v4140, %v4126
    %v4142 = vadd.f32 %v4141, %v4127
    %v4143 = vadd.f32 %v4142, %v4128
    %v4144 = vadd.f32 %v4143, %v4129
    %v4145 = vadd.f32 %v4144, %v4130
    %v4146 = vadd.f32 %v4145, %v4131
    %v4147 = vrot.slane %v4146, 4
    %v4148 = vadd.f32 %v4146, %v4147
    %v4149 = vrot.slane %v4148, 2
    %v4150 = vadd.f32 %v4148, %v4149
    %v4151 = vrot.slane %v4150, 1
    %v4152 = vadd.f32 %v4150, %v4151
    %v4153 = vadd.f32 %v4152, 1e-12
    %v4154 = vrsqrt.pop %v4153
    %v4155 = vmul.f32 %v4154, %v4153
    %v4156 = vmul.f32 %v4155, %v4154
    %v4157 = vmul.f32 0.5, %v4156
    %v4158 = vsub.f32 1.5, %v4157
    %v4159 = vmul.f32 %v4154, %v4158
    %vm4160 = vweird.f32 %v4153
    %vm4161 = vweird.f32 %v4154
    %vm4162 = vmor %vm4160, %vm4161
    %v4163 = vsel %vm4162, %v4154, %v4159
    %v4164 = vmul.f32 %v4100, %v4163
    %v4165 = vmul.f32 %v4101, %v4163
    %v4166 = vmul.f32 %v4102, %v4163
    %v4167 = vmul.f32 %v4103, %v4163
    %v4168 = vmul.f32 %v4104, %v4163
    %v4169 = vmul.f32 %v4105, %v4163
    %v4170 = vmul.f32 %v4106, %v4163
    %v4171 = vmul.f32 %v4107, %v4163
    %v4172 = vmul.f32 %v4108, %v4163
    %v4173 = vmul.f32 %v4109, %v4163
    %v4174 = vmul.f32 %v4110, %v4163
    %v4175 = vmul.f32 %v4111, %v4163
    %v4176 = vmul.f32 %v4112, %v4163
    %v4177 = vmul.f32 %v4113, %v4163
    %v4178 = vmul.f32 %v4114, %v4163
    %v4179 = vmul.f32 %v4115, %v4163
    %4180 = vmatpush.msra.mxu0 %v4179
    %4181 = vmatpush.msra.mxu0 %v4178
    %4182 = vmatpush.msra.mxu0 %v4177
    %4183 = vmatpush.msra.mxu0 %v4176
    %4184 = vmatpush.msra.mxu0 %v4175
    %4185 = vmatpush.msra.mxu0 %v4174
    %4186 = vmatpush.msra.mxu0 %v4173
    %4187 = vmatpush.msra.mxu0 %v4172
    %4188 = vmatpush.msra.mxu0 %v4171
    %4189 = vmatpush.msra.mxu0 %v4170
    %4190 = vmatpush.msra.mxu0 %v4169
    %4191 = vmatpush.msra.mxu0 %v4168
    %4192 = vmatpush.msra.mxu0 %v4167
    %4193 = vmatpush.msra.mxu0 %v4166
    %4194 = vmatpush.msra.mxu0 %v4165
    %4195 = vmatpush.msra.mxu0 %v4164
    %4196 = vmatmul.f32.gmra.mxu0 %v4099
    %v4197 = vpop.f32.mrf.mxu0
    %v4198 = vadd.f32 0.0, %v4197
    %4199 = vdwg.mxu0
    %v4200 = vmax.f32 %v4198, -1.0
    %v4201 = vmin.f32 %v4200, 1.0
    %v4202 = vmul.f32 %v4201, %v4201
    %v4203 = vsub.f32 1.0, %v4202
    %v4204 = vmax.f32 %v4203, 0.0
    %v4205 = vrsqrt.pop %v4204
    %v4206 = vmul.f32 %v4205, %v4204
    %v4207 = vmul.f32 %v4206, %v4205
    %v4208 = vmul.f32 0.5, %v4207
    %v4209 = vsub.f32 1.5, %v4208
    %v4210 = vmul.f32 %v4205, %v4209
    %v4211 = vmul.f32 %v4204, %v4210
    %vm4212 = vcmp.eq.f32.partialorder %v4204, inf
    %v4213 = vsel %vm4212, %v4204, %v4211
    %vm4214 = vcmp.eq.f32.partialorder %v4204, 0.0
    %v4215 = vand.u32 %v4204, 2147483648
    %v4216 = vsel %vm4214, %v4215, %v4213
    %vm4217 = vcmp.gt.f32.partialorder %v4201, -0.87758255
    %v4218 = vmul.f32 %v4201, 0.87758255
    %v4219 = vmul.f32 %v4216, 0.47942555
    %v4220 = vsub.f32 %v4218, %v4219
    %v4221 = vsub.f32 %v4201, 0.23971277
    %v4222 = vsel %vm4217, %v4220, %v4221
    %v4223 = vld [vmem:[%s1] sm:$0xff]
    %vm4224 = vcmp.gt.f32.partialorder %v4223, 0.5
    %v4225 = vsel %vm4224, %v4222, %v4201
    %v4226 = vmul.f32 %v4225, 64.0
    %4227 = vst [vmem:[%s8] sm:$0xff] %v4226
    %v4228 = vld [vmem:[%s5 + $0xb0] sm:$0xff]
    %v4229 = vld [vmem:[%s5 + $0xb8] sm:$0xff]
    %v4230 = vld [vmem:[%s5 + $0xc0] sm:$0xff]
    %v4231 = vld [vmem:[%s5 + $0xc8] sm:$0xff]
    %v4232 = vld [vmem:[%s5 + $0xd0] sm:$0xff]
    %v4233 = vld [vmem:[%s5 + $0xd8] sm:$0xff]
    %v4234 = vld [vmem:[%s5 + $0xe0] sm:$0xff]
    %v4235 = vld [vmem:[%s5 + $0xe8] sm:$0xff]
    %v4236 = vld [vmem:[%s5 + $0xf0] sm:$0xff]
    %v4237 = vld [vmem:[%s5 + $0xf8] sm:$0xff]
    %v4238 = vld [vmem:[%s5 + $0x100] sm:$0xff]
    %v4239 = vld [vmem:[%s5 + $0x108] sm:$0xff]
    %v4240 = vld [vmem:[%s5 + $0x110] sm:$0xff]
    %v4241 = vld [vmem:[%s5 + $0x118] sm:$0xff]
    %v4242 = vld [vmem:[%s5 + $0x120] sm:$0xff]
    %v4243 = vld [vmem:[%s5 + $0x128] sm:$0xff]
    %v4244 = vld [vmem:[%s5 + $0x130] sm:$0xff]
    %v4245 = vld [vmem:[%s5 + $0x138] sm:$0xff]
    %v4246 = vld [vmem:[%s5 + $0x140] sm:$0xff]
    %v4247 = vld [vmem:[%s5 + $0x148] sm:$0xff]
    %v4248 = vld [vmem:[%s5 + $0x150] sm:$0xff]
    %v4249 = vld [vmem:[%s5 + $0x158] sm:$0xff]
    %v4250 = vld [vmem:[%s5 + $0x160] sm:$0xff]
    %v4251 = vld [vmem:[%s5 + $0x168] sm:$0xff]
    %v4252 = vld [vmem:[%s5 + $0x170] sm:$0xff]
    %v4253 = vld [vmem:[%s5 + $0x178] sm:$0xff]
    %v4254 = vld [vmem:[%s5 + $0x180] sm:$0xff]
    %v4255 = vld [vmem:[%s5 + $0x188] sm:$0xff]
    %v4256 = vld [vmem:[%s5 + $0x190] sm:$0xff]
    %v4257 = vld [vmem:[%s5 + $0x198] sm:$0xff]
    %v4258 = vld [vmem:[%s5 + $0x1a0] sm:$0xff]
    %v4259 = vld [vmem:[%s5 + $0x1a8] sm:$0xff]
    %v4260 = vld [vmem:[%s5 + $0x1b0] sm:$0xff]
    %v4261 = vld [vmem:[%s5 + $0x1b8] sm:$0xff]
    %v4262 = vld [vmem:[%s5 + $0x1c0] sm:$0xff]
    %v4263 = vld [vmem:[%s5 + $0x1c8] sm:$0xff]
    %v4264 = vld [vmem:[%s5 + $0x1d0] sm:$0xff]
    %v4265 = vld [vmem:[%s5 + $0x1d8] sm:$0xff]
    %v4266 = vld [vmem:[%s5 + $0x1e0] sm:$0xff]
    %v4267 = vld [vmem:[%s5 + $0x1e8] sm:$0xff]
    %v4268 = vld [vmem:[%s5 + $0x1f0] sm:$0xff]
    %v4269 = vld [vmem:[%s5 + $0x1f8] sm:$0xff]
    %v4270 = vld [vmem:[%s5 + $0x200] sm:$0xff]
    %v4271 = vld [vmem:[%s5 + $0x208] sm:$0xff]
    %v4272 = vld [vmem:[%s5 + $0x210] sm:$0xff]
    %v4273 = vld [vmem:[%s5 + $0x218] sm:$0xff]
    %v4274 = vld [vmem:[%s5 + $0x220] sm:$0xff]
    %v4275 = vld [vmem:[%s5 + $0x228] sm:$0xff]
    %v4276 = vld [vmem:[%s5 + $0x230] sm:$0xff]
    %v4277 = vld [vmem:[%s5 + $0x238] sm:$0xff]
    %v4278 = vld [vmem:[%s5 + $0x240] sm:$0xff]
    %v4279 = vld [vmem:[%s5 + $0x248] sm:$0xff]
    %v4280 = vld [vmem:[%s5 + $0x250] sm:$0xff]
    %v4281 = vld [vmem:[%s5 + $0x258] sm:$0xff]
    %v4282 = vld [vmem:[%s5 + $0x260] sm:$0xff]
    %v4283 = vld [vmem:[%s5 + $0x268] sm:$0xff]
    %v4284 = vld [vmem:[%s5 + $0x270] sm:$0xff]
    %v4285 = vld [vmem:[%s5 + $0x278] sm:$0xff]
    %v4286 = vld [vmem:[%s5 + $0x280] sm:$0xff]
    %v4287 = vld [vmem:[%s5 + $0x288] sm:$0xff]
    %v4288 = vld [vmem:[%s5 + $0x290] sm:$0xff]
    %v4289 = vld [vmem:[%s5 + $0x298] sm:$0xff]
    %v4290 = vld [vmem:[%s5 + $0x2a0] sm:$0xff]
    %v4291 = vld [vmem:[%s5 + $0x2a8] sm:$0xff]
    %v4292 = vld [vmem:[%s5 + $0x2b0] sm:$0xff]
    %v4293 = vld [vmem:[%s5 + $0x2b8] sm:$0xff]
    %v4294 = vld [vmem:[%s5 + $0x2c0] sm:$0xff]
    %v4295 = vld [vmem:[%s5 + $0x2c8] sm:$0xff]
    %v4296 = vld [vmem:[%s5 + $0x2d0] sm:$0xff]
    %v4297 = vld [vmem:[%s5 + $0x2d8] sm:$0xff]
    %v4298 = vld [vmem:[%s5 + $0x2e0] sm:$0xff]
    %v4299 = vld [vmem:[%s5 + $0x2e8] sm:$0xff]
    %v4300 = vld [vmem:[%s5 + $0x2f0] sm:$0xff]
    %v4301 = vld [vmem:[%s5 + $0x2f8] sm:$0xff]
    %v4302 = vld [vmem:[%s5 + $0x300] sm:$0xff]
    %v4303 = vld [vmem:[%s5 + $0x308] sm:$0xff]
    %v4304 = vld [vmem:[%s5 + $0x310] sm:$0xff]
    %v4305 = vld [vmem:[%s5 + $0x318] sm:$0xff]
    %v4306 = vld [vmem:[%s5 + $0x320] sm:$0xff]
    %v4307 = vld [vmem:[%s5 + $0x328] sm:$0xff]
    %v4308 = vld [vmem:[%s5 + $0x330] sm:$0xff]
    %v4309 = vld [vmem:[%s5 + $0x338] sm:$0xff]
    %v4310 = vld [vmem:[%s5 + $0x340] sm:$0xff]
    %v4311 = vld [vmem:[%s5 + $0x348] sm:$0xff]
    %v4312 = vld [vmem:[%s5 + $0x350] sm:$0xff]
    %v4313 = vld [vmem:[%s5 + $0x358] sm:$0xff]
    %v4314 = vld [vmem:[%s5 + $0x360] sm:$0xff]
    %v4315 = vld [vmem:[%s5 + $0x368] sm:$0xff]
    %v4316 = vld [vmem:[%s5 + $0x370] sm:$0xff]
    %v4317 = vld [vmem:[%s5 + $0x378] sm:$0xff]
    %v4318 = vld [vmem:[%s5 + $0x380] sm:$0xff]
    %v4319 = vld [vmem:[%s5 + $0x388] sm:$0xff]
    %v4320 = vld [vmem:[%s5 + $0x390] sm:$0xff]
    %v4321 = vld [vmem:[%s5 + $0x398] sm:$0xff]
    %v4322 = vld [vmem:[%s5 + $0x3a0] sm:$0xff]
    %v4323 = vld [vmem:[%s5 + $0x3a8] sm:$0xff]
    %v4324 = vld [vmem:[%s5 + $0x3b0] sm:$0xff]
    %v4325 = vld [vmem:[%s5 + $0x3b8] sm:$0xff]
    %v4326 = vld [vmem:[%s5 + $0x3c0] sm:$0xff]
    %v4327 = vld [vmem:[%s5 + $0x3c8] sm:$0xff]
    %v4328 = vld [vmem:[%s5 + $0x3d0] sm:$0xff]
    %v4329 = vld [vmem:[%s5 + $0x3d8] sm:$0xff]
    %v4330 = vld [vmem:[%s5 + $0x3e0] sm:$0xff]
    %v4331 = vld [vmem:[%s5 + $0x3e8] sm:$0xff]
    %v4332 = vld [vmem:[%s5 + $0x3f0] sm:$0xff]
    %v4333 = vld [vmem:[%s5 + $0x3f8] sm:$0xff]
    %v4334 = vld [vmem:[%s5 + $0x400] sm:$0xff]
    %v4335 = vld [vmem:[%s5 + $0x408] sm:$0xff]
    %v4336 = vld [vmem:[%s5 + $0x410] sm:$0xff]
    %v4337 = vld [vmem:[%s5 + $0x418] sm:$0xff]
    %v4338 = vld [vmem:[%s5 + $0x420] sm:$0xff]
    %v4339 = vld [vmem:[%s5 + $0x428] sm:$0xff]
    %v4340 = vld [vmem:[%s5 + $0x430] sm:$0xff]
    %v4341 = vld [vmem:[%s5 + $0x438] sm:$0xff]
    %v4342 = vld [vmem:[%s5 + $0x440] sm:$0xff]
    %v4343 = vld [vmem:[%s5 + $0x448] sm:$0xff]
    %v4344 = vld [vmem:[%s5 + $0x450] sm:$0xff]
    %v4345 = vld [vmem:[%s5 + $0x458] sm:$0xff]
    %v4346 = vld [vmem:[%s5 + $0x460] sm:$0xff]
    %v4347 = vld [vmem:[%s5 + $0x468] sm:$0xff]
    %v4348 = vld [vmem:[%s5 + $0x470] sm:$0xff]
    %v4349 = vld [vmem:[%s5 + $0x478] sm:$0xff]
    %v4350 = vld [vmem:[%s5 + $0x480] sm:$0xff]
    %v4351 = vld [vmem:[%s5 + $0x488] sm:$0xff]
    %v4352 = vld [vmem:[%s5 + $0x490] sm:$0xff]
    %v4353 = vld [vmem:[%s5 + $0x498] sm:$0xff]
    %v4354 = vld [vmem:[%s5 + $0x4a0] sm:$0xff]
    %v4355 = vld [vmem:[%s5 + $0x4a8] sm:$0xff]
    %4356 = vmatpush.msra.mxu0 %v4258
    %4357 = vmatpush.msra.mxu0 %v4256
    %4358 = vmatpush.msra.mxu0 %v4254
    %4359 = vmatpush.msra.mxu0 %v4252
    %4360 = vmatpush.msra.mxu0 %v4250
    %4361 = vmatpush.msra.mxu0 %v4248
    %4362 = vmatpush.msra.mxu0 %v4246
    %4363 = vmatpush.msra.mxu0 %v4244
    %4364 = vmatpush.msra.mxu0 %v4242
    %4365 = vmatpush.msra.mxu0 %v4240
    %4366 = vmatpush.msra.mxu0 %v4238
    %4367 = vmatpush.msra.mxu0 %v4236
    %4368 = vmatpush.msra.mxu0 %v4234
    %4369 = vmatpush.msra.mxu0 %v4232
    %4370 = vmatpush.msra.mxu0 %v4230
    %4371 = vmatpush.msra.mxu0 %v4228
    %4372 = vmatmul.f32.gmra.mxu0 %v3598
    %v4373 = vpop.f32.mrf.mxu0
    %v4374 = vadd.f32 0.0, %v4373
    %4375 = vdwg.mxu0
    %4376 = vmatpush.msra.mxu0 %v4290
    %4377 = vmatpush.msra.mxu0 %v4288
    %4378 = vmatpush.msra.mxu0 %v4286
    %4379 = vmatpush.msra.mxu0 %v4284
    %4380 = vmatpush.msra.mxu0 %v4282
    %4381 = vmatpush.msra.mxu0 %v4280
    %4382 = vmatpush.msra.mxu0 %v4278
    %4383 = vmatpush.msra.mxu0 %v4276
    %4384 = vmatpush.msra.mxu0 %v4274
    %4385 = vmatpush.msra.mxu0 %v4272
    %4386 = vmatpush.msra.mxu0 %v4270
    %4387 = vmatpush.msra.mxu0 %v4268
    %4388 = vmatpush.msra.mxu0 %v4266
    %4389 = vmatpush.msra.mxu0 %v4264
    %4390 = vmatpush.msra.mxu0 %v4262
    %4391 = vmatpush.msra.mxu0 %v4260
    %4392 = vmatmul.f32.gmra.mxu0 %v3599
    %v4393 = vpop.f32.mrf.mxu0
    %v4394 = vadd.f32 %v4374, %v4393
    %4395 = vdwg.mxu0
    %4396 = vmatpush.msra.mxu0 %v4322
    %4397 = vmatpush.msra.mxu0 %v4320
    %4398 = vmatpush.msra.mxu0 %v4318
    %4399 = vmatpush.msra.mxu0 %v4316
    %4400 = vmatpush.msra.mxu0 %v4314
    %4401 = vmatpush.msra.mxu0 %v4312
    %4402 = vmatpush.msra.mxu0 %v4310
    %4403 = vmatpush.msra.mxu0 %v4308
    %4404 = vmatpush.msra.mxu0 %v4306
    %4405 = vmatpush.msra.mxu0 %v4304
    %4406 = vmatpush.msra.mxu0 %v4302
    %4407 = vmatpush.msra.mxu0 %v4300
    %4408 = vmatpush.msra.mxu0 %v4298
    %4409 = vmatpush.msra.mxu0 %v4296
    %4410 = vmatpush.msra.mxu0 %v4294
    %4411 = vmatpush.msra.mxu0 %v4292
    %4412 = vmatmul.f32.gmra.mxu0 %v3600
    %v4413 = vpop.f32.mrf.mxu0
    %v4414 = vadd.f32 %v4394, %v4413
    %4415 = vdwg.mxu0
    %4416 = vmatpush.msra.mxu0 %v4354
    %4417 = vmatpush.msra.mxu0 %v4352
    %4418 = vmatpush.msra.mxu0 %v4350
    %4419 = vmatpush.msra.mxu0 %v4348
    %4420 = vmatpush.msra.mxu0 %v4346
    %4421 = vmatpush.msra.mxu0 %v4344
    %4422 = vmatpush.msra.mxu0 %v4342
    %4423 = vmatpush.msra.mxu0 %v4340
    %4424 = vmatpush.msra.mxu0 %v4338
    %4425 = vmatpush.msra.mxu0 %v4336
    %4426 = vmatpush.msra.mxu0 %v4334
    %4427 = vmatpush.msra.mxu0 %v4332
    %4428 = vmatpush.msra.mxu0 %v4330
    %4429 = vmatpush.msra.mxu0 %v4328
    %4430 = vmatpush.msra.mxu0 %v4326
    %4431 = vmatpush.msra.mxu0 %v4324
    %4432 = vmatmul.f32.gmra.mxu0 %v3601
    %v4433 = vpop.f32.mrf.mxu0
    %v4434 = vadd.f32 %v4414, %v4433
    %4435 = vdwg.mxu0
    %4436 = vmatpush.msra.mxu0 %v4259
    %4437 = vmatpush.msra.mxu0 %v4257
    %4438 = vmatpush.msra.mxu0 %v4255
    %4439 = vmatpush.msra.mxu0 %v4253
    %4440 = vmatpush.msra.mxu0 %v4251
    %4441 = vmatpush.msra.mxu0 %v4249
    %4442 = vmatpush.msra.mxu0 %v4247
    %4443 = vmatpush.msra.mxu0 %v4245
    %4444 = vmatpush.msra.mxu0 %v4243
    %4445 = vmatpush.msra.mxu0 %v4241
    %4446 = vmatpush.msra.mxu0 %v4239
    %4447 = vmatpush.msra.mxu0 %v4237
    %4448 = vmatpush.msra.mxu0 %v4235
    %4449 = vmatpush.msra.mxu0 %v4233
    %4450 = vmatpush.msra.mxu0 %v4231
    %4451 = vmatpush.msra.mxu0 %v4229
    %4452 = vmatmul.f32.gmra.mxu0 %v3598
    %v4453 = vpop.f32.mrf.mxu0
    %v4454 = vadd.f32 0.0, %v4453
    %4455 = vdwg.mxu0
    %4456 = vmatpush.msra.mxu0 %v4291
    %4457 = vmatpush.msra.mxu0 %v4289
    %4458 = vmatpush.msra.mxu0 %v4287
    %4459 = vmatpush.msra.mxu0 %v4285
    %4460 = vmatpush.msra.mxu0 %v4283
    %4461 = vmatpush.msra.mxu0 %v4281
    %4462 = vmatpush.msra.mxu0 %v4279
    %4463 = vmatpush.msra.mxu0 %v4277
    %4464 = vmatpush.msra.mxu0 %v4275
    %4465 = vmatpush.msra.mxu0 %v4273
    %4466 = vmatpush.msra.mxu0 %v4271
    %4467 = vmatpush.msra.mxu0 %v4269
    %4468 = vmatpush.msra.mxu0 %v4267
    %4469 = vmatpush.msra.mxu0 %v4265
    %4470 = vmatpush.msra.mxu0 %v4263
    %4471 = vmatpush.msra.mxu0 %v4261
    %4472 = vmatmul.f32.gmra.mxu0 %v3599
    %v4473 = vpop.f32.mrf.mxu0
    %v4474 = vadd.f32 %v4454, %v4473
    %4475 = vdwg.mxu0
    %4476 = vmatpush.msra.mxu0 %v4323
    %4477 = vmatpush.msra.mxu0 %v4321
    %4478 = vmatpush.msra.mxu0 %v4319
    %4479 = vmatpush.msra.mxu0 %v4317
    %4480 = vmatpush.msra.mxu0 %v4315
    %4481 = vmatpush.msra.mxu0 %v4313
    %4482 = vmatpush.msra.mxu0 %v4311
    %4483 = vmatpush.msra.mxu0 %v4309
    %4484 = vmatpush.msra.mxu0 %v4307
    %4485 = vmatpush.msra.mxu0 %v4305
    %4486 = vmatpush.msra.mxu0 %v4303
    %4487 = vmatpush.msra.mxu0 %v4301
    %4488 = vmatpush.msra.mxu0 %v4299
    %4489 = vmatpush.msra.mxu0 %v4297
    %4490 = vmatpush.msra.mxu0 %v4295
    %4491 = vmatpush.msra.mxu0 %v4293
    %4492 = vmatmul.f32.gmra.mxu0 %v3600
    %v4493 = vpop.f32.mrf.mxu0
    %v4494 = vadd.f32 %v4474, %v4493
    %4495 = vdwg.mxu0
    %4496 = vmatpush.msra.mxu0 %v4355
    %4497 = vmatpush.msra.mxu0 %v4353
    %4498 = vmatpush.msra.mxu0 %v4351
    %4499 = vmatpush.msra.mxu0 %v4349
    %4500 = vmatpush.msra.mxu0 %v4347
    %4501 = vmatpush.msra.mxu0 %v4345
    %4502 = vmatpush.msra.mxu0 %v4343
    %4503 = vmatpush.msra.mxu0 %v4341
    %4504 = vmatpush.msra.mxu0 %v4339
    %4505 = vmatpush.msra.mxu0 %v4337
    %4506 = vmatpush.msra.mxu0 %v4335
    %4507 = vmatpush.msra.mxu0 %v4333
    %4508 = vmatpush.msra.mxu0 %v4331
    %4509 = vmatpush.msra.mxu0 %v4329
    %4510 = vmatpush.msra.mxu0 %v4327
    %4511 = vmatpush.msra.mxu0 %v4325
    %4512 = vmatmul.f32.gmra.mxu0 %v3601
    %v4513 = vpop.f32.mrf.mxu0
    %v4514 = vadd.f32 %v4494, %v4513
    %4515 = vdwg.mxu0
    %v4516 = vrot.slane %v4434, 4
    %v4517 = vadd.f32 %v4434, %v4516
    %v4518 = vrot.slane %v4517, 2
    %v4519 = vadd.f32 %v4517, %v4518
    %v4520 = vrot.slane %v4519, 1
    %v4521 = vadd.f32 %v4519, %v4520
    %v4522 = vrot.slane %v4514, 4
    %v4523 = vadd.f32 %v4514, %v4522
    %v4524 = vrot.slane %v4523, 2
    %v4525 = vadd.f32 %v4523, %v4524
    %v4526 = vrot.slane %v4525, 1
    %v4527 = vadd.f32 %v4525, %v4526
    %v4528 = vmul.f32 %v4521, 0.16666667
    %v4529 = vmul.f32 %v4527, 0.16666667
    %v4530 = vmul.f32 %v4434, %v4434
    %v4531 = vmul.f32 %v4514, %v4514
    %v4532 = vrot.slane %v4530, 4
    %v4533 = vadd.f32 %v4530, %v4532
    %v4534 = vrot.slane %v4533, 2
    %v4535 = vadd.f32 %v4533, %v4534
    %v4536 = vrot.slane %v4535, 1
    %v4537 = vadd.f32 %v4535, %v4536
    %v4538 = vrot.slane %v4531, 4
    %v4539 = vadd.f32 %v4531, %v4538
    %v4540 = vrot.slane %v4539, 2
    %v4541 = vadd.f32 %v4539, %v4540
    %v4542 = vrot.slane %v4541, 1
    %v4543 = vadd.f32 %v4541, %v4542
    %v4544 = vmul.f32 %v4537, 0.16666667
    %v4545 = vmul.f32 %v4543, 0.16666667
    %4546 = vmatpush.msra.mxu0 %v3632
    %4547 = vmatpush.msra.mxu0 %v3630
    %4548 = vmatpush.msra.mxu0 %v3628
    %4549 = vmatpush.msra.mxu0 %v3626
    %4550 = vmatpush.msra.mxu0 %v3624
    %4551 = vmatpush.msra.mxu0 %v3622
    %4552 = vmatpush.msra.mxu0 %v3620
    %4553 = vmatpush.msra.mxu0 %v3618
    %4554 = vmatpush.msra.mxu0 %v3616
    %4555 = vmatpush.msra.mxu0 %v3614
    %4556 = vmatpush.msra.mxu0 %v3612
    %4557 = vmatpush.msra.mxu0 %v3610
    %4558 = vmatpush.msra.mxu0 %v3608
    %4559 = vmatpush.msra.mxu0 %v3606
    %4560 = vmatpush.msra.mxu0 %v3604
    %4561 = vmatpush.msra.mxu0 %v3602
    %4562 = vmatmul.f32.gmra.mxu0 %v4528
    %v4563 = vpop.f32.mrf.mxu0
    %v4564 = vadd.f32 0.0, %v4563
    %4565 = vdwg.mxu0
    %4566 = vmatpush.msra.mxu0 %v3664
    %4567 = vmatpush.msra.mxu0 %v3662
    %4568 = vmatpush.msra.mxu0 %v3660
    %4569 = vmatpush.msra.mxu0 %v3658
    %4570 = vmatpush.msra.mxu0 %v3656
    %4571 = vmatpush.msra.mxu0 %v3654
    %4572 = vmatpush.msra.mxu0 %v3652
    %4573 = vmatpush.msra.mxu0 %v3650
    %4574 = vmatpush.msra.mxu0 %v3648
    %4575 = vmatpush.msra.mxu0 %v3646
    %4576 = vmatpush.msra.mxu0 %v3644
    %4577 = vmatpush.msra.mxu0 %v3642
    %4578 = vmatpush.msra.mxu0 %v3640
    %4579 = vmatpush.msra.mxu0 %v3638
    %4580 = vmatpush.msra.mxu0 %v3636
    %4581 = vmatpush.msra.mxu0 %v3634
    %4582 = vmatmul.f32.gmra.mxu0 %v4529
    %v4583 = vpop.f32.mrf.mxu0
    %v4584 = vadd.f32 %v4564, %v4583
    %4585 = vdwg.mxu0
    %4586 = vmatpush.msra.mxu0 %v3633
    %4587 = vmatpush.msra.mxu0 %v3631
    %4588 = vmatpush.msra.mxu0 %v3629
    %4589 = vmatpush.msra.mxu0 %v3627
    %4590 = vmatpush.msra.mxu0 %v3625
    %4591 = vmatpush.msra.mxu0 %v3623
    %4592 = vmatpush.msra.mxu0 %v3621
    %4593 = vmatpush.msra.mxu0 %v3619
    %4594 = vmatpush.msra.mxu0 %v3617
    %4595 = vmatpush.msra.mxu0 %v3615
    %4596 = vmatpush.msra.mxu0 %v3613
    %4597 = vmatpush.msra.mxu0 %v3611
    %4598 = vmatpush.msra.mxu0 %v3609
    %4599 = vmatpush.msra.mxu0 %v3607
    %4600 = vmatpush.msra.mxu0 %v3605
    %4601 = vmatpush.msra.mxu0 %v3603
    %4602 = vmatmul.f32.gmra.mxu0 %v4528
    %v4603 = vpop.f32.mrf.mxu0
    %v4604 = vadd.f32 0.0, %v4603
    %4605 = vdwg.mxu0
    %4606 = vmatpush.msra.mxu0 %v3665
    %4607 = vmatpush.msra.mxu0 %v3663
    %4608 = vmatpush.msra.mxu0 %v3661
    %4609 = vmatpush.msra.mxu0 %v3659
    %4610 = vmatpush.msra.mxu0 %v3657
    %4611 = vmatpush.msra.mxu0 %v3655
    %4612 = vmatpush.msra.mxu0 %v3653
    %4613 = vmatpush.msra.mxu0 %v3651
    %4614 = vmatpush.msra.mxu0 %v3649
    %4615 = vmatpush.msra.mxu0 %v3647
    %4616 = vmatpush.msra.mxu0 %v3645
    %4617 = vmatpush.msra.mxu0 %v3643
    %4618 = vmatpush.msra.mxu0 %v3641
    %4619 = vmatpush.msra.mxu0 %v3639
    %4620 = vmatpush.msra.mxu0 %v3637
    %4621 = vmatpush.msra.mxu0 %v3635
    %4622 = vmatmul.f32.gmra.mxu0 %v4529
    %v4623 = vpop.f32.mrf.mxu0
    %v4624 = vadd.f32 %v4604, %v4623
    %4625 = vdwg.mxu0
    %4626 = vmatpush.msra.mxu0 %v3632
    %4627 = vmatpush.msra.mxu0 %v3630
    %4628 = vmatpush.msra.mxu0 %v3628
    %4629 = vmatpush.msra.mxu0 %v3626
    %4630 = vmatpush.msra.mxu0 %v3624
    %4631 = vmatpush.msra.mxu0 %v3622
    %4632 = vmatpush.msra.mxu0 %v3620
    %4633 = vmatpush.msra.mxu0 %v3618
    %4634 = vmatpush.msra.mxu0 %v3616
    %4635 = vmatpush.msra.mxu0 %v3614
    %4636 = vmatpush.msra.mxu0 %v3612
    %4637 = vmatpush.msra.mxu0 %v3610
    %4638 = vmatpush.msra.mxu0 %v3608
    %4639 = vmatpush.msra.mxu0 %v3606
    %4640 = vmatpush.msra.mxu0 %v3604
    %4641 = vmatpush.msra.mxu0 %v3602
    %4642 = vmatmul.f32.gmra.mxu0 %v4544
    %v4643 = vpop.f32.mrf.mxu0
    %v4644 = vadd.f32 0.0, %v4643
    %4645 = vdwg.mxu0
    %4646 = vmatpush.msra.mxu0 %v3664
    %4647 = vmatpush.msra.mxu0 %v3662
    %4648 = vmatpush.msra.mxu0 %v3660
    %4649 = vmatpush.msra.mxu0 %v3658
    %4650 = vmatpush.msra.mxu0 %v3656
    %4651 = vmatpush.msra.mxu0 %v3654
    %4652 = vmatpush.msra.mxu0 %v3652
    %4653 = vmatpush.msra.mxu0 %v3650
    %4654 = vmatpush.msra.mxu0 %v3648
    %4655 = vmatpush.msra.mxu0 %v3646
    %4656 = vmatpush.msra.mxu0 %v3644
    %4657 = vmatpush.msra.mxu0 %v3642
    %4658 = vmatpush.msra.mxu0 %v3640
    %4659 = vmatpush.msra.mxu0 %v3638
    %4660 = vmatpush.msra.mxu0 %v3636
    %4661 = vmatpush.msra.mxu0 %v3634
    %4662 = vmatmul.f32.gmra.mxu0 %v4545
    %v4663 = vpop.f32.mrf.mxu0
    %v4664 = vadd.f32 %v4644, %v4663
    %4665 = vdwg.mxu0
    %4666 = vmatpush.msra.mxu0 %v3633
    %4667 = vmatpush.msra.mxu0 %v3631
    %4668 = vmatpush.msra.mxu0 %v3629
    %4669 = vmatpush.msra.mxu0 %v3627
    %4670 = vmatpush.msra.mxu0 %v3625
    %4671 = vmatpush.msra.mxu0 %v3623
    %4672 = vmatpush.msra.mxu0 %v3621
    %4673 = vmatpush.msra.mxu0 %v3619
    %4674 = vmatpush.msra.mxu0 %v3617
    %4675 = vmatpush.msra.mxu0 %v3615
    %4676 = vmatpush.msra.mxu0 %v3613
    %4677 = vmatpush.msra.mxu0 %v3611
    %4678 = vmatpush.msra.mxu0 %v3609
    %4679 = vmatpush.msra.mxu0 %v3607
    %4680 = vmatpush.msra.mxu0 %v3605
    %4681 = vmatpush.msra.mxu0 %v3603
    %4682 = vmatmul.f32.gmra.mxu0 %v4544
    %v4683 = vpop.f32.mrf.mxu0
    %v4684 = vadd.f32 0.0, %v4683
    %4685 = vdwg.mxu0
    %4686 = vmatpush.msra.mxu0 %v3665
    %4687 = vmatpush.msra.mxu0 %v3663
    %4688 = vmatpush.msra.mxu0 %v3661
    %4689 = vmatpush.msra.mxu0 %v3659
    %4690 = vmatpush.msra.mxu0 %v3657
    %4691 = vmatpush.msra.mxu0 %v3655
    %4692 = vmatpush.msra.mxu0 %v3653
    %4693 = vmatpush.msra.mxu0 %v3651
    %4694 = vmatpush.msra.mxu0 %v3649
    %4695 = vmatpush.msra.mxu0 %v3647
    %4696 = vmatpush.msra.mxu0 %v3645
    %4697 = vmatpush.msra.mxu0 %v3643
    %4698 = vmatpush.msra.mxu0 %v3641
    %4699 = vmatpush.msra.mxu0 %v3639
    %4700 = vmatpush.msra.mxu0 %v3637
    %4701 = vmatpush.msra.mxu0 %v3635
    %4702 = vmatmul.f32.gmra.mxu0 %v4545
    %v4703 = vpop.f32.mrf.mxu0
    %v4704 = vadd.f32 %v4684, %v4703
    %4705 = vdwg.mxu0
    %v4706 = vmul.f32 %v4584, %v4584
    %v4707 = vmul.f32 %v4624, %v4624
    %v4708 = vsub.f32 %v4664, %v4706
    %v4709 = vsub.f32 %v4704, %v4707
    %v4710 = vmax.f32 %v4708, 0.0
    %v4711 = vmax.f32 %v4709, 0.0
    %v4712 = vperm.slane %v4584, 0
    %v4713 = vperm.slane %v4624, 0
    %v4714 = vsub.f32 %v4434, %v4712
    %v4715 = vsub.f32 %v4514, %v4713
    %v4716 = vadd.f32 %v4710, 1e-05
    %v4717 = vadd.f32 %v4711, 1e-05
    %v4718 = vrsqrt.pop %v4716
    %v4719 = vmul.f32 %v4718, %v4716
    %v4720 = vmul.f32 %v4719, %v4718
    %v4721 = vmul.f32 0.5, %v4720
    %v4722 = vsub.f32 1.5, %v4721
    %v4723 = vmul.f32 %v4718, %v4722
    %vm4724 = vweird.f32 %v4716
    %vm4725 = vweird.f32 %v4718
    %vm4726 = vmor %vm4724, %vm4725
    %v4727 = vsel %vm4726, %v4718, %v4723
    %v4728 = vrsqrt.pop %v4717
    %v4729 = vmul.f32 %v4728, %v4717
    %v4730 = vmul.f32 %v4729, %v4728
    %v4731 = vmul.f32 0.5, %v4730
    %v4732 = vsub.f32 1.5, %v4731
    %v4733 = vmul.f32 %v4728, %v4732
    %vm4734 = vweird.f32 %v4717
    %vm4735 = vweird.f32 %v4728
    %vm4736 = vmor %vm4734, %vm4735
    %v4737 = vsel %vm4736, %v4728, %v4733
    %v4738 = vperm.slane %v4727, 0
    %v4739 = vperm.slane %v4737, 0
    %v4740 = vmul.f32 %v4714, %v4738
    %v4741 = vmul.f32 %v4715, %v4739
    %v4742 = vperm.slane %v50, 6
    %v4743 = vperm.slane %v51, 6
    %v4744 = vmul.f32 %v4740, %v4742
    %v4745 = vmul.f32 %v4741, %v4743
    %v4746 = vperm.slane %v50, 7
    %v4747 = vperm.slane %v51, 7
    %v4748 = vadd.f32 %v4744, %v4746
    %v4749 = vadd.f32 %v4745, %v4747
    %v4750 = vmax.f32 %v4748, 0.0
    %v4751 = vmax.f32 %v4749, 0.0
    %v4752 = vsel %vm2305, %v4750, 0.0
    %v4753 = vsel %vm2305, %v4751, 0.0
    %v4754 = vld [vmem:[%s5 + $0x4b0] sm:$0xff]
    %v4755 = vld [vmem:[%s5 + $0x4b8] sm:$0xff]
    %v4756 = vld [vmem:[%s5 + $0x4c0] sm:$0xff]
    %v4757 = vld [vmem:[%s5 + $0x4c8] sm:$0xff]
    %v4758 = vld [vmem:[%s5 + $0x4d0] sm:$0xff]
    %v4759 = vld [vmem:[%s5 + $0x4d8] sm:$0xff]
    %v4760 = vld [vmem:[%s5 + $0x4e0] sm:$0xff]
    %v4761 = vld [vmem:[%s5 + $0x4e8] sm:$0xff]
    %v4762 = vld [vmem:[%s5 + $0x4f0] sm:$0xff]
    %v4763 = vld [vmem:[%s5 + $0x4f8] sm:$0xff]
    %v4764 = vld [vmem:[%s5 + $0x500] sm:$0xff]
    %v4765 = vld [vmem:[%s5 + $0x508] sm:$0xff]
    %v4766 = vld [vmem:[%s5 + $0x510] sm:$0xff]
    %v4767 = vld [vmem:[%s5 + $0x518] sm:$0xff]
    %v4768 = vld [vmem:[%s5 + $0x520] sm:$0xff]
    %v4769 = vld [vmem:[%s5 + $0x528] sm:$0xff]
    %v4770 = vld [vmem:[%s5 + $0x530] sm:$0xff]
    %v4771 = vld [vmem:[%s5 + $0x538] sm:$0xff]
    %v4772 = vld [vmem:[%s5 + $0x540] sm:$0xff]
    %v4773 = vld [vmem:[%s5 + $0x548] sm:$0xff]
    %v4774 = vld [vmem:[%s5 + $0x550] sm:$0xff]
    %v4775 = vld [vmem:[%s5 + $0x558] sm:$0xff]
    %v4776 = vld [vmem:[%s5 + $0x560] sm:$0xff]
    %v4777 = vld [vmem:[%s5 + $0x568] sm:$0xff]
    %v4778 = vld [vmem:[%s5 + $0x570] sm:$0xff]
    %v4779 = vld [vmem:[%s5 + $0x578] sm:$0xff]
    %v4780 = vld [vmem:[%s5 + $0x580] sm:$0xff]
    %v4781 = vld [vmem:[%s5 + $0x588] sm:$0xff]
    %v4782 = vld [vmem:[%s5 + $0x590] sm:$0xff]
    %v4783 = vld [vmem:[%s5 + $0x598] sm:$0xff]
    %v4784 = vld [vmem:[%s5 + $0x5a0] sm:$0xff]
    %v4785 = vld [vmem:[%s5 + $0x5a8] sm:$0xff]
    %v4786 = vld [vmem:[%s5 + $0x5b0] sm:$0xff]
    %v4787 = vld [vmem:[%s5 + $0x5b8] sm:$0xff]
    %v4788 = vld [vmem:[%s5 + $0x5c0] sm:$0xff]
    %v4789 = vld [vmem:[%s5 + $0x5c8] sm:$0xff]
    %v4790 = vld [vmem:[%s5 + $0x5d0] sm:$0xff]
    %v4791 = vld [vmem:[%s5 + $0x5d8] sm:$0xff]
    %v4792 = vld [vmem:[%s5 + $0x5e0] sm:$0xff]
    %v4793 = vld [vmem:[%s5 + $0x5e8] sm:$0xff]
    %v4794 = vld [vmem:[%s5 + $0x5f0] sm:$0xff]
    %v4795 = vld [vmem:[%s5 + $0x5f8] sm:$0xff]
    %v4796 = vld [vmem:[%s5 + $0x600] sm:$0xff]
    %v4797 = vld [vmem:[%s5 + $0x608] sm:$0xff]
    %v4798 = vld [vmem:[%s5 + $0x610] sm:$0xff]
    %v4799 = vld [vmem:[%s5 + $0x618] sm:$0xff]
    %v4800 = vld [vmem:[%s5 + $0x620] sm:$0xff]
    %v4801 = vld [vmem:[%s5 + $0x628] sm:$0xff]
    %v4802 = vld [vmem:[%s5 + $0x630] sm:$0xff]
    %v4803 = vld [vmem:[%s5 + $0x638] sm:$0xff]
    %v4804 = vld [vmem:[%s5 + $0x640] sm:$0xff]
    %v4805 = vld [vmem:[%s5 + $0x648] sm:$0xff]
    %v4806 = vld [vmem:[%s5 + $0x650] sm:$0xff]
    %v4807 = vld [vmem:[%s5 + $0x658] sm:$0xff]
    %v4808 = vld [vmem:[%s5 + $0x660] sm:$0xff]
    %v4809 = vld [vmem:[%s5 + $0x668] sm:$0xff]
    %v4810 = vld [vmem:[%s5 + $0x670] sm:$0xff]
    %v4811 = vld [vmem:[%s5 + $0x678] sm:$0xff]
    %v4812 = vld [vmem:[%s5 + $0x680] sm:$0xff]
    %v4813 = vld [vmem:[%s5 + $0x688] sm:$0xff]
    %v4814 = vld [vmem:[%s5 + $0x690] sm:$0xff]
    %v4815 = vld [vmem:[%s5 + $0x698] sm:$0xff]
    %v4816 = vld [vmem:[%s5 + $0x6a0] sm:$0xff]
    %v4817 = vld [vmem:[%s5 + $0x6a8] sm:$0xff]
    %v4818 = vld [vmem:[%s5 + $0x6b0] sm:$0xff]
    %v4819 = vld [vmem:[%s5 + $0x6b8] sm:$0xff]
    %v4820 = vld [vmem:[%s5 + $0x6c0] sm:$0xff]
    %v4821 = vld [vmem:[%s5 + $0x6c8] sm:$0xff]
    %v4822 = vld [vmem:[%s5 + $0x6d0] sm:$0xff]
    %v4823 = vld [vmem:[%s5 + $0x6d8] sm:$0xff]
    %v4824 = vld [vmem:[%s5 + $0x6e0] sm:$0xff]
    %v4825 = vld [vmem:[%s5 + $0x6e8] sm:$0xff]
    %v4826 = vld [vmem:[%s5 + $0x6f0] sm:$0xff]
    %v4827 = vld [vmem:[%s5 + $0x6f8] sm:$0xff]
    %v4828 = vld [vmem:[%s5 + $0x700] sm:$0xff]
    %v4829 = vld [vmem:[%s5 + $0x708] sm:$0xff]
    %v4830 = vld [vmem:[%s5 + $0x710] sm:$0xff]
    %v4831 = vld [vmem:[%s5 + $0x718] sm:$0xff]
    %v4832 = vld [vmem:[%s5 + $0x720] sm:$0xff]
    %v4833 = vld [vmem:[%s5 + $0x728] sm:$0xff]
    %v4834 = vld [vmem:[%s5 + $0x730] sm:$0xff]
    %v4835 = vld [vmem:[%s5 + $0x738] sm:$0xff]
    %v4836 = vld [vmem:[%s5 + $0x740] sm:$0xff]
    %v4837 = vld [vmem:[%s5 + $0x748] sm:$0xff]
    %v4838 = vld [vmem:[%s5 + $0x750] sm:$0xff]
    %v4839 = vld [vmem:[%s5 + $0x758] sm:$0xff]
    %v4840 = vld [vmem:[%s5 + $0x760] sm:$0xff]
    %v4841 = vld [vmem:[%s5 + $0x768] sm:$0xff]
    %v4842 = vld [vmem:[%s5 + $0x770] sm:$0xff]
    %v4843 = vld [vmem:[%s5 + $0x778] sm:$0xff]
    %v4844 = vld [vmem:[%s5 + $0x780] sm:$0xff]
    %v4845 = vld [vmem:[%s5 + $0x788] sm:$0xff]
    %v4846 = vld [vmem:[%s5 + $0x790] sm:$0xff]
    %v4847 = vld [vmem:[%s5 + $0x798] sm:$0xff]
    %v4848 = vld [vmem:[%s5 + $0x7a0] sm:$0xff]
    %v4849 = vld [vmem:[%s5 + $0x7a8] sm:$0xff]
    %v4850 = vld [vmem:[%s5 + $0x7b0] sm:$0xff]
    %v4851 = vld [vmem:[%s5 + $0x7b8] sm:$0xff]
    %v4852 = vld [vmem:[%s5 + $0x7c0] sm:$0xff]
    %v4853 = vld [vmem:[%s5 + $0x7c8] sm:$0xff]
    %v4854 = vld [vmem:[%s5 + $0x7d0] sm:$0xff]
    %v4855 = vld [vmem:[%s5 + $0x7d8] sm:$0xff]
    %v4856 = vld [vmem:[%s5 + $0x7e0] sm:$0xff]
    %v4857 = vld [vmem:[%s5 + $0x7e8] sm:$0xff]
    %v4858 = vld [vmem:[%s5 + $0x7f0] sm:$0xff]
    %v4859 = vld [vmem:[%s5 + $0x7f8] sm:$0xff]
    %v4860 = vld [vmem:[%s5 + $0x800] sm:$0xff]
    %v4861 = vld [vmem:[%s5 + $0x808] sm:$0xff]
    %v4862 = vld [vmem:[%s5 + $0x810] sm:$0xff]
    %v4863 = vld [vmem:[%s5 + $0x818] sm:$0xff]
    %v4864 = vld [vmem:[%s5 + $0x820] sm:$0xff]
    %v4865 = vld [vmem:[%s5 + $0x828] sm:$0xff]
    %v4866 = vld [vmem:[%s5 + $0x830] sm:$0xff]
    %v4867 = vld [vmem:[%s5 + $0x838] sm:$0xff]
    %v4868 = vld [vmem:[%s5 + $0x840] sm:$0xff]
    %v4869 = vld [vmem:[%s5 + $0x848] sm:$0xff]
    %v4870 = vld [vmem:[%s5 + $0x850] sm:$0xff]
    %v4871 = vld [vmem:[%s5 + $0x858] sm:$0xff]
    %v4872 = vld [vmem:[%s5 + $0x860] sm:$0xff]
    %v4873 = vld [vmem:[%s5 + $0x868] sm:$0xff]
    %v4874 = vld [vmem:[%s5 + $0x870] sm:$0xff]
    %v4875 = vld [vmem:[%s5 + $0x878] sm:$0xff]
    %v4876 = vld [vmem:[%s5 + $0x880] sm:$0xff]
    %v4877 = vld [vmem:[%s5 + $0x888] sm:$0xff]
    %v4878 = vld [vmem:[%s5 + $0x890] sm:$0xff]
    %v4879 = vld [vmem:[%s5 + $0x898] sm:$0xff]
    %v4880 = vld [vmem:[%s5 + $0x8a0] sm:$0xff]
    %v4881 = vld [vmem:[%s5 + $0x8a8] sm:$0xff]
    %4882 = vmatpush.msra.mxu0 %v4848
    %4883 = vmatpush.msra.mxu0 %v4846
    %4884 = vmatpush.msra.mxu0 %v4844
    %4885 = vmatpush.msra.mxu0 %v4842
    %4886 = vmatpush.msra.mxu0 %v4840
    %4887 = vmatpush.msra.mxu0 %v4838
    %4888 = vmatpush.msra.mxu0 %v4836
    %4889 = vmatpush.msra.mxu0 %v4834
    %4890 = vmatpush.msra.mxu0 %v4832
    %4891 = vmatpush.msra.mxu0 %v4830
    %4892 = vmatpush.msra.mxu0 %v4828
    %4893 = vmatpush.msra.mxu0 %v4826
    %4894 = vmatpush.msra.mxu0 %v4824
    %4895 = vmatpush.msra.mxu0 %v4822
    %4896 = vmatpush.msra.mxu0 %v4820
    %4897 = vmatpush.msra.mxu0 %v4818
    %4898 = vmatmul.f32.gmra.mxu0 %v4752
    %v4899 = vpop.f32.mrf.mxu0
    %v4900 = vadd.f32 0.0, %v4899
    %4901 = vdwg.mxu0
    %4902 = vmatpush.msra.mxu0 %v4880
    %4903 = vmatpush.msra.mxu0 %v4878
    %4904 = vmatpush.msra.mxu0 %v4876
    %4905 = vmatpush.msra.mxu0 %v4874
    %4906 = vmatpush.msra.mxu0 %v4872
    %4907 = vmatpush.msra.mxu0 %v4870
    %4908 = vmatpush.msra.mxu0 %v4868
    %4909 = vmatpush.msra.mxu0 %v4866
    %4910 = vmatpush.msra.mxu0 %v4864
    %4911 = vmatpush.msra.mxu0 %v4862
    %4912 = vmatpush.msra.mxu0 %v4860
    %4913 = vmatpush.msra.mxu0 %v4858
    %4914 = vmatpush.msra.mxu0 %v4856
    %4915 = vmatpush.msra.mxu0 %v4854
    %4916 = vmatpush.msra.mxu0 %v4852
    %4917 = vmatpush.msra.mxu0 %v4850
    %4918 = vmatmul.f32.gmra.mxu0 %v4753
    %v4919 = vpop.f32.mrf.mxu0
    %v4920 = vadd.f32 %v4900, %v4919
    %4921 = vdwg.mxu0
    %4922 = vmatpush.msra.mxu0 %v4849
    %4923 = vmatpush.msra.mxu0 %v4847
    %4924 = vmatpush.msra.mxu0 %v4845
    %4925 = vmatpush.msra.mxu0 %v4843
    %4926 = vmatpush.msra.mxu0 %v4841
    %4927 = vmatpush.msra.mxu0 %v4839
    %4928 = vmatpush.msra.mxu0 %v4837
    %4929 = vmatpush.msra.mxu0 %v4835
    %4930 = vmatpush.msra.mxu0 %v4833
    %4931 = vmatpush.msra.mxu0 %v4831
    %4932 = vmatpush.msra.mxu0 %v4829
    %4933 = vmatpush.msra.mxu0 %v4827
    %4934 = vmatpush.msra.mxu0 %v4825
    %4935 = vmatpush.msra.mxu0 %v4823
    %4936 = vmatpush.msra.mxu0 %v4821
    %4937 = vmatpush.msra.mxu0 %v4819
    %4938 = vmatmul.f32.gmra.mxu0 %v4752
    %v4939 = vpop.f32.mrf.mxu0
    %v4940 = vadd.f32 0.0, %v4939
    %4941 = vdwg.mxu0
    %4942 = vmatpush.msra.mxu0 %v4881
    %4943 = vmatpush.msra.mxu0 %v4879
    %4944 = vmatpush.msra.mxu0 %v4877
    %4945 = vmatpush.msra.mxu0 %v4875
    %4946 = vmatpush.msra.mxu0 %v4873
    %4947 = vmatpush.msra.mxu0 %v4871
    %4948 = vmatpush.msra.mxu0 %v4869
    %4949 = vmatpush.msra.mxu0 %v4867
    %4950 = vmatpush.msra.mxu0 %v4865
    %4951 = vmatpush.msra.mxu0 %v4863
    %4952 = vmatpush.msra.mxu0 %v4861
    %4953 = vmatpush.msra.mxu0 %v4859
    %4954 = vmatpush.msra.mxu0 %v4857
    %4955 = vmatpush.msra.mxu0 %v4855
    %4956 = vmatpush.msra.mxu0 %v4853
    %4957 = vmatpush.msra.mxu0 %v4851
    %4958 = vmatmul.f32.gmra.mxu0 %v4753
    %v4959 = vpop.f32.mrf.mxu0
    %v4960 = vadd.f32 %v4940, %v4959
    %4961 = vdwg.mxu0
    %4962 = vmatpush.msra.mxu0 %v4784
    %4963 = vmatpush.msra.mxu0 %v4782
    %4964 = vmatpush.msra.mxu0 %v4780
    %4965 = vmatpush.msra.mxu0 %v4778
    %4966 = vmatpush.msra.mxu0 %v4776
    %4967 = vmatpush.msra.mxu0 %v4774
    %4968 = vmatpush.msra.mxu0 %v4772
    %4969 = vmatpush.msra.mxu0 %v4770
    %4970 = vmatpush.msra.mxu0 %v4768
    %4971 = vmatpush.msra.mxu0 %v4766
    %4972 = vmatpush.msra.mxu0 %v4764
    %4973 = vmatpush.msra.mxu0 %v4762
    %4974 = vmatpush.msra.mxu0 %v4760
    %4975 = vmatpush.msra.mxu0 %v4758
    %4976 = vmatpush.msra.mxu0 %v4756
    %4977 = vmatpush.msra.mxu0 %v4754
    %4978 = vmatmul.f32.gmra.mxu0 %v4011
    %v4979 = vpop.f32.mrf.mxu0
    %v4980 = vadd.f32 %v4920, %v4979
    %4981 = vdwg.mxu0
    %4982 = vmatpush.msra.mxu0 %v4816
    %4983 = vmatpush.msra.mxu0 %v4814
    %4984 = vmatpush.msra.mxu0 %v4812
    %4985 = vmatpush.msra.mxu0 %v4810
    %4986 = vmatpush.msra.mxu0 %v4808
    %4987 = vmatpush.msra.mxu0 %v4806
    %4988 = vmatpush.msra.mxu0 %v4804
    %4989 = vmatpush.msra.mxu0 %v4802
    %4990 = vmatpush.msra.mxu0 %v4800
    %4991 = vmatpush.msra.mxu0 %v4798
    %4992 = vmatpush.msra.mxu0 %v4796
    %4993 = vmatpush.msra.mxu0 %v4794
    %4994 = vmatpush.msra.mxu0 %v4792
    %4995 = vmatpush.msra.mxu0 %v4790
    %4996 = vmatpush.msra.mxu0 %v4788
    %4997 = vmatpush.msra.mxu0 %v4786
    %4998 = vmatmul.f32.gmra.mxu0 %v4012
    %v4999 = vpop.f32.mrf.mxu0
    %v5000 = vadd.f32 %v4980, %v4999
    %5001 = vdwg.mxu0
    %5002 = vmatpush.msra.mxu0 %v4785
    %5003 = vmatpush.msra.mxu0 %v4783
    %5004 = vmatpush.msra.mxu0 %v4781
    %5005 = vmatpush.msra.mxu0 %v4779
    %5006 = vmatpush.msra.mxu0 %v4777
    %5007 = vmatpush.msra.mxu0 %v4775
    %5008 = vmatpush.msra.mxu0 %v4773
    %5009 = vmatpush.msra.mxu0 %v4771
    %5010 = vmatpush.msra.mxu0 %v4769
    %5011 = vmatpush.msra.mxu0 %v4767
    %5012 = vmatpush.msra.mxu0 %v4765
    %5013 = vmatpush.msra.mxu0 %v4763
    %5014 = vmatpush.msra.mxu0 %v4761
    %5015 = vmatpush.msra.mxu0 %v4759
    %5016 = vmatpush.msra.mxu0 %v4757
    %5017 = vmatpush.msra.mxu0 %v4755
    %5018 = vmatmul.f32.gmra.mxu0 %v4011
    %v5019 = vpop.f32.mrf.mxu0
    %v5020 = vadd.f32 %v4960, %v5019
    %5021 = vdwg.mxu0
    %5022 = vmatpush.msra.mxu0 %v4817
    %5023 = vmatpush.msra.mxu0 %v4815
    %5024 = vmatpush.msra.mxu0 %v4813
    %5025 = vmatpush.msra.mxu0 %v4811
    %5026 = vmatpush.msra.mxu0 %v4809
    %5027 = vmatpush.msra.mxu0 %v4807
    %5028 = vmatpush.msra.mxu0 %v4805
    %5029 = vmatpush.msra.mxu0 %v4803
    %5030 = vmatpush.msra.mxu0 %v4801
    %5031 = vmatpush.msra.mxu0 %v4799
    %5032 = vmatpush.msra.mxu0 %v4797
    %5033 = vmatpush.msra.mxu0 %v4795
    %5034 = vmatpush.msra.mxu0 %v4793
    %5035 = vmatpush.msra.mxu0 %v4791
    %5036 = vmatpush.msra.mxu0 %v4789
    %5037 = vmatpush.msra.mxu0 %v4787
    %5038 = vmatmul.f32.gmra.mxu0 %v4012
    %v5039 = vpop.f32.mrf.mxu0
    %v5040 = vadd.f32 %v5020, %v5039
    %5041 = vdwg.mxu0
    %v5042 = vrot.slane %v5000, 4
    %v5043 = vadd.f32 %v5000, %v5042
    %v5044 = vrot.slane %v5043, 2
    %v5045 = vadd.f32 %v5043, %v5044
    %v5046 = vrot.slane %v5045, 1
    %v5047 = vadd.f32 %v5045, %v5046
    %v5048 = vrot.slane %v5040, 4
    %v5049 = vadd.f32 %v5040, %v5048
    %v5050 = vrot.slane %v5049, 2
    %v5051 = vadd.f32 %v5049, %v5050
    %v5052 = vrot.slane %v5051, 1
    %v5053 = vadd.f32 %v5051, %v5052
    %v5054 = vmul.f32 %v5047, 0.16666667
    %v5055 = vmul.f32 %v5053, 0.16666667
    %v5056 = vmul.f32 %v5000, %v5000
    %v5057 = vmul.f32 %v5040, %v5040
    %v5058 = vrot.slane %v5056, 4
    %v5059 = vadd.f32 %v5056, %v5058
    %v5060 = vrot.slane %v5059, 2
    %v5061 = vadd.f32 %v5059, %v5060
    %v5062 = vrot.slane %v5061, 1
    %v5063 = vadd.f32 %v5061, %v5062
    %v5064 = vrot.slane %v5057, 4
    %v5065 = vadd.f32 %v5057, %v5064
    %v5066 = vrot.slane %v5065, 2
    %v5067 = vadd.f32 %v5065, %v5066
    %v5068 = vrot.slane %v5067, 1
    %v5069 = vadd.f32 %v5067, %v5068
    %v5070 = vmul.f32 %v5063, 0.16666667
    %v5071 = vmul.f32 %v5069, 0.16666667
    %5072 = vmatpush.msra.mxu0 %v3632
    %5073 = vmatpush.msra.mxu0 %v3630
    %5074 = vmatpush.msra.mxu0 %v3628
    %5075 = vmatpush.msra.mxu0 %v3626
    %5076 = vmatpush.msra.mxu0 %v3624
    %5077 = vmatpush.msra.mxu0 %v3622
    %5078 = vmatpush.msra.mxu0 %v3620
    %5079 = vmatpush.msra.mxu0 %v3618
    %5080 = vmatpush.msra.mxu0 %v3616
    %5081 = vmatpush.msra.mxu0 %v3614
    %5082 = vmatpush.msra.mxu0 %v3612
    %5083 = vmatpush.msra.mxu0 %v3610
    %5084 = vmatpush.msra.mxu0 %v3608
    %5085 = vmatpush.msra.mxu0 %v3606
    %5086 = vmatpush.msra.mxu0 %v3604
    %5087 = vmatpush.msra.mxu0 %v3602
    %5088 = vmatmul.f32.gmra.mxu0 %v5054
    %v5089 = vpop.f32.mrf.mxu0
    %v5090 = vadd.f32 0.0, %v5089
    %5091 = vdwg.mxu0
    %5092 = vmatpush.msra.mxu0 %v3664
    %5093 = vmatpush.msra.mxu0 %v3662
    %5094 = vmatpush.msra.mxu0 %v3660
    %5095 = vmatpush.msra.mxu0 %v3658
    %5096 = vmatpush.msra.mxu0 %v3656
    %5097 = vmatpush.msra.mxu0 %v3654
    %5098 = vmatpush.msra.mxu0 %v3652
    %5099 = vmatpush.msra.mxu0 %v3650
    %5100 = vmatpush.msra.mxu0 %v3648
    %5101 = vmatpush.msra.mxu0 %v3646
    %5102 = vmatpush.msra.mxu0 %v3644
    %5103 = vmatpush.msra.mxu0 %v3642
    %5104 = vmatpush.msra.mxu0 %v3640
    %5105 = vmatpush.msra.mxu0 %v3638
    %5106 = vmatpush.msra.mxu0 %v3636
    %5107 = vmatpush.msra.mxu0 %v3634
    %5108 = vmatmul.f32.gmra.mxu0 %v5055
    %v5109 = vpop.f32.mrf.mxu0
    %v5110 = vadd.f32 %v5090, %v5109
    %5111 = vdwg.mxu0
    %5112 = vmatpush.msra.mxu0 %v3633
    %5113 = vmatpush.msra.mxu0 %v3631
    %5114 = vmatpush.msra.mxu0 %v3629
    %5115 = vmatpush.msra.mxu0 %v3627
    %5116 = vmatpush.msra.mxu0 %v3625
    %5117 = vmatpush.msra.mxu0 %v3623
    %5118 = vmatpush.msra.mxu0 %v3621
    %5119 = vmatpush.msra.mxu0 %v3619
    %5120 = vmatpush.msra.mxu0 %v3617
    %5121 = vmatpush.msra.mxu0 %v3615
    %5122 = vmatpush.msra.mxu0 %v3613
    %5123 = vmatpush.msra.mxu0 %v3611
    %5124 = vmatpush.msra.mxu0 %v3609
    %5125 = vmatpush.msra.mxu0 %v3607
    %5126 = vmatpush.msra.mxu0 %v3605
    %5127 = vmatpush.msra.mxu0 %v3603
    %5128 = vmatmul.f32.gmra.mxu0 %v5054
    %v5129 = vpop.f32.mrf.mxu0
    %v5130 = vadd.f32 0.0, %v5129
    %5131 = vdwg.mxu0
    %5132 = vmatpush.msra.mxu0 %v3665
    %5133 = vmatpush.msra.mxu0 %v3663
    %5134 = vmatpush.msra.mxu0 %v3661
    %5135 = vmatpush.msra.mxu0 %v3659
    %5136 = vmatpush.msra.mxu0 %v3657
    %5137 = vmatpush.msra.mxu0 %v3655
    %5138 = vmatpush.msra.mxu0 %v3653
    %5139 = vmatpush.msra.mxu0 %v3651
    %5140 = vmatpush.msra.mxu0 %v3649
    %5141 = vmatpush.msra.mxu0 %v3647
    %5142 = vmatpush.msra.mxu0 %v3645
    %5143 = vmatpush.msra.mxu0 %v3643
    %5144 = vmatpush.msra.mxu0 %v3641
    %5145 = vmatpush.msra.mxu0 %v3639
    %5146 = vmatpush.msra.mxu0 %v3637
    %5147 = vmatpush.msra.mxu0 %v3635
    %5148 = vmatmul.f32.gmra.mxu0 %v5055
    %v5149 = vpop.f32.mrf.mxu0
    %v5150 = vadd.f32 %v5130, %v5149
    %5151 = vdwg.mxu0
    %5152 = vmatpush.msra.mxu0 %v3632
    %5153 = vmatpush.msra.mxu0 %v3630
    %5154 = vmatpush.msra.mxu0 %v3628
    %5155 = vmatpush.msra.mxu0 %v3626
    %5156 = vmatpush.msra.mxu0 %v3624
    %5157 = vmatpush.msra.mxu0 %v3622
    %5158 = vmatpush.msra.mxu0 %v3620
    %5159 = vmatpush.msra.mxu0 %v3618
    %5160 = vmatpush.msra.mxu0 %v3616
    %5161 = vmatpush.msra.mxu0 %v3614
    %5162 = vmatpush.msra.mxu0 %v3612
    %5163 = vmatpush.msra.mxu0 %v3610
    %5164 = vmatpush.msra.mxu0 %v3608
    %5165 = vmatpush.msra.mxu0 %v3606
    %5166 = vmatpush.msra.mxu0 %v3604
    %5167 = vmatpush.msra.mxu0 %v3602
    %5168 = vmatmul.f32.gmra.mxu0 %v5070
    %v5169 = vpop.f32.mrf.mxu0
    %v5170 = vadd.f32 0.0, %v5169
    %5171 = vdwg.mxu0
    %5172 = vmatpush.msra.mxu0 %v3664
    %5173 = vmatpush.msra.mxu0 %v3662
    %5174 = vmatpush.msra.mxu0 %v3660
    %5175 = vmatpush.msra.mxu0 %v3658
    %5176 = vmatpush.msra.mxu0 %v3656
    %5177 = vmatpush.msra.mxu0 %v3654
    %5178 = vmatpush.msra.mxu0 %v3652
    %5179 = vmatpush.msra.mxu0 %v3650
    %5180 = vmatpush.msra.mxu0 %v3648
    %5181 = vmatpush.msra.mxu0 %v3646
    %5182 = vmatpush.msra.mxu0 %v3644
    %5183 = vmatpush.msra.mxu0 %v3642
    %5184 = vmatpush.msra.mxu0 %v3640
    %5185 = vmatpush.msra.mxu0 %v3638
    %5186 = vmatpush.msra.mxu0 %v3636
    %5187 = vmatpush.msra.mxu0 %v3634
    %5188 = vmatmul.f32.gmra.mxu0 %v5071
    %v5189 = vpop.f32.mrf.mxu0
    %v5190 = vadd.f32 %v5170, %v5189
    %5191 = vdwg.mxu0
    %5192 = vmatpush.msra.mxu0 %v3633
    %5193 = vmatpush.msra.mxu0 %v3631
    %5194 = vmatpush.msra.mxu0 %v3629
    %5195 = vmatpush.msra.mxu0 %v3627
    %5196 = vmatpush.msra.mxu0 %v3625
    %5197 = vmatpush.msra.mxu0 %v3623
    %5198 = vmatpush.msra.mxu0 %v3621
    %5199 = vmatpush.msra.mxu0 %v3619
    %5200 = vmatpush.msra.mxu0 %v3617
    %5201 = vmatpush.msra.mxu0 %v3615
    %5202 = vmatpush.msra.mxu0 %v3613
    %5203 = vmatpush.msra.mxu0 %v3611
    %5204 = vmatpush.msra.mxu0 %v3609
    %5205 = vmatpush.msra.mxu0 %v3607
    %5206 = vmatpush.msra.mxu0 %v3605
    %5207 = vmatpush.msra.mxu0 %v3603
    %5208 = vmatmul.f32.gmra.mxu0 %v5070
    %v5209 = vpop.f32.mrf.mxu0
    %v5210 = vadd.f32 0.0, %v5209
    %5211 = vdwg.mxu0
    %5212 = vmatpush.msra.mxu0 %v3665
    %5213 = vmatpush.msra.mxu0 %v3663
    %5214 = vmatpush.msra.mxu0 %v3661
    %5215 = vmatpush.msra.mxu0 %v3659
    %5216 = vmatpush.msra.mxu0 %v3657
    %5217 = vmatpush.msra.mxu0 %v3655
    %5218 = vmatpush.msra.mxu0 %v3653
    %5219 = vmatpush.msra.mxu0 %v3651
    %5220 = vmatpush.msra.mxu0 %v3649
    %5221 = vmatpush.msra.mxu0 %v3647
    %5222 = vmatpush.msra.mxu0 %v3645
    %5223 = vmatpush.msra.mxu0 %v3643
    %5224 = vmatpush.msra.mxu0 %v3641
    %5225 = vmatpush.msra.mxu0 %v3639
    %5226 = vmatpush.msra.mxu0 %v3637
    %5227 = vmatpush.msra.mxu0 %v3635
    %5228 = vmatmul.f32.gmra.mxu0 %v5071
    %v5229 = vpop.f32.mrf.mxu0
    %v5230 = vadd.f32 %v5210, %v5229
    %5231 = vdwg.mxu0
    %v5232 = vmul.f32 %v5110, %v5110
    %v5233 = vmul.f32 %v5150, %v5150
    %v5234 = vsub.f32 %v5190, %v5232
    %v5235 = vsub.f32 %v5230, %v5233
    %v5236 = vmax.f32 %v5234, 0.0
    %v5237 = vmax.f32 %v5235, 0.0
    %v5238 = vperm.slane %v5110, 0
    %v5239 = vperm.slane %v5150, 0
    %v5240 = vsub.f32 %v5000, %v5238
    %v5241 = vsub.f32 %v5040, %v5239
    %v5242 = vadd.f32 %v5236, 1e-05
    %v5243 = vadd.f32 %v5237, 1e-05
    %v5244 = vrsqrt.pop %v5242
    %v5245 = vmul.f32 %v5244, %v5242
    %v5246 = vmul.f32 %v5245, %v5244
    %v5247 = vmul.f32 0.5, %v5246
    %v5248 = vsub.f32 1.5, %v5247
    %v5249 = vmul.f32 %v5244, %v5248
    %vm5250 = vweird.f32 %v5242
    %vm5251 = vweird.f32 %v5244
    %vm5252 = vmor %vm5250, %vm5251
    %v5253 = vsel %vm5252, %v5244, %v5249
    %v5254 = vrsqrt.pop %v5243
    %v5255 = vmul.f32 %v5254, %v5243
    %v5256 = vmul.f32 %v5255, %v5254
    %v5257 = vmul.f32 0.5, %v5256
    %v5258 = vsub.f32 1.5, %v5257
    %v5259 = vmul.f32 %v5254, %v5258
    %vm5260 = vweird.f32 %v5243
    %vm5261 = vweird.f32 %v5254
    %vm5262 = vmor %vm5260, %vm5261
    %v5263 = vsel %vm5262, %v5254, %v5259
    %v5264 = vperm.slane %v5253, 0
    %v5265 = vperm.slane %v5263, 0
    %v5266 = vmul.f32 %v5240, %v5264
    %v5267 = vmul.f32 %v5241, %v5265
    %v5268 = vperm.slane %v54, 0
    %v5269 = vperm.slane %v55, 0
    %v5270 = vmul.f32 %v5266, %v5268
    %v5271 = vmul.f32 %v5267, %v5269
    %v5272 = vperm.slane %v54, 1
    %v5273 = vperm.slane %v55, 1
    %v5274 = vadd.f32 %v5270, %v5272
    %v5275 = vadd.f32 %v5271, %v5273
    %v5276 = vmax.f32 %v5274, 0.0
    %v5277 = vmax.f32 %v5275, 0.0
    %v5278 = vsel %vm2305, %v5276, 0.0
    %v5279 = vsel %vm2305, %v5277, 0.0
    %v5280 = vld [vmem:[#allocation2 + $0x180] sm:$0xff]
    %v5281 = vld [vmem:[#allocation2 + $0x188] sm:$0xff]
    %v5282 = vld [vmem:[#allocation2 + $0x190] sm:$0xff]
    %v5283 = vld [vmem:[#allocation2 + $0x198] sm:$0xff]
    %v5284 = vld [vmem:[#allocation2 + $0x1a0] sm:$0xff]
    %v5285 = vld [vmem:[#allocation2 + $0x1a8] sm:$0xff]
    %v5286 = vld [vmem:[#allocation2 + $0x1b0] sm:$0xff]
    %v5287 = vld [vmem:[#allocation2 + $0x1b8] sm:$0xff]
    %v5288 = vld [vmem:[#allocation2 + $0x1c0] sm:$0xff]
    %v5289 = vld [vmem:[#allocation2 + $0x1c8] sm:$0xff]
    %v5290 = vld [vmem:[#allocation2 + $0x1d0] sm:$0xff]
    %v5291 = vld [vmem:[#allocation2 + $0x1d8] sm:$0xff]
    %v5292 = vld [vmem:[#allocation2 + $0x1e0] sm:$0xff]
    %v5293 = vld [vmem:[#allocation2 + $0x1e8] sm:$0xff]
    %v5294 = vld [vmem:[#allocation2 + $0x1f0] sm:$0xff]
    %v5295 = vld [vmem:[#allocation2 + $0x1f8] sm:$0xff]
    %v5296 = vld [vmem:[#allocation2 + $0x200] sm:$0xff]
    %v5297 = vld [vmem:[#allocation2 + $0x208] sm:$0xff]
    %v5298 = vld [vmem:[#allocation2 + $0x210] sm:$0xff]
    %v5299 = vld [vmem:[#allocation2 + $0x218] sm:$0xff]
    %v5300 = vld [vmem:[#allocation2 + $0x220] sm:$0xff]
    %v5301 = vld [vmem:[#allocation2 + $0x228] sm:$0xff]
    %v5302 = vld [vmem:[#allocation2 + $0x230] sm:$0xff]
    %v5303 = vld [vmem:[#allocation2 + $0x238] sm:$0xff]
    %v5304 = vld [vmem:[#allocation2 + $0x240] sm:$0xff]
    %v5305 = vld [vmem:[#allocation2 + $0x248] sm:$0xff]
    %v5306 = vld [vmem:[#allocation2 + $0x250] sm:$0xff]
    %v5307 = vld [vmem:[#allocation2 + $0x258] sm:$0xff]
    %v5308 = vld [vmem:[#allocation2 + $0x260] sm:$0xff]
    %v5309 = vld [vmem:[#allocation2 + $0x268] sm:$0xff]
    %v5310 = vld [vmem:[#allocation2 + $0x270] sm:$0xff]
    %v5311 = vld [vmem:[#allocation2 + $0x278] sm:$0xff]
    %v5312 = vld [vmem:[#allocation2 + $0x280] sm:$0xff]
    %5313 = vmatpush.msra.mxu0 %v5295
    %5314 = vmatpush.msra.mxu0 %v5294
    %5315 = vmatpush.msra.mxu0 %v5293
    %5316 = vmatpush.msra.mxu0 %v5292
    %5317 = vmatpush.msra.mxu0 %v5291
    %5318 = vmatpush.msra.mxu0 %v5290
    %5319 = vmatpush.msra.mxu0 %v5289
    %5320 = vmatpush.msra.mxu0 %v5288
    %5321 = vmatpush.msra.mxu0 %v5287
    %5322 = vmatpush.msra.mxu0 %v5286
    %5323 = vmatpush.msra.mxu0 %v5285
    %5324 = vmatpush.msra.mxu0 %v5284
    %5325 = vmatpush.msra.mxu0 %v5283
    %5326 = vmatpush.msra.mxu0 %v5282
    %5327 = vmatpush.msra.mxu0 %v5281
    %5328 = vmatpush.msra.mxu0 %v5280
    %5329 = vmatmul.f32.gmra.mxu0 %v5278
    %v5330 = vpop.f32.mrf.mxu0
    %v5331 = vadd.f32 %v5312, %v5330
    %5332 = vdwg.mxu0
    %5333 = vmatpush.msra.mxu0 %v5311
    %5334 = vmatpush.msra.mxu0 %v5310
    %5335 = vmatpush.msra.mxu0 %v5309
    %5336 = vmatpush.msra.mxu0 %v5308
    %5337 = vmatpush.msra.mxu0 %v5307
    %5338 = vmatpush.msra.mxu0 %v5306
    %5339 = vmatpush.msra.mxu0 %v5305
    %5340 = vmatpush.msra.mxu0 %v5304
    %5341 = vmatpush.msra.mxu0 %v5303
    %5342 = vmatpush.msra.mxu0 %v5302
    %5343 = vmatpush.msra.mxu0 %v5301
    %5344 = vmatpush.msra.mxu0 %v5300
    %5345 = vmatpush.msra.mxu0 %v5299
    %5346 = vmatpush.msra.mxu0 %v5298
    %5347 = vmatpush.msra.mxu0 %v5297
    %5348 = vmatpush.msra.mxu0 %v5296
    %5349 = vmatmul.f32.gmra.mxu0 %v5279
    %v5350 = vpop.f32.mrf.mxu0
    %v5351 = vadd.f32 %v5331, %v5350
    %5352 = vdwg.mxu0
    %5353 = vst [vmem:[%s9] sm:$0xff] %v5351
    // Predicated region
    $region38: #{cmtlnet_forward.1} parent=1 // pred_check
      _
    $region39: #{cmtlnet_forward.1} parent=1 // pred_check_branch
      %5355 = sbr.rel (0) target = $region41
    $region40: #{cmtlnet_forward.1} parent=1 // pred_region
      _
    $region41: #{cmtlnet_forward.1} parent=1 // pred_fallthru
      _
    // Predicated region
    $region42: #{cmtlnet_forward.1} parent=1 // pred_check
      _
    $region43: #{cmtlnet_forward.1} parent=1 // pred_check_branch
      %5357 = sbr.rel (0) target = $region45
    $region44: #{cmtlnet_forward.1} parent=1 // pred_region
      _
    $region45: #{cmtlnet_forward.1} parent=1 // pred_fallthru
      _
    // Predicated region
    $region46: #{cmtlnet_forward.1} parent=1 // pred_check
      _
    $region47: #{cmtlnet_forward.1} parent=1 // pred_check_branch
      %5359 = sbr.rel (0) target = $region49
    $region48: #{cmtlnet_forward.1} parent=1 // pred_region
      _
    $region49: #{cmtlnet_forward.1} parent=1 // pred_fallthru
      _
    // Predicated region
    $region50: #{cmtlnet_forward.1} parent=1 // pred_check
      _
    $region51: #{cmtlnet_forward.1} parent=1 // pred_check_branch
      %5361 = sbr.rel (0) target = $region53
    $region52: #{cmtlnet_forward.1} parent=1 // pred_region
      _
    $region53: #{cmtlnet_forward.1} parent=1 // pred_fallthru
      _
    %5362 = vsyncpa [#allocation3], 1

</llo_original>
